<compile_context>
chip_gen: v5e
topology: v5e:2x2
jax: 0.10.0
libtpu: 0.0.40
codegen_flags: <defaults>
</compile_context>

<pallas_src>
import math
from functools import partial

import jax
import jax.numpy as jnp
from jax.experimental import pallas as pl
from jax.experimental.pallas import tpu as pltpu

LN_EPS = 1e-5


def _vmem_budget_bytes():
    """Generation-aware scoped-VMEM budget (3/4 of physical, capped)."""
    cap = 64 * 1024 * 1024                      # safe fallback (v7x-sized)
    try:
        info = pltpu.get_tpu_info()
        cap = int(getattr(info, "vmem_capacity_bytes", cap))
    except Exception:
        pass
    return min((cap * 3) // 4, 100 * 1024 * 1024)


VMEM_LIMIT = _vmem_budget_bytes()
_BIG_VMEM = VMEM_LIMIT >= 64 * 1024 * 1024      # True on v5e/v6e, False on v7x
TM_PREF = 512 if _BIG_VMEM else 256             # row-tile preference
TN_PREF = 256                                   # output-column tile preference
TK_PREF = 512                                   # contraction tile preference
TF_PREF = 1024 if _BIG_VMEM else 512            # FFN hidden tile preference
TQ_PREF = 256 if _BIG_VMEM else 128             # attention q-tile preference


def _tile(dim, pref, align):
    """Largest divisor of `dim` that is a multiple of `align` and <= pref.

    Falls back to the full dimension (block == array extent, always legal)."""
    t = (min(pref, dim) // align) * align
    while t >= align:
        if dim % t == 0:
            return t
        t -= align
    return dim


# ----------------------------------------------------------------------------
# Tiled matmul + bias (fused QKV / Q / KV projections).  bf16 in, bf16 out,
# f32 VMEM accumulator with pl.when init/finalize over the K axis.
# ----------------------------------------------------------------------------
def _matmul_bias_kernel(x_ref, w_ref, b_ref, o_ref, acc_ref):
    k = pl.program_id(2)

    @pl.when(k == 0)
    def _init():
        acc_ref[...] = jnp.zeros_like(acc_ref)

    acc_ref[...] += jnp.dot(x_ref[...], w_ref[...],
                            preferred_element_type=jnp.float32)

    @pl.when(k == pl.num_programs(2) - 1)
    def _finalize():
        o_ref[...] = (acc_ref[...] + b_ref[...]).astype(o_ref.dtype)


def matmul_bias(x, w, b):
    """o = x @ w + b.  x:(M,K) bf16, w:(K,N) bf16, b:(1,N) f32 -> (M,N) bf16."""
    M, K = x.shape
    N = w.shape[1]
    tm = _tile(M, TM_PREF, 8)
    tn = _tile(N, TN_PREF, 128)
    tk = _tile(K, TK_PREF, 128)
    return pl.pallas_call(
        _matmul_bias_kernel,
        out_shape=jax.ShapeDtypeStruct((M, N), jnp.bfloat16),
        grid=(M // tm, N // tn, K // tk),
        in_specs=[
            pl.BlockSpec((tm, tk), lambda i, j, k: (i, k)),
            pl.BlockSpec((tk, tn), lambda i, j, k: (k, j)),
            pl.BlockSpec((1, tn), lambda i, j, k: (0, j)),
        ],
        out_specs=pl.BlockSpec((tm, tn), lambda i, j, k: (i, j)),
        scratch_shapes=[pltpu.VMEM((tm, tn), jnp.float32)],
        compiler_params=pltpu.CompilerParams(
            dimension_semantics=("parallel", "parallel", "arbitrary"),
            vmem_limit_bytes=VMEM_LIMIT),
    )(x, w, b)


# ----------------------------------------------------------------------------
# Fused multi-head attention block:
#   softmax(q k^T / sqrt(dh)) v  ->  out-proj (W_o resident)  ->  + residual
#   ->  LayerNorm, all in ONE kernel per (batch, q-tile) grid step.
# Heads stay packed along the feature axis (static column slices, no
# transposes); per-head PV results go straight into a VMEM (tq, D) bf16 slab.
# Also emits the head-AVERAGED attention weights (B, Sq, Sk).
# ----------------------------------------------------------------------------
def _mha_fused_kernel(q_ref, k_ref, v_ref, wo_ref, bo_ref, r_ref, g_ref, bt_ref,
                      o_ref, w_ref, head_ref, *, num_heads, dh, scale):
    tq = q_ref.shape[1]
    sk = k_ref.shape[1]

    # Fold the softmax scale into q once (tq*D multiplies, not tq*Sk per head).
    q = q_ref[0] * scale                                    # bf16, (tq, D)

    w_acc = jnp.zeros((tq, sk), jnp.float32)
    for h in range(num_heads):                              # static unroll
        lo, hi = h * dh, (h + 1) * dh
        qh = q[:, lo:hi]                                    # (tq, dh) bf16
        kh = k_ref[0, :, lo:hi]                             # (sk, dh) bf16
        vh = v_ref[0, :, lo:hi]                             # (sk, dh) bf16
        s = jax.lax.dot_general(qh, kh, (((1,), (1,)), ((), ())),
                                preferred_element_type=jnp.float32)
        m = jnp.max(s, axis=-1, keepdims=True)
        e = jnp.exp(s - m)
        p = e * pl.reciprocal(jnp.sum(e, axis=-1, keepdims=True))  # exact
        w_acc = w_acc + p
        # Per-head result written straight to the VMEM slab (no concatenate).
        head_ref[:, lo:hi] = jnp.dot(p.astype(vh.dtype), vh,
                                     preferred_element_type=jnp.float32
                                     ).astype(head_ref.dtype)

    w_ref[0] = w_acc * (1.0 / num_heads)                    # head-averaged

    # Fused out-projection + residual + LayerNorm epilogue.
    y = jnp.dot(head_ref[...], wo_ref[...], preferred_element_type=jnp.float32)
    y = y + bo_ref[...] + r_ref[0].astype(jnp.float32)
    mu = jnp.mean(y, axis=-1, keepdims=True)
    var = jnp.mean(jnp.square(y - mu), axis=-1, keepdims=True)
    o_ref[0] = ((y - mu) * jax.lax.rsqrt(var + LN_EPS) * g_ref[...]
                + bt_ref[...]).astype(o_ref.dtype)


def mha_block(q_arr, kv_arr, q_blk, k_blk, v_blk, residual, wo, bo, gamma, beta,
              *, num_heads, d_model, tq_pref=TQ_PREF):
    """q_arr holds q at block-column `q_blk`; kv_arr holds k / v at
    block-columns `k_blk` / `v_blk` (block width = d_model).  Returns the
    LayerNorm(residual + attn_out @ W_o + b_o) activations (B,Sq,D) bf16 and
    the head-averaged attention weights (B,Sq,Sk) f32."""
    B, Sq, _ = q_arr.shape
    _, Sk, _ = kv_arr.shape
    dh = d_model // num_heads
    tq = _tile(Sq, tq_pref, 8)
    kern = partial(_mha_fused_kernel, num_heads=num_heads, dh=dh,
                   scale=1.0 / math.sqrt(dh))
    return pl.pallas_call(
        kern,
        out_shape=(jax.ShapeDtypeStruct((B, Sq, d_model), jnp.bfloat16),
                   jax.ShapeDtypeStruct((B, Sq, Sk), jnp.float32)),
        grid=(B, Sq // tq),
        in_specs=[
            # D-wide column blocks only (no 3D-wide slab DMA).
            pl.BlockSpec((1, tq, d_model), lambda b, i: (b, i, q_blk)),
            pl.BlockSpec((1, Sk, d_model), lambda b, i: (b, 0, k_blk)),
            pl.BlockSpec((1, Sk, d_model), lambda b, i: (b, 0, v_blk)),
            pl.BlockSpec((d_model, d_model), lambda b, i: (0, 0)),   # W_o
            pl.BlockSpec((1, d_model), lambda b, i: (0, 0)),         # b_o
            pl.BlockSpec((1, tq, d_model), lambda b, i: (b, i, 0)),  # residual
            pl.BlockSpec((1, d_model), lambda b, i: (0, 0)),         # ln gamma
            pl.BlockSpec((1, d_model), lambda b, i: (0, 0)),         # ln beta
        ],
        out_specs=(
            pl.BlockSpec((1, tq, d_model), lambda b, i: (b, i, 0)),
            pl.BlockSpec((1, tq, Sk), lambda b, i: (b, i, 0)),
        ),
        scratch_shapes=[pltpu.VMEM((tq, d_model), jnp.bfloat16)],
        compiler_params=pltpu.CompilerParams(
            dimension_semantics=("parallel", "parallel"),
            vmem_limit_bytes=VMEM_LIMIT),
    )(q_arr, kv_arr, kv_arr, wo, bo, residual, gamma, beta)


# ----------------------------------------------------------------------------
# Fused FFN: (x @ W1 + b1) -> ReLU -> @ W2 + b2 -> + x -> LayerNorm
# Grid = (M tiles, FF tiles); the (tm, tf) hidden activation never hits HBM.
# ----------------------------------------------------------------------------
def _ffn_kernel(x_ref, w1_ref, b1_ref, w2_ref, b2_ref, g_ref, bt_ref, o_ref,
                acc_ref):
    f = pl.program_id(1)

    @pl.when(f == 0)
    def _init():
        acc_ref[...] = jnp.zeros_like(acc_ref)

    h = jnp.dot(x_ref[...], w1_ref[...], preferred_element_type=jnp.float32)
    h = jnp.maximum(h + b1_ref[...], 0.0)
    acc_ref[...] += jnp.dot(h.astype(jnp.bfloat16), w2_ref[...],
                            preferred_element_type=jnp.float32)

    @pl.when(f == pl.num_programs(1) - 1)
    def _finalize():
        y = acc_ref[...] + b2_ref[...] + x_ref[...].astype(jnp.float32)
        mu = jnp.mean(y, axis=-1, keepdims=True)
        var = jnp.mean(jnp.square(y - mu), axis=-1, keepdims=True)
        o_ref[...] = ((y - mu) * jax.lax.rsqrt(var + LN_EPS) * g_ref[...]
                      + bt_ref[...]).astype(o_ref.dtype)


def ffn_residual_ln(x, w1, b1, w2, b2, gamma, beta):
    M, D = x.shape
    FF = w1.shape[1]
    tm = _tile(M, TM_PREF, 8)
    tf = _tile(FF, TF_PREF, 128)
    return pl.pallas_call(
        _ffn_kernel,
        out_shape=jax.ShapeDtypeStruct((M, D), jnp.bfloat16),
        grid=(M // tm, FF // tf),
        in_specs=[
            pl.BlockSpec((tm, D), lambda i, f: (i, 0)),
            pl.BlockSpec((D, tf), lambda i, f: (0, f)),
            pl.BlockSpec((1, tf), lambda i, f: (0, f)),
            pl.BlockSpec((tf, D), lambda i, f: (f, 0)),
            pl.BlockSpec((1, D), lambda i, f: (0, 0)),
            pl.BlockSpec((1, D), lambda i, f: (0, 0)),
            pl.BlockSpec((1, D), lambda i, f: (0, 0)),
        ],
        out_specs=pl.BlockSpec((tm, D), lambda i, f: (i, 0)),
        scratch_shapes=[pltpu.VMEM((tm, D), jnp.float32)],
        compiler_params=pltpu.CompilerParams(
            dimension_semantics=("parallel", "arbitrary"),
            vmem_limit_bytes=VMEM_LIMIT),
    )(x, w1, b1, w2, b2, gamma, beta)


# ----------------------------------------------------------------------------
# Standalone LayerNorm (only for the stack's optional final norm)
# ----------------------------------------------------------------------------
def _layernorm_kernel(x_ref, g_ref, b_ref, o_ref):
    x = x_ref[...].astype(jnp.float32)
    mu = jnp.mean(x, axis=-1, keepdims=True)
    var = jnp.mean(jnp.square(x - mu), axis=-1, keepdims=True)
    o_ref[...] = (x - mu) * jax.lax.rsqrt(var + LN_EPS) * g_ref[...] + b_ref[...]


def layer_norm(x, gamma, beta):
    M, D = x.shape
    tm = _tile(M, TM_PREF, 8)
    return pl.pallas_call(
        _layernorm_kernel,
        out_shape=jax.ShapeDtypeStruct((M, D), jnp.float32),
        grid=(M // tm,),
        in_specs=[pl.BlockSpec((tm, D), lambda i: (i, 0)),
                  pl.BlockSpec((1, D), lambda i: (0, 0)),
                  pl.BlockSpec((1, D), lambda i: (0, 0))],
        out_specs=pl.BlockSpec((tm, D), lambda i: (i, 0)),
        compiler_params=pltpu.CompilerParams(
            dimension_semantics=("parallel",),
            vmem_limit_bytes=VMEM_LIMIT),
    )(x, gamma, beta)


# ----------------------------------------------------------------------------
# One transformer layer and the full stack (mirrors the PyTorch wrapper)
# ----------------------------------------------------------------------------
def transformer_layer(x, key, p, num_heads):
    B, S, D = x.shape
    Sk = key.shape[1]
    M = B * S

    # --- self-attention: fused QKV projection + fused MHA/out-proj/LN ---
    qkv = matmul_bias(x.reshape(M, D), p["sa_wqkv"], p["sa_bqkv"]
                      ).reshape(B, S, 3 * D)
    x, attn1 = mha_block(qkv, qkv, 0, 1, 2, x, p["sa_wo"], p["sa_bo"],
                         p["ln1_g"], p["ln1_b"],
                         num_heads=num_heads, d_model=D)

    # --- cross-attention (in 'encoder' mode key == this layer's input) ---
    q = matmul_bias(x.reshape(M, D), p["ca_wq"], p["ca_bq"]).reshape(B, S, D)
    kv = matmul_bias(key.reshape(B * Sk, D), p["ca_wkv"], p["ca_bkv"]
                     ).reshape(B, Sk, 2 * D)
    x, attn2 = mha_block(q, kv, 0, 0, 1, x, p["ca_wo"], p["ca_bo"],
                         p["ln2_g"], p["ln2_b"],
                         num_heads=num_heads, d_model=D)

    # --- fused FFN + residual + LayerNorm ---
    x = ffn_residual_ln(x.reshape(M, D), p["w1"], p["b1"], p["w2"], p["b2"],
                        p["ln3_g"], p["ln3_b"]).reshape(B, S, D)
    return x, attn1, attn2


def transformer_model(query, key, params, *, num_layers, num_heads,
                      module="encoder", att_mask=None, key_padding_mask=None):
    # TODO(synk): att_mask / key_padding_mask are None in this run and are not
    # wired into the attention kernel (would be an additive bias pre-softmax).
    output = query.astype(jnp.bfloat16)
    key = key.astype(jnp.bfloat16)
    atts1, atts2 = [], []
    for i in range(num_layers):
        if module == "encoder":          # mirrors `self.module is 'encoder'`
            key = output
        output, a1, a2 = transformer_layer(output, key,
                                           params["layers"][i], num_heads)
        atts1.append(a1)
        atts2.append(a2)
    if params.get("norm") is not None:
        B, S, D = output.shape
        output = layer_norm(output.reshape(B * S, D),
                            params["norm"]["g"],
                            params["norm"]["b"]).reshape(B, S, D)
    return output, atts1, atts2


# ----------------------------------------------------------------------------
# Deterministic parameter construction (weights bf16, biases / LN params f32)
# ----------------------------------------------------------------------------
def make_params(rng, num_layers, d_model, d_ff):
    def dense(key, fan_in, fan_out):
        kw, key = jax.random.split(key)
        w = (jax.random.normal(kw, (fan_in, fan_out), jnp.float32)
             * 0.02).astype(jnp.bfloat16)
        b = jnp.zeros((1, fan_out), jnp.float32)
        return w, b, key

    layers = []
    key = rng
    for _ in range(num_layers):
        p = {}
        p["sa_wqkv"], p["sa_bqkv"], key = dense(key, d_model, 3 * d_model)
        p["sa_wo"], p["sa_bo"], key = dense(key, d_model, d_model)
        p["ca_wq"], p["ca_bq"], key = dense(key, d_model, d_model)
        p["ca_wkv"], p["ca_bkv"], key = dense(key, d_model, 2 * d_model)
        p["ca_wo"], p["ca_bo"], key = dense(key, d_model, d_model)
        p["w1"], p["b1"], key = dense(key, d_model, d_ff)
        p["w2"], p["b2"], key = dense(key, d_ff, d_model)
        for n in ("ln1", "ln2", "ln3"):
            p[n + "_g"] = jnp.ones((1, d_model), jnp.float32)
            p[n + "_b"] = jnp.zeros((1, d_model), jnp.float32)
        layers.append(p)
    norm = {"g": jnp.ones((1, d_model), jnp.float32),
            "b": jnp.zeros((1, d_model), jnp.float32)}
    return {"layers": layers, "norm": norm}


# ----------------------------------------------------------------------------
if __name__ == "__main__":
    # Small but lane/sublane-aligned demo shapes (D multiple of 128, S
    # multiple of 8) so every BlockSpec is unmasked / lane-dense.
    B, S, D, H, FF = 2, 16, 128, 4, 256
    NUM_LAYERS = 2

    root = jax.random.PRNGKey(0)
    k_q, k_k, k_p = jax.random.split(root, 3)
    query = jax.random.normal(k_q, (B, S, D), jnp.float32)
    key_in = jax.random.normal(k_k, (B, S, D), jnp.float32)
    params = make_params(k_p, NUM_LAYERS, D, FF)

    fwd = jax.jit(partial(transformer_model, num_layers=NUM_LAYERS,
                          num_heads=H, module="encoder"))
    output, atts1, atts2 = fwd(query, key_in, params)
    output, atts1, atts2 = jax.block_until_ready((output, atts1, atts2))

    assert output.shape == (B, S, D)
    assert len(atts1) == NUM_LAYERS and atts1[0].shape == (B, S, S)
    assert len(atts2) == NUM_LAYERS and atts2[0].shape == (B, S, S)
    assert bool(jnp.all(jnp.isfinite(output)))
    print("KERNEL_OK")
</pallas_src>

<mosaic_0001>
module attributes {stable_mosaic.version = 11 : i64} {
  func.func @_mha_fused_kernel(%arg0: i32, %arg1: i32, %arg2: memref<1x16x128xbf16, #tpu.memory_space<vmem>>, %arg3: memref<1x16x128xbf16, #tpu.memory_space<vmem>>, %arg4: memref<1x16x128xbf16, #tpu.memory_space<vmem>>, %arg5: memref<128x128xbf16, #tpu.memory_space<vmem>>, %arg6: memref<1x128xf32, #tpu.memory_space<vmem>>, %arg7: memref<1x16x128xbf16, #tpu.memory_space<vmem>>, %arg8: memref<1x128xf32, #tpu.memory_space<vmem>>, %arg9: memref<1x128xf32, #tpu.memory_space<vmem>>, %arg10: memref<1x16x128xbf16, #tpu.memory_space<vmem>>, %arg11: memref<1x16x16xf32, #tpu.memory_space<vmem>>, %arg12: memref<16x128xbf16, #tpu.memory_space<vmem>>) attributes {dimension_semantics = [#tpu.dimension_semantics<parallel>, #tpu.dimension_semantics<parallel>], iteration_bounds = array<i64: 2, 1>, scalar_prefetch = 0 : i64, scratch_operands = 1 : i64, tpu.core_type = #tpu.core_type<tc>, window_params = [{transform_indices = @transform_0, window_bounds = array<i64: 1, 16, 128>}, {transform_indices = @transform_1, window_bounds = array<i64: 1, 16, 128>}, {transform_indices = @transform_2, window_bounds = array<i64: 1, 16, 128>}, {pipeline_mode = #tpu.pipeline_mode<synchronous>, transform_indices = @transform_3, window_bounds = array<i64: 128, 128>}, {pipeline_mode = #tpu.pipeline_mode<synchronous>, transform_indices = @transform_4, window_bounds = array<i64: 1, 128>}, {transform_indices = @transform_5, window_bounds = array<i64: 1, 16, 128>}, {pipeline_mode = #tpu.pipeline_mode<synchronous>, transform_indices = @transform_6, window_bounds = array<i64: 1, 128>}, {pipeline_mode = #tpu.pipeline_mode<synchronous>, transform_indices = @transform_7, window_bounds = array<i64: 1, 128>}, {transform_indices = @transform_8, window_bounds = array<i64: 1, 16, 128>}, {transform_indices = @transform_9, window_bounds = array<i64: 1, 16, 16>}]} {
    %c0 = arith.constant 0 : index
    %c0_0 = arith.constant 0 : index
    %c0_1 = arith.constant 0 : index
    %0 = vector.load %arg2[%c0, %c0_0, %c0_1] : memref<1x16x128xbf16, #tpu.memory_space<vmem>>, vector<1x16x128xbf16>
    %1 = vector.shape_cast %0 : vector<1x16x128xbf16> to vector<16x128xbf16>
    %cst = arith.constant 1.767580e-01 : bf16
    %2 = vector.broadcast %cst : bf16 to vector<16x128xbf16>
    %3 = arith.mulf %1, %2 : vector<16x128xbf16>
    %cst_2 = arith.constant 0.000000e+00 : f32
    %4 = vector.broadcast %cst_2 : f32 to vector<16x16xf32>
    %5 = vector.extract_strided_slice %3 {offsets = [0, 0], sizes = [16, 32], strides = [1, 1]} : vector<16x128xbf16> to vector<16x32xbf16>
    %c0_3 = arith.constant 0 : index
    %c0_4 = arith.constant 0 : index
    %c0_5 = arith.constant 0 : index
    %6 = vector.load %arg3[%c0_3, %c0_4, %c0_5] : memref<1x16x128xbf16, #tpu.memory_space<vmem>>, vector<1x16x32xbf16>
    %7 = vector.shape_cast %6 : vector<1x16x32xbf16> to vector<16x32xbf16>
    %c0_6 = arith.constant 0 : index
    %c0_7 = arith.constant 0 : index
    %c0_8 = arith.constant 0 : index
    %8 = vector.load %arg4[%c0_6, %c0_7, %c0_8] : memref<1x16x128xbf16, #tpu.memory_space<vmem>>, vector<1x16x32xbf16>
    %9 = vector.shape_cast %8 : vector<1x16x32xbf16> to vector<16x32xbf16>
    %cst_9 = arith.constant dense<0.000000e+00> : vector<16x16xf32>
    %10 = tpu.matmul %5, %7, %cst_9 {dimension_numbers = #tpu.dot_dimension_numbers<[1], [1], [0], [0], [0, 0, 1, 0], [], []>} : vector<16x32xbf16>, vector<16x32xbf16>, vector<16x16xf32> -> vector<16x16xf32>
    %cst_10 = arith.constant dense<0xFF800000> : vector<16xf32>
    %11 = vector.multi_reduction <maximumf>, %10, %cst_10 [1] : vector<16x16xf32> to vector<16xf32>
    %12 = vector.shape_cast %11 : vector<16xf32> to vector<16x1xf32>
    %13 = vector.broadcast %12 : vector<16x1xf32> to vector<16x16xf32>
    %14 = arith.subf %10, %13 : vector<16x16xf32>
    %15 = math.exp %14 : vector<16x16xf32>
    %cst_11 = arith.constant dense<0.000000e+00> : vector<16xf32>
    %16 = vector.multi_reduction <add>, %15, %cst_11 [1] : vector<16x16xf32> to vector<16xf32>
    %17 = vector.shape_cast %16 : vector<16xf32> to vector<16x1xf32>
    %18 = tpu.reciprocal %17 : vector<16x1xf32> -> vector<16x1xf32>
    %19 = vector.broadcast %18 : vector<16x1xf32> to vector<16x16xf32>
    %20 = arith.mulf %15, %19 : vector<16x16xf32>
    %21 = arith.addf %4, %20 : vector<16x16xf32>
    %22 = arith.truncf %20 : vector<16x16xf32> to vector<16x16xbf16>
    %cst_12 = arith.constant dense<0.000000e+00> : vector<16x32xf32>
    %23 = tpu.matmul %22, %9, %cst_12 {dimension_numbers = #tpu.dot_dimension_numbers<[1], [0], [0], [1], [0, 0, 1, 1], [], []>} : vector<16x16xbf16>, vector<16x32xbf16>, vector<16x32xf32> -> vector<16x32xf32>
    %24 = arith.truncf %23 : vector<16x32xf32> to vector<16x32xbf16>
    %c0_13 = arith.constant 0 : index
    %c0_14 = arith.constant 0 : index
    %25 = vector.load %arg12[%c0_13, %c0_14] : memref<16x128xbf16, #tpu.memory_space<vmem>>, vector<16x32xbf16>
    tpu.vector_store %arg12[%c0_13, %c0_14], %24 {strides = array<i32>} : memref<16x128xbf16, #tpu.memory_space<vmem>>, vector<16x32xbf16>,
    %26 = vector.extract_strided_slice %3 {offsets = [0, 32], sizes = [16, 32], strides = [1, 1]} : vector<16x128xbf16> to vector<16x32xbf16>
    %c0_15 = arith.constant 0 : index
    %c0_16 = arith.constant 0 : index
    %c32 = arith.constant 32 : index
    %27 = vector.load %arg3[%c0_15, %c0_16, %c32] : memref<1x16x128xbf16, #tpu.memory_space<vmem>>, vector<1x16x32xbf16>
    %28 = vector.shape_cast %27 : vector<1x16x32xbf16> to vector<16x32xbf16>
    %c0_17 = arith.constant 0 : index
    %c0_18 = arith.constant 0 : index
    %c32_19 = arith.constant 32 : index
    %29 = vector.load %arg4[%c0_17, %c0_18, %c32_19] : memref<1x16x128xbf16, #tpu.memory_space<vmem>>, vector<1x16x32xbf16>
    %30 = vector.shape_cast %29 : vector<1x16x32xbf16> to vector<16x32xbf16>
    %cst_20 = arith.constant dense<0.000000e+00> : vector<16x16xf32>
    %31 = tpu.matmul %26, %28, %cst_20 {dimension_numbers = #tpu.dot_dimension_numbers<[1], [1], [0], [0], [0, 0, 1, 0], [], []>} : vector<16x32xbf16>, vector<16x32xbf16>, vector<16x16xf32> -> vector<16x16xf32>
    %cst_21 = arith.constant dense<0xFF800000> : vector<16xf32>
    %32 = vector.multi_reduction <maximumf>, %31, %cst_21 [1] : vector<16x16xf32> to vector<16xf32>
    %33 = vector.shape_cast %32 : vector<16xf32> to vector<16x1xf32>
    %34 = vector.broadcast %33 : vector<16x1xf32> to vector<16x16xf32>
    %35 = arith.subf %31, %34 : vector<16x16xf32>
    %36 = math.exp %35 : vector<16x16xf32>
    %cst_22 = arith.constant dense<0.000000e+00> : vector<16xf32>
    %37 = vector.multi_reduction <add>, %36, %cst_22 [1] : vector<16x16xf32> to vector<16xf32>
    %38 = vector.shape_cast %37 : vector<16xf32> to vector<16x1xf32>
    %39 = tpu.reciprocal %38 : vector<16x1xf32> -> vector<16x1xf32>
    %40 = vector.broadcast %39 : vector<16x1xf32> to vector<16x16xf32>
    %41 = arith.mulf %36, %40 : vector<16x16xf32>
    %42 = arith.addf %21, %41 : vector<16x16xf32>
    %43 = arith.truncf %41 : vector<16x16xf32> to vector<16x16xbf16>
    %cst_23 = arith.constant dense<0.000000e+00> : vector<16x32xf32>
    %44 = tpu.matmul %43, %30, %cst_23 {dimension_numbers = #tpu.dot_dimension_numbers<[1], [0], [0], [1], [0, 0, 1, 1], [], []>} : vector<16x16xbf16>, vector<16x32xbf16>, vector<16x32xf32> -> vector<16x32xf32>
    %45 = arith.truncf %44 : vector<16x32xf32> to vector<16x32xbf16>
    %c0_24 = arith.constant 0 : index
    %c32_25 = arith.constant 32 : index
    %46 = vector.load %arg12[%c0_24, %c32_25] : memref<16x128xbf16, #tpu.memory_space<vmem>>, vector<16x32xbf16>
    tpu.vector_store %arg12[%c0_24, %c32_25], %45 {strides = array<i32>} : memref<16x128xbf16, #tpu.memory_space<vmem>>, vector<16x32xbf16>,
    %47 = vector.extract_strided_slice %3 {offsets = [0, 64], sizes = [16, 32], strides = [1, 1]} : vector<16x128xbf16> to vector<16x32xbf16>
    %c0_26 = arith.constant 0 : index
    %c0_27 = arith.constant 0 : index
    %c64 = arith.constant 64 : index
    %48 = vector.load %arg3[%c0_26, %c0_27, %c64] : memref<1x16x128xbf16, #tpu.memory_space<vmem>>, vector<1x16x32xbf16>
    %49 = vector.shape_cast %48 : vector<1x16x32xbf16> to vector<16x32xbf16>
    %c0_28 = arith.constant 0 : index
    %c0_29 = arith.constant 0 : index
    %c64_30 = arith.constant 64 : index
    %50 = vector.load %arg4[%c0_28, %c0_29, %c64_30] : memref<1x16x128xbf16, #tpu.memory_space<vmem>>, vector<1x16x32xbf16>
    %51 = vector.shape_cast %50 : vector<1x16x32xbf16> to vector<16x32xbf16>
    %cst_31 = arith.constant dense<0.000000e+00> : vector<16x16xf32>
    %52 = tpu.matmul %47, %49, %cst_31 {dimension_numbers = #tpu.dot_dimension_numbers<[1], [1], [0], [0], [0, 0, 1, 0], [], []>} : vector<16x32xbf16>, vector<16x32xbf16>, vector<16x16xf32> -> vector<16x16xf32>
    %cst_32 = arith.constant dense<0xFF800000> : vector<16xf32>
    %53 = vector.multi_reduction <maximumf>, %52, %cst_32 [1] : vector<16x16xf32> to vector<16xf32>
    %54 = vector.shape_cast %53 : vector<16xf32> to vector<16x1xf32>
    %55 = vector.broadcast %54 : vector<16x1xf32> to vector<16x16xf32>
    %56 = arith.subf %52, %55 : vector<16x16xf32>
    %57 = math.exp %56 : vector<16x16xf32>
    %cst_33 = arith.constant dense<0.000000e+00> : vector<16xf32>
    %58 = vector.multi_reduction <add>, %57, %cst_33 [1] : vector<16x16xf32> to vector<16xf32>
    %59 = vector.shape_cast %58 : vector<16xf32> to vector<16x1xf32>
    %60 = tpu.reciprocal %59 : vector<16x1xf32> -> vector<16x1xf32>
    %61 = vector.broadcast %60 : vector<16x1xf32> to vector<16x16xf32>
    %62 = arith.mulf %57, %61 : vector<16x16xf32>
    %63 = arith.addf %42, %62 : vector<16x16xf32>
    %64 = arith.truncf %62 : vector<16x16xf32> to vector<16x16xbf16>
    %cst_34 = arith.constant dense<0.000000e+00> : vector<16x32xf32>
    %65 = tpu.matmul %64, %51, %cst_34 {dimension_numbers = #tpu.dot_dimension_numbers<[1], [0], [0], [1], [0, 0, 1, 1], [], []>} : vector<16x16xbf16>, vector<16x32xbf16>, vector<16x32xf32> -> vector<16x32xf32>
    %66 = arith.truncf %65 : vector<16x32xf32> to vector<16x32xbf16>
    %c0_35 = arith.constant 0 : index
    %c64_36 = arith.constant 64 : index
    %67 = vector.load %arg12[%c0_35, %c64_36] : memref<16x128xbf16, #tpu.memory_space<vmem>>, vector<16x32xbf16>
    tpu.vector_store %arg12[%c0_35, %c64_36], %66 {strides = array<i32>} : memref<16x128xbf16, #tpu.memory_space<vmem>>, vector<16x32xbf16>,
    %68 = vector.extract_strided_slice %3 {offsets = [0, 96], sizes = [16, 32], strides = [1, 1]} : vector<16x128xbf16> to vector<16x32xbf16>
    %c0_37 = arith.constant 0 : index
    %c0_38 = arith.constant 0 : index
    %c96 = arith.constant 96 : index
    %69 = vector.load %arg3[%c0_37, %c0_38, %c96] : memref<1x16x128xbf16, #tpu.memory_space<vmem>>, vector<1x16x32xbf16>
    %70 = vector.shape_cast %69 : vector<1x16x32xbf16> to vector<16x32xbf16>
    %c0_39 = arith.constant 0 : index
    %c0_40 = arith.constant 0 : index
    %c96_41 = arith.constant 96 : index
    %71 = vector.load %arg4[%c0_39, %c0_40, %c96_41] : memref<1x16x128xbf16, #tpu.memory_space<vmem>>, vector<1x16x32xbf16>
    %72 = vector.shape_cast %71 : vector<1x16x32xbf16> to vector<16x32xbf16>
    %cst_42 = arith.constant dense<0.000000e+00> : vector<16x16xf32>
    %73 = tpu.matmul %68, %70, %cst_42 {dimension_numbers = #tpu.dot_dimension_numbers<[1], [1], [0], [0], [0, 0, 1, 0], [], []>} : vector<16x32xbf16>, vector<16x32xbf16>, vector<16x16xf32> -> vector<16x16xf32>
    %cst_43 = arith.constant dense<0xFF800000> : vector<16xf32>
    %74 = vector.multi_reduction <maximumf>, %73, %cst_43 [1] : vector<16x16xf32> to vector<16xf32>
    %75 = vector.shape_cast %74 : vector<16xf32> to vector<16x1xf32>
    %76 = vector.broadcast %75 : vector<16x1xf32> to vector<16x16xf32>
    %77 = arith.subf %73, %76 : vector<16x16xf32>
    %78 = math.exp %77 : vector<16x16xf32>
    %cst_44 = arith.constant dense<0.000000e+00> : vector<16xf32>
    %79 = vector.multi_reduction <add>, %78, %cst_44 [1] : vector<16x16xf32> to vector<16xf32>
    %80 = vector.shape_cast %79 : vector<16xf32> to vector<16x1xf32>
    %81 = tpu.reciprocal %80 : vector<16x1xf32> -> vector<16x1xf32>
    %82 = vector.broadcast %81 : vector<16x1xf32> to vector<16x16xf32>
    %83 = arith.mulf %78, %82 : vector<16x16xf32>
    %84 = arith.addf %63, %83 : vector<16x16xf32>
    %85 = arith.truncf %83 : vector<16x16xf32> to vector<16x16xbf16>
    %cst_45 = arith.constant dense<0.000000e+00> : vector<16x32xf32>
    %86 = tpu.matmul %85, %72, %cst_45 {dimension_numbers = #tpu.dot_dimension_numbers<[1], [0], [0], [1], [0, 0, 1, 1], [], []>} : vector<16x16xbf16>, vector<16x32xbf16>, vector<16x32xf32> -> vector<16x32xf32>
    %87 = arith.truncf %86 : vector<16x32xf32> to vector<16x32xbf16>
    %c0_46 = arith.constant 0 : index
    %c96_47 = arith.constant 96 : index
    %88 = vector.load %arg12[%c0_46, %c96_47] : memref<16x128xbf16, #tpu.memory_space<vmem>>, vector<16x32xbf16>
    tpu.vector_store %arg12[%c0_46, %c96_47], %87 {strides = array<i32>} : memref<16x128xbf16, #tpu.memory_space<vmem>>, vector<16x32xbf16>,
    %cst_48 = arith.constant 2.500000e-01 : f32
    %89 = vector.broadcast %cst_48 : f32 to vector<16x16xf32>
    %90 = arith.mulf %84, %89 : vector<16x16xf32>
    %c0_49 = arith.constant 0 : index
    %c0_50 = arith.constant 0 : index
    %c0_51 = arith.constant 0 : index
    %91 = vector.load %arg11[%c0_49, %c0_50, %c0_51] : memref<1x16x16xf32, #tpu.memory_space<vmem>>, vector<1x16x16xf32>
    %92 = vector.shape_cast %91 : vector<1x16x16xf32> to vector<16x16xf32>
    %93 = vector.shape_cast %90 : vector<16x16xf32> to vector<1x16x16xf32>
    tpu.vector_store %arg11[%c0_49, %c0_50, %c0_51], %93 {strides = array<i32>} : memref<1x16x16xf32, #tpu.memory_space<vmem>>, vector<1x16x16xf32>,
    %c0_52 = arith.constant 0 : index
    %c0_53 = arith.constant 0 : index
    %94 = vector.load %arg12[%c0_52, %c0_53] : memref<16x128xbf16, #tpu.memory_space<vmem>>, vector<16x128xbf16>
    %c0_54 = arith.constant 0 : index
    %c0_55 = arith.constant 0 : index
    %95 = vector.load %arg5[%c0_54, %c0_55] : memref<128x128xbf16, #tpu.memory_space<vmem>>, vector<128x128xbf16>
    %cst_56 = arith.constant dense<0.000000e+00> : vector<16x128xf32>
    %96 = tpu.matmul %94, %95, %cst_56 {dimension_numbers = #tpu.dot_dimension_numbers<[1], [0], [0], [1], [0, 0, 1, 1], [], []>} : vector<16x128xbf16>, vector<128x128xbf16>, vector<16x128xf32> -> vector<16x128xf32>
    %c0_57 = arith.constant 0 : index
    %c0_58 = arith.constant 0 : index
    %97 = vector.load %arg6[%c0_57, %c0_58] : memref<1x128xf32, #tpu.memory_space<vmem>>, vector<1x128xf32>
    %98 = vector.broadcast %97 : vector<1x128xf32> to vector<16x128xf32>
    %99 = arith.addf %96, %98 : vector<16x128xf32>
    %c0_59 = arith.constant 0 : index
    %c0_60 = arith.constant 0 : index
    %c0_61 = arith.constant 0 : index
    %100 = vector.load %arg7[%c0_59, %c0_60, %c0_61] : memref<1x16x128xbf16, #tpu.memory_space<vmem>>, vector<1x16x128xbf16>
    %101 = vector.shape_cast %100 : vector<1x16x128xbf16> to vector<16x128xbf16>
    %102 = arith.extf %101 : vector<16x128xbf16> to vector<16x128xf32>
    %103 = arith.addf %99, %102 : vector<16x128xf32>
    %cst_62 = arith.constant dense<0.000000e+00> : vector<16xf32>
    %104 = vector.multi_reduction <add>, %103, %cst_62 [1] : vector<16x128xf32> to vector<16xf32>
    %105 = vector.shape_cast %104 : vector<16xf32> to vector<16x1xf32>
    %cst_63 = arith.constant 1.280000e+02 : f32
    %106 = vector.broadcast %cst_63 : f32 to vector<16x1xf32>
    %107 = arith.divf %105, %106 : vector<16x1xf32>
    %108 = vector.broadcast %107 : vector<16x1xf32> to vector<16x128xf32>
    %109 = arith.subf %103, %108 : vector<16x128xf32>
    %110 = arith.mulf %109, %109 : vector<16x128xf32>
    %cst_64 = arith.constant dense<0.000000e+00> : vector<16xf32>
    %111 = vector.multi_reduction <add>, %110, %cst_64 [1] : vector<16x128xf32> to vector<16xf32>
    %112 = vector.shape_cast %111 : vector<16xf32> to vector<16x1xf32>
    %cst_65 = arith.constant 1.280000e+02 : f32
    %113 = vector.broadcast %cst_65 : f32 to vector<16x1xf32>
    %114 = arith.divf %112, %113 : vector<16x1xf32>
    %115 = vector.broadcast %107 : vector<16x1xf32> to vector<16x128xf32>
    %116 = arith.subf %103, %115 : vector<16x128xf32>
    %cst_66 = arith.constant 9.99999974E-6 : f32
    %117 = vector.broadcast %cst_66 : f32 to vector<16x1xf32>
    %118 = arith.addf %114, %117 : vector<16x1xf32>
    %119 = math.rsqrt %118 : vector<16x1xf32>
    %120 = vector.broadcast %119 : vector<16x1xf32> to vector<16x128xf32>
    %121 = arith.mulf %116, %120 : vector<16x128xf32>
    %c0_67 = arith.constant 0 : index
    %c0_68 = arith.constant 0 : index
    %122 = vector.load %arg8[%c0_67, %c0_68] : memref<1x128xf32, #tpu.memory_space<vmem>>, vector<1x128xf32>
    %123 = vector.broadcast %122 : vector<1x128xf32> to vector<16x128xf32>
    %124 = arith.mulf %121, %123 : vector<16x128xf32>
    %c0_69 = arith.constant 0 : index
    %c0_70 = arith.constant 0 : index
    %125 = vector.load %arg9[%c0_69, %c0_70] : memref<1x128xf32, #tpu.memory_space<vmem>>, vector<1x128xf32>
    %126 = vector.broadcast %125 : vector<1x128xf32> to vector<16x128xf32>
    %127 = arith.addf %124, %126 : vector<16x128xf32>
    %128 = arith.truncf %127 : vector<16x128xf32> to vector<16x128xbf16>
    %c0_71 = arith.constant 0 : index
    %c0_72 = arith.constant 0 : index
    %c0_73 = arith.constant 0 : index
    %129 = vector.load %arg10[%c0_71, %c0_72, %c0_73] : memref<1x16x128xbf16, #tpu.memory_space<vmem>>, vector<1x16x128xbf16>
    %130 = vector.shape_cast %129 : vector<1x16x128xbf16> to vector<16x128xbf16>
    %131 = vector.shape_cast %128 : vector<16x128xbf16> to vector<1x16x128xbf16>
    tpu.vector_store %arg10[%c0_71, %c0_72, %c0_73], %131 {strides = array<i32>} : memref<1x16x128xbf16, #tpu.memory_space<vmem>>, vector<1x16x128xbf16>,
    return
  }
  func.func @transform_0(%arg0: i32, %arg1: i32) -> (i32, i32, i32) {
    %c0_i32 = arith.constant 0 : i32
    %c0_i32_0 = arith.constant 0 : i32
    return %arg0, %arg1, %c0_i32 : i32, i32, i32
  }
  func.func @transform_1(%arg0: i32, %arg1: i32) -> (i32, i32, i32) {
    %c0_i32 = arith.constant 0 : i32
    %c1_i32 = arith.constant 1 : i32
    %c0_i32_0 = arith.constant 0 : i32
    return %arg0, %c0_i32, %c1_i32 : i32, i32, i32
  }
  func.func @transform_2(%arg0: i32, %arg1: i32) -> (i32, i32, i32) {
    %c0_i32 = arith.constant 0 : i32
    %c2_i32 = arith.constant 2 : i32
    %c0_i32_0 = arith.constant 0 : i32
    return %arg0, %c0_i32, %c2_i32 : i32, i32, i32
  }
  func.func @transform_3(%arg0: i32, %arg1: i32) -> (i32, i32) {
    %c0_i32 = arith.constant 0 : i32
    %c0_i32_0 = arith.constant 0 : i32
    %c0_i32_1 = arith.constant 0 : i32
    return %c0_i32, %c0_i32_0 : i32, i32
  }
  func.func @transform_4(%arg0: i32, %arg1: i32) -> (i32, i32) {
    %c0_i32 = arith.constant 0 : i32
    %c0_i32_0 = arith.constant 0 : i32
    %c0_i32_1 = arith.constant 0 : i32
    return %c0_i32, %c0_i32_0 : i32, i32
  }
  func.func @transform_5(%arg0: i32, %arg1: i32) -> (i32, i32, i32) {
    %c0_i32 = arith.constant 0 : i32
    %c0_i32_0 = arith.constant 0 : i32
    return %arg0, %arg1, %c0_i32 : i32, i32, i32
  }
  func.func @transform_6(%arg0: i32, %arg1: i32) -> (i32, i32) {
    %c0_i32 = arith.constant 0 : i32
    %c0_i32_0 = arith.constant 0 : i32
    %c0_i32_1 = arith.constant 0 : i32
    return %c0_i32, %c0_i32_0 : i32, i32
  }
  func.func @transform_7(%arg0: i32, %arg1: i32) -> (i32, i32) {
    %c0_i32 = arith.constant 0 : i32
    %c0_i32_0 = arith.constant 0 : i32
    %c0_i32_1 = arith.constant 0 : i32
    return %c0_i32, %c0_i32_0 : i32, i32
  }
  func.func @transform_8(%arg0: i32, %arg1: i32) -> (i32, i32, i32) {
    %c0_i32 = arith.constant 0 : i32
    %c0_i32_0 = arith.constant 0 : i32
    return %arg0, %arg1, %c0_i32 : i32, i32, i32
  }
  func.func @transform_9(%arg0: i32, %arg1: i32) -> (i32, i32, i32) {
    %c0_i32 = arith.constant 0 : i32
    %c0_i32_0 = arith.constant 0 : i32
    return %arg0, %arg1, %c0_i32 : i32, i32, i32
  }
}

module attributes {stable_mosaic.version = 11 : i64} {
  func.func @_matmul_bias_kernel(%arg0: i32, %arg1: i32, %arg2: i32, %arg3: memref<32x128xbf16, #tpu.memory_space<vmem>>, %arg4: memref<128x256xbf16, #tpu.memory_space<vmem>>, %arg5: memref<1x256xf32, #tpu.memory_space<vmem>>, %arg6: memref<32x256xbf16, #tpu.memory_space<vmem>>, %arg7: memref<32x256xf32, #tpu.memory_space<vmem>>) attributes {dimension_semantics = [#tpu.dimension_semantics<parallel>, #tpu.dimension_semantics<parallel>, #tpu.dimension_semantics<arbitrary>], iteration_bounds = array<i64: 1, 1, 1>, scalar_prefetch = 0 : i64, scratch_operands = 1 : i64, tpu.core_type = #tpu.core_type<tc>, window_params = [{transform_indices = @transform_0, window_bounds = array<i64: 32, 128>}, {transform_indices = @transform_1, window_bounds = array<i64: 128, 256>}, {transform_indices = @transform_2, window_bounds = array<i64: 1, 256>}, {transform_indices = @transform_3, window_bounds = array<i64: 32, 256>}]} {
    %c0_i32 = arith.constant 0 : i32
    %0 = arith.cmpi eq, %arg2, %c0_i32 : i32
    %1 = arith.extui %0 : i1 to i32
    %c0_i32_0 = arith.constant 0 : i32
    %2 = arith.cmpi ne, %1, %c0_i32_0 : i32
    scf.if %2 {
      %cst_10 = arith.constant 0.000000e+00 : f32
      %12 = vector.broadcast %cst_10 : f32 to vector<32x256xf32>
      %c0_11 = arith.constant 0 : index
      %c0_12 = arith.constant 0 : index
      %13 = vector.load %arg7[%c0_11, %c0_12] : memref<32x256xf32, #tpu.memory_space<vmem>>, vector<32x256xf32>
      tpu.vector_store %arg7[%c0_11, %c0_12], %12 {strides = array<i32>} : memref<32x256xf32, #tpu.memory_space<vmem>>, vector<32x256xf32>,
    } else {
    }
    %c0 = arith.constant 0 : index
    %c0_1 = arith.constant 0 : index
    %3 = vector.load %arg7[%c0, %c0_1] : memref<32x256xf32, #tpu.memory_space<vmem>>, vector<32x256xf32>
    %c0_2 = arith.constant 0 : index
    %c0_3 = arith.constant 0 : index
    %4 = vector.load %arg3[%c0_2, %c0_3] : memref<32x128xbf16, #tpu.memory_space<vmem>>, vector<32x128xbf16>
    %c0_4 = arith.constant 0 : index
    %c0_5 = arith.constant 0 : index
    %5 = vector.load %arg4[%c0_4, %c0_5] : memref<128x256xbf16, #tpu.memory_space<vmem>>, vector<128x256xbf16>
    %cst = arith.constant dense<0.000000e+00> : vector<32x256xf32>
    %6 = tpu.matmul %4, %5, %cst {dimension_numbers = #tpu.dot_dimension_numbers<[1], [0], [0], [1], [0, 0, 1, 1], [], []>} : vector<32x128xbf16>, vector<128x256xbf16>, vector<32x256xf32> -> vector<32x256xf32>
    %7 = arith.addf %3, %6 : vector<32x256xf32>
    %c0_6 = arith.constant 0 : index
    %c0_7 = arith.constant 0 : index
    %8 = vector.load %arg7[%c0_6, %c0_7] : memref<32x256xf32, #tpu.memory_space<vmem>>, vector<32x256xf32>
    tpu.vector_store %arg7[%c0_6, %c0_7], %7 {strides = array<i32>} : memref<32x256xf32, #tpu.memory_space<vmem>>, vector<32x256xf32>,
    %c0_i32_8 = arith.constant 0 : i32
    %9 = arith.cmpi eq, %arg2, %c0_i32_8 : i32
    %10 = arith.extui %9 : i1 to i32
    %c0_i32_9 = arith.constant 0 : i32
    %11 = arith.cmpi ne, %10, %c0_i32_9 : i32
    scf.if %11 {
      %c0_10 = arith.constant 0 : index
      %c0_11 = arith.constant 0 : index
      %12 = vector.load %arg7[%c0_10, %c0_11] : memref<32x256xf32, #tpu.memory_space<vmem>>, vector<32x256xf32>
      %c0_12 = arith.constant 0 : index
      %c0_13 = arith.constant 0 : index
      %13 = vector.load %arg5[%c0_12, %c0_13] : memref<1x256xf32, #tpu.memory_space<vmem>>, vector<1x256xf32>
      %14 = vector.broadcast %13 : vector<1x256xf32> to vector<32x256xf32>
      %15 = arith.addf %12, %14 : vector<32x256xf32>
      %16 = arith.truncf %15 : vector<32x256xf32> to vector<32x256xbf16>
      %c0_14 = arith.constant 0 : index
      %c0_15 = arith.constant 0 : index
      %17 = vector.load %arg6[%c0_14, %c0_15] : memref<32x256xbf16, #tpu.memory_space<vmem>>, vector<32x256xbf16>
      tpu.vector_store %arg6[%c0_14, %c0_15], %16 {strides = array<i32>} : memref<32x256xbf16, #tpu.memory_space<vmem>>, vector<32x256xbf16>,
    } else {
    }
    return
  }
  func.func @transform_0(%arg0: i32, %arg1: i32, %arg2: i32) -> (i32, i32) {
    %c0_i32 = arith.constant 0 : i32
    return %arg0, %arg2 : i32, i32
  }
  func.func @transform_1(%arg0: i32, %arg1: i32, %arg2: i32) -> (i32, i32) {
    %c0_i32 = arith.constant 0 : i32
    return %arg2, %arg1 : i32, i32
  }
  func.func @transform_2(%arg0: i32, %arg1: i32, %arg2: i32) -> (i32, i32) {
    %c0_i32 = arith.constant 0 : i32
    %c0_i32_0 = arith.constant 0 : i32
    return %c0_i32, %arg1 : i32, i32
  }
  func.func @transform_3(%arg0: i32, %arg1: i32, %arg2: i32) -> (i32, i32) {
    %c0_i32 = arith.constant 0 : i32
    return %arg0, %arg1 : i32, i32
  }
}

module attributes {stable_mosaic.version = 11 : i64} {
  func.func @_matmul_bias_kernel(%arg0: i32, %arg1: i32, %arg2: i32, %arg3: memref<32x128xbf16, #tpu.memory_space<vmem>>, %arg4: memref<128x128xbf16, #tpu.memory_space<vmem>>, %arg5: memref<1x128xf32, #tpu.memory_space<vmem>>, %arg6: memref<32x128xbf16, #tpu.memory_space<vmem>>, %arg7: memref<32x128xf32, #tpu.memory_space<vmem>>) attributes {dimension_semantics = [#tpu.dimension_semantics<parallel>, #tpu.dimension_semantics<parallel>, #tpu.dimension_semantics<arbitrary>], iteration_bounds = array<i64: 1, 3, 1>, scalar_prefetch = 0 : i64, scratch_operands = 1 : i64, tpu.core_type = #tpu.core_type<tc>, window_params = [{transform_indices = @transform_0, window_bounds = array<i64: 32, 128>}, {transform_indices = @transform_1, window_bounds = array<i64: 128, 128>}, {transform_indices = @transform_2, window_bounds = array<i64: 1, 128>}, {transform_indices = @transform_3, window_bounds = array<i64: 32, 128>}]} {
    %c0_i32 = arith.constant 0 : i32
    %0 = arith.cmpi eq, %arg2, %c0_i32 : i32
    %1 = arith.extui %0 : i1 to i32
    %c0_i32_0 = arith.constant 0 : i32
    %2 = arith.cmpi ne, %1, %c0_i32_0 : i32
    scf.if %2 {
      %cst_10 = arith.constant 0.000000e+00 : f32
      %12 = vector.broadcast %cst_10 : f32 to vector<32x128xf32>
      %c0_11 = arith.constant 0 : index
      %c0_12 = arith.constant 0 : index
      %13 = vector.load %arg7[%c0_11, %c0_12] : memref<32x128xf32, #tpu.memory_space<vmem>>, vector<32x128xf32>
      tpu.vector_store %arg7[%c0_11, %c0_12], %12 {strides = array<i32>} : memref<32x128xf32, #tpu.memory_space<vmem>>, vector<32x128xf32>,
    } else {
    }
    %c0 = arith.constant 0 : index
    %c0_1 = arith.constant 0 : index
    %3 = vector.load %arg7[%c0, %c0_1] : memref<32x128xf32, #tpu.memory_space<vmem>>, vector<32x128xf32>
    %c0_2 = arith.constant 0 : index
    %c0_3 = arith.constant 0 : index
    %4 = vector.load %arg3[%c0_2, %c0_3] : memref<32x128xbf16, #tpu.memory_space<vmem>>, vector<32x128xbf16>
    %c0_4 = arith.constant 0 : index
    %c0_5 = arith.constant 0 : index
    %5 = vector.load %arg4[%c0_4, %c0_5] : memref<128x128xbf16, #tpu.memory_space<vmem>>, vector<128x128xbf16>
    %cst = arith.constant dense<0.000000e+00> : vector<32x128xf32>
    %6 = tpu.matmul %4, %5, %cst {dimension_numbers = #tpu.dot_dimension_numbers<[1], [0], [0], [1], [0, 0, 1, 1], [], []>} : vector<32x128xbf16>, vector<128x128xbf16>, vector<32x128xf32> -> vector<32x128xf32>
    %7 = arith.addf %3, %6 : vector<32x128xf32>
    %c0_6 = arith.constant 0 : index
    %c0_7 = arith.constant 0 : index
    %8 = vector.load %arg7[%c0_6, %c0_7] : memref<32x128xf32, #tpu.memory_space<vmem>>, vector<32x128xf32>
    tpu.vector_store %arg7[%c0_6, %c0_7], %7 {strides = array<i32>} : memref<32x128xf32, #tpu.memory_space<vmem>>, vector<32x128xf32>,
    %c0_i32_8 = arith.constant 0 : i32
    %9 = arith.cmpi eq, %arg2, %c0_i32_8 : i32
    %10 = arith.extui %9 : i1 to i32
    %c0_i32_9 = arith.constant 0 : i32
    %11 = arith.cmpi ne, %10, %c0_i32_9 : i32
    scf.if %11 {
      %c0_10 = arith.constant 0 : index
      %c0_11 = arith.constant 0 : index
      %12 = vector.load %arg7[%c0_10, %c0_11] : memref<32x128xf32, #tpu.memory_space<vmem>>, vector<32x128xf32>
      %c0_12 = arith.constant 0 : index
      %c0_13 = arith.constant 0 : index
      %13 = vector.load %arg5[%c0_12, %c0_13] : memref<1x128xf32, #tpu.memory_space<vmem>>, vector<1x128xf32>
      %14 = vector.broadcast %13 : vector<1x128xf32> to vector<32x128xf32>
      %15 = arith.addf %12, %14 : vector<32x128xf32>
      %16 = arith.truncf %15 : vector<32x128xf32> to vector<32x128xbf16>
      %c0_14 = arith.constant 0 : index
      %c0_15 = arith.constant 0 : index
      %17 = vector.load %arg6[%c0_14, %c0_15] : memref<32x128xbf16, #tpu.memory_space<vmem>>, vector<32x128xbf16>
      tpu.vector_store %arg6[%c0_14, %c0_15], %16 {strides = array<i32>} : memref<32x128xbf16, #tpu.memory_space<vmem>>, vector<32x128xbf16>,
    } else {
    }
    return
  }
  func.func @transform_0(%arg0: i32, %arg1: i32, %arg2: i32) -> (i32, i32) {
    %c0_i32 = arith.constant 0 : i32
    return %arg0, %arg2 : i32, i32
  }
  func.func @transform_1(%arg0: i32, %arg1: i32, %arg2: i32) -> (i32, i32) {
    %c0_i32 = arith.constant 0 : i32
    return %arg2, %arg1 : i32, i32
  }
  func.func @transform_2(%arg0: i32, %arg1: i32, %arg2: i32) -> (i32, i32) {
    %c0_i32 = arith.constant 0 : i32
    %c0_i32_0 = arith.constant 0 : i32
    return %c0_i32, %arg1 : i32, i32
  }
  func.func @transform_3(%arg0: i32, %arg1: i32, %arg2: i32) -> (i32, i32) {
    %c0_i32 = arith.constant 0 : i32
    return %arg0, %arg1 : i32, i32
  }
}

module attributes {stable_mosaic.version = 11 : i64} {
  func.func @_matmul_bias_kernel(%arg0: i32, %arg1: i32, %arg2: i32, %arg3: memref<32x128xbf16, #tpu.memory_space<vmem>>, %arg4: memref<128x128xbf16, #tpu.memory_space<vmem>>, %arg5: memref<1x128xf32, #tpu.memory_space<vmem>>, %arg6: memref<32x128xbf16, #tpu.memory_space<vmem>>, %arg7: memref<32x128xf32, #tpu.memory_space<vmem>>) attributes {dimension_semantics = [#tpu.dimension_semantics<parallel>, #tpu.dimension_semantics<parallel>, #tpu.dimension_semantics<arbitrary>], iteration_bounds = array<i64: 1, 1, 1>, scalar_prefetch = 0 : i64, scratch_operands = 1 : i64, tpu.core_type = #tpu.core_type<tc>, window_params = [{transform_indices = @transform_0, window_bounds = array<i64: 32, 128>}, {transform_indices = @transform_1, window_bounds = array<i64: 128, 128>}, {transform_indices = @transform_2, window_bounds = array<i64: 1, 128>}, {transform_indices = @transform_3, window_bounds = array<i64: 32, 128>}]} {
    %c0_i32 = arith.constant 0 : i32
    %0 = arith.cmpi eq, %arg2, %c0_i32 : i32
    %1 = arith.extui %0 : i1 to i32
    %c0_i32_0 = arith.constant 0 : i32
    %2 = arith.cmpi ne, %1, %c0_i32_0 : i32
    scf.if %2 {
      %cst_10 = arith.constant 0.000000e+00 : f32
      %12 = vector.broadcast %cst_10 : f32 to vector<32x128xf32>
      %c0_11 = arith.constant 0 : index
      %c0_12 = arith.constant 0 : index
      %13 = vector.load %arg7[%c0_11, %c0_12] : memref<32x128xf32, #tpu.memory_space<vmem>>, vector<32x128xf32>
      tpu.vector_store %arg7[%c0_11, %c0_12], %12 {strides = array<i32>} : memref<32x128xf32, #tpu.memory_space<vmem>>, vector<32x128xf32>,
    } else {
    }
    %c0 = arith.constant 0 : index
    %c0_1 = arith.constant 0 : index
    %3 = vector.load %arg7[%c0, %c0_1] : memref<32x128xf32, #tpu.memory_space<vmem>>, vector<32x128xf32>
    %c0_2 = arith.constant 0 : index
    %c0_3 = arith.constant 0 : index
    %4 = vector.load %arg3[%c0_2, %c0_3] : memref<32x128xbf16, #tpu.memory_space<vmem>>, vector<32x128xbf16>
    %c0_4 = arith.constant 0 : index
    %c0_5 = arith.constant 0 : index
    %5 = vector.load %arg4[%c0_4, %c0_5] : memref<128x128xbf16, #tpu.memory_space<vmem>>, vector<128x128xbf16>
    %cst = arith.constant dense<0.000000e+00> : vector<32x128xf32>
    %6 = tpu.matmul %4, %5, %cst {dimension_numbers = #tpu.dot_dimension_numbers<[1], [0], [0], [1], [0, 0, 1, 1], [], []>} : vector<32x128xbf16>, vector<128x128xbf16>, vector<32x128xf32> -> vector<32x128xf32>
    %7 = arith.addf %3, %6 : vector<32x128xf32>
    %c0_6 = arith.constant 0 : index
    %c0_7 = arith.constant 0 : index
    %8 = vector.load %arg7[%c0_6, %c0_7] : memref<32x128xf32, #tpu.memory_space<vmem>>, vector<32x128xf32>
    tpu.vector_store %arg7[%c0_6, %c0_7], %7 {strides = array<i32>} : memref<32x128xf32, #tpu.memory_space<vmem>>, vector<32x128xf32>,
    %c0_i32_8 = arith.constant 0 : i32
    %9 = arith.cmpi eq, %arg2, %c0_i32_8 : i32
    %10 = arith.extui %9 : i1 to i32
    %c0_i32_9 = arith.constant 0 : i32
    %11 = arith.cmpi ne, %10, %c0_i32_9 : i32
    scf.if %11 {
      %c0_10 = arith.constant 0 : index
      %c0_11 = arith.constant 0 : index
      %12 = vector.load %arg7[%c0_10, %c0_11] : memref<32x128xf32, #tpu.memory_space<vmem>>, vector<32x128xf32>
      %c0_12 = arith.constant 0 : index
      %c0_13 = arith.constant 0 : index
      %13 = vector.load %arg5[%c0_12, %c0_13] : memref<1x128xf32, #tpu.memory_space<vmem>>, vector<1x128xf32>
      %14 = vector.broadcast %13 : vector<1x128xf32> to vector<32x128xf32>
      %15 = arith.addf %12, %14 : vector<32x128xf32>
      %16 = arith.truncf %15 : vector<32x128xf32> to vector<32x128xbf16>
      %c0_14 = arith.constant 0 : index
      %c0_15 = arith.constant 0 : index
      %17 = vector.load %arg6[%c0_14, %c0_15] : memref<32x128xbf16, #tpu.memory_space<vmem>>, vector<32x128xbf16>
      tpu.vector_store %arg6[%c0_14, %c0_15], %16 {strides = array<i32>} : memref<32x128xbf16, #tpu.memory_space<vmem>>, vector<32x128xbf16>,
    } else {
    }
    return
  }
  func.func @transform_0(%arg0: i32, %arg1: i32, %arg2: i32) -> (i32, i32) {
    %c0_i32 = arith.constant 0 : i32
    return %arg0, %arg2 : i32, i32
  }
  func.func @transform_1(%arg0: i32, %arg1: i32, %arg2: i32) -> (i32, i32) {
    %c0_i32 = arith.constant 0 : i32
    return %arg2, %arg1 : i32, i32
  }
  func.func @transform_2(%arg0: i32, %arg1: i32, %arg2: i32) -> (i32, i32) {
    %c0_i32 = arith.constant 0 : i32
    %c0_i32_0 = arith.constant 0 : i32
    return %c0_i32, %arg1 : i32, i32
  }
  func.func @transform_3(%arg0: i32, %arg1: i32, %arg2: i32) -> (i32, i32) {
    %c0_i32 = arith.constant 0 : i32
    return %arg0, %arg1 : i32, i32
  }
}

module attributes {stable_mosaic.version = 11 : i64} {
  func.func @_ffn_kernel(%arg0: i32, %arg1: i32, %arg2: memref<32x128xbf16, #tpu.memory_space<vmem>>, %arg3: memref<128x256xbf16, #tpu.memory_space<vmem>>, %arg4: memref<1x256xf32, #tpu.memory_space<vmem>>, %arg5: memref<256x128xbf16, #tpu.memory_space<vmem>>, %arg6: memref<1x128xf32, #tpu.memory_space<vmem>>, %arg7: memref<1x128xf32, #tpu.memory_space<vmem>>, %arg8: memref<1x128xf32, #tpu.memory_space<vmem>>, %arg9: memref<32x128xbf16, #tpu.memory_space<vmem>>, %arg10: memref<32x128xf32, #tpu.memory_space<vmem>>) attributes {dimension_semantics = [#tpu.dimension_semantics<parallel>, #tpu.dimension_semantics<arbitrary>], iteration_bounds = array<i64: 1, 1>, scalar_prefetch = 0 : i64, scratch_operands = 1 : i64, tpu.core_type = #tpu.core_type<tc>, window_params = [{transform_indices = @transform_0, window_bounds = array<i64: 32, 128>}, {transform_indices = @transform_1, window_bounds = array<i64: 128, 256>}, {transform_indices = @transform_2, window_bounds = array<i64: 1, 256>}, {transform_indices = @transform_3, window_bounds = array<i64: 256, 128>}, {pipeline_mode = #tpu.pipeline_mode<synchronous>, transform_indices = @transform_4, window_bounds = array<i64: 1, 128>}, {pipeline_mode = #tpu.pipeline_mode<synchronous>, transform_indices = @transform_5, window_bounds = array<i64: 1, 128>}, {pipeline_mode = #tpu.pipeline_mode<synchronous>, transform_indices = @transform_6, window_bounds = array<i64: 1, 128>}, {transform_indices = @transform_7, window_bounds = array<i64: 32, 128>}]} {
    %c0_i32 = arith.constant 0 : i32
    %0 = arith.cmpi eq, %arg1, %c0_i32 : i32
    %1 = arith.extui %0 : i1 to i32
    %c0_i32_0 = arith.constant 0 : i32
    %2 = arith.cmpi ne, %1, %c0_i32_0 : i32
    scf.if %2 {
      %cst_16 = arith.constant 0.000000e+00 : f32
      %20 = vector.broadcast %cst_16 : f32 to vector<32x128xf32>
      %c0_17 = arith.constant 0 : index
      %c0_18 = arith.constant 0 : index
      %21 = vector.load %arg10[%c0_17, %c0_18] : memref<32x128xf32, #tpu.memory_space<vmem>>, vector<32x128xf32>
      tpu.vector_store %arg10[%c0_17, %c0_18], %20 {strides = array<i32>} : memref<32x128xf32, #tpu.memory_space<vmem>>, vector<32x128xf32>,
    } else {
    }
    %c0 = arith.constant 0 : index
    %c0_1 = arith.constant 0 : index
    %3 = vector.load %arg2[%c0, %c0_1] : memref<32x128xbf16, #tpu.memory_space<vmem>>, vector<32x128xbf16>
    %c0_2 = arith.constant 0 : index
    %c0_3 = arith.constant 0 : index
    %4 = vector.load %arg3[%c0_2, %c0_3] : memref<128x256xbf16, #tpu.memory_space<vmem>>, vector<128x256xbf16>
    %cst = arith.constant dense<0.000000e+00> : vector<32x256xf32>
    %5 = tpu.matmul %3, %4, %cst {dimension_numbers = #tpu.dot_dimension_numbers<[1], [0], [0], [1], [0, 0, 1, 1], [], []>} : vector<32x128xbf16>, vector<128x256xbf16>, vector<32x256xf32> -> vector<32x256xf32>
    %c0_4 = arith.constant 0 : index
    %c0_5 = arith.constant 0 : index
    %6 = vector.load %arg4[%c0_4, %c0_5] : memref<1x256xf32, #tpu.memory_space<vmem>>, vector<1x256xf32>
    %7 = vector.broadcast %6 : vector<1x256xf32> to vector<32x256xf32>
    %8 = arith.addf %5, %7 : vector<32x256xf32>
    %cst_6 = arith.constant 0.000000e+00 : f32
    %9 = vector.broadcast %cst_6 : f32 to vector<32x256xf32>
    %10 = arith.maximumf %8, %9 : vector<32x256xf32>
    %c0_7 = arith.constant 0 : index
    %c0_8 = arith.constant 0 : index
    %11 = vector.load %arg10[%c0_7, %c0_8] : memref<32x128xf32, #tpu.memory_space<vmem>>, vector<32x128xf32>
    %12 = arith.truncf %10 : vector<32x256xf32> to vector<32x256xbf16>
    %c0_9 = arith.constant 0 : index
    %c0_10 = arith.constant 0 : index
    %13 = vector.load %arg5[%c0_9, %c0_10] : memref<256x128xbf16, #tpu.memory_space<vmem>>, vector<256x128xbf16>
    %cst_11 = arith.constant dense<0.000000e+00> : vector<32x128xf32>
    %14 = tpu.matmul %12, %13, %cst_11 {dimension_numbers = #tpu.dot_dimension_numbers<[1], [0], [0], [1], [0, 0, 1, 1], [], []>} : vector<32x256xbf16>, vector<256x128xbf16>, vector<32x128xf32> -> vector<32x128xf32>
    %15 = arith.addf %11, %14 : vector<32x128xf32>
    %c0_12 = arith.constant 0 : index
    %c0_13 = arith.constant 0 : index
    %16 = vector.load %arg10[%c0_12, %c0_13] : memref<32x128xf32, #tpu.memory_space<vmem>>, vector<32x128xf32>
    tpu.vector_store %arg10[%c0_12, %c0_13], %15 {strides = array<i32>} : memref<32x128xf32, #tpu.memory_space<vmem>>, vector<32x128xf32>,
    %c0_i32_14 = arith.constant 0 : i32
    %17 = arith.cmpi eq, %arg1, %c0_i32_14 : i32
    %18 = arith.extui %17 : i1 to i32
    %c0_i32_15 = arith.constant 0 : i32
    %19 = arith.cmpi ne, %18, %c0_i32_15 : i32
    scf.if %19 {
      %c0_16 = arith.constant 0 : index
      %c0_17 = arith.constant 0 : index
      %20 = vector.load %arg10[%c0_16, %c0_17] : memref<32x128xf32, #tpu.memory_space<vmem>>, vector<32x128xf32>
      %c0_18 = arith.constant 0 : index
      %c0_19 = arith.constant 0 : index
      %21 = vector.load %arg6[%c0_18, %c0_19] : memref<1x128xf32, #tpu.memory_space<vmem>>, vector<1x128xf32>
      %22 = vector.broadcast %21 : vector<1x128xf32> to vector<32x128xf32>
      %23 = arith.addf %20, %22 : vector<32x128xf32>
      %c0_20 = arith.constant 0 : index
      %c0_21 = arith.constant 0 : index
      %24 = vector.load %arg2[%c0_20, %c0_21] : memref<32x128xbf16, #tpu.memory_space<vmem>>, vector<32x128xbf16>
      %25 = arith.extf %24 : vector<32x128xbf16> to vector<32x128xf32>
      %26 = arith.addf %23, %25 : vector<32x128xf32>
      %cst_22 = arith.constant dense<0.000000e+00> : vector<32xf32>
      %27 = vector.multi_reduction <add>, %26, %cst_22 [1] : vector<32x128xf32> to vector<32xf32>
      %28 = vector.shape_cast %27 : vector<32xf32> to vector<32x1xf32>
      %cst_23 = arith.constant 1.280000e+02 : f32
      %29 = vector.broadcast %cst_23 : f32 to vector<32x1xf32>
      %30 = arith.divf %28, %29 : vector<32x1xf32>
      %31 = vector.broadcast %30 : vector<32x1xf32> to vector<32x128xf32>
      %32 = arith.subf %26, %31 : vector<32x128xf32>
      %33 = arith.mulf %32, %32 : vector<32x128xf32>
      %cst_24 = arith.constant dense<0.000000e+00> : vector<32xf32>
      %34 = vector.multi_reduction <add>, %33, %cst_24 [1] : vector<32x128xf32> to vector<32xf32>
      %35 = vector.shape_cast %34 : vector<32xf32> to vector<32x1xf32>
      %cst_25 = arith.constant 1.280000e+02 : f32
      %36 = vector.broadcast %cst_25 : f32 to vector<32x1xf32>
      %37 = arith.divf %35, %36 : vector<32x1xf32>
      %38 = vector.broadcast %30 : vector<32x1xf32> to vector<32x128xf32>
      %39 = arith.subf %26, %38 : vector<32x128xf32>
      %cst_26 = arith.constant 9.99999974E-6 : f32
      %40 = vector.broadcast %cst_26 : f32 to vector<32x1xf32>
      %41 = arith.addf %37, %40 : vector<32x1xf32>
      %42 = math.rsqrt %41 : vector<32x1xf32>
      %43 = vector.broadcast %42 : vector<32x1xf32> to vector<32x128xf32>
      %44 = arith.mulf %39, %43 : vector<32x128xf32>
      %c0_27 = arith.constant 0 : index
      %c0_28 = arith.constant 0 : index
      %45 = vector.load %arg7[%c0_27, %c0_28] : memref<1x128xf32, #tpu.memory_space<vmem>>, vector<1x128xf32>
      %46 = vector.broadcast %45 : vector<1x128xf32> to vector<32x128xf32>
      %47 = arith.mulf %44, %46 : vector<32x128xf32>
      %c0_29 = arith.constant 0 : index
      %c0_30 = arith.constant 0 : index
      %48 = vector.load %arg8[%c0_29, %c0_30] : memref<1x128xf32, #tpu.memory_space<vmem>>, vector<1x128xf32>
      %49 = vector.broadcast %48 : vector<1x128xf32> to vector<32x128xf32>
      %50 = arith.addf %47, %49 : vector<32x128xf32>
      %51 = arith.truncf %50 : vector<32x128xf32> to vector<32x128xbf16>
      %c0_31 = arith.constant 0 : index
      %c0_32 = arith.constant 0 : index
      %52 = vector.load %arg9[%c0_31, %c0_32] : memref<32x128xbf16, #tpu.memory_space<vmem>>, vector<32x128xbf16>
      tpu.vector_store %arg9[%c0_31, %c0_32], %51 {strides = array<i32>} : memref<32x128xbf16, #tpu.memory_space<vmem>>, vector<32x128xbf16>,
    } else {
    }
    return
  }
  func.func @transform_0(%arg0: i32, %arg1: i32) -> (i32, i32) {
    %c0_i32 = arith.constant 0 : i32
    %c0_i32_0 = arith.constant 0 : i32
    return %arg0, %c0_i32 : i32, i32
  }
  func.func @transform_1(%arg0: i32, %arg1: i32) -> (i32, i32) {
    %c0_i32 = arith.constant 0 : i32
    %c0_i32_0 = arith.constant 0 : i32
    return %c0_i32, %arg1 : i32, i32
  }
  func.func @transform_2(%arg0: i32, %arg1: i32) -> (i32, i32) {
    %c0_i32 = arith.constant 0 : i32
    %c0_i32_0 = arith.constant 0 : i32
    return %c0_i32, %arg1 : i32, i32
  }
  func.func @transform_3(%arg0: i32, %arg1: i32) -> (i32, i32) {
    %c0_i32 = arith.constant 0 : i32
    %c0_i32_0 = arith.constant 0 : i32
    return %arg1, %c0_i32 : i32, i32
  }
  func.func @transform_4(%arg0: i32, %arg1: i32) -> (i32, i32) {
    %c0_i32 = arith.constant 0 : i32
    %c0_i32_0 = arith.constant 0 : i32
    %c0_i32_1 = arith.constant 0 : i32
    return %c0_i32, %c0_i32_0 : i32, i32
  }
  func.func @transform_5(%arg0: i32, %arg1: i32) -> (i32, i32) {
    %c0_i32 = arith.constant 0 : i32
    %c0_i32_0 = arith.constant 0 : i32
    %c0_i32_1 = arith.constant 0 : i32
    return %c0_i32, %c0_i32_0 : i32, i32
  }
  func.func @transform_6(%arg0: i32, %arg1: i32) -> (i32, i32) {
    %c0_i32 = arith.constant 0 : i32
    %c0_i32_0 = arith.constant 0 : i32
    %c0_i32_1 = arith.constant 0 : i32
    return %c0_i32, %c0_i32_0 : i32, i32
  }
  func.func @transform_7(%arg0: i32, %arg1: i32) -> (i32, i32) {
    %c0_i32 = arith.constant 0 : i32
    %c0_i32_0 = arith.constant 0 : i32
    return %arg0, %c0_i32 : i32, i32
  }
}

module attributes {stable_mosaic.version = 11 : i64} {
  func.func @_mha_fused_kernel(%arg0: i32, %arg1: i32, %arg2: memref<1x16x128xbf16, #tpu.memory_space<vmem>>, %arg3: memref<1x16x128xbf16, #tpu.memory_space<vmem>>, %arg4: memref<1x16x128xbf16, #tpu.memory_space<vmem>>, %arg5: memref<128x128xbf16, #tpu.memory_space<vmem>>, %arg6: memref<1x128xf32, #tpu.memory_space<vmem>>, %arg7: memref<1x16x128xbf16, #tpu.memory_space<vmem>>, %arg8: memref<1x128xf32, #tpu.memory_space<vmem>>, %arg9: memref<1x128xf32, #tpu.memory_space<vmem>>, %arg10: memref<1x16x128xbf16, #tpu.memory_space<vmem>>, %arg11: memref<1x16x16xf32, #tpu.memory_space<vmem>>, %arg12: memref<16x128xbf16, #tpu.memory_space<vmem>>) attributes {dimension_semantics = [#tpu.dimension_semantics<parallel>, #tpu.dimension_semantics<parallel>], iteration_bounds = array<i64: 2, 1>, scalar_prefetch = 0 : i64, scratch_operands = 1 : i64, tpu.core_type = #tpu.core_type<tc>, window_params = [{transform_indices = @transform_0, window_bounds = array<i64: 1, 16, 128>}, {transform_indices = @transform_1, window_bounds = array<i64: 1, 16, 128>}, {transform_indices = @transform_2, window_bounds = array<i64: 1, 16, 128>}, {pipeline_mode = #tpu.pipeline_mode<synchronous>, transform_indices = @transform_3, window_bounds = array<i64: 128, 128>}, {pipeline_mode = #tpu.pipeline_mode<synchronous>, transform_indices = @transform_4, window_bounds = array<i64: 1, 128>}, {transform_indices = @transform_5, window_bounds = array<i64: 1, 16, 128>}, {pipeline_mode = #tpu.pipeline_mode<synchronous>, transform_indices = @transform_6, window_bounds = array<i64: 1, 128>}, {pipeline_mode = #tpu.pipeline_mode<synchronous>, transform_indices = @transform_7, window_bounds = array<i64: 1, 128>}, {transform_indices = @transform_8, window_bounds = array<i64: 1, 16, 128>}, {transform_indices = @transform_9, window_bounds = array<i64: 1, 16, 16>}]} {
    %c0 = arith.constant 0 : index
    %c0_0 = arith.constant 0 : index
    %c0_1 = arith.constant 0 : index
    %0 = vector.load %arg2[%c0, %c0_0, %c0_1] : memref<1x16x128xbf16, #tpu.memory_space<vmem>>, vector<1x16x128xbf16>
    %1 = vector.shape_cast %0 : vector<1x16x128xbf16> to vector<16x128xbf16>
    %cst = arith.constant 1.767580e-01 : bf16
    %2 = vector.broadcast %cst : bf16 to vector<16x128xbf16>
    %3 = arith.mulf %1, %2 : vector<16x128xbf16>
    %cst_2 = arith.constant 0.000000e+00 : f32
    %4 = vector.broadcast %cst_2 : f32 to vector<16x16xf32>
    %5 = vector.extract_strided_slice %3 {offsets = [0, 0], sizes = [16, 32], strides = [1, 1]} : vector<16x128xbf16> to vector<16x32xbf16>
    %c0_3 = arith.constant 0 : index
    %c0_4 = arith.constant 0 : index
    %c0_5 = arith.constant 0 : index
    %6 = vector.load %arg3[%c0_3, %c0_4, %c0_5] : memref<1x16x128xbf16, #tpu.memory_space<vmem>>, vector<1x16x32xbf16>
    %7 = vector.shape_cast %6 : vector<1x16x32xbf16> to vector<16x32xbf16>
    %c0_6 = arith.constant 0 : index
    %c0_7 = arith.constant 0 : index
    %c0_8 = arith.constant 0 : index
    %8 = vector.load %arg4[%c0_6, %c0_7, %c0_8] : memref<1x16x128xbf16, #tpu.memory_space<vmem>>, vector<1x16x32xbf16>
    %9 = vector.shape_cast %8 : vector<1x16x32xbf16> to vector<16x32xbf16>
    %cst_9 = arith.constant dense<0.000000e+00> : vector<16x16xf32>
    %10 = tpu.matmul %5, %7, %cst_9 {dimension_numbers = #tpu.dot_dimension_numbers<[1], [1], [0], [0], [0, 0, 1, 0], [], []>} : vector<16x32xbf16>, vector<16x32xbf16>, vector<16x16xf32> -> vector<16x16xf32>
    %cst_10 = arith.constant dense<0xFF800000> : vector<16xf32>
    %11 = vector.multi_reduction <maximumf>, %10, %cst_10 [1] : vector<16x16xf32> to vector<16xf32>
    %12 = vector.shape_cast %11 : vector<16xf32> to vector<16x1xf32>
    %13 = vector.broadcast %12 : vector<16x1xf32> to vector<16x16xf32>
    %14 = arith.subf %10, %13 : vector<16x16xf32>
    %15 = math.exp %14 : vector<16x16xf32>
    %cst_11 = arith.constant dense<0.000000e+00> : vector<16xf32>
    %16 = vector.multi_reduction <add>, %15, %cst_11 [1] : vector<16x16xf32> to vector<16xf32>
    %17 = vector.shape_cast %16 : vector<16xf32> to vector<16x1xf32>
    %18 = tpu.reciprocal %17 : vector<16x1xf32> -> vector<16x1xf32>
    %19 = vector.broadcast %18 : vector<16x1xf32> to vector<16x16xf32>
    %20 = arith.mulf %15, %19 : vector<16x16xf32>
    %21 = arith.addf %4, %20 : vector<16x16xf32>
    %22 = arith.truncf %20 : vector<16x16xf32> to vector<16x16xbf16>
    %cst_12 = arith.constant dense<0.000000e+00> : vector<16x32xf32>
    %23 = tpu.matmul %22, %9, %cst_12 {dimension_numbers = #tpu.dot_dimension_numbers<[1], [0], [0], [1], [0, 0, 1, 1], [], []>} : vector<16x16xbf16>, vector<16x32xbf16>, vector<16x32xf32> -> vector<16x32xf32>
    %24 = arith.truncf %23 : vector<16x32xf32> to vector<16x32xbf16>
    %c0_13 = arith.constant 0 : index
    %c0_14 = arith.constant 0 : index
    %25 = vector.load %arg12[%c0_13, %c0_14] : memref<16x128xbf16, #tpu.memory_space<vmem>>, vector<16x32xbf16>
    tpu.vector_store %arg12[%c0_13, %c0_14], %24 {strides = array<i32>} : memref<16x128xbf16, #tpu.memory_space<vmem>>, vector<16x32xbf16>,
    %26 = vector.extract_strided_slice %3 {offsets = [0, 32], sizes = [16, 32], strides = [1, 1]} : vector<16x128xbf16> to vector<16x32xbf16>
    %c0_15 = arith.constant 0 : index
    %c0_16 = arith.constant 0 : index
    %c32 = arith.constant 32 : index
    %27 = vector.load %arg3[%c0_15, %c0_16, %c32] : memref<1x16x128xbf16, #tpu.memory_space<vmem>>, vector<1x16x32xbf16>
    %28 = vector.shape_cast %27 : vector<1x16x32xbf16> to vector<16x32xbf16>
    %c0_17 = arith.constant 0 : index
    %c0_18 = arith.constant 0 : index
    %c32_19 = arith.constant 32 : index
    %29 = vector.load %arg4[%c0_17, %c0_18, %c32_19] : memref<1x16x128xbf16, #tpu.memory_space<vmem>>, vector<1x16x32xbf16>
    %30 = vector.shape_cast %29 : vector<1x16x32xbf16> to vector<16x32xbf16>
    %cst_20 = arith.constant dense<0.000000e+00> : vector<16x16xf32>
    %31 = tpu.matmul %26, %28, %cst_20 {dimension_numbers = #tpu.dot_dimension_numbers<[1], [1], [0], [0], [0, 0, 1, 0], [], []>} : vector<16x32xbf16>, vector<16x32xbf16>, vector<16x16xf32> -> vector<16x16xf32>
    %cst_21 = arith.constant dense<0xFF800000> : vector<16xf32>
    %32 = vector.multi_reduction <maximumf>, %31, %cst_21 [1] : vector<16x16xf32> to vector<16xf32>
    %33 = vector.shape_cast %32 : vector<16xf32> to vector<16x1xf32>
    %34 = vector.broadcast %33 : vector<16x1xf32> to vector<16x16xf32>
    %35 = arith.subf %31, %34 : vector<16x16xf32>
    %36 = math.exp %35 : vector<16x16xf32>
    %cst_22 = arith.constant dense<0.000000e+00> : vector<16xf32>
    %37 = vector.multi_reduction <add>, %36, %cst_22 [1] : vector<16x16xf32> to vector<16xf32>
    %38 = vector.shape_cast %37 : vector<16xf32> to vector<16x1xf32>
    %39 = tpu.reciprocal %38 : vector<16x1xf32> -> vector<16x1xf32>
    %40 = vector.broadcast %39 : vector<16x1xf32> to vector<16x16xf32>
    %41 = arith.mulf %36, %40 : vector<16x16xf32>
    %42 = arith.addf %21, %41 : vector<16x16xf32>
    %43 = arith.truncf %41 : vector<16x16xf32> to vector<16x16xbf16>
    %cst_23 = arith.constant dense<0.000000e+00> : vector<16x32xf32>
    %44 = tpu.matmul %43, %30, %cst_23 {dimension_numbers = #tpu.dot_dimension_numbers<[1], [0], [0], [1], [0, 0, 1, 1], [], []>} : vector<16x16xbf16>, vector<16x32xbf16>, vector<16x32xf32> -> vector<16x32xf32>
    %45 = arith.truncf %44 : vector<16x32xf32> to vector<16x32xbf16>
    %c0_24 = arith.constant 0 : index
    %c32_25 = arith.constant 32 : index
    %46 = vector.load %arg12[%c0_24, %c32_25] : memref<16x128xbf16, #tpu.memory_space<vmem>>, vector<16x32xbf16>
    tpu.vector_store %arg12[%c0_24, %c32_25], %45 {strides = array<i32>} : memref<16x128xbf16, #tpu.memory_space<vmem>>, vector<16x32xbf16>,
    %47 = vector.extract_strided_slice %3 {offsets = [0, 64], sizes = [16, 32], strides = [1, 1]} : vector<16x128xbf16> to vector<16x32xbf16>
    %c0_26 = arith.constant 0 : index
    %c0_27 = arith.constant 0 : index
    %c64 = arith.constant 64 : index
    %48 = vector.load %arg3[%c0_26, %c0_27, %c64] : memref<1x16x128xbf16, #tpu.memory_space<vmem>>, vector<1x16x32xbf16>
    %49 = vector.shape_cast %48 : vector<1x16x32xbf16> to vector<16x32xbf16>
    %c0_28 = arith.constant 0 : index
    %c0_29 = arith.constant 0 : index
    %c64_30 = arith.constant 64 : index
    %50 = vector.load %arg4[%c0_28, %c0_29, %c64_30] : memref<1x16x128xbf16, #tpu.memory_space<vmem>>, vector<1x16x32xbf16>
    %51 = vector.shape_cast %50 : vector<1x16x32xbf16> to vector<16x32xbf16>
    %cst_31 = arith.constant dense<0.000000e+00> : vector<16x16xf32>
    %52 = tpu.matmul %47, %49, %cst_31 {dimension_numbers = #tpu.dot_dimension_numbers<[1], [1], [0], [0], [0, 0, 1, 0], [], []>} : vector<16x32xbf16>, vector<16x32xbf16>, vector<16x16xf32> -> vector<16x16xf32>
    %cst_32 = arith.constant dense<0xFF800000> : vector<16xf32>
    %53 = vector.multi_reduction <maximumf>, %52, %cst_32 [1] : vector<16x16xf32> to vector<16xf32>
    %54 = vector.shape_cast %53 : vector<16xf32> to vector<16x1xf32>
    %55 = vector.broadcast %54 : vector<16x1xf32> to vector<16x16xf32>
    %56 = arith.subf %52, %55 : vector<16x16xf32>
    %57 = math.exp %56 : vector<16x16xf32>
    %cst_33 = arith.constant dense<0.000000e+00> : vector<16xf32>
    %58 = vector.multi_reduction <add>, %57, %cst_33 [1] : vector<16x16xf32> to vector<16xf32>
    %59 = vector.shape_cast %58 : vector<16xf32> to vector<16x1xf32>
    %60 = tpu.reciprocal %59 : vector<16x1xf32> -> vector<16x1xf32>
    %61 = vector.broadcast %60 : vector<16x1xf32> to vector<16x16xf32>
    %62 = arith.mulf %57, %61 : vector<16x16xf32>
    %63 = arith.addf %42, %62 : vector<16x16xf32>
    %64 = arith.truncf %62 : vector<16x16xf32> to vector<16x16xbf16>
    %cst_34 = arith.constant dense<0.000000e+00> : vector<16x32xf32>
    %65 = tpu.matmul %64, %51, %cst_34 {dimension_numbers = #tpu.dot_dimension_numbers<[1], [0], [0], [1], [0, 0, 1, 1], [], []>} : vector<16x16xbf16>, vector<16x32xbf16>, vector<16x32xf32> -> vector<16x32xf32>
    %66 = arith.truncf %65 : vector<16x32xf32> to vector<16x32xbf16>
    %c0_35 = arith.constant 0 : index
    %c64_36 = arith.constant 64 : index
    %67 = vector.load %arg12[%c0_35, %c64_36] : memref<16x128xbf16, #tpu.memory_space<vmem>>, vector<16x32xbf16>
    tpu.vector_store %arg12[%c0_35, %c64_36], %66 {strides = array<i32>} : memref<16x128xbf16, #tpu.memory_space<vmem>>, vector<16x32xbf16>,
    %68 = vector.extract_strided_slice %3 {offsets = [0, 96], sizes = [16, 32], strides = [1, 1]} : vector<16x128xbf16> to vector<16x32xbf16>
    %c0_37 = arith.constant 0 : index
    %c0_38 = arith.constant 0 : index
    %c96 = arith.constant 96 : index
    %69 = vector.load %arg3[%c0_37, %c0_38, %c96] : memref<1x16x128xbf16, #tpu.memory_space<vmem>>, vector<1x16x32xbf16>
    %70 = vector.shape_cast %69 : vector<1x16x32xbf16> to vector<16x32xbf16>
    %c0_39 = arith.constant 0 : index
    %c0_40 = arith.constant 0 : index
    %c96_41 = arith.constant 96 : index
    %71 = vector.load %arg4[%c0_39, %c0_40, %c96_41] : memref<1x16x128xbf16, #tpu.memory_space<vmem>>, vector<1x16x32xbf16>
    %72 = vector.shape_cast %71 : vector<1x16x32xbf16> to vector<16x32xbf16>
    %cst_42 = arith.constant dense<0.000000e+00> : vector<16x16xf32>
    %73 = tpu.matmul %68, %70, %cst_42 {dimension_numbers = #tpu.dot_dimension_numbers<[1], [1], [0], [0], [0, 0, 1, 0], [], []>} : vector<16x32xbf16>, vector<16x32xbf16>, vector<16x16xf32> -> vector<16x16xf32>
    %cst_43 = arith.constant dense<0xFF800000> : vector<16xf32>
    %74 = vector.multi_reduction <maximumf>, %73, %cst_43 [1] : vector<16x16xf32> to vector<16xf32>
    %75 = vector.shape_cast %74 : vector<16xf32> to vector<16x1xf32>
    %76 = vector.broadcast %75 : vector<16x1xf32> to vector<16x16xf32>
    %77 = arith.subf %73, %76 : vector<16x16xf32>
    %78 = math.exp %77 : vector<16x16xf32>
    %cst_44 = arith.constant dense<0.000000e+00> : vector<16xf32>
    %79 = vector.multi_reduction <add>, %78, %cst_44 [1] : vector<16x16xf32> to vector<16xf32>
    %80 = vector.shape_cast %79 : vector<16xf32> to vector<16x1xf32>
    %81 = tpu.reciprocal %80 : vector<16x1xf32> -> vector<16x1xf32>
    %82 = vector.broadcast %81 : vector<16x1xf32> to vector<16x16xf32>
    %83 = arith.mulf %78, %82 : vector<16x16xf32>
    %84 = arith.addf %63, %83 : vector<16x16xf32>
    %85 = arith.truncf %83 : vector<16x16xf32> to vector<16x16xbf16>
    %cst_45 = arith.constant dense<0.000000e+00> : vector<16x32xf32>
    %86 = tpu.matmul %85, %72, %cst_45 {dimension_numbers = #tpu.dot_dimension_numbers<[1], [0], [0], [1], [0, 0, 1, 1], [], []>} : vector<16x16xbf16>, vector<16x32xbf16>, vector<16x32xf32> -> vector<16x32xf32>
    %87 = arith.truncf %86 : vector<16x32xf32> to vector<16x32xbf16>
    %c0_46 = arith.constant 0 : index
    %c96_47 = arith.constant 96 : index
    %88 = vector.load %arg12[%c0_46, %c96_47] : memref<16x128xbf16, #tpu.memory_space<vmem>>, vector<16x32xbf16>
    tpu.vector_store %arg12[%c0_46, %c96_47], %87 {strides = array<i32>} : memref<16x128xbf16, #tpu.memory_space<vmem>>, vector<16x32xbf16>,
    %cst_48 = arith.constant 2.500000e-01 : f32
    %89 = vector.broadcast %cst_48 : f32 to vector<16x16xf32>
    %90 = arith.mulf %84, %89 : vector<16x16xf32>
    %c0_49 = arith.constant 0 : index
    %c0_50 = arith.constant 0 : index
    %c0_51 = arith.constant 0 : index
    %91 = vector.load %arg11[%c0_49, %c0_50, %c0_51] : memref<1x16x16xf32, #tpu.memory_space<vmem>>, vector<1x16x16xf32>
    %92 = vector.shape_cast %91 : vector<1x16x16xf32> to vector<16x16xf32>
    %93 = vector.shape_cast %90 : vector<16x16xf32> to vector<1x16x16xf32>
    tpu.vector_store %arg11[%c0_49, %c0_50, %c0_51], %93 {strides = array<i32>} : memref<1x16x16xf32, #tpu.memory_space<vmem>>, vector<1x16x16xf32>,
    %c0_52 = arith.constant 0 : index
    %c0_53 = arith.constant 0 : index
    %94 = vector.load %arg12[%c0_52, %c0_53] : memref<16x128xbf16, #tpu.memory_space<vmem>>, vector<16x128xbf16>
    %c0_54 = arith.constant 0 : index
    %c0_55 = arith.constant 0 : index
    %95 = vector.load %arg5[%c0_54, %c0_55] : memref<128x128xbf16, #tpu.memory_space<vmem>>, vector<128x128xbf16>
    %cst_56 = arith.constant dense<0.000000e+00> : vector<16x128xf32>
    %96 = tpu.matmul %94, %95, %cst_56 {dimension_numbers = #tpu.dot_dimension_numbers<[1], [0], [0], [1], [0, 0, 1, 1], [], []>} : vector<16x128xbf16>, vector<128x128xbf16>, vector<16x128xf32> -> vector<16x128xf32>
    %c0_57 = arith.constant 0 : index
    %c0_58 = arith.constant 0 : index
    %97 = vector.load %arg6[%c0_57, %c0_58] : memref<1x128xf32, #tpu.memory_space<vmem>>, vector<1x128xf32>
    %98 = vector.broadcast %97 : vector<1x128xf32> to vector<16x128xf32>
    %99 = arith.addf %96, %98 : vector<16x128xf32>
    %c0_59 = arith.constant 0 : index
    %c0_60 = arith.constant 0 : index
    %c0_61 = arith.constant 0 : index
    %100 = vector.load %arg7[%c0_59, %c0_60, %c0_61] : memref<1x16x128xbf16, #tpu.memory_space<vmem>>, vector<1x16x128xbf16>
    %101 = vector.shape_cast %100 : vector<1x16x128xbf16> to vector<16x128xbf16>
    %102 = arith.extf %101 : vector<16x128xbf16> to vector<16x128xf32>
    %103 = arith.addf %99, %102 : vector<16x128xf32>
    %cst_62 = arith.constant dense<0.000000e+00> : vector<16xf32>
    %104 = vector.multi_reduction <add>, %103, %cst_62 [1] : vector<16x128xf32> to vector<16xf32>
    %105 = vector.shape_cast %104 : vector<16xf32> to vector<16x1xf32>
    %cst_63 = arith.constant 1.280000e+02 : f32
    %106 = vector.broadcast %cst_63 : f32 to vector<16x1xf32>
    %107 = arith.divf %105, %106 : vector<16x1xf32>
    %108 = vector.broadcast %107 : vector<16x1xf32> to vector<16x128xf32>
    %109 = arith.subf %103, %108 : vector<16x128xf32>
    %110 = arith.mulf %109, %109 : vector<16x128xf32>
    %cst_64 = arith.constant dense<0.000000e+00> : vector<16xf32>
    %111 = vector.multi_reduction <add>, %110, %cst_64 [1] : vector<16x128xf32> to vector<16xf32>
    %112 = vector.shape_cast %111 : vector<16xf32> to vector<16x1xf32>
    %cst_65 = arith.constant 1.280000e+02 : f32
    %113 = vector.broadcast %cst_65 : f32 to vector<16x1xf32>
    %114 = arith.divf %112, %113 : vector<16x1xf32>
    %115 = vector.broadcast %107 : vector<16x1xf32> to vector<16x128xf32>
    %116 = arith.subf %103, %115 : vector<16x128xf32>
    %cst_66 = arith.constant 9.99999974E-6 : f32
    %117 = vector.broadcast %cst_66 : f32 to vector<16x1xf32>
    %118 = arith.addf %114, %117 : vector<16x1xf32>
    %119 = math.rsqrt %118 : vector<16x1xf32>
    %120 = vector.broadcast %119 : vector<16x1xf32> to vector<16x128xf32>
    %121 = arith.mulf %116, %120 : vector<16x128xf32>
    %c0_67 = arith.constant 0 : index
    %c0_68 = arith.constant 0 : index
    %122 = vector.load %arg8[%c0_67, %c0_68] : memref<1x128xf32, #tpu.memory_space<vmem>>, vector<1x128xf32>
    %123 = vector.broadcast %122 : vector<1x128xf32> to vector<16x128xf32>
    %124 = arith.mulf %121, %123 : vector<16x128xf32>
    %c0_69 = arith.constant 0 : index
    %c0_70 = arith.constant 0 : index
    %125 = vector.load %arg9[%c0_69, %c0_70] : memref<1x128xf32, #tpu.memory_space<vmem>>, vector<1x128xf32>
    %126 = vector.broadcast %125 : vector<1x128xf32> to vector<16x128xf32>
    %127 = arith.addf %124, %126 : vector<16x128xf32>
    %128 = arith.truncf %127 : vector<16x128xf32> to vector<16x128xbf16>
    %c0_71 = arith.constant 0 : index
    %c0_72 = arith.constant 0 : index
    %c0_73 = arith.constant 0 : index
    %129 = vector.load %arg10[%c0_71, %c0_72, %c0_73] : memref<1x16x128xbf16, #tpu.memory_space<vmem>>, vector<1x16x128xbf16>
    %130 = vector.shape_cast %129 : vector<1x16x128xbf16> to vector<16x128xbf16>
    %131 = vector.shape_cast %128 : vector<16x128xbf16> to vector<1x16x128xbf16>
    tpu.vector_store %arg10[%c0_71, %c0_72, %c0_73], %131 {strides = array<i32>} : memref<1x16x128xbf16, #tpu.memory_space<vmem>>, vector<1x16x128xbf16>,
    return
  }
  func.func @transform_0(%arg0: i32, %arg1: i32) -> (i32, i32, i32) {
    %c0_i32 = arith.constant 0 : i32
    %c0_i32_0 = arith.constant 0 : i32
    return %arg0, %arg1, %c0_i32 : i32, i32, i32
  }
  func.func @transform_1(%arg0: i32, %arg1: i32) -> (i32, i32, i32) {
    %c0_i32 = arith.constant 0 : i32
    %c0_i32_0 = arith.constant 0 : i32
    %c0_i32_1 = arith.constant 0 : i32
    return %arg0, %c0_i32, %c0_i32_0 : i32, i32, i32
  }
  func.func @transform_2(%arg0: i32, %arg1: i32) -> (i32, i32, i32) {
    %c0_i32 = arith.constant 0 : i32
    %c1_i32 = arith.constant 1 : i32
    %c0_i32_0 = arith.constant 0 : i32
    return %arg0, %c0_i32, %c1_i32 : i32, i32, i32
  }
  func.func @transform_3(%arg0: i32, %arg1: i32) -> (i32, i32) {
    %c0_i32 = arith.constant 0 : i32
    %c0_i32_0 = arith.constant 0 : i32
    %c0_i32_1 = arith.constant 0 : i32
    return %c0_i32, %c0_i32_0 : i32, i32
  }
  func.func @transform_4(%arg0: i32, %arg1: i32) -> (i32, i32) {
    %c0_i32 = arith.constant 0 : i32
    %c0_i32_0 = arith.constant 0 : i32
    %c0_i32_1 = arith.constant 0 : i32
    return %c0_i32, %c0_i32_0 : i32, i32
  }
  func.func @transform_5(%arg0: i32, %arg1: i32) -> (i32, i32, i32) {
    %c0_i32 = arith.constant 0 : i32
    %c0_i32_0 = arith.constant 0 : i32
    return %arg0, %arg1, %c0_i32 : i32, i32, i32
  }
  func.func @transform_6(%arg0: i32, %arg1: i32) -> (i32, i32) {
    %c0_i32 = arith.constant 0 : i32
    %c0_i32_0 = arith.constant 0 : i32
    %c0_i32_1 = arith.constant 0 : i32
    return %c0_i32, %c0_i32_0 : i32, i32
  }
  func.func @transform_7(%arg0: i32, %arg1: i32) -> (i32, i32) {
    %c0_i32 = arith.constant 0 : i32
    %c0_i32_0 = arith.constant 0 : i32
    %c0_i32_1 = arith.constant 0 : i32
    return %c0_i32, %c0_i32_0 : i32, i32
  }
  func.func @transform_8(%arg0: i32, %arg1: i32) -> (i32, i32, i32) {
    %c0_i32 = arith.constant 0 : i32
    %c0_i32_0 = arith.constant 0 : i32
    return %arg0, %arg1, %c0_i32 : i32, i32, i32
  }
  func.func @transform_9(%arg0: i32, %arg1: i32) -> (i32, i32, i32) {
    %c0_i32 = arith.constant 0 : i32
    %c0_i32_0 = arith.constant 0 : i32
    return %arg0, %arg1, %c0_i32 : i32, i32, i32
  }
}

module attributes {stable_mosaic.version = 11 : i64} {
  func.func @_matmul_bias_kernel(%arg0: i32, %arg1: i32, %arg2: i32, %arg3: memref<32x128xbf16, #tpu.memory_space<vmem>>, %arg4: memref<128x256xbf16, #tpu.memory_space<vmem>>, %arg5: memref<1x256xf32, #tpu.memory_space<vmem>>, %arg6: memref<32x256xbf16, #tpu.memory_space<vmem>>, %arg7: memref<32x256xf32, #tpu.memory_space<vmem>>) attributes {dimension_semantics = [#tpu.dimension_semantics<parallel>, #tpu.dimension_semantics<parallel>, #tpu.dimension_semantics<arbitrary>], iteration_bounds = array<i64: 1, 1, 1>, scalar_prefetch = 0 : i64, scratch_operands = 1 : i64, tpu.core_type = #tpu.core_type<tc>, window_params = [{transform_indices = @transform_0, window_bounds = array<i64: 32, 128>}, {transform_indices = @transform_1, window_bounds = array<i64: 128, 256>}, {transform_indices = @transform_2, window_bounds = array<i64: 1, 256>}, {transform_indices = @transform_3, window_bounds = array<i64: 32, 256>}]} {
    %c0_i32 = arith.constant 0 : i32
    %0 = arith.cmpi eq, %arg2, %c0_i32 : i32
    %1 = arith.extui %0 : i1 to i32
    %c0_i32_0 = arith.constant 0 : i32
    %2 = arith.cmpi ne, %1, %c0_i32_0 : i32
    scf.if %2 {
      %cst_10 = arith.constant 0.000000e+00 : f32
      %12 = vector.broadcast %cst_10 : f32 to vector<32x256xf32>
      %c0_11 = arith.constant 0 : index
      %c0_12 = arith.constant 0 : index
      %13 = vector.load %arg7[%c0_11, %c0_12] : memref<32x256xf32, #tpu.memory_space<vmem>>, vector<32x256xf32>
      tpu.vector_store %arg7[%c0_11, %c0_12], %12 {strides = array<i32>} : memref<32x256xf32, #tpu.memory_space<vmem>>, vector<32x256xf32>,
    } else {
    }
    %c0 = arith.constant 0 : index
    %c0_1 = arith.constant 0 : index
    %3 = vector.load %arg7[%c0, %c0_1] : memref<32x256xf32, #tpu.memory_space<vmem>>, vector<32x256xf32>
    %c0_2 = arith.constant 0 : index
    %c0_3 = arith.constant 0 : index
    %4 = vector.load %arg3[%c0_2, %c0_3] : memref<32x128xbf16, #tpu.memory_space<vmem>>, vector<32x128xbf16>
    %c0_4 = arith.constant 0 : index
    %c0_5 = arith.constant 0 : index
    %5 = vector.load %arg4[%c0_4, %c0_5] : memref<128x256xbf16, #tpu.memory_space<vmem>>, vector<128x256xbf16>
    %cst = arith.constant dense<0.000000e+00> : vector<32x256xf32>
    %6 = tpu.matmul %4, %5, %cst {dimension_numbers = #tpu.dot_dimension_numbers<[1], [0], [0], [1], [0, 0, 1, 1], [], []>} : vector<32x128xbf16>, vector<128x256xbf16>, vector<32x256xf32> -> vector<32x256xf32>
    %7 = arith.addf %3, %6 : vector<32x256xf32>
    %c0_6 = arith.constant 0 : index
    %c0_7 = arith.constant 0 : index
    %8 = vector.load %arg7[%c0_6, %c0_7] : memref<32x256xf32, #tpu.memory_space<vmem>>, vector<32x256xf32>
    tpu.vector_store %arg7[%c0_6, %c0_7], %7 {strides = array<i32>} : memref<32x256xf32, #tpu.memory_space<vmem>>, vector<32x256xf32>,
    %c0_i32_8 = arith.constant 0 : i32
    %9 = arith.cmpi eq, %arg2, %c0_i32_8 : i32
    %10 = arith.extui %9 : i1 to i32
    %c0_i32_9 = arith.constant 0 : i32
    %11 = arith.cmpi ne, %10, %c0_i32_9 : i32
    scf.if %11 {
      %c0_10 = arith.constant 0 : index
      %c0_11 = arith.constant 0 : index
      %12 = vector.load %arg7[%c0_10, %c0_11] : memref<32x256xf32, #tpu.memory_space<vmem>>, vector<32x256xf32>
      %c0_12 = arith.constant 0 : index
      %c0_13 = arith.constant 0 : index
      %13 = vector.load %arg5[%c0_12, %c0_13] : memref<1x256xf32, #tpu.memory_space<vmem>>, vector<1x256xf32>
      %14 = vector.broadcast %13 : vector<1x256xf32> to vector<32x256xf32>
      %15 = arith.addf %12, %14 : vector<32x256xf32>
      %16 = arith.truncf %15 : vector<32x256xf32> to vector<32x256xbf16>
      %c0_14 = arith.constant 0 : index
      %c0_15 = arith.constant 0 : index
      %17 = vector.load %arg6[%c0_14, %c0_15] : memref<32x256xbf16, #tpu.memory_space<vmem>>, vector<32x256xbf16>
      tpu.vector_store %arg6[%c0_14, %c0_15], %16 {strides = array<i32>} : memref<32x256xbf16, #tpu.memory_space<vmem>>, vector<32x256xbf16>,
    } else {
    }
    return
  }
  func.func @transform_0(%arg0: i32, %arg1: i32, %arg2: i32) -> (i32, i32) {
    %c0_i32 = arith.constant 0 : i32
    return %arg0, %arg2 : i32, i32
  }
  func.func @transform_1(%arg0: i32, %arg1: i32, %arg2: i32) -> (i32, i32) {
    %c0_i32 = arith.constant 0 : i32
    return %arg2, %arg1 : i32, i32
  }
  func.func @transform_2(%arg0: i32, %arg1: i32, %arg2: i32) -> (i32, i32) {
    %c0_i32 = arith.constant 0 : i32
    %c0_i32_0 = arith.constant 0 : i32
    return %c0_i32, %arg1 : i32, i32
  }
  func.func @transform_3(%arg0: i32, %arg1: i32, %arg2: i32) -> (i32, i32) {
    %c0_i32 = arith.constant 0 : i32
    return %arg0, %arg1 : i32, i32
  }
}

module attributes {stable_mosaic.version = 11 : i64} {
  func.func @_mha_fused_kernel(%arg0: i32, %arg1: i32, %arg2: memref<1x16x128xbf16, #tpu.memory_space<vmem>>, %arg3: memref<1x16x128xbf16, #tpu.memory_space<vmem>>, %arg4: memref<1x16x128xbf16, #tpu.memory_space<vmem>>, %arg5: memref<128x128xbf16, #tpu.memory_space<vmem>>, %arg6: memref<1x128xf32, #tpu.memory_space<vmem>>, %arg7: memref<1x16x128xbf16, #tpu.memory_space<vmem>>, %arg8: memref<1x128xf32, #tpu.memory_space<vmem>>, %arg9: memref<1x128xf32, #tpu.memory_space<vmem>>, %arg10: memref<1x16x128xbf16, #tpu.memory_space<vmem>>, %arg11: memref<1x16x16xf32, #tpu.memory_space<vmem>>, %arg12: memref<16x128xbf16, #tpu.memory_space<vmem>>) attributes {dimension_semantics = [#tpu.dimension_semantics<parallel>, #tpu.dimension_semantics<parallel>], iteration_bounds = array<i64: 2, 1>, scalar_prefetch = 0 : i64, scratch_operands = 1 : i64, tpu.core_type = #tpu.core_type<tc>, window_params = [{transform_indices = @transform_0, window_bounds = array<i64: 1, 16, 128>}, {transform_indices = @transform_1, window_bounds = array<i64: 1, 16, 128>}, {transform_indices = @transform_2, window_bounds = array<i64: 1, 16, 128>}, {pipeline_mode = #tpu.pipeline_mode<synchronous>, transform_indices = @transform_3, window_bounds = array<i64: 128, 128>}, {pipeline_mode = #tpu.pipeline_mode<synchronous>, transform_indices = @transform_4, window_bounds = array<i64: 1, 128>}, {transform_indices = @transform_5, window_bounds = array<i64: 1, 16, 128>}, {pipeline_mode = #tpu.pipeline_mode<synchronous>, transform_indices = @transform_6, window_bounds = array<i64: 1, 128>}, {pipeline_mode = #tpu.pipeline_mode<synchronous>, transform_indices = @transform_7, window_bounds = array<i64: 1, 128>}, {transform_indices = @transform_8, window_bounds = array<i64: 1, 16, 128>}, {transform_indices = @transform_9, window_bounds = array<i64: 1, 16, 16>}]} {
    %c0 = arith.constant 0 : index
    %c0_0 = arith.constant 0 : index
    %c0_1 = arith.constant 0 : index
    %0 = vector.load %arg2[%c0, %c0_0, %c0_1] : memref<1x16x128xbf16, #tpu.memory_space<vmem>>, vector<1x16x128xbf16>
    %1 = vector.shape_cast %0 : vector<1x16x128xbf16> to vector<16x128xbf16>
    %cst = arith.constant 1.767580e-01 : bf16
    %2 = vector.broadcast %cst : bf16 to vector<16x128xbf16>
    %3 = arith.mulf %1, %2 : vector<16x128xbf16>
    %cst_2 = arith.constant 0.000000e+00 : f32
    %4 = vector.broadcast %cst_2 : f32 to vector<16x16xf32>
    %5 = vector.extract_strided_slice %3 {offsets = [0, 0], sizes = [16, 32], strides = [1, 1]} : vector<16x128xbf16> to vector<16x32xbf16>
    %c0_3 = arith.constant 0 : index
    %c0_4 = arith.constant 0 : index
    %c0_5 = arith.constant 0 : index
    %6 = vector.load %arg3[%c0_3, %c0_4, %c0_5] : memref<1x16x128xbf16, #tpu.memory_space<vmem>>, vector<1x16x32xbf16>
    %7 = vector.shape_cast %6 : vector<1x16x32xbf16> to vector<16x32xbf16>
    %c0_6 = arith.constant 0 : index
    %c0_7 = arith.constant 0 : index
    %c0_8 = arith.constant 0 : index
    %8 = vector.load %arg4[%c0_6, %c0_7, %c0_8] : memref<1x16x128xbf16, #tpu.memory_space<vmem>>, vector<1x16x32xbf16>
    %9 = vector.shape_cast %8 : vector<1x16x32xbf16> to vector<16x32xbf16>
    %cst_9 = arith.constant dense<0.000000e+00> : vector<16x16xf32>
    %10 = tpu.matmul %5, %7, %cst_9 {dimension_numbers = #tpu.dot_dimension_numbers<[1], [1], [0], [0], [0, 0, 1, 0], [], []>} : vector<16x32xbf16>, vector<16x32xbf16>, vector<16x16xf32> -> vector<16x16xf32>
    %cst_10 = arith.constant dense<0xFF800000> : vector<16xf32>
    %11 = vector.multi_reduction <maximumf>, %10, %cst_10 [1] : vector<16x16xf32> to vector<16xf32>
    %12 = vector.shape_cast %11 : vector<16xf32> to vector<16x1xf32>
    %13 = vector.broadcast %12 : vector<16x1xf32> to vector<16x16xf32>
    %14 = arith.subf %10, %13 : vector<16x16xf32>
    %15 = math.exp %14 : vector<16x16xf32>
    %cst_11 = arith.constant dense<0.000000e+00> : vector<16xf32>
    %16 = vector.multi_reduction <add>, %15, %cst_11 [1] : vector<16x16xf32> to vector<16xf32>
    %17 = vector.shape_cast %16 : vector<16xf32> to vector<16x1xf32>
    %18 = tpu.reciprocal %17 : vector<16x1xf32> -> vector<16x1xf32>
    %19 = vector.broadcast %18 : vector<16x1xf32> to vector<16x16xf32>
    %20 = arith.mulf %15, %19 : vector<16x16xf32>
    %21 = arith.addf %4, %20 : vector<16x16xf32>
    %22 = arith.truncf %20 : vector<16x16xf32> to vector<16x16xbf16>
    %cst_12 = arith.constant dense<0.000000e+00> : vector<16x32xf32>
    %23 = tpu.matmul %22, %9, %cst_12 {dimension_numbers = #tpu.dot_dimension_numbers<[1], [0], [0], [1], [0, 0, 1, 1], [], []>} : vector<16x16xbf16>, vector<16x32xbf16>, vector<16x32xf32> -> vector<16x32xf32>
    %24 = arith.truncf %23 : vector<16x32xf32> to vector<16x32xbf16>
    %c0_13 = arith.constant 0 : index
    %c0_14 = arith.constant 0 : index
    %25 = vector.load %arg12[%c0_13, %c0_14] : memref<16x128xbf16, #tpu.memory_space<vmem>>, vector<16x32xbf16>
    tpu.vector_store %arg12[%c0_13, %c0_14], %24 {strides = array<i32>} : memref<16x128xbf16, #tpu.memory_space<vmem>>, vector<16x32xbf16>,
    %26 = vector.extract_strided_slice %3 {offsets = [0, 32], sizes = [16, 32], strides = [1, 1]} : vector<16x128xbf16> to vector<16x32xbf16>
    %c0_15 = arith.constant 0 : index
    %c0_16 = arith.constant 0 : index
    %c32 = arith.constant 32 : index
    %27 = vector.load %arg3[%c0_15, %c0_16, %c32] : memref<1x16x128xbf16, #tpu.memory_space<vmem>>, vector<1x16x32xbf16>
    %28 = vector.shape_cast %27 : vector<1x16x32xbf16> to vector<16x32xbf16>
    %c0_17 = arith.constant 0 : index
    %c0_18 = arith.constant 0 : index
    %c32_19 = arith.constant 32 : index
    %29 = vector.load %arg4[%c0_17, %c0_18, %c32_19] : memref<1x16x128xbf16, #tpu.memory_space<vmem>>, vector<1x16x32xbf16>
    %30 = vector.shape_cast %29 : vector<1x16x32xbf16> to vector<16x32xbf16>
    %cst_20 = arith.constant dense<0.000000e+00> : vector<16x16xf32>
    %31 = tpu.matmul %26, %28, %cst_20 {dimension_numbers = #tpu.dot_dimension_numbers<[1], [1], [0], [0], [0, 0, 1, 0], [], []>} : vector<16x32xbf16>, vector<16x32xbf16>, vector<16x16xf32> -> vector<16x16xf32>
    %cst_21 = arith.constant dense<0xFF800000> : vector<16xf32>
    %32 = vector.multi_reduction <maximumf>, %31, %cst_21 [1] : vector<16x16xf32> to vector<16xf32>
    %33 = vector.shape_cast %32 : vector<16xf32> to vector<16x1xf32>
    %34 = vector.broadcast %33 : vector<16x1xf32> to vector<16x16xf32>
    %35 = arith.subf %31, %34 : vector<16x16xf32>
    %36 = math.exp %35 : vector<16x16xf32>
    %cst_22 = arith.constant dense<0.000000e+00> : vector<16xf32>
    %37 = vector.multi_reduction <add>, %36, %cst_22 [1] : vector<16x16xf32> to vector<16xf32>
    %38 = vector.shape_cast %37 : vector<16xf32> to vector<16x1xf32>
    %39 = tpu.reciprocal %38 : vector<16x1xf32> -> vector<16x1xf32>
    %40 = vector.broadcast %39 : vector<16x1xf32> to vector<16x16xf32>
    %41 = arith.mulf %36, %40 : vector<16x16xf32>
    %42 = arith.addf %21, %41 : vector<16x16xf32>
    %43 = arith.truncf %41 : vector<16x16xf32> to vector<16x16xbf16>
    %cst_23 = arith.constant dense<0.000000e+00> : vector<16x32xf32>
    %44 = tpu.matmul %43, %30, %cst_23 {dimension_numbers = #tpu.dot_dimension_numbers<[1], [0], [0], [1], [0, 0, 1, 1], [], []>} : vector<16x16xbf16>, vector<16x32xbf16>, vector<16x32xf32> -> vector<16x32xf32>
    %45 = arith.truncf %44 : vector<16x32xf32> to vector<16x32xbf16>
    %c0_24 = arith.constant 0 : index
    %c32_25 = arith.constant 32 : index
    %46 = vector.load %arg12[%c0_24, %c32_25] : memref<16x128xbf16, #tpu.memory_space<vmem>>, vector<16x32xbf16>
    tpu.vector_store %arg12[%c0_24, %c32_25], %45 {strides = array<i32>} : memref<16x128xbf16, #tpu.memory_space<vmem>>, vector<16x32xbf16>,
    %47 = vector.extract_strided_slice %3 {offsets = [0, 64], sizes = [16, 32], strides = [1, 1]} : vector<16x128xbf16> to vector<16x32xbf16>
    %c0_26 = arith.constant 0 : index
    %c0_27 = arith.constant 0 : index
    %c64 = arith.constant 64 : index
    %48 = vector.load %arg3[%c0_26, %c0_27, %c64] : memref<1x16x128xbf16, #tpu.memory_space<vmem>>, vector<1x16x32xbf16>
    %49 = vector.shape_cast %48 : vector<1x16x32xbf16> to vector<16x32xbf16>
    %c0_28 = arith.constant 0 : index
    %c0_29 = arith.constant 0 : index
    %c64_30 = arith.constant 64 : index
    %50 = vector.load %arg4[%c0_28, %c0_29, %c64_30] : memref<1x16x128xbf16, #tpu.memory_space<vmem>>, vector<1x16x32xbf16>
    %51 = vector.shape_cast %50 : vector<1x16x32xbf16> to vector<16x32xbf16>
    %cst_31 = arith.constant dense<0.000000e+00> : vector<16x16xf32>
    %52 = tpu.matmul %47, %49, %cst_31 {dimension_numbers = #tpu.dot_dimension_numbers<[1], [1], [0], [0], [0, 0, 1, 0], [], []>} : vector<16x32xbf16>, vector<16x32xbf16>, vector<16x16xf32> -> vector<16x16xf32>
    %cst_32 = arith.constant dense<0xFF800000> : vector<16xf32>
    %53 = vector.multi_reduction <maximumf>, %52, %cst_32 [1] : vector<16x16xf32> to vector<16xf32>
    %54 = vector.shape_cast %53 : vector<16xf32> to vector<16x1xf32>
    %55 = vector.broadcast %54 : vector<16x1xf32> to vector<16x16xf32>
    %56 = arith.subf %52, %55 : vector<16x16xf32>
    %57 = math.exp %56 : vector<16x16xf32>
    %cst_33 = arith.constant dense<0.000000e+00> : vector<16xf32>
    %58 = vector.multi_reduction <add>, %57, %cst_33 [1] : vector<16x16xf32> to vector<16xf32>
    %59 = vector.shape_cast %58 : vector<16xf32> to vector<16x1xf32>
    %60 = tpu.reciprocal %59 : vector<16x1xf32> -> vector<16x1xf32>
    %61 = vector.broadcast %60 : vector<16x1xf32> to vector<16x16xf32>
    %62 = arith.mulf %57, %61 : vector<16x16xf32>
    %63 = arith.addf %42, %62 : vector<16x16xf32>
    %64 = arith.truncf %62 : vector<16x16xf32> to vector<16x16xbf16>
    %cst_34 = arith.constant dense<0.000000e+00> : vector<16x32xf32>
    %65 = tpu.matmul %64, %51, %cst_34 {dimension_numbers = #tpu.dot_dimension_numbers<[1], [0], [0], [1], [0, 0, 1, 1], [], []>} : vector<16x16xbf16>, vector<16x32xbf16>, vector<16x32xf32> -> vector<16x32xf32>
    %66 = arith.truncf %65 : vector<16x32xf32> to vector<16x32xbf16>
    %c0_35 = arith.constant 0 : index
    %c64_36 = arith.constant 64 : index
    %67 = vector.load %arg12[%c0_35, %c64_36] : memref<16x128xbf16, #tpu.memory_space<vmem>>, vector<16x32xbf16>
    tpu.vector_store %arg12[%c0_35, %c64_36], %66 {strides = array<i32>} : memref<16x128xbf16, #tpu.memory_space<vmem>>, vector<16x32xbf16>,
    %68 = vector.extract_strided_slice %3 {offsets = [0, 96], sizes = [16, 32], strides = [1, 1]} : vector<16x128xbf16> to vector<16x32xbf16>
    %c0_37 = arith.constant 0 : index
    %c0_38 = arith.constant 0 : index
    %c96 = arith.constant 96 : index
    %69 = vector.load %arg3[%c0_37, %c0_38, %c96] : memref<1x16x128xbf16, #tpu.memory_space<vmem>>, vector<1x16x32xbf16>
    %70 = vector.shape_cast %69 : vector<1x16x32xbf16> to vector<16x32xbf16>
    %c0_39 = arith.constant 0 : index
    %c0_40 = arith.constant 0 : index
    %c96_41 = arith.constant 96 : index
    %71 = vector.load %arg4[%c0_39, %c0_40, %c96_41] : memref<1x16x128xbf16, #tpu.memory_space<vmem>>, vector<1x16x32xbf16>
    %72 = vector.shape_cast %71 : vector<1x16x32xbf16> to vector<16x32xbf16>
    %cst_42 = arith.constant dense<0.000000e+00> : vector<16x16xf32>
    %73 = tpu.matmul %68, %70, %cst_42 {dimension_numbers = #tpu.dot_dimension_numbers<[1], [1], [0], [0], [0, 0, 1, 0], [], []>} : vector<16x32xbf16>, vector<16x32xbf16>, vector<16x16xf32> -> vector<16x16xf32>
    %cst_43 = arith.constant dense<0xFF800000> : vector<16xf32>
    %74 = vector.multi_reduction <maximumf>, %73, %cst_43 [1] : vector<16x16xf32> to vector<16xf32>
    %75 = vector.shape_cast %74 : vector<16xf32> to vector<16x1xf32>
    %76 = vector.broadcast %75 : vector<16x1xf32> to vector<16x16xf32>
    %77 = arith.subf %73, %76 : vector<16x16xf32>
    %78 = math.exp %77 : vector<16x16xf32>
    %cst_44 = arith.constant dense<0.000000e+00> : vector<16xf32>
    %79 = vector.multi_reduction <add>, %78, %cst_44 [1] : vector<16x16xf32> to vector<16xf32>
    %80 = vector.shape_cast %79 : vector<16xf32> to vector<16x1xf32>
    %81 = tpu.reciprocal %80 : vector<16x1xf32> -> vector<16x1xf32>
    %82 = vector.broadcast %81 : vector<16x1xf32> to vector<16x16xf32>
    %83 = arith.mulf %78, %82 : vector<16x16xf32>
    %84 = arith.addf %63, %83 : vector<16x16xf32>
    %85 = arith.truncf %83 : vector<16x16xf32> to vector<16x16xbf16>
    %cst_45 = arith.constant dense<0.000000e+00> : vector<16x32xf32>
    %86 = tpu.matmul %85, %72, %cst_45 {dimension_numbers = #tpu.dot_dimension_numbers<[1], [0], [0], [1], [0, 0, 1, 1], [], []>} : vector<16x16xbf16>, vector<16x32xbf16>, vector<16x32xf32> -> vector<16x32xf32>
    %87 = arith.truncf %86 : vector<16x32xf32> to vector<16x32xbf16>
    %c0_46 = arith.constant 0 : index
    %c96_47 = arith.constant 96 : index
    %88 = vector.load %arg12[%c0_46, %c96_47] : memref<16x128xbf16, #tpu.memory_space<vmem>>, vector<16x32xbf16>
    tpu.vector_store %arg12[%c0_46, %c96_47], %87 {strides = array<i32>} : memref<16x128xbf16, #tpu.memory_space<vmem>>, vector<16x32xbf16>,
    %cst_48 = arith.constant 2.500000e-01 : f32
    %89 = vector.broadcast %cst_48 : f32 to vector<16x16xf32>
    %90 = arith.mulf %84, %89 : vector<16x16xf32>
    %c0_49 = arith.constant 0 : index
    %c0_50 = arith.constant 0 : index
    %c0_51 = arith.constant 0 : index
    %91 = vector.load %arg11[%c0_49, %c0_50, %c0_51] : memref<1x16x16xf32, #tpu.memory_space<vmem>>, vector<1x16x16xf32>
    %92 = vector.shape_cast %91 : vector<1x16x16xf32> to vector<16x16xf32>
    %93 = vector.shape_cast %90 : vector<16x16xf32> to vector<1x16x16xf32>
    tpu.vector_store %arg11[%c0_49, %c0_50, %c0_51], %93 {strides = array<i32>} : memref<1x16x16xf32, #tpu.memory_space<vmem>>, vector<1x16x16xf32>,
    %c0_52 = arith.constant 0 : index
    %c0_53 = arith.constant 0 : index
    %94 = vector.load %arg12[%c0_52, %c0_53] : memref<16x128xbf16, #tpu.memory_space<vmem>>, vector<16x128xbf16>
    %c0_54 = arith.constant 0 : index
    %c0_55 = arith.constant 0 : index
    %95 = vector.load %arg5[%c0_54, %c0_55] : memref<128x128xbf16, #tpu.memory_space<vmem>>, vector<128x128xbf16>
    %cst_56 = arith.constant dense<0.000000e+00> : vector<16x128xf32>
    %96 = tpu.matmul %94, %95, %cst_56 {dimension_numbers = #tpu.dot_dimension_numbers<[1], [0], [0], [1], [0, 0, 1, 1], [], []>} : vector<16x128xbf16>, vector<128x128xbf16>, vector<16x128xf32> -> vector<16x128xf32>
    %c0_57 = arith.constant 0 : index
    %c0_58 = arith.constant 0 : index
    %97 = vector.load %arg6[%c0_57, %c0_58] : memref<1x128xf32, #tpu.memory_space<vmem>>, vector<1x128xf32>
    %98 = vector.broadcast %97 : vector<1x128xf32> to vector<16x128xf32>
    %99 = arith.addf %96, %98 : vector<16x128xf32>
    %c0_59 = arith.constant 0 : index
    %c0_60 = arith.constant 0 : index
    %c0_61 = arith.constant 0 : index
    %100 = vector.load %arg7[%c0_59, %c0_60, %c0_61] : memref<1x16x128xbf16, #tpu.memory_space<vmem>>, vector<1x16x128xbf16>
    %101 = vector.shape_cast %100 : vector<1x16x128xbf16> to vector<16x128xbf16>
    %102 = arith.extf %101 : vector<16x128xbf16> to vector<16x128xf32>
    %103 = arith.addf %99, %102 : vector<16x128xf32>
    %cst_62 = arith.constant dense<0.000000e+00> : vector<16xf32>
    %104 = vector.multi_reduction <add>, %103, %cst_62 [1] : vector<16x128xf32> to vector<16xf32>
    %105 = vector.shape_cast %104 : vector<16xf32> to vector<16x1xf32>
    %cst_63 = arith.constant 1.280000e+02 : f32
    %106 = vector.broadcast %cst_63 : f32 to vector<16x1xf32>
    %107 = arith.divf %105, %106 : vector<16x1xf32>
    %108 = vector.broadcast %107 : vector<16x1xf32> to vector<16x128xf32>
    %109 = arith.subf %103, %108 : vector<16x128xf32>
    %110 = arith.mulf %109, %109 : vector<16x128xf32>
    %cst_64 = arith.constant dense<0.000000e+00> : vector<16xf32>
    %111 = vector.multi_reduction <add>, %110, %cst_64 [1] : vector<16x128xf32> to vector<16xf32>
    %112 = vector.shape_cast %111 : vector<16xf32> to vector<16x1xf32>
    %cst_65 = arith.constant 1.280000e+02 : f32
    %113 = vector.broadcast %cst_65 : f32 to vector<16x1xf32>
    %114 = arith.divf %112, %113 : vector<16x1xf32>
    %115 = vector.broadcast %107 : vector<16x1xf32> to vector<16x128xf32>
    %116 = arith.subf %103, %115 : vector<16x128xf32>
    %cst_66 = arith.constant 9.99999974E-6 : f32
    %117 = vector.broadcast %cst_66 : f32 to vector<16x1xf32>
    %118 = arith.addf %114, %117 : vector<16x1xf32>
    %119 = math.rsqrt %118 : vector<16x1xf32>
    %120 = vector.broadcast %119 : vector<16x1xf32> to vector<16x128xf32>
    %121 = arith.mulf %116, %120 : vector<16x128xf32>
    %c0_67 = arith.constant 0 : index
    %c0_68 = arith.constant 0 : index
    %122 = vector.load %arg8[%c0_67, %c0_68] : memref<1x128xf32, #tpu.memory_space<vmem>>, vector<1x128xf32>
    %123 = vector.broadcast %122 : vector<1x128xf32> to vector<16x128xf32>
    %124 = arith.mulf %121, %123 : vector<16x128xf32>
    %c0_69 = arith.constant 0 : index
    %c0_70 = arith.constant 0 : index
    %125 = vector.load %arg9[%c0_69, %c0_70] : memref<1x128xf32, #tpu.memory_space<vmem>>, vector<1x128xf32>
    %126 = vector.broadcast %125 : vector<1x128xf32> to vector<16x128xf32>
    %127 = arith.addf %124, %126 : vector<16x128xf32>
    %128 = arith.truncf %127 : vector<16x128xf32> to vector<16x128xbf16>
    %c0_71 = arith.constant 0 : index
    %c0_72 = arith.constant 0 : index
    %c0_73 = arith.constant 0 : index
    %129 = vector.load %arg10[%c0_71, %c0_72, %c0_73] : memref<1x16x128xbf16, #tpu.memory_space<vmem>>, vector<1x16x128xbf16>
    %130 = vector.shape_cast %129 : vector<1x16x128xbf16> to vector<16x128xbf16>
    %131 = vector.shape_cast %128 : vector<16x128xbf16> to vector<1x16x128xbf16>
    tpu.vector_store %arg10[%c0_71, %c0_72, %c0_73], %131 {strides = array<i32>} : memref<1x16x128xbf16, #tpu.memory_space<vmem>>, vector<1x16x128xbf16>,
    return
  }
  func.func @transform_0(%arg0: i32, %arg1: i32) -> (i32, i32, i32) {
    %c0_i32 = arith.constant 0 : i32
    %c0_i32_0 = arith.constant 0 : i32
    return %arg0, %arg1, %c0_i32 : i32, i32, i32
  }
  func.func @transform_1(%arg0: i32, %arg1: i32) -> (i32, i32, i32) {
    %c0_i32 = arith.constant 0 : i32
    %c1_i32 = arith.constant 1 : i32
    %c0_i32_0 = arith.constant 0 : i32
    return %arg0, %c0_i32, %c1_i32 : i32, i32, i32
  }
  func.func @transform_2(%arg0: i32, %arg1: i32) -> (i32, i32, i32) {
    %c0_i32 = arith.constant 0 : i32
    %c2_i32 = arith.constant 2 : i32
    %c0_i32_0 = arith.constant 0 : i32
    return %arg0, %c0_i32, %c2_i32 : i32, i32, i32
  }
  func.func @transform_3(%arg0: i32, %arg1: i32) -> (i32, i32) {
    %c0_i32 = arith.constant 0 : i32
    %c0_i32_0 = arith.constant 0 : i32
    %c0_i32_1 = arith.constant 0 : i32
    return %c0_i32, %c0_i32_0 : i32, i32
  }
  func.func @transform_4(%arg0: i32, %arg1: i32) -> (i32, i32) {
    %c0_i32 = arith.constant 0 : i32
    %c0_i32_0 = arith.constant 0 : i32
    %c0_i32_1 = arith.constant 0 : i32
    return %c0_i32, %c0_i32_0 : i32, i32
  }
  func.func @transform_5(%arg0: i32, %arg1: i32) -> (i32, i32, i32) {
    %c0_i32 = arith.constant 0 : i32
    %c0_i32_0 = arith.constant 0 : i32
    return %arg0, %arg1, %c0_i32 : i32, i32, i32
  }
  func.func @transform_6(%arg0: i32, %arg1: i32) -> (i32, i32) {
    %c0_i32 = arith.constant 0 : i32
    %c0_i32_0 = arith.constant 0 : i32
    %c0_i32_1 = arith.constant 0 : i32
    return %c0_i32, %c0_i32_0 : i32, i32
  }
  func.func @transform_7(%arg0: i32, %arg1: i32) -> (i32, i32) {
    %c0_i32 = arith.constant 0 : i32
    %c0_i32_0 = arith.constant 0 : i32
    %c0_i32_1 = arith.constant 0 : i32
    return %c0_i32, %c0_i32_0 : i32, i32
  }
  func.func @transform_8(%arg0: i32, %arg1: i32) -> (i32, i32, i32) {
    %c0_i32 = arith.constant 0 : i32
    %c0_i32_0 = arith.constant 0 : i32
    return %arg0, %arg1, %c0_i32 : i32, i32, i32
  }
  func.func @transform_9(%arg0: i32, %arg1: i32) -> (i32, i32, i32) {
    %c0_i32 = arith.constant 0 : i32
    %c0_i32_0 = arith.constant 0 : i32
    return %arg0, %arg1, %c0_i32 : i32, i32, i32
  }
}

module attributes {stable_mosaic.version = 11 : i64} {
  func.func @_ffn_kernel(%arg0: i32, %arg1: i32, %arg2: memref<32x128xbf16, #tpu.memory_space<vmem>>, %arg3: memref<128x256xbf16, #tpu.memory_space<vmem>>, %arg4: memref<1x256xf32, #tpu.memory_space<vmem>>, %arg5: memref<256x128xbf16, #tpu.memory_space<vmem>>, %arg6: memref<1x128xf32, #tpu.memory_space<vmem>>, %arg7: memref<1x128xf32, #tpu.memory_space<vmem>>, %arg8: memref<1x128xf32, #tpu.memory_space<vmem>>, %arg9: memref<32x128xbf16, #tpu.memory_space<vmem>>, %arg10: memref<32x128xf32, #tpu.memory_space<vmem>>) attributes {dimension_semantics = [#tpu.dimension_semantics<parallel>, #tpu.dimension_semantics<arbitrary>], iteration_bounds = array<i64: 1, 1>, scalar_prefetch = 0 : i64, scratch_operands = 1 : i64, tpu.core_type = #tpu.core_type<tc>, window_params = [{transform_indices = @transform_0, window_bounds = array<i64: 32, 128>}, {transform_indices = @transform_1, window_bounds = array<i64: 128, 256>}, {transform_indices = @transform_2, window_bounds = array<i64: 1, 256>}, {transform_indices = @transform_3, window_bounds = array<i64: 256, 128>}, {pipeline_mode = #tpu.pipeline_mode<synchronous>, transform_indices = @transform_4, window_bounds = array<i64: 1, 128>}, {pipeline_mode = #tpu.pipeline_mode<synchronous>, transform_indices = @transform_5, window_bounds = array<i64: 1, 128>}, {pipeline_mode = #tpu.pipeline_mode<synchronous>, transform_indices = @transform_6, window_bounds = array<i64: 1, 128>}, {transform_indices = @transform_7, window_bounds = array<i64: 32, 128>}]} {
    %c0_i32 = arith.constant 0 : i32
    %0 = arith.cmpi eq, %arg1, %c0_i32 : i32
    %1 = arith.extui %0 : i1 to i32
    %c0_i32_0 = arith.constant 0 : i32
    %2 = arith.cmpi ne, %1, %c0_i32_0 : i32
    scf.if %2 {
      %cst_16 = arith.constant 0.000000e+00 : f32
      %20 = vector.broadcast %cst_16 : f32 to vector<32x128xf32>
      %c0_17 = arith.constant 0 : index
      %c0_18 = arith.constant 0 : index
      %21 = vector.load %arg10[%c0_17, %c0_18] : memref<32x128xf32, #tpu.memory_space<vmem>>, vector<32x128xf32>
      tpu.vector_store %arg10[%c0_17, %c0_18], %20 {strides = array<i32>} : memref<32x128xf32, #tpu.memory_space<vmem>>, vector<32x128xf32>,
    } else {
    }
    %c0 = arith.constant 0 : index
    %c0_1 = arith.constant 0 : index
    %3 = vector.load %arg2[%c0, %c0_1] : memref<32x128xbf16, #tpu.memory_space<vmem>>, vector<32x128xbf16>
    %c0_2 = arith.constant 0 : index
    %c0_3 = arith.constant 0 : index
    %4 = vector.load %arg3[%c0_2, %c0_3] : memref<128x256xbf16, #tpu.memory_space<vmem>>, vector<128x256xbf16>
    %cst = arith.constant dense<0.000000e+00> : vector<32x256xf32>
    %5 = tpu.matmul %3, %4, %cst {dimension_numbers = #tpu.dot_dimension_numbers<[1], [0], [0], [1], [0, 0, 1, 1], [], []>} : vector<32x128xbf16>, vector<128x256xbf16>, vector<32x256xf32> -> vector<32x256xf32>
    %c0_4 = arith.constant 0 : index
    %c0_5 = arith.constant 0 : index
    %6 = vector.load %arg4[%c0_4, %c0_5] : memref<1x256xf32, #tpu.memory_space<vmem>>, vector<1x256xf32>
    %7 = vector.broadcast %6 : vector<1x256xf32> to vector<32x256xf32>
    %8 = arith.addf %5, %7 : vector<32x256xf32>
    %cst_6 = arith.constant 0.000000e+00 : f32
    %9 = vector.broadcast %cst_6 : f32 to vector<32x256xf32>
    %10 = arith.maximumf %8, %9 : vector<32x256xf32>
    %c0_7 = arith.constant 0 : index
    %c0_8 = arith.constant 0 : index
    %11 = vector.load %arg10[%c0_7, %c0_8] : memref<32x128xf32, #tpu.memory_space<vmem>>, vector<32x128xf32>
    %12 = arith.truncf %10 : vector<32x256xf32> to vector<32x256xbf16>
    %c0_9 = arith.constant 0 : index
    %c0_10 = arith.constant 0 : index
    %13 = vector.load %arg5[%c0_9, %c0_10] : memref<256x128xbf16, #tpu.memory_space<vmem>>, vector<256x128xbf16>
    %cst_11 = arith.constant dense<0.000000e+00> : vector<32x128xf32>
    %14 = tpu.matmul %12, %13, %cst_11 {dimension_numbers = #tpu.dot_dimension_numbers<[1], [0], [0], [1], [0, 0, 1, 1], [], []>} : vector<32x256xbf16>, vector<256x128xbf16>, vector<32x128xf32> -> vector<32x128xf32>
    %15 = arith.addf %11, %14 : vector<32x128xf32>
    %c0_12 = arith.constant 0 : index
    %c0_13 = arith.constant 0 : index
    %16 = vector.load %arg10[%c0_12, %c0_13] : memref<32x128xf32, #tpu.memory_space<vmem>>, vector<32x128xf32>
    tpu.vector_store %arg10[%c0_12, %c0_13], %15 {strides = array<i32>} : memref<32x128xf32, #tpu.memory_space<vmem>>, vector<32x128xf32>,
    %c0_i32_14 = arith.constant 0 : i32
    %17 = arith.cmpi eq, %arg1, %c0_i32_14 : i32
    %18 = arith.extui %17 : i1 to i32
    %c0_i32_15 = arith.constant 0 : i32
    %19 = arith.cmpi ne, %18, %c0_i32_15 : i32
    scf.if %19 {
      %c0_16 = arith.constant 0 : index
      %c0_17 = arith.constant 0 : index
      %20 = vector.load %arg10[%c0_16, %c0_17] : memref<32x128xf32, #tpu.memory_space<vmem>>, vector<32x128xf32>
      %c0_18 = arith.constant 0 : index
      %c0_19 = arith.constant 0 : index
      %21 = vector.load %arg6[%c0_18, %c0_19] : memref<1x128xf32, #tpu.memory_space<vmem>>, vector<1x128xf32>
      %22 = vector.broadcast %21 : vector<1x128xf32> to vector<32x128xf32>
      %23 = arith.addf %20, %22 : vector<32x128xf32>
      %c0_20 = arith.constant 0 : index
      %c0_21 = arith.constant 0 : index
      %24 = vector.load %arg2[%c0_20, %c0_21] : memref<32x128xbf16, #tpu.memory_space<vmem>>, vector<32x128xbf16>
      %25 = arith.extf %24 : vector<32x128xbf16> to vector<32x128xf32>
      %26 = arith.addf %23, %25 : vector<32x128xf32>
      %cst_22 = arith.constant dense<0.000000e+00> : vector<32xf32>
      %27 = vector.multi_reduction <add>, %26, %cst_22 [1] : vector<32x128xf32> to vector<32xf32>
      %28 = vector.shape_cast %27 : vector<32xf32> to vector<32x1xf32>
      %cst_23 = arith.constant 1.280000e+02 : f32
      %29 = vector.broadcast %cst_23 : f32 to vector<32x1xf32>
      %30 = arith.divf %28, %29 : vector<32x1xf32>
      %31 = vector.broadcast %30 : vector<32x1xf32> to vector<32x128xf32>
      %32 = arith.subf %26, %31 : vector<32x128xf32>
      %33 = arith.mulf %32, %32 : vector<32x128xf32>
      %cst_24 = arith.constant dense<0.000000e+00> : vector<32xf32>
      %34 = vector.multi_reduction <add>, %33, %cst_24 [1] : vector<32x128xf32> to vector<32xf32>
      %35 = vector.shape_cast %34 : vector<32xf32> to vector<32x1xf32>
      %cst_25 = arith.constant 1.280000e+02 : f32
      %36 = vector.broadcast %cst_25 : f32 to vector<32x1xf32>
      %37 = arith.divf %35, %36 : vector<32x1xf32>
      %38 = vector.broadcast %30 : vector<32x1xf32> to vector<32x128xf32>
      %39 = arith.subf %26, %38 : vector<32x128xf32>
      %cst_26 = arith.constant 9.99999974E-6 : f32
      %40 = vector.broadcast %cst_26 : f32 to vector<32x1xf32>
      %41 = arith.addf %37, %40 : vector<32x1xf32>
      %42 = math.rsqrt %41 : vector<32x1xf32>
      %43 = vector.broadcast %42 : vector<32x1xf32> to vector<32x128xf32>
      %44 = arith.mulf %39, %43 : vector<32x128xf32>
      %c0_27 = arith.constant 0 : index
      %c0_28 = arith.constant 0 : index
      %45 = vector.load %arg7[%c0_27, %c0_28] : memref<1x128xf32, #tpu.memory_space<vmem>>, vector<1x128xf32>
      %46 = vector.broadcast %45 : vector<1x128xf32> to vector<32x128xf32>
      %47 = arith.mulf %44, %46 : vector<32x128xf32>
      %c0_29 = arith.constant 0 : index
      %c0_30 = arith.constant 0 : index
      %48 = vector.load %arg8[%c0_29, %c0_30] : memref<1x128xf32, #tpu.memory_space<vmem>>, vector<1x128xf32>
      %49 = vector.broadcast %48 : vector<1x128xf32> to vector<32x128xf32>
      %50 = arith.addf %47, %49 : vector<32x128xf32>
      %51 = arith.truncf %50 : vector<32x128xf32> to vector<32x128xbf16>
      %c0_31 = arith.constant 0 : index
      %c0_32 = arith.constant 0 : index
      %52 = vector.load %arg9[%c0_31, %c0_32] : memref<32x128xbf16, #tpu.memory_space<vmem>>, vector<32x128xbf16>
      tpu.vector_store %arg9[%c0_31, %c0_32], %51 {strides = array<i32>} : memref<32x128xbf16, #tpu.memory_space<vmem>>, vector<32x128xbf16>,
    } else {
    }
    return
  }
  func.func @transform_0(%arg0: i32, %arg1: i32) -> (i32, i32) {
    %c0_i32 = arith.constant 0 : i32
    %c0_i32_0 = arith.constant 0 : i32
    return %arg0, %c0_i32 : i32, i32
  }
  func.func @transform_1(%arg0: i32, %arg1: i32) -> (i32, i32) {
    %c0_i32 = arith.constant 0 : i32
    %c0_i32_0 = arith.constant 0 : i32
    return %c0_i32, %arg1 : i32, i32
  }
  func.func @transform_2(%arg0: i32, %arg1: i32) -> (i32, i32) {
    %c0_i32 = arith.constant 0 : i32
    %c0_i32_0 = arith.constant 0 : i32
    return %c0_i32, %arg1 : i32, i32
  }
  func.func @transform_3(%arg0: i32, %arg1: i32) -> (i32, i32) {
    %c0_i32 = arith.constant 0 : i32
    %c0_i32_0 = arith.constant 0 : i32
    return %arg1, %c0_i32 : i32, i32
  }
  func.func @transform_4(%arg0: i32, %arg1: i32) -> (i32, i32) {
    %c0_i32 = arith.constant 0 : i32
    %c0_i32_0 = arith.constant 0 : i32
    %c0_i32_1 = arith.constant 0 : i32
    return %c0_i32, %c0_i32_0 : i32, i32
  }
  func.func @transform_5(%arg0: i32, %arg1: i32) -> (i32, i32) {
    %c0_i32 = arith.constant 0 : i32
    %c0_i32_0 = arith.constant 0 : i32
    %c0_i32_1 = arith.constant 0 : i32
    return %c0_i32, %c0_i32_0 : i32, i32
  }
  func.func @transform_6(%arg0: i32, %arg1: i32) -> (i32, i32) {
    %c0_i32 = arith.constant 0 : i32
    %c0_i32_0 = arith.constant 0 : i32
    %c0_i32_1 = arith.constant 0 : i32
    return %c0_i32, %c0_i32_0 : i32, i32
  }
  func.func @transform_7(%arg0: i32, %arg1: i32) -> (i32, i32) {
    %c0_i32 = arith.constant 0 : i32
    %c0_i32_0 = arith.constant 0 : i32
    return %arg0, %c0_i32 : i32, i32
  }
}

module attributes {stable_mosaic.version = 11 : i64} {
  func.func @_layernorm_kernel(%arg0: i32, %arg1: memref<32x128xbf16, #tpu.memory_space<vmem>>, %arg2: memref<1x128xf32, #tpu.memory_space<vmem>>, %arg3: memref<1x128xf32, #tpu.memory_space<vmem>>, %arg4: memref<32x128xf32, #tpu.memory_space<vmem>>) attributes {dimension_semantics = [#tpu.dimension_semantics<parallel>], iteration_bounds = array<i64: 1>, scalar_prefetch = 0 : i64, scratch_operands = 0 : i64, tpu.core_type = #tpu.core_type<tc>, window_params = [{transform_indices = @transform_0, window_bounds = array<i64: 32, 128>}, {pipeline_mode = #tpu.pipeline_mode<synchronous>, transform_indices = @transform_1, window_bounds = array<i64: 1, 128>}, {pipeline_mode = #tpu.pipeline_mode<synchronous>, transform_indices = @transform_2, window_bounds = array<i64: 1, 128>}, {transform_indices = @transform_3, window_bounds = array<i64: 32, 128>}]} {
    %c0 = arith.constant 0 : index
    %c0_0 = arith.constant 0 : index
    %0 = vector.load %arg1[%c0, %c0_0] : memref<32x128xbf16, #tpu.memory_space<vmem>>, vector<32x128xbf16>
    %1 = arith.extf %0 : vector<32x128xbf16> to vector<32x128xf32>
    %cst = arith.constant dense<0.000000e+00> : vector<32xf32>
    %2 = vector.multi_reduction <add>, %1, %cst [1] : vector<32x128xf32> to vector<32xf32>
    %3 = vector.shape_cast %2 : vector<32xf32> to vector<32x1xf32>
    %cst_1 = arith.constant 1.280000e+02 : f32
    %4 = vector.broadcast %cst_1 : f32 to vector<32x1xf32>
    %5 = arith.divf %3, %4 : vector<32x1xf32>
    %6 = vector.broadcast %5 : vector<32x1xf32> to vector<32x128xf32>
    %7 = arith.subf %1, %6 : vector<32x128xf32>
    %8 = arith.mulf %7, %7 : vector<32x128xf32>
    %cst_2 = arith.constant dense<0.000000e+00> : vector<32xf32>
    %9 = vector.multi_reduction <add>, %8, %cst_2 [1] : vector<32x128xf32> to vector<32xf32>
    %10 = vector.shape_cast %9 : vector<32xf32> to vector<32x1xf32>
    %cst_3 = arith.constant 1.280000e+02 : f32
    %11 = vector.broadcast %cst_3 : f32 to vector<32x1xf32>
    %12 = arith.divf %10, %11 : vector<32x1xf32>
    %13 = vector.broadcast %5 : vector<32x1xf32> to vector<32x128xf32>
    %14 = arith.subf %1, %13 : vector<32x128xf32>
    %cst_4 = arith.constant 9.99999974E-6 : f32
    %15 = vector.broadcast %cst_4 : f32 to vector<32x1xf32>
    %16 = arith.addf %12, %15 : vector<32x1xf32>
    %17 = math.rsqrt %16 : vector<32x1xf32>
    %18 = vector.broadcast %17 : vector<32x1xf32> to vector<32x128xf32>
    %19 = arith.mulf %14, %18 : vector<32x128xf32>
    %c0_5 = arith.constant 0 : index
    %c0_6 = arith.constant 0 : index
    %20 = vector.load %arg2[%c0_5, %c0_6] : memref<1x128xf32, #tpu.memory_space<vmem>>, vector<1x128xf32>
    %21 = vector.broadcast %20 : vector<1x128xf32> to vector<32x128xf32>
    %22 = arith.mulf %19, %21 : vector<32x128xf32>
    %c0_7 = arith.constant 0 : index
    %c0_8 = arith.constant 0 : index
    %23 = vector.load %arg3[%c0_7, %c0_8] : memref<1x128xf32, #tpu.memory_space<vmem>>, vector<1x128xf32>
    %24 = vector.broadcast %23 : vector<1x128xf32> to vector<32x128xf32>
    %25 = arith.addf %22, %24 : vector<32x128xf32>
    %c0_9 = arith.constant 0 : index
    %c0_10 = arith.constant 0 : index
    %26 = vector.load %arg4[%c0_9, %c0_10] : memref<32x128xf32, #tpu.memory_space<vmem>>, vector<32x128xf32>
    tpu.vector_store %arg4[%c0_9, %c0_10], %25 {strides = array<i32>} : memref<32x128xf32, #tpu.memory_space<vmem>>, vector<32x128xf32>,
    return
  }
  func.func @transform_0(%arg0: i32) -> (i32, i32) {
    %c0_i32 = arith.constant 0 : i32
    %c0_i32_0 = arith.constant 0 : i32
    return %arg0, %c0_i32 : i32, i32
  }
  func.func @transform_1(%arg0: i32) -> (i32, i32) {
    %c0_i32 = arith.constant 0 : i32
    %c0_i32_0 = arith.constant 0 : i32
    %c0_i32_1 = arith.constant 0 : i32
    return %c0_i32, %c0_i32_0 : i32, i32
  }
  func.func @transform_2(%arg0: i32) -> (i32, i32) {
    %c0_i32 = arith.constant 0 : i32
    %c0_i32_0 = arith.constant 0 : i32
    %c0_i32_1 = arith.constant 0 : i32
    return %c0_i32, %c0_i32_0 : i32, i32
  }
  func.func @transform_3(%arg0: i32) -> (i32, i32) {
    %c0_i32 = arith.constant 0 : i32
    %c0_i32_0 = arith.constant 0 : i32
    return %arg0, %c0_i32 : i32, i32
  }
}

</mosaic_0001>

<llo_original>
// kernel: transformer_model.13
$region0: #{transformer_model.13}
  #allocation0 [shape = 'u32[]', space=smem, size = 0x4, offset = 0x4, fixed_abs, tag = 'smem constant byte address 0x4 - core index']
  #allocation1 [shape = 'u32[72,128]{1,0:T(1,128)}', space=vmem, size = 0x9000, scoped, tag = 'internal scratch']
  #allocation2 [shape = 'f32[32,128]{1,0:T(8,128)}', space=vmem, size = 0x4000, scoped, tag = 'scratch operand']
  %s0 = inlined_call_operand.vmem [shape: bf16[32,128], index: 0, kind: input, shape index: {}]
  %s1 = inlined_call_operand.hbm [shape: bf16[128,384], index: 1, kind: input, shape index: {}]
  %s2 = inlined_call_operand.vmem [shape: f32[1,384], index: 2, kind: input, shape index: {}]
  %s3 = inlined_call_operand.vmem [shape: bf16[32,384], index: 3, kind: output, shape index: {}]
  %s4 = sld [smem:[#allocation0]]
  $region94: #{transformer_model.13} parent=0
    _
  %s6 = ssub.s32 1, %s4
  %s7 = scalar_select 0, %s6, %s4
  $region1: #{transformer_model.13} parent=0
    #allocation3 [shape = 'u8[65536]{0}', space=vmem, size = 0x10000, scoped, tag = 'input window, operand 1']
    #allocation4 [shape = 's32[2]{0}', space=sflag, size = 0x8, scoped, tag = 'scoped memory for transformer_model.13']
    #allocation5 [shape = 'u8[16384]{0}', space=vmem, size = 0x4000, scoped, tag = 'output window, operand 0']
    %8 = vsyncpa [#allocation4], 0
    %s9 = scalar_lea.sflag [#allocation4], 1
    %10 = vsyncpa %s9, 0
    loop: start=0, step=1, limit=5
    $region2: #{transformer_model.13} parent=1 // loop_pre_header
      _
    $region3: #{transformer_model.13} parent=1 // loop_header
      %s12 = sphi 0, %s16
      %p13 = scmp.ge.s32.totalorder %s12, 5
      %s19 = sphi 0, %s38
      %s20 = sphi 0, %s34
      %s21 = sphi 0, %s30
      %s22 = sphi 0, %s19
      %s23 = sphi 0, %s20
      %s24 = sphi 0, %s21
      %s25 = sphi 0, %s22
      %s26 = sphi 0, %s23
      %s27 = sphi 0, %s24
      %s43 = sphi 0, %s45
      %s46 = sphi 0, %s43
      %s47 = sphi 0, %s46
      %s63 = sphi 0, %s47
      %s71 = sphi 0, %s73
      %s74 = sphi 0, %s71
      %s75 = sphi 0, %s74
      %s91 = sphi 0, %s75
      %s97 = sphi 0, %s99
      %s100 = sphi 0, %s97
      %s101 = sphi 0, %s100
      %s117 = sphi 0, %s101
      %s125 = sphi 0, %s127
      %s128 = sphi 0, %s125
      %s129 = sphi 0, %s128
      %s145 = sphi 0, %s129
    $region4: #{transformer_model.13} parent=1 // loop_header_branch
      %15 = sbr.rel (%p13) target = $region8
    $region5: #{transformer_model.13} parent=1 // loop_body
      %s17 = ssub.s32 %s12, 1
      %s18 = ssub.s32 %s12, 2
      %s28 = sadd.s32 1, %s21
      %p29 = scmp.ge.s32.totalorder %s28, 1
      %s30 = scalar_select %p29, 0, %s28
      %s31 = sadd.s32 1, %s20
      %s32 = scalar_select %p29, %s31, %s20
      %p33 = scmp.ge.s32.totalorder %s32, 3
      %s34 = scalar_select %p33, 0, %s32
      %s35 = sadd.s32 1, %s19
      %s36 = scalar_select %p33, %s35, %s19
      %p37 = scmp.ge.s32.totalorder %s36, 1
      %s38 = scalar_select %p37, 0, %s36
      %s39 = ssub.s32 %s19, %s38
      %s40 = ssub.s32 %s21, %s30
      %s41 = sor.u32 %s39, %s40
      %p42 = scmp.eq.s32.totalorder %s41, 0
      %s44 = sadd.s32 %s43, 1
      %s45 = scalar_select %p42, %s43, %s44
      %p48 = pneg %p42
      %p49 = scmp.eq.s32.totalorder %s12, 2
      %p50 = por %p48, %p49
      %p51 = scmp.ne.s32.totalorder %s43, %s46
      %p52 = scmp.eq.s32.totalorder %s12, 0
      %p53 = por %p51, %p52
      %p54 = scmp.ne.s32.totalorder %s43, %s46
      %p55 = scmp.eq.s32.totalorder %s17, 2
      %p56 = por %p54, %p55
      %p57 = scmp.ne.s32.totalorder %s46, %s47
      %p58 = scmp.eq.s32.totalorder %s17, 0
      %p59 = por %p57, %p58
      %p60 = scmp.ne.s32.totalorder %s46, %s47
      %p61 = scmp.eq.s32.totalorder %s18, 2
      %p62 = por %p60, %p61
      %p64 = scmp.ne.s32.totalorder %s47, %s63
      %p65 = scmp.eq.s32.totalorder %s18, 0
      %p66 = por %p64, %p65
      %s67 = ssub.s32 %s21, %s30
      %s68 = ssub.s32 %s20, %s34
      %s69 = sor.u32 %s67, %s68
      %p70 = scmp.eq.s32.totalorder %s69, 0
      %s72 = sadd.s32 %s71, 1
      %s73 = scalar_select %p70, %s71, %s72
      %p76 = pneg %p70
      %p77 = scmp.eq.s32.totalorder %s12, 2
      %p78 = por %p76, %p77
      %p79 = scmp.ne.s32.totalorder %s71, %s74
      %p80 = scmp.eq.s32.totalorder %s12, 0
      %p81 = por %p79, %p80
      %p82 = scmp.ne.s32.totalorder %s71, %s74
      %p83 = scmp.eq.s32.totalorder %s17, 2
      %p84 = por %p82, %p83
      %p85 = scmp.ne.s32.totalorder %s74, %s75
      %p86 = scmp.eq.s32.totalorder %s17, 0
      %p87 = por %p85, %p86
      %p88 = scmp.ne.s32.totalorder %s74, %s75
      %p89 = scmp.eq.s32.totalorder %s18, 2
      %p90 = por %p88, %p89
      %p92 = scmp.ne.s32.totalorder %s75, %s91
      %p93 = scmp.eq.s32.totalorder %s18, 0
      %p94 = por %p92, %p93
      %s95 = ssub.s32 %s20, %s34
      %p96 = scmp.eq.s32.totalorder %s95, 0
      %s98 = sadd.s32 %s97, 1
      %s99 = scalar_select %p96, %s97, %s98
      %p102 = pneg %p96
      %p103 = scmp.eq.s32.totalorder %s12, 2
      %p104 = por %p102, %p103
      %p105 = scmp.ne.s32.totalorder %s97, %s100
      %p106 = scmp.eq.s32.totalorder %s12, 0
      %p107 = por %p105, %p106
      %p108 = scmp.ne.s32.totalorder %s97, %s100
      %p109 = scmp.eq.s32.totalorder %s17, 2
      %p110 = por %p108, %p109
      %p111 = scmp.ne.s32.totalorder %s100, %s101
      %p112 = scmp.eq.s32.totalorder %s17, 0
      %p113 = por %p111, %p112
      %p114 = scmp.ne.s32.totalorder %s100, %s101
      %p115 = scmp.eq.s32.totalorder %s18, 2
      %p116 = por %p114, %p115
      %p118 = scmp.ne.s32.totalorder %s101, %s117
      %p119 = scmp.eq.s32.totalorder %s18, 0
      %p120 = por %p118, %p119
      %s121 = ssub.s32 %s19, %s38
      %s122 = ssub.s32 %s20, %s34
      %s123 = sor.u32 %s121, %s122
      %p124 = scmp.eq.s32.totalorder %s123, 0
      %s126 = sadd.s32 %s125, 1
      %s127 = scalar_select %p124, %s125, %s126
      %p130 = pneg %p124
      %p131 = scmp.eq.s32.totalorder %s12, 2
      %p132 = por %p130, %p131
      %p133 = scmp.ne.s32.totalorder %s125, %s128
      %p134 = scmp.eq.s32.totalorder %s12, 0
      %p135 = por %p133, %p134
      %p136 = scmp.ne.s32.totalorder %s125, %s128
      %p137 = scmp.eq.s32.totalorder %s17, 2
      %p138 = por %p136, %p137
      %p139 = scmp.ne.s32.totalorder %s128, %s129
      %p140 = scmp.eq.s32.totalorder %s17, 0
      %p141 = por %p139, %p140
      %p142 = scmp.ne.s32.totalorder %s128, %s129
      %p143 = scmp.eq.s32.totalorder %s18, 2
      %p144 = por %p142, %p143
      %p146 = scmp.ne.s32.totalorder %s129, %s145
      %p147 = scmp.eq.s32.totalorder %s18, 0
      %p148 = por %p146, %p147
      %p149 = scmp.le.s32.totalorder 1, %s12
      %p150 = scmp.lt.s32.totalorder %s12, 4
      %p151 = pnand %p149, %p150
      %p152 = pneg %p151
      // Predicated region
      $region9: #{transformer_model.13} parent=5 // pred_check
        _
      $region10: #{transformer_model.13} parent=5 // pred_check_branch
        %154 = sbr.rel (%p151) target = $region12
      $region11: #{transformer_model.13} parent=5 // pred_region
        %s155 = ssub.s32 %s12, 1
        // Predicated region
        $region13: #{transformer_model.13} parent=11 // pred_check
          %p156 = pneg %p59
        $region14: #{transformer_model.13} parent=11 // pred_check_branch
          %158 = sbr.rel (%p156) target = $region16
        $region15: #{transformer_model.13} parent=11 // pred_region
          %s159 = smul.u32 4, %s22
          %p160 = scmp.lt.s32.totalorder %s159, 3
          %s161 = scalar_select %p160, %s159, 3
          %p162 = scmp.lt.s32.totalorder %s24, 0
          %s163 = scalar_select %p162, %s24, 0
          %s164 = sadd.s32 %s163, %s161
          %s165 = smul.addr %s164, 4
          %s166 = scalar_lea.vmem %s0, %s165
          %s167 = smul.u32 4, %s22
        $region16: #{transformer_model.13} parent=11 // pred_fallthru
          _
      $region12: #{transformer_model.13} parent=5 // pred_fallthru
        _
      %p168 = scmp.lt.s32.totalorder %s12, 3
      // Predicated region
      $region17: #{transformer_model.13} parent=5 // pred_check
        %p169 = pneg %p168
      $region18: #{transformer_model.13} parent=5 // pred_check_branch
        %171 = sbr.rel (%p169) target = $region20
      $region19: #{transformer_model.13} parent=5 // pred_region
        // Predicated region
        $region21: #{transformer_model.13} parent=19 // pred_check
          %p172 = pneg %p81
        $region22: #{transformer_model.13} parent=19 // pred_check_branch
          %174 = sbr.rel (%p172) target = $region24
        $region23: #{transformer_model.13} parent=19 // pred_region
          %s175 = sand.u32 %s71, 1
          %s176 = scalar_lea.sflag [#allocation4], %s175
          %s177 = sand.u32 %s71, 1
          %s178 = smul.addr %s177, 64
          %s179 = scalar_lea.vmem [#allocation3], %s178
          %s180 = smul.u32 16, %s21
          %182 = vsyncadd %s176, 0
          %s183 = smul.addr %s180, 3
          %s184 = sadd.s32 %s20, %s183
          %s185 = smul.addr %s184, 4
          %s186 = scalar_lea.hbm %s1, %s185
          %s187 = sshll.u32 %s186, 4
          %s188 = int_to_ptr.hbm [resolvable:$true] %s187
          %s189 = sshll.u32 %s179, 4
          %s190 = int_to_ptr.vmem [resolvable:$true] %s189
          %195 = dma.hbm_to_vmem [thread:$0]  %s188, 1024, %s190, %s176, 192, 64, 4
        $region24: #{transformer_model.13} parent=19 // pred_fallthru
          _
        // Predicated region
        $region25: #{transformer_model.13} parent=19 // pred_check
          %p196 = pneg %p107
        $region26: #{transformer_model.13} parent=19 // pred_check_branch
          %198 = sbr.rel (%p196) target = $region28
        $region27: #{transformer_model.13} parent=19 // pred_region
          %p199 = scmp.lt.s32.totalorder %s20, 2
          %s200 = scalar_select %p199, %s20, 2
          %s201 = scalar_lea.vmem %s2, %s200
        $region28: #{transformer_model.13} parent=19 // pred_fallthru
          _
      $region20: #{transformer_model.13} parent=5 // pred_fallthru
        _
      %p202 = scmp.le.s32.totalorder 1, %s12
      %p203 = scmp.lt.s32.totalorder %s12, 4
      %p204 = pnand %p202, %p203
      %p205 = pneg %p204
      // Predicated region
      $region29: #{transformer_model.13} parent=5 // pred_check
        _
      $region30: #{transformer_model.13} parent=5 // pred_check_branch
        %207 = sbr.rel (%p204) target = $region32
      $region31: #{transformer_model.13} parent=5 // pred_region
        %s208 = ssub.s32 %s12, 1
        %s209 = sand.u32 %s74, 1
        %s210 = scalar_lea.sflag [#allocation4], %s209
        %s211 = sand.u32 %s74, 1
        %s212 = smul.addr %s211, 64
        %s213 = scalar_lea.vmem [#allocation3], %s212
        // Predicated region
        $region33: #{transformer_model.13} parent=31 // pred_check
          %p214 = pneg %p87
        $region34: #{transformer_model.13} parent=31 // pred_check_branch
          %216 = sbr.rel (%p214) target = $region36
        $region35: #{transformer_model.13} parent=31 // pred_region
          %218 = dma.done %s210, 1024
        $region36: #{transformer_model.13} parent=31 // pred_fallthru
          _
        %s219 = smul.u32 4, %s22
        %p220 = scmp.lt.s32.totalorder %s219, 3
        %s221 = scalar_select %p220, %s219, 3
        %p222 = scmp.lt.s32.totalorder %s24, 0
        %s223 = scalar_select %p222, %s24, 0
        %s224 = sadd.s32 %s223, %s221
        %s225 = smul.addr %s224, 4
        %s226 = scalar_lea.vmem %s0, %s225
        %p227 = pneg %p59
        %p228 = pneg %p56
        %s229 = sand.u32 %s74, 1
        %s230 = scalar_lea.sflag [#allocation4], %s229
        %s231 = sand.u32 %s74, 1
        %s232 = smul.addr %s231, 64
        %s233 = scalar_lea.vmem [#allocation3], %s232
        %p234 = pneg %p87
        %p235 = pneg %p84
        %p236 = scmp.lt.s32.totalorder %s23, 2
        %s237 = scalar_select %p236, %s23, 2
        %s238 = scalar_lea.vmem %s2, %s237
        %p239 = pneg %p113
        %p240 = pneg %p110
        %p241 = pneg %p141
        %p242 = pneg %p138
        %s243 = sand.u32 %s128, 1
        %s244 = sand.u32 %s128, 1
        %s245 = smul.addr %s244, 16
        %s246 = scalar_lea.vmem [#allocation5], %s245
        %s247 = smul.u32 4, %s22
        %p248 = scmp.lt.s32.totalorder %s247, 3
        %s249 = scalar_select %p248, %s247, 3
        %p250 = scmp.lt.s32.totalorder %s24, 0
        %s251 = scalar_select %p250, %s24, 0
        %s252 = sadd.s32 %s251, %s249
        %s253 = smul.addr %s252, 4
        %s254 = scalar_lea.vmem %s0, %s253
        %s255 = smul.u32 4, %s22
        %s256 = smul.u32 16, %s24
        %p257 = scmp.lt.s32.totalorder %s23, 2
        %s258 = scalar_select %p257, %s23, 2
        %s259 = scalar_lea.vmem %s2, %s258
        %s260 = smul.u32 4, %s22
        %p261 = scmp.eq.s32.totalorder %s24, 0
        // Predicated region
        $region37: #{transformer_model.13} parent=31 // pred_check
          %p262 = pneg %p261
        $region38: #{transformer_model.13} parent=31 // pred_check_branch
          %264 = sbr.rel (%p262) target = $region40
        $region39: #{transformer_model.13} parent=31 // pred_region
          %265 = vst [vmem:[#allocation2] sm:$0xff] 0.0
          %266 = vst [vmem:[#allocation2 + $0x8] sm:$0xff] 0.0
          %267 = vst [vmem:[#allocation2 + $0x10] sm:$0xff] 0.0
          %268 = vst [vmem:[#allocation2 + $0x18] sm:$0xff] 0.0
        $region40: #{transformer_model.13} parent=31 // pred_fallthru
          _
        %v269 = vld [vmem:[#allocation2] sm:$0xff]
        %v270 = vld [vmem:[#allocation2 + $0x8] sm:$0xff]
        %v271 = vld [vmem:[#allocation2 + $0x10] sm:$0xff]
        %v272 = vld [vmem:[#allocation2 + $0x18] sm:$0xff]
        %v273 = vld [vmem:[%s254] sm:$0xf]
        %v274 = vld [vmem:[%s254 + $0x4] sm:$0xf]
        %v275 = vld [vmem:[%s254 + $0x8] sm:$0xf]
        %v276 = vld [vmem:[%s254 + $0xc] sm:$0xf]
        %v277 = vld [vmem:[%s213] sm:$0xf]
        %v278 = vld [vmem:[%s213 + $0x4] sm:$0xf]
        %v279 = vld [vmem:[%s213 + $0x8] sm:$0xf]
        %v280 = vld [vmem:[%s213 + $0xc] sm:$0xf]
        %v281 = vld [vmem:[%s213 + $0x10] sm:$0xf]
        %v282 = vld [vmem:[%s213 + $0x14] sm:$0xf]
        %v283 = vld [vmem:[%s213 + $0x18] sm:$0xf]
        %v284 = vld [vmem:[%s213 + $0x1c] sm:$0xf]
        %v285 = vld [vmem:[%s213 + $0x20] sm:$0xf]
        %v286 = vld [vmem:[%s213 + $0x24] sm:$0xf]
        %v287 = vld [vmem:[%s213 + $0x28] sm:$0xf]
        %v288 = vld [vmem:[%s213 + $0x2c] sm:$0xf]
        %v289 = vld [vmem:[%s213 + $0x30] sm:$0xf]
        %v290 = vld [vmem:[%s213 + $0x34] sm:$0xf]
        %v291 = vld [vmem:[%s213 + $0x38] sm:$0xf]
        %v292 = vld [vmem:[%s213 + $0x3c] sm:$0xf]
        %v297 = vunpack.c.l.b16 %v273
        %v298 = vunpack.c.l.b16 %v274
        %v299 = vunpack.c.l.b16 %v275
        %v300 = vunpack.c.l.b16 %v276
        %v301 = vpack.c.b16 %v298, %v297
        %v302 = vpack.c.b16 %v300, %v299
        %v321 = vunpack.c.l.b16 %v277
        %v322 = vunpack.c.l.b16 %v278
        %v323 = vunpack.c.l.b16 %v279
        %v324 = vunpack.c.l.b16 %v280
        %v325 = vunpack.c.l.b16 %v281
        %v326 = vunpack.c.l.b16 %v282
        %v327 = vunpack.c.l.b16 %v283
        %v328 = vunpack.c.l.b16 %v284
        %v329 = vunpack.c.l.b16 %v285
        %v330 = vunpack.c.l.b16 %v286
        %v331 = vunpack.c.l.b16 %v287
        %v332 = vunpack.c.l.b16 %v288
        %v333 = vunpack.c.l.b16 %v289
        %v334 = vunpack.c.l.b16 %v290
        %v335 = vunpack.c.l.b16 %v291
        %v336 = vunpack.c.l.b16 %v292
        %v337 = vpack.c.b16 %v322, %v321
        %v338 = vpack.c.b16 %v324, %v323
        %v339 = vpack.c.b16 %v326, %v325
        %v340 = vpack.c.b16 %v328, %v327
        %v341 = vpack.c.b16 %v330, %v329
        %v342 = vpack.c.b16 %v332, %v331
        %v343 = vpack.c.b16 %v334, %v333
        %v344 = vpack.c.b16 %v336, %v335
        %353 = vmatpush.bf16.msra.mxu0 %v344
        %354 = vmatpush.bf16.msra.mxu0 %v343
        %355 = vmatpush.bf16.msra.mxu0 %v342
        %356 = vmatpush.bf16.msra.mxu0 %v341
        %357 = vmatpush.bf16.msra.mxu0 %v340
        %358 = vmatpush.bf16.msra.mxu0 %v339
        %359 = vmatpush.bf16.msra.mxu0 %v338
        %360 = vmatpush.bf16.msra.mxu0 %v337
        %361 = vmatmul.bf16.gmra.mxu0 %v301
        %v362 = vpop.f32.mrf.mxu0
        %v363 = vadd.f32 0.0, %v362
        %v364 = vpop.f32.mrf.mxu0
        %v365 = vadd.f32 0.0, %v364
        %366 = vmatmul.bf16.gmra.mxu0 %v302
        %v367 = vpop.f32.mrf.mxu0
        %v368 = vadd.f32 0.0, %v367
        %v369 = vpop.f32.mrf.mxu0
        %v370 = vadd.f32 0.0, %v369
        %371 = vdwg.mxu0
        %v372 = vadd.f32 %v269, %v363
        %v373 = vadd.f32 %v270, %v365
        %v374 = vadd.f32 %v271, %v368
        %v375 = vadd.f32 %v272, %v370
        %376 = vst [vmem:[#allocation2] sm:$0xff] %v372
        %377 = vst [vmem:[#allocation2 + $0x8] sm:$0xff] %v373
        %378 = vst [vmem:[#allocation2 + $0x10] sm:$0xff] %v374
        %379 = vst [vmem:[#allocation2 + $0x18] sm:$0xff] %v375
        // Predicated region
        $region41: #{transformer_model.13} parent=31 // pred_check
          %p380 = pneg %p261
        $region42: #{transformer_model.13} parent=31 // pred_check_branch
          %382 = sbr.rel (%p380) target = $region44
        $region43: #{transformer_model.13} parent=31 // pred_region
          %v383 = vld [vmem:[#allocation2] sm:$0xff]
          %v384 = vld [vmem:[#allocation2 + $0x8] sm:$0xff]
          %v385 = vld [vmem:[#allocation2 + $0x10] sm:$0xff]
          %v386 = vld [vmem:[#allocation2 + $0x18] sm:$0xff]
          %v387 = vld [vmem:[%s259] sm:$0x1]
          %v389 = vperm.slane %v387, 0
          %v391 = vadd.f32 %v383, %v389
          %v392 = vadd.f32 %v384, %v389
          %v393 = vadd.f32 %v385, %v389
          %v394 = vadd.f32 %v386, %v389
          %v395 = vpack.c.bf16 %v391, %v391
          %v396 = vpack.c.bf16 %v392, %v392
          %v397 = vpack.c.bf16 %v393, %v393
          %v398 = vpack.c.bf16 %v394, %v394
          %399 = vst [vmem:[%s246] sm:$0xf] %v395
          %400 = vst [vmem:[%s246 + $0x4] sm:$0xf] %v396
          %401 = vst [vmem:[%s246 + $0x8] sm:$0xf] %v397
          %402 = vst [vmem:[%s246 + $0xc] sm:$0xf] %v398
        $region44: #{transformer_model.13} parent=31 // pred_fallthru
          _
        %s403 = sand.u32 %s128, 1
        %s404 = sand.u32 %s128, 1
        %s405 = smul.addr %s404, 16
        %s406 = scalar_lea.vmem [#allocation5], %s405
        // Predicated region
        $region45: #{transformer_model.13} parent=31 // pred_check
          %p407 = pneg %p138
        $region46: #{transformer_model.13} parent=31 // pred_check_branch
          %409 = sbr.rel (%p407) target = $region48
        $region47: #{transformer_model.13} parent=31 // pred_region
          %s410 = smul.u32 4, %s22
          %s411 = smul.addr %s410, 3
          %s412 = sadd.s32 %s23, %s411
          %s413 = smul.addr %s412, 4
          %s414 = scalar_lea.vmem %s3, %s413
          // Predicated region
          $region49: #{transformer_model.13} parent=47 // pred_check
            _
          $region50: #{transformer_model.13} parent=47 // pred_check_branch
            %416 = sbr.rel (0) target = $region52
          $region51: #{transformer_model.13} parent=47 // pred_region
            // Predicated region
            $region53: #{transformer_model.13} parent=51 // pred_check
              _
            $region54: #{transformer_model.13} parent=51 // pred_check_branch
              %418 = sbr.rel target = $region56
            $region55: #{transformer_model.13} parent=51 // pred_region
              // Predicated region
              $region68: #{transformer_model.13} parent=55 // pred_check
                _
              $region69: #{transformer_model.13} parent=55 // pred_check_branch
                %440 = sbr.rel (0) target = $region71
              $region70: #{transformer_model.13} parent=55 // pred_region
                loop: start=0, step=1, limit=1
                $region72: #{transformer_model.13} parent=70 // loop_pre_header
                  _
                $region73: #{transformer_model.13} parent=70 // loop_header
                  %s442 = sphi 0, %s446
                  %p443 = scmp.ge.s32.totalorder %s442, 1
                  %s447 = sphi %s406, %s406
                  %s448 = sphi %s414, %s414
                $region74: #{transformer_model.13} parent=70 // loop_header_branch
                  %445 = sbr.rel (%p443) target = $region78
                $region75: #{transformer_model.13} parent=70 // loop_body
                  _
                $region76: #{transformer_model.13} parent=70 // loop_footer
                  %s446 = sadd.s32 1, %s442
                $region77: #{transformer_model.13} parent=70 // loop_footer_branch
                  %441 = sbr.rel target = $region73
                $region78: #{transformer_model.13} parent=70 // loop_exit
                  _
                %s450 = ssub.s32 16, 1
                loop: start=0, step=1, limit=1
                $region79: #{transformer_model.13} parent=70 // loop_pre_header
                  _
                $region80: #{transformer_model.13} parent=70 // loop_header
                  %s452 = sphi 0, %s456
                  %p453 = scmp.ge.s32.totalorder %s452, 1
                  %s457 = sphi %s406, %s406
                  %s458 = sphi %s414, %s414
                $region81: #{transformer_model.13} parent=70 // loop_header_branch
                  %455 = sbr.rel (%p453) target = $region85
                $region82: #{transformer_model.13} parent=70 // loop_body
                  %v459 = vld [vmem:[%s457] sm:%s450]
                  %460 = vst [vmem:[%s458] sm:%s450] %v459
                  %v461 = vld [vmem:[%s457 + $0x4] sm:%s450]
                  %462 = vst [vmem:[%s458 + $0xc] sm:%s450] %v461
                  %v463 = vld [vmem:[%s457 + $0x8] sm:%s450]
                  %464 = vst [vmem:[%s458 + $0x18] sm:%s450] %v463
                  %v465 = vld [vmem:[%s457 + $0xc] sm:%s450]
                  %466 = vst [vmem:[%s458 + $0x24] sm:%s450] %v465
                $region83: #{transformer_model.13} parent=70 // loop_footer
                  %s456 = sadd.s32 1, %s452
                $region84: #{transformer_model.13} parent=70 // loop_footer_branch
                  %451 = sbr.rel target = $region80
                $region85: #{transformer_model.13} parent=70 // loop_exit
                  _
              $region71: #{transformer_model.13} parent=55 // pred_fallthru
                _
            $region56: #{transformer_model.13} parent=51 // pred_fallthru
              _
            // Predicated region
            $region57: #{transformer_model.13} parent=51 // pred_check
              _
            $region58: #{transformer_model.13} parent=51 // pred_check_branch
              %420 = sbr.rel (0) target = $region60
            $region59: #{transformer_model.13} parent=51 // pred_region
              %s422 = ssub.s32 16, 1
              loop: start=0, step=1, limit=1
              $region61: #{transformer_model.13} parent=59 // loop_pre_header
                _
              $region62: #{transformer_model.13} parent=59 // loop_header
                %s424 = sphi 0, %s428
                %p425 = scmp.ge.s32.totalorder %s424, 1
                %s429 = sphi %s406, %s406
                %s430 = sphi %s414, %s414
              $region63: #{transformer_model.13} parent=59 // loop_header_branch
                %427 = sbr.rel (%p425) target = $region67
              $region64: #{transformer_model.13} parent=59 // loop_body
                %v431 = vld [vmem:[%s429] sm:%s422]
                %432 = vst [vmem:[%s430] sm:%s422] %v431
                %v433 = vld [vmem:[%s429 + $0x4] sm:%s422]
                %434 = vst [vmem:[%s430 + $0xc] sm:%s422] %v433
                %v435 = vld [vmem:[%s429 + $0x8] sm:%s422]
                %436 = vst [vmem:[%s430 + $0x18] sm:%s422] %v435
                %v437 = vld [vmem:[%s429 + $0xc] sm:%s422]
                %438 = vst [vmem:[%s430 + $0x24] sm:%s422] %v437
              $region65: #{transformer_model.13} parent=59 // loop_footer
                %s428 = sadd.s32 1, %s424
              $region66: #{transformer_model.13} parent=59 // loop_footer_branch
                %423 = sbr.rel target = $region62
              $region67: #{transformer_model.13} parent=59 // loop_exit
                _
            $region60: #{transformer_model.13} parent=51 // pred_fallthru
              _
          $region52: #{transformer_model.13} parent=47 // pred_fallthru
            _
          %467 = vnop
        $region48: #{transformer_model.13} parent=31 // pred_fallthru
          _
      $region32: #{transformer_model.13} parent=5 // pred_fallthru
        _
      %p468 = scmp.le.s32.totalorder 2, %s12
      // Predicated region
      $region86: #{transformer_model.13} parent=5 // pred_check
        %p469 = pneg %p468
      $region87: #{transformer_model.13} parent=5 // pred_check_branch
        %471 = sbr.rel (%p469) target = $region89
      $region88: #{transformer_model.13} parent=5 // pred_region
        %s472 = ssub.s32 %s12, 2
        // Predicated region
        $region90: #{transformer_model.13} parent=88 // pred_check
          %p473 = pneg %p144
        $region91: #{transformer_model.13} parent=88 // pred_check_branch
          %475 = sbr.rel (%p473) target = $region93
        $region92: #{transformer_model.13} parent=88 // pred_region
          %s476 = sand.u32 %s129, 1
          %s477 = sand.u32 %s129, 1
          %s478 = smul.addr %s477, 16
          %s479 = scalar_lea.vmem [#allocation5], %s478
        $region93: #{transformer_model.13} parent=88 // pred_fallthru
          _
      $region89: #{transformer_model.13} parent=5 // pred_fallthru
        _
    $region6: #{transformer_model.13} parent=1 // loop_footer
      %s16 = sadd.s32 1, %s12
    $region7: #{transformer_model.13} parent=1 // loop_footer_branch
      %11 = sbr.rel target = $region3
    $region8: #{transformer_model.13} parent=1 // loop_exit
      _
    %480 = vsyncpa [#allocation4], 1
    %s481 = scalar_lea.sflag [#allocation4], 1
    %482 = vsyncpa %s481, 1

// kernel: transformer_model.16
$region0: #{transformer_model.16}
  #allocation0 [shape = 'u32[]', space=smem, size = 0x4, offset = 0x4, fixed_abs, tag = 'smem constant byte address 0x4 - core index']
  #allocation1 [shape = 'u32[72,128]{1,0:T(1,128)}', space=vmem, size = 0x9000, scoped, tag = 'internal scratch']
  #allocation2 [shape = 'f32[32,256]{1,0:T(8,128)}', space=vmem, size = 0x8000, scoped, tag = 'scratch operand']
  %s0 = inlined_call_operand.vmem [shape: bf16[32,128], index: 0, kind: input, shape index: {}]
  %s1 = inlined_call_operand.hbm [shape: bf16[128,256], index: 1, kind: input, shape index: {}]
  %s2 = inlined_call_operand.hbm [shape: f32[1,256], index: 2, kind: input, shape index: {}]
  %s3 = inlined_call_operand.vmem [shape: bf16[32,256], index: 3, kind: output, shape index: {}]
  %s4 = sld [smem:[#allocation0]]
  $region38: #{transformer_model.16} parent=0
    _
  %s6 = ssub.s32 1, %s4
  %s7 = scalar_select 0, %s6, %s4
  $region1: #{transformer_model.16} parent=0
    #allocation3 [shape = 'u8[65536]{0}', space=vmem, size = 0x10000, scoped, tag = 'input window, operand 1, single buffered']
    #allocation4 [shape = 's32[1]{0}', space=sflag, size = 0x4, scoped, tag = 'scoped memory for transformer_model.16']
    #allocation5 [shape = 'u8[1024]{0}', space=vmem, size = 0x400, scoped, tag = 'input window, operand 2, single buffered']
    #allocation6 [shape = 's32[1]{0}', space=sflag, size = 0x4, scoped, tag = 'scoped memory for transformer_model.16']
    %8 = vsyncpa [#allocation4], 0
    %9 = vsyncpa [#allocation6], 0
    // Predicated region
    $region2: #{transformer_model.16} parent=1 // pred_check
      _
    $region3: #{transformer_model.16} parent=1 // pred_check_branch
      %11 = sbr.rel (0) target = $region5
    $region4: #{transformer_model.16} parent=1 // pred_region
      _
    $region5: #{transformer_model.16} parent=1 // pred_fallthru
      _
    // Predicated region
    $region6: #{transformer_model.16} parent=1 // pred_check
      _
    $region7: #{transformer_model.16} parent=1 // pred_check_branch
      %13 = sbr.rel (0) target = $region9
    $region8: #{transformer_model.16} parent=1 // pred_region
      %15 = vsyncadd [#allocation4], 0
      %s16 = sshll.u32 %s1, 4
      %s17 = int_to_ptr.hbm [resolvable:$true] %s16
      %s18 = sshll.u32 [#allocation3], 4
      %s19 = int_to_ptr.vmem [resolvable:$true] %s18
      %24 = dma.hbm_to_vmem [thread:$0]  %s17, 2048, %s19, [#allocation4], 128, 128, 8
    $region9: #{transformer_model.16} parent=1 // pred_fallthru
      _
    // Predicated region
    $region10: #{transformer_model.16} parent=1 // pred_check
      _
    $region11: #{transformer_model.16} parent=1 // pred_check_branch
      %26 = sbr.rel (0) target = $region13
    $region12: #{transformer_model.16} parent=1 // pred_region
      %28 = vsyncadd [#allocation6], 0
      %s30 = sshll.u32 %s2, 4
      %s31 = int_to_ptr.hbm [resolvable:$true] %s30
      %s32 = sshll.u32 [#allocation5], 4
      %s33 = int_to_ptr.vmem [resolvable:$true] %s32
      %35 = dma.hbm_to_vmem [thread:$0]  %s31, 32, %s33, [#allocation6]
    $region13: #{transformer_model.16} parent=1 // pred_fallthru
      _
    // Predicated region
    $region14: #{transformer_model.16} parent=1 // pred_check
      _
    $region15: #{transformer_model.16} parent=1 // pred_check_branch
      %37 = sbr.rel (0) target = $region17
    $region16: #{transformer_model.16} parent=1 // pred_region
      %39 = dma.done [#allocation4], 2048
    $region17: #{transformer_model.16} parent=1 // pred_fallthru
      _
    // Predicated region
    $region18: #{transformer_model.16} parent=1 // pred_check
      _
    $region19: #{transformer_model.16} parent=1 // pred_check_branch
      %41 = sbr.rel (0) target = $region21
    $region20: #{transformer_model.16} parent=1 // pred_region
      %43 = dma.done [#allocation6], 32
    $region21: #{transformer_model.16} parent=1 // pred_fallthru
      _
    %p44 = scmp.eq.s32.totalorder 0, 0
    // Predicated region
    $region22: #{transformer_model.16} parent=1 // pred_check
      %p45 = pneg %p44
    $region23: #{transformer_model.16} parent=1 // pred_check_branch
      %47 = sbr.rel (%p45) target = $region25
    $region24: #{transformer_model.16} parent=1 // pred_region
      %48 = vst [vmem:[#allocation2] sm:$0xff] 0.0
      %49 = vst [vmem:[#allocation2 + $0x8] sm:$0xff] 0.0
      %50 = vst [vmem:[#allocation2 + $0x10] sm:$0xff] 0.0
      %51 = vst [vmem:[#allocation2 + $0x18] sm:$0xff] 0.0
      %52 = vst [vmem:[#allocation2 + $0x20] sm:$0xff] 0.0
      %53 = vst [vmem:[#allocation2 + $0x28] sm:$0xff] 0.0
      %54 = vst [vmem:[#allocation2 + $0x30] sm:$0xff] 0.0
      %55 = vst [vmem:[#allocation2 + $0x38] sm:$0xff] 0.0
    $region25: #{transformer_model.16} parent=1 // pred_fallthru
      _
    %v56 = vld [vmem:[#allocation2] sm:$0xff]
    %v57 = vld [vmem:[#allocation2 + $0x8] sm:$0xff]
    %v58 = vld [vmem:[#allocation2 + $0x10] sm:$0xff]
    %v59 = vld [vmem:[#allocation2 + $0x18] sm:$0xff]
    %v60 = vld [vmem:[#allocation2 + $0x20] sm:$0xff]
    %v61 = vld [vmem:[#allocation2 + $0x28] sm:$0xff]
    %v62 = vld [vmem:[#allocation2 + $0x30] sm:$0xff]
    %v63 = vld [vmem:[#allocation2 + $0x38] sm:$0xff]
    %v64 = vld [vmem:[%s0] sm:$0xf]
    %v65 = vld [vmem:[%s0 + $0x4] sm:$0xf]
    %v66 = vld [vmem:[%s0 + $0x8] sm:$0xf]
    %v67 = vld [vmem:[%s0 + $0xc] sm:$0xf]
    %v68 = vld [vmem:[#allocation3] sm:$0xff]
    %v69 = vld [vmem:[#allocation3 + $0x8] sm:$0xff]
    %v70 = vld [vmem:[#allocation3 + $0x10] sm:$0xff]
    %v71 = vld [vmem:[#allocation3 + $0x18] sm:$0xff]
    %v72 = vld [vmem:[#allocation3 + $0x20] sm:$0xff]
    %v73 = vld [vmem:[#allocation3 + $0x28] sm:$0xff]
    %v74 = vld [vmem:[#allocation3 + $0x30] sm:$0xff]
    %v75 = vld [vmem:[#allocation3 + $0x38] sm:$0xff]
    %v76 = vld [vmem:[#allocation3 + $0x40] sm:$0xff]
    %v77 = vld [vmem:[#allocation3 + $0x48] sm:$0xff]
    %v78 = vld [vmem:[#allocation3 + $0x50] sm:$0xff]
    %v79 = vld [vmem:[#allocation3 + $0x58] sm:$0xff]
    %v80 = vld [vmem:[#allocation3 + $0x60] sm:$0xff]
    %v81 = vld [vmem:[#allocation3 + $0x68] sm:$0xff]
    %v82 = vld [vmem:[#allocation3 + $0x70] sm:$0xff]
    %v83 = vld [vmem:[#allocation3 + $0x78] sm:$0xff]
    %v88 = vunpack.c.l.b16 %v64
    %v89 = vunpack.c.l.b16 %v65
    %v90 = vunpack.c.l.b16 %v66
    %v91 = vunpack.c.l.b16 %v67
    %v92 = vpack.c.b16 %v89, %v88
    %v93 = vpack.c.b16 %v91, %v90
    %v112 = vunpack.c.l.b16 %v68
    %v113 = vunpack.c.h.b16 %v68
    %v114 = vunpack.c.l.b16 %v69
    %v115 = vunpack.c.h.b16 %v69
    %v116 = vunpack.c.l.b16 %v70
    %v117 = vunpack.c.h.b16 %v70
    %v118 = vunpack.c.l.b16 %v71
    %v119 = vunpack.c.h.b16 %v71
    %v120 = vunpack.c.l.b16 %v72
    %v121 = vunpack.c.h.b16 %v72
    %v122 = vunpack.c.l.b16 %v73
    %v123 = vunpack.c.h.b16 %v73
    %v124 = vunpack.c.l.b16 %v74
    %v125 = vunpack.c.h.b16 %v74
    %v126 = vunpack.c.l.b16 %v75
    %v127 = vunpack.c.h.b16 %v75
    %v128 = vunpack.c.l.b16 %v76
    %v129 = vunpack.c.h.b16 %v76
    %v130 = vunpack.c.l.b16 %v77
    %v131 = vunpack.c.h.b16 %v77
    %v132 = vunpack.c.l.b16 %v78
    %v133 = vunpack.c.h.b16 %v78
    %v134 = vunpack.c.l.b16 %v79
    %v135 = vunpack.c.h.b16 %v79
    %v136 = vunpack.c.l.b16 %v80
    %v137 = vunpack.c.h.b16 %v80
    %v138 = vunpack.c.l.b16 %v81
    %v139 = vunpack.c.h.b16 %v81
    %v140 = vunpack.c.l.b16 %v82
    %v141 = vunpack.c.h.b16 %v82
    %v142 = vunpack.c.l.b16 %v83
    %v143 = vunpack.c.h.b16 %v83
    %v144 = vpack.c.b16 %v114, %v112
    %v145 = vpack.c.b16 %v115, %v113
    %v146 = vpack.c.b16 %v118, %v116
    %v147 = vpack.c.b16 %v119, %v117
    %v148 = vpack.c.b16 %v122, %v120
    %v149 = vpack.c.b16 %v123, %v121
    %v150 = vpack.c.b16 %v126, %v124
    %v151 = vpack.c.b16 %v127, %v125
    %v152 = vpack.c.b16 %v130, %v128
    %v153 = vpack.c.b16 %v131, %v129
    %v154 = vpack.c.b16 %v134, %v132
    %v155 = vpack.c.b16 %v135, %v133
    %v156 = vpack.c.b16 %v138, %v136
    %v157 = vpack.c.b16 %v139, %v137
    %v158 = vpack.c.b16 %v142, %v140
    %v159 = vpack.c.b16 %v143, %v141
    %176 = vmatpush.bf16.msra.mxu0 %v158
    %177 = vmatpush.bf16.msra.mxu0 %v156
    %178 = vmatpush.bf16.msra.mxu0 %v154
    %179 = vmatpush.bf16.msra.mxu0 %v152
    %180 = vmatpush.bf16.msra.mxu0 %v150
    %181 = vmatpush.bf16.msra.mxu0 %v148
    %182 = vmatpush.bf16.msra.mxu0 %v146
    %183 = vmatpush.bf16.msra.mxu0 %v144
    %184 = vmatmul.bf16.gmra.mxu0 %v92
    %v185 = vpop.f32.mrf.mxu0
    %v186 = vadd.f32 0.0, %v185
    %v187 = vpop.f32.mrf.mxu0
    %v188 = vadd.f32 0.0, %v187
    %189 = vmatmul.bf16.gmra.mxu0 %v93
    %v190 = vpop.f32.mrf.mxu0
    %v191 = vadd.f32 0.0, %v190
    %v192 = vpop.f32.mrf.mxu0
    %v193 = vadd.f32 0.0, %v192
    %194 = vdwg.mxu0
    %195 = vmatpush.bf16.msra.mxu0 %v159
    %196 = vmatpush.bf16.msra.mxu0 %v157
    %197 = vmatpush.bf16.msra.mxu0 %v155
    %198 = vmatpush.bf16.msra.mxu0 %v153
    %199 = vmatpush.bf16.msra.mxu0 %v151
    %200 = vmatpush.bf16.msra.mxu0 %v149
    %201 = vmatpush.bf16.msra.mxu0 %v147
    %202 = vmatpush.bf16.msra.mxu0 %v145
    %203 = vmatmul.bf16.gmra.mxu0 %v92
    %v204 = vpop.f32.mrf.mxu0
    %v205 = vadd.f32 0.0, %v204
    %v206 = vpop.f32.mrf.mxu0
    %v207 = vadd.f32 0.0, %v206
    %208 = vmatmul.bf16.gmra.mxu0 %v93
    %v209 = vpop.f32.mrf.mxu0
    %v210 = vadd.f32 0.0, %v209
    %v211 = vpop.f32.mrf.mxu0
    %v212 = vadd.f32 0.0, %v211
    %213 = vdwg.mxu0
    %v214 = vadd.f32 %v56, %v186
    %v215 = vadd.f32 %v57, %v205
    %v216 = vadd.f32 %v58, %v188
    %v217 = vadd.f32 %v59, %v207
    %v218 = vadd.f32 %v60, %v191
    %v219 = vadd.f32 %v61, %v210
    %v220 = vadd.f32 %v62, %v193
    %v221 = vadd.f32 %v63, %v212
    %222 = vst [vmem:[#allocation2] sm:$0xff] %v214
    %223 = vst [vmem:[#allocation2 + $0x8] sm:$0xff] %v215
    %224 = vst [vmem:[#allocation2 + $0x10] sm:$0xff] %v216
    %225 = vst [vmem:[#allocation2 + $0x18] sm:$0xff] %v217
    %226 = vst [vmem:[#allocation2 + $0x20] sm:$0xff] %v218
    %227 = vst [vmem:[#allocation2 + $0x28] sm:$0xff] %v219
    %228 = vst [vmem:[#allocation2 + $0x30] sm:$0xff] %v220
    %229 = vst [vmem:[#allocation2 + $0x38] sm:$0xff] %v221
    // Predicated region
    $region26: #{transformer_model.16} parent=1 // pred_check
      %p230 = pneg %p44
    $region27: #{transformer_model.16} parent=1 // pred_check_branch
      %232 = sbr.rel (%p230) target = $region29
    $region28: #{transformer_model.16} parent=1 // pred_region
      %v233 = vld [vmem:[#allocation2] sm:$0xff]
      %v234 = vld [vmem:[#allocation2 + $0x8] sm:$0xff]
      %v235 = vld [vmem:[#allocation2 + $0x10] sm:$0xff]
      %v236 = vld [vmem:[#allocation2 + $0x18] sm:$0xff]
      %v237 = vld [vmem:[#allocation2 + $0x20] sm:$0xff]
      %v238 = vld [vmem:[#allocation2 + $0x28] sm:$0xff]
      %v239 = vld [vmem:[#allocation2 + $0x30] sm:$0xff]
      %v240 = vld [vmem:[#allocation2 + $0x38] sm:$0xff]
      %v241 = vld [vmem:[#allocation5] sm:$0x3]
      %v243 = vperm.slane %v241, 0
      %v244 = vperm.slane %v241, 1
      %v247 = vadd.f32 %v233, %v243
      %v248 = vadd.f32 %v234, %v244
      %v249 = vadd.f32 %v235, %v243
      %v250 = vadd.f32 %v236, %v244
      %v251 = vadd.f32 %v237, %v243
      %v252 = vadd.f32 %v238, %v244
      %v253 = vadd.f32 %v239, %v243
      %v254 = vadd.f32 %v240, %v244
      %v255 = vpack.c.bf16 %v248, %v247
      %v256 = vpack.c.bf16 %v250, %v249
      %v257 = vpack.c.bf16 %v252, %v251
      %v258 = vpack.c.bf16 %v254, %v253
      %259 = vst [vmem:[%s3] sm:$0xff] %v255
      %260 = vst [vmem:[%s3 + $0x8] sm:$0xff] %v256
      %261 = vst [vmem:[%s3 + $0x10] sm:$0xff] %v257
      %262 = vst [vmem:[%s3 + $0x18] sm:$0xff] %v258
    $region29: #{transformer_model.16} parent=1 // pred_fallthru
      _
    // Predicated region
    $region30: #{transformer_model.16} parent=1 // pred_check
      _
    $region31: #{transformer_model.16} parent=1 // pred_check_branch
      %264 = sbr.rel (0) target = $region33
    $region32: #{transformer_model.16} parent=1 // pred_region
      _
    $region33: #{transformer_model.16} parent=1 // pred_fallthru
      _
    // Predicated region
    $region34: #{transformer_model.16} parent=1 // pred_check
      _
    $region35: #{transformer_model.16} parent=1 // pred_check_branch
      %266 = sbr.rel (0) target = $region37
    $region36: #{transformer_model.16} parent=1 // pred_region
      _
    $region37: #{transformer_model.16} parent=1 // pred_fallthru
      _
    %267 = vsyncpa [#allocation4], 1
    %268 = vsyncpa [#allocation6], 1

// kernel: transformer_model.14
$region0: #{transformer_model.14}
  #allocation0 [shape = 'u32[]', space=smem, size = 0x4, offset = 0x4, fixed_abs, tag = 'smem constant byte address 0x4 - core index']
  #allocation1 [shape = 'u32[72,128]{1,0:T(1,128)}', space=vmem, size = 0x9000, scoped, tag = 'internal scratch']
  #allocation2 [shape = 'bf16[16,128]{1,0:T(8,128)(2,1)}', space=vmem, size = 0x1000, scoped, tag = 'scratch operand']
  %s0 = inlined_call_operand.vmem [shape: bf16[2,16,384], index: 0, kind: input, shape index: {}, may-alias: {0,1,2}]
  %s1 = inlined_call_operand.vmem [shape: bf16[2,16,384], index: 1, kind: input, shape index: {}, may-alias: {0,1,2}]
  %s2 = inlined_call_operand.vmem [shape: bf16[2,16,384], index: 2, kind: input, shape index: {}, may-alias: {0,1,2}]
  %s3 = inlined_call_operand.vmem [shape: bf16[128,128], index: 3, kind: input, shape index: {}]
  %s4 = inlined_call_operand.vmem [shape: f32[1,128], index: 4, kind: input, shape index: {}]
  %s5 = inlined_call_operand.vmem [shape: bf16[2,16,128], index: 5, kind: input, shape index: {}]
  %s6 = inlined_call_operand.vmem [shape: f32[1,128], index: 6, kind: input, shape index: {}]
  %s7 = inlined_call_operand.hbm [shape: f32[1,128], index: 7, kind: input, shape index: {}]
  %s8 = inlined_call_operand.vmem [shape: bf16[2,16,128], index: 8, kind: output, shape index: {0}]
  %s9 = inlined_call_operand.hbm [shape: f32[2,16,16], index: 9, kind: output, shape index: {1}]
  %10 = xla_tuple %s8, %s9
  %s11 = sld [smem:[#allocation0]]
  $region200: #{transformer_model.14} parent=0
    _
  %s13 = ssub.s32 1, %s11
  %s14 = scalar_select 0, %s13, %s11
  $region1: #{transformer_model.14} parent=0
    #allocation3 [shape = 'u8[8192]{0}', space=vmem, size = 0x2000, scoped, tag = 'input window, operand 0']
    #allocation4 [shape = 'u8[8192]{0}', space=vmem, size = 0x2000, scoped, tag = 'input window, operand 1']
    #allocation5 [shape = 'u8[8192]{0}', space=vmem, size = 0x2000, scoped, tag = 'input window, operand 2']
    #allocation6 [shape = 'u8[512]{0}', space=vmem, size = 0x400, scoped, tag = 'input window, operand 7, single buffered']
    #allocation7 [shape = 's32[2]{0}', space=sflag, size = 0x8, scoped, tag = 'scoped memory for transformer_model.14']
    #allocation8 [shape = 's32[2]{0}', space=sflag, size = 0x8, scoped, tag = 'scoped memory for transformer_model.14']
    #allocation9 [shape = 'u8[16384]{0}', space=vmem, size = 0x4000, scoped, tag = 'output window, operand 1']
    %15 = vsyncpa [#allocation7], 0
    %16 = vsyncpa [#allocation8], 0
    %s17 = scalar_lea.sflag [#allocation8], 1
    %18 = vsyncpa %s17, 0
    loop: start=0, step=1, limit=4
    $region2: #{transformer_model.14} parent=1 // loop_pre_header
      _
    $region3: #{transformer_model.14} parent=1 // loop_header
      %s20 = sphi 0, %s24
      %p21 = scmp.ge.s32.totalorder %s20, 4
      %s27 = sphi 0, %s39
      %s28 = sphi 0, %s35
      %s29 = sphi 0, %s27
      %s30 = sphi 0, %s28
      %s31 = sphi 0, %s29
      %s32 = sphi 0, %s30
      %s44 = sphi 0, %s46
      %s47 = sphi 0, %s44
      %s48 = sphi 0, %s47
      %s64 = sphi 0, %s48
      %s70 = sphi 0, %s72
      %s73 = sphi 0, %s70
      %s74 = sphi 0, %s73
      %s90 = sphi 0, %s74
      %s96 = sphi 0, %s98
      %s99 = sphi 0, %s96
      %s100 = sphi 0, %s99
      %s116 = sphi 0, %s100
      %s120 = sphi 0, %s120
      %s122 = sphi 0, %s120
      %s123 = sphi 0, %s122
      %s137 = sphi 0, %s123
      %s141 = sphi 0, %s141
      %s143 = sphi 0, %s141
      %s144 = sphi 0, %s143
      %s158 = sphi 0, %s144
      %s166 = sphi 0, %s168
      %s169 = sphi 0, %s166
      %s170 = sphi 0, %s169
      %s186 = sphi 0, %s170
      %s190 = sphi 0, %s190
      %s192 = sphi 0, %s190
      %s193 = sphi 0, %s192
      %s207 = sphi 0, %s193
      %s211 = sphi 0, %s211
      %s213 = sphi 0, %s211
      %s214 = sphi 0, %s213
      %s228 = sphi 0, %s214
      %s236 = sphi 0, %s238
      %s239 = sphi 0, %s236
      %s240 = sphi 0, %s239
      %s256 = sphi 0, %s240
      %s264 = sphi 0, %s266
      %s267 = sphi 0, %s264
      %s268 = sphi 0, %s267
      %s284 = sphi 0, %s268
    $region4: #{transformer_model.14} parent=1 // loop_header_branch
      %23 = sbr.rel (%p21) target = $region8
    $region5: #{transformer_model.14} parent=1 // loop_body
      %s25 = ssub.s32 %s20, 1
      %s26 = ssub.s32 %s20, 2
      %s33 = sadd.s32 1, %s28
      %p34 = scmp.ge.s32.totalorder %s33, 1
      %s35 = scalar_select %p34, 0, %s33
      %s36 = sadd.s32 1, %s27
      %s37 = scalar_select %p34, %s36, %s27
      %p38 = scmp.ge.s32.totalorder %s37, 2
      %s39 = scalar_select %p38, 0, %s37
      %s40 = ssub.s32 %s27, %s39
      %s41 = ssub.s32 %s28, %s35
      %s42 = sor.u32 %s40, %s41
      %p43 = scmp.eq.s32.totalorder %s42, 0
      %s45 = sadd.s32 %s44, 1
      %s46 = scalar_select %p43, %s44, %s45
      %p49 = pneg %p43
      %p50 = scmp.eq.s32.totalorder %s20, 1
      %p51 = por %p49, %p50
      %p52 = scmp.ne.s32.totalorder %s44, %s47
      %p53 = scmp.eq.s32.totalorder %s20, 0
      %p54 = por %p52, %p53
      %p55 = scmp.ne.s32.totalorder %s44, %s47
      %p56 = scmp.eq.s32.totalorder %s25, 1
      %p57 = por %p55, %p56
      %p58 = scmp.ne.s32.totalorder %s47, %s48
      %p59 = scmp.eq.s32.totalorder %s25, 0
      %p60 = por %p58, %p59
      %p61 = scmp.ne.s32.totalorder %s47, %s48
      %p62 = scmp.eq.s32.totalorder %s26, 1
      %p63 = por %p61, %p62
      %p65 = scmp.ne.s32.totalorder %s48, %s64
      %p66 = scmp.eq.s32.totalorder %s26, 0
      %p67 = por %p65, %p66
      %s68 = ssub.s32 %s27, %s39
      %p69 = scmp.eq.s32.totalorder %s68, 0
      %s71 = sadd.s32 %s70, 1
      %s72 = scalar_select %p69, %s70, %s71
      %p75 = pneg %p69
      %p76 = scmp.eq.s32.totalorder %s20, 1
      %p77 = por %p75, %p76
      %p78 = scmp.ne.s32.totalorder %s70, %s73
      %p79 = scmp.eq.s32.totalorder %s20, 0
      %p80 = por %p78, %p79
      %p81 = scmp.ne.s32.totalorder %s70, %s73
      %p82 = scmp.eq.s32.totalorder %s25, 1
      %p83 = por %p81, %p82
      %p84 = scmp.ne.s32.totalorder %s73, %s74
      %p85 = scmp.eq.s32.totalorder %s25, 0
      %p86 = por %p84, %p85
      %p87 = scmp.ne.s32.totalorder %s73, %s74
      %p88 = scmp.eq.s32.totalorder %s26, 1
      %p89 = por %p87, %p88
      %p91 = scmp.ne.s32.totalorder %s74, %s90
      %p92 = scmp.eq.s32.totalorder %s26, 0
      %p93 = por %p91, %p92
      %s94 = ssub.s32 %s27, %s39
      %p95 = scmp.eq.s32.totalorder %s94, 0
      %s97 = sadd.s32 %s96, 1
      %s98 = scalar_select %p95, %s96, %s97
      %p101 = pneg %p95
      %p102 = scmp.eq.s32.totalorder %s20, 1
      %p103 = por %p101, %p102
      %p104 = scmp.ne.s32.totalorder %s96, %s99
      %p105 = scmp.eq.s32.totalorder %s20, 0
      %p106 = por %p104, %p105
      %p107 = scmp.ne.s32.totalorder %s96, %s99
      %p108 = scmp.eq.s32.totalorder %s25, 1
      %p109 = por %p107, %p108
      %p110 = scmp.ne.s32.totalorder %s99, %s100
      %p111 = scmp.eq.s32.totalorder %s25, 0
      %p112 = por %p110, %p111
      %p113 = scmp.ne.s32.totalorder %s99, %s100
      %p114 = scmp.eq.s32.totalorder %s26, 1
      %p115 = por %p113, %p114
      %p117 = scmp.ne.s32.totalorder %s100, %s116
      %p118 = scmp.eq.s32.totalorder %s26, 0
      %p119 = por %p117, %p118
      %s121 = sadd.s32 %s120, 1
      %p124 = scmp.eq.s32.totalorder %s20, 1
      %p125 = scmp.ne.s32.totalorder %s120, %s122
      %p126 = scmp.eq.s32.totalorder %s20, 0
      %p127 = por %p125, %p126
      %p128 = scmp.ne.s32.totalorder %s120, %s122
      %p129 = scmp.eq.s32.totalorder %s25, 1
      %p130 = por %p128, %p129
      %p131 = scmp.ne.s32.totalorder %s122, %s123
      %p132 = scmp.eq.s32.totalorder %s25, 0
      %p133 = por %p131, %p132
      %p134 = scmp.ne.s32.totalorder %s122, %s123
      %p135 = scmp.eq.s32.totalorder %s26, 1
      %p136 = por %p134, %p135
      %p138 = scmp.ne.s32.totalorder %s123, %s137
      %p139 = scmp.eq.s32.totalorder %s26, 0
      %p140 = por %p138, %p139
      %s142 = sadd.s32 %s141, 1
      %p145 = scmp.eq.s32.totalorder %s20, 1
      %p146 = scmp.ne.s32.totalorder %s141, %s143
      %p147 = scmp.eq.s32.totalorder %s20, 0
      %p148 = por %p146, %p147
      %p149 = scmp.ne.s32.totalorder %s141, %s143
      %p150 = scmp.eq.s32.totalorder %s25, 1
      %p151 = por %p149, %p150
      %p152 = scmp.ne.s32.totalorder %s143, %s144
      %p153 = scmp.eq.s32.totalorder %s25, 0
      %p154 = por %p152, %p153
      %p155 = scmp.ne.s32.totalorder %s143, %s144
      %p156 = scmp.eq.s32.totalorder %s26, 1
      %p157 = por %p155, %p156
      %p159 = scmp.ne.s32.totalorder %s144, %s158
      %p160 = scmp.eq.s32.totalorder %s26, 0
      %p161 = por %p159, %p160
      %s162 = ssub.s32 %s27, %s39
      %s163 = ssub.s32 %s28, %s35
      %s164 = sor.u32 %s162, %s163
      %p165 = scmp.eq.s32.totalorder %s164, 0
      %s167 = sadd.s32 %s166, 1
      %s168 = scalar_select %p165, %s166, %s167
      %p171 = pneg %p165
      %p172 = scmp.eq.s32.totalorder %s20, 1
      %p173 = por %p171, %p172
      %p174 = scmp.ne.s32.totalorder %s166, %s169
      %p175 = scmp.eq.s32.totalorder %s20, 0
      %p176 = por %p174, %p175
      %p177 = scmp.ne.s32.totalorder %s166, %s169
      %p178 = scmp.eq.s32.totalorder %s25, 1
      %p179 = por %p177, %p178
      %p180 = scmp.ne.s32.totalorder %s169, %s170
      %p181 = scmp.eq.s32.totalorder %s25, 0
      %p182 = por %p180, %p181
      %p183 = scmp.ne.s32.totalorder %s169, %s170
      %p184 = scmp.eq.s32.totalorder %s26, 1
      %p185 = por %p183, %p184
      %p187 = scmp.ne.s32.totalorder %s170, %s186
      %p188 = scmp.eq.s32.totalorder %s26, 0
      %p189 = por %p187, %p188
      %s191 = sadd.s32 %s190, 1
      %p194 = scmp.eq.s32.totalorder %s20, 1
      %p195 = scmp.ne.s32.totalorder %s190, %s192
      %p196 = scmp.eq.s32.totalorder %s20, 0
      %p197 = por %p195, %p196
      %p198 = scmp.ne.s32.totalorder %s190, %s192
      %p199 = scmp.eq.s32.totalorder %s25, 1
      %p200 = por %p198, %p199
      %p201 = scmp.ne.s32.totalorder %s192, %s193
      %p202 = scmp.eq.s32.totalorder %s25, 0
      %p203 = por %p201, %p202
      %p204 = scmp.ne.s32.totalorder %s192, %s193
      %p205 = scmp.eq.s32.totalorder %s26, 1
      %p206 = por %p204, %p205
      %p208 = scmp.ne.s32.totalorder %s193, %s207
      %p209 = scmp.eq.s32.totalorder %s26, 0
      %p210 = por %p208, %p209
      %s212 = sadd.s32 %s211, 1
      %p215 = scmp.eq.s32.totalorder %s20, 1
      %p216 = scmp.ne.s32.totalorder %s211, %s213
      %p217 = scmp.eq.s32.totalorder %s20, 0
      %p218 = por %p216, %p217
      %p219 = scmp.ne.s32.totalorder %s211, %s213
      %p220 = scmp.eq.s32.totalorder %s25, 1
      %p221 = por %p219, %p220
      %p222 = scmp.ne.s32.totalorder %s213, %s214
      %p223 = scmp.eq.s32.totalorder %s25, 0
      %p224 = por %p222, %p223
      %p225 = scmp.ne.s32.totalorder %s213, %s214
      %p226 = scmp.eq.s32.totalorder %s26, 1
      %p227 = por %p225, %p226
      %p229 = scmp.ne.s32.totalorder %s214, %s228
      %p230 = scmp.eq.s32.totalorder %s26, 0
      %p231 = por %p229, %p230
      %s232 = ssub.s32 %s27, %s39
      %s233 = ssub.s32 %s28, %s35
      %s234 = sor.u32 %s232, %s233
      %p235 = scmp.eq.s32.totalorder %s234, 0
      %s237 = sadd.s32 %s236, 1
      %s238 = scalar_select %p235, %s236, %s237
      %p241 = pneg %p235
      %p242 = scmp.eq.s32.totalorder %s20, 1
      %p243 = por %p241, %p242
      %p244 = scmp.ne.s32.totalorder %s236, %s239
      %p245 = scmp.eq.s32.totalorder %s20, 0
      %p246 = por %p244, %p245
      %p247 = scmp.ne.s32.totalorder %s236, %s239
      %p248 = scmp.eq.s32.totalorder %s25, 1
      %p249 = por %p247, %p248
      %p250 = scmp.ne.s32.totalorder %s239, %s240
      %p251 = scmp.eq.s32.totalorder %s25, 0
      %p252 = por %p250, %p251
      %p253 = scmp.ne.s32.totalorder %s239, %s240
      %p254 = scmp.eq.s32.totalorder %s26, 1
      %p255 = por %p253, %p254
      %p257 = scmp.ne.s32.totalorder %s240, %s256
      %p258 = scmp.eq.s32.totalorder %s26, 0
      %p259 = por %p257, %p258
      %s260 = ssub.s32 %s27, %s39
      %s261 = ssub.s32 %s28, %s35
      %s262 = sor.u32 %s260, %s261
      %p263 = scmp.eq.s32.totalorder %s262, 0
      %s265 = sadd.s32 %s264, 1
      %s266 = scalar_select %p263, %s264, %s265
      %p269 = pneg %p263
      %p270 = scmp.eq.s32.totalorder %s20, 1
      %p271 = por %p269, %p270
      %p272 = scmp.ne.s32.totalorder %s264, %s267
      %p273 = scmp.eq.s32.totalorder %s20, 0
      %p274 = por %p272, %p273
      %p275 = scmp.ne.s32.totalorder %s264, %s267
      %p276 = scmp.eq.s32.totalorder %s25, 1
      %p277 = por %p275, %p276
      %p278 = scmp.ne.s32.totalorder %s267, %s268
      %p279 = scmp.eq.s32.totalorder %s25, 0
      %p280 = por %p278, %p279
      %p281 = scmp.ne.s32.totalorder %s267, %s268
      %p282 = scmp.eq.s32.totalorder %s26, 1
      %p283 = por %p281, %p282
      %p285 = scmp.ne.s32.totalorder %s268, %s284
      %p286 = scmp.eq.s32.totalorder %s26, 0
      %p287 = por %p285, %p286
      %p288 = scmp.le.s32.totalorder 1, %s20
      %p289 = scmp.lt.s32.totalorder %s20, 3
      %p290 = pnand %p288, %p289
      %p291 = pneg %p290
      // Predicated region
      $region9: #{transformer_model.14} parent=5 // pred_check
        _
      $region10: #{transformer_model.14} parent=5 // pred_check_branch
        %293 = sbr.rel (%p290) target = $region12
      $region11: #{transformer_model.14} parent=5 // pred_region
        %s294 = ssub.s32 %s20, 1
        // Predicated region
        $region13: #{transformer_model.14} parent=11 // pred_check
          %p295 = pneg %p133
        $region14: #{transformer_model.14} parent=11 // pred_check_branch
          %297 = sbr.rel (%p295) target = $region16
        $region15: #{transformer_model.14} parent=11 // pred_region
          _
        $region16: #{transformer_model.14} parent=11 // pred_fallthru
          _
        // Predicated region
        $region17: #{transformer_model.14} parent=11 // pred_check
          %p298 = pneg %p154
        $region18: #{transformer_model.14} parent=11 // pred_check_branch
          %300 = sbr.rel (%p298) target = $region20
        $region19: #{transformer_model.14} parent=11 // pred_region
          _
        $region20: #{transformer_model.14} parent=11 // pred_fallthru
          _
        // Predicated region
        $region21: #{transformer_model.14} parent=11 // pred_check
          %p301 = pneg %p203
        $region22: #{transformer_model.14} parent=11 // pred_check_branch
          %303 = sbr.rel (%p301) target = $region24
        $region23: #{transformer_model.14} parent=11 // pred_region
          _
        $region24: #{transformer_model.14} parent=11 // pred_fallthru
          _
        // Predicated region
        $region25: #{transformer_model.14} parent=11 // pred_check
          %p304 = pneg %p224
        $region26: #{transformer_model.14} parent=11 // pred_check_branch
          %306 = sbr.rel (%p304) target = $region28
        $region27: #{transformer_model.14} parent=11 // pred_region
          %308 = vsyncadd [#allocation7], 0
          %s310 = sshll.u32 %s7, 4
          %s311 = int_to_ptr.hbm [resolvable:$true] %s310
          %s312 = sshll.u32 [#allocation6], 4
          %s313 = int_to_ptr.vmem [resolvable:$true] %s312
          %315 = dma.hbm_to_vmem [thread:$0]  %s311, 16, %s313, [#allocation7]
        $region28: #{transformer_model.14} parent=11 // pred_fallthru
          _
      $region12: #{transformer_model.14} parent=5 // pred_fallthru
        _
      %p316 = scmp.lt.s32.totalorder %s20, 2
      // Predicated region
      $region29: #{transformer_model.14} parent=5 // pred_check
        %p317 = pneg %p316
      $region30: #{transformer_model.14} parent=5 // pred_check_branch
        %319 = sbr.rel (%p317) target = $region32
      $region31: #{transformer_model.14} parent=5 // pred_region
        // Predicated region
        $region33: #{transformer_model.14} parent=31 // pred_check
          %p320 = pneg %p54
        $region34: #{transformer_model.14} parent=31 // pred_check_branch
          %322 = sbr.rel (%p320) target = $region36
        $region35: #{transformer_model.14} parent=31 // pred_region
          %s323 = sand.u32 %s44, 1
          %s324 = sand.u32 %s44, 1
          %s325 = smul.addr %s324, 8
          %s326 = scalar_lea.vmem [#allocation3], %s325
          %s327 = smul.u32 2, %s28
          %s328 = smul.addr %s327, 3
          %s329 = smul.addr %s27, 6
          %s330 = sadd.s32 %s328, %s329
          %s331 = smul.addr %s330, 4
          %s332 = scalar_lea.vmem %s0, %s331
          // Predicated region
          $region37: #{transformer_model.14} parent=35 // pred_check
            _
          $region38: #{transformer_model.14} parent=35 // pred_check_branch
            %334 = sbr.rel (0) target = $region40
          $region39: #{transformer_model.14} parent=35 // pred_region
            // Predicated region
            $region41: #{transformer_model.14} parent=39 // pred_check
              _
            $region42: #{transformer_model.14} parent=39 // pred_check_branch
              %336 = sbr.rel target = $region44
            $region43: #{transformer_model.14} parent=39 // pred_region
              // Predicated region
              $region56: #{transformer_model.14} parent=43 // pred_check
                _
              $region57: #{transformer_model.14} parent=43 // pred_check_branch
                %354 = sbr.rel (0) target = $region59
              $region58: #{transformer_model.14} parent=43 // pred_region
                loop: start=0, step=1, limit=1
                $region60: #{transformer_model.14} parent=58 // loop_pre_header
                  _
                $region61: #{transformer_model.14} parent=58 // loop_header
                  %s356 = sphi 0, %s360
                  %p357 = scmp.ge.s32.totalorder %s356, 1
                  %s361 = sphi %s332, %s332
                  %s362 = sphi %s326, %s326
                $region62: #{transformer_model.14} parent=58 // loop_header_branch
                  %359 = sbr.rel (%p357) target = $region66
                $region63: #{transformer_model.14} parent=58 // loop_body
                  _
                $region64: #{transformer_model.14} parent=58 // loop_footer
                  %s360 = sadd.s32 1, %s356
                $region65: #{transformer_model.14} parent=58 // loop_footer_branch
                  %355 = sbr.rel target = $region61
                $region66: #{transformer_model.14} parent=58 // loop_exit
                  _
                %s364 = ssub.s32 16, 1
                loop: start=0, step=1, limit=1
                $region67: #{transformer_model.14} parent=58 // loop_pre_header
                  _
                $region68: #{transformer_model.14} parent=58 // loop_header
                  %s366 = sphi 0, %s370
                  %p367 = scmp.ge.s32.totalorder %s366, 1
                  %s371 = sphi %s332, %s332
                  %s372 = sphi %s326, %s326
                $region69: #{transformer_model.14} parent=58 // loop_header_branch
                  %369 = sbr.rel (%p367) target = $region73
                $region70: #{transformer_model.14} parent=58 // loop_body
                  %v373 = vld [vmem:[%s371] sm:%s364]
                  %374 = vst [vmem:[%s372] sm:%s364] %v373
                  %v375 = vld [vmem:[%s371 + $0xc] sm:%s364]
                  %376 = vst [vmem:[%s372 + $0x4] sm:%s364] %v375
                $region71: #{transformer_model.14} parent=58 // loop_footer
                  %s370 = sadd.s32 1, %s366
                $region72: #{transformer_model.14} parent=58 // loop_footer_branch
                  %365 = sbr.rel target = $region68
                $region73: #{transformer_model.14} parent=58 // loop_exit
                  _
              $region59: #{transformer_model.14} parent=43 // pred_fallthru
                _
            $region44: #{transformer_model.14} parent=39 // pred_fallthru
              _
            // Predicated region
            $region45: #{transformer_model.14} parent=39 // pred_check
              _
            $region46: #{transformer_model.14} parent=39 // pred_check_branch
              %338 = sbr.rel (0) target = $region48
            $region47: #{transformer_model.14} parent=39 // pred_region
              %s340 = ssub.s32 16, 1
              loop: start=0, step=1, limit=1
              $region49: #{transformer_model.14} parent=47 // loop_pre_header
                _
              $region50: #{transformer_model.14} parent=47 // loop_header
                %s342 = sphi 0, %s346
                %p343 = scmp.ge.s32.totalorder %s342, 1
                %s347 = sphi %s332, %s332
                %s348 = sphi %s326, %s326
              $region51: #{transformer_model.14} parent=47 // loop_header_branch
                %345 = sbr.rel (%p343) target = $region55
              $region52: #{transformer_model.14} parent=47 // loop_body
                %v349 = vld [vmem:[%s347] sm:%s340]
                %350 = vst [vmem:[%s348] sm:%s340] %v349
                %v351 = vld [vmem:[%s347 + $0xc] sm:%s340]
                %352 = vst [vmem:[%s348 + $0x4] sm:%s340] %v351
              $region53: #{transformer_model.14} parent=47 // loop_footer
                %s346 = sadd.s32 1, %s342
              $region54: #{transformer_model.14} parent=47 // loop_footer_branch
                %341 = sbr.rel target = $region50
              $region55: #{transformer_model.14} parent=47 // loop_exit
                _
            $region48: #{transformer_model.14} parent=39 // pred_fallthru
              _
          $region40: #{transformer_model.14} parent=35 // pred_fallthru
            _
          %377 = vnop
        $region36: #{transformer_model.14} parent=31 // pred_fallthru
          _
        // Predicated region
        $region74: #{transformer_model.14} parent=31 // pred_check
          %p378 = pneg %p80
        $region75: #{transformer_model.14} parent=31 // pred_check_branch
          %380 = sbr.rel (%p378) target = $region77
        $region76: #{transformer_model.14} parent=31 // pred_region
          %s381 = sand.u32 %s70, 1
          %s382 = sand.u32 %s70, 1
          %s383 = smul.addr %s382, 8
          %s384 = scalar_lea.vmem [#allocation4], %s383
          %s385 = smul.addr %s27, 6
          %s386 = sadd.s32 1, %s385
          %s387 = smul.addr %s386, 4
          %s388 = scalar_lea.vmem %s1, %s387
          // Predicated region
          $region78: #{transformer_model.14} parent=76 // pred_check
            _
          $region79: #{transformer_model.14} parent=76 // pred_check_branch
            %390 = sbr.rel (0) target = $region81
          $region80: #{transformer_model.14} parent=76 // pred_region
            // Predicated region
            $region82: #{transformer_model.14} parent=80 // pred_check
              _
            $region83: #{transformer_model.14} parent=80 // pred_check_branch
              %392 = sbr.rel target = $region85
            $region84: #{transformer_model.14} parent=80 // pred_region
              // Predicated region
              $region97: #{transformer_model.14} parent=84 // pred_check
                _
              $region98: #{transformer_model.14} parent=84 // pred_check_branch
                %410 = sbr.rel (0) target = $region100
              $region99: #{transformer_model.14} parent=84 // pred_region
                loop: start=0, step=1, limit=1
                $region101: #{transformer_model.14} parent=99 // loop_pre_header
                  _
                $region102: #{transformer_model.14} parent=99 // loop_header
                  %s412 = sphi 0, %s416
                  %p413 = scmp.ge.s32.totalorder %s412, 1
                  %s417 = sphi %s388, %s388
                  %s418 = sphi %s384, %s384
                $region103: #{transformer_model.14} parent=99 // loop_header_branch
                  %415 = sbr.rel (%p413) target = $region107
                $region104: #{transformer_model.14} parent=99 // loop_body
                  _
                $region105: #{transformer_model.14} parent=99 // loop_footer
                  %s416 = sadd.s32 1, %s412
                $region106: #{transformer_model.14} parent=99 // loop_footer_branch
                  %411 = sbr.rel target = $region102
                $region107: #{transformer_model.14} parent=99 // loop_exit
                  _
                %s420 = ssub.s32 16, 1
                loop: start=0, step=1, limit=1
                $region108: #{transformer_model.14} parent=99 // loop_pre_header
                  _
                $region109: #{transformer_model.14} parent=99 // loop_header
                  %s422 = sphi 0, %s426
                  %p423 = scmp.ge.s32.totalorder %s422, 1
                  %s427 = sphi %s388, %s388
                  %s428 = sphi %s384, %s384
                $region110: #{transformer_model.14} parent=99 // loop_header_branch
                  %425 = sbr.rel (%p423) target = $region114
                $region111: #{transformer_model.14} parent=99 // loop_body
                  %v429 = vld [vmem:[%s427] sm:%s420]
                  %430 = vst [vmem:[%s428] sm:%s420] %v429
                  %v431 = vld [vmem:[%s427 + $0xc] sm:%s420]
                  %432 = vst [vmem:[%s428 + $0x4] sm:%s420] %v431
                $region112: #{transformer_model.14} parent=99 // loop_footer
                  %s426 = sadd.s32 1, %s422
                $region113: #{transformer_model.14} parent=99 // loop_footer_branch
                  %421 = sbr.rel target = $region109
                $region114: #{transformer_model.14} parent=99 // loop_exit
                  _
              $region100: #{transformer_model.14} parent=84 // pred_fallthru
                _
            $region85: #{transformer_model.14} parent=80 // pred_fallthru
              _
            // Predicated region
            $region86: #{transformer_model.14} parent=80 // pred_check
              _
            $region87: #{transformer_model.14} parent=80 // pred_check_branch
              %394 = sbr.rel (0) target = $region89
            $region88: #{transformer_model.14} parent=80 // pred_region
              %s396 = ssub.s32 16, 1
              loop: start=0, step=1, limit=1
              $region90: #{transformer_model.14} parent=88 // loop_pre_header
                _
              $region91: #{transformer_model.14} parent=88 // loop_header
                %s398 = sphi 0, %s402
                %p399 = scmp.ge.s32.totalorder %s398, 1
                %s403 = sphi %s388, %s388
                %s404 = sphi %s384, %s384
              $region92: #{transformer_model.14} parent=88 // loop_header_branch
                %401 = sbr.rel (%p399) target = $region96
              $region93: #{transformer_model.14} parent=88 // loop_body
                %v405 = vld [vmem:[%s403] sm:%s396]
                %406 = vst [vmem:[%s404] sm:%s396] %v405
                %v407 = vld [vmem:[%s403 + $0xc] sm:%s396]
                %408 = vst [vmem:[%s404 + $0x4] sm:%s396] %v407
              $region94: #{transformer_model.14} parent=88 // loop_footer
                %s402 = sadd.s32 1, %s398
              $region95: #{transformer_model.14} parent=88 // loop_footer_branch
                %397 = sbr.rel target = $region91
              $region96: #{transformer_model.14} parent=88 // loop_exit
                _
            $region89: #{transformer_model.14} parent=80 // pred_fallthru
              _
          $region81: #{transformer_model.14} parent=76 // pred_fallthru
            _
          %433 = vnop
        $region77: #{transformer_model.14} parent=31 // pred_fallthru
          _
        // Predicated region
        $region115: #{transformer_model.14} parent=31 // pred_check
          %p434 = pneg %p106
        $region116: #{transformer_model.14} parent=31 // pred_check_branch
          %436 = sbr.rel (%p434) target = $region118
        $region117: #{transformer_model.14} parent=31 // pred_region
          %s437 = sand.u32 %s96, 1
          %s438 = sand.u32 %s96, 1
          %s439 = smul.addr %s438, 8
          %s440 = scalar_lea.vmem [#allocation5], %s439
          %s441 = smul.addr %s27, 6
          %s442 = sadd.s32 2, %s441
          %s443 = smul.addr %s442, 4
          %s444 = scalar_lea.vmem %s2, %s443
          // Predicated region
          $region119: #{transformer_model.14} parent=117 // pred_check
            _
          $region120: #{transformer_model.14} parent=117 // pred_check_branch
            %446 = sbr.rel (0) target = $region122
          $region121: #{transformer_model.14} parent=117 // pred_region
            // Predicated region
            $region123: #{transformer_model.14} parent=121 // pred_check
              _
            $region124: #{transformer_model.14} parent=121 // pred_check_branch
              %448 = sbr.rel target = $region126
            $region125: #{transformer_model.14} parent=121 // pred_region
              // Predicated region
              $region138: #{transformer_model.14} parent=125 // pred_check
                _
              $region139: #{transformer_model.14} parent=125 // pred_check_branch
                %466 = sbr.rel (0) target = $region141
              $region140: #{transformer_model.14} parent=125 // pred_region
                loop: start=0, step=1, limit=1
                $region142: #{transformer_model.14} parent=140 // loop_pre_header
                  _
                $region143: #{transformer_model.14} parent=140 // loop_header
                  %s468 = sphi 0, %s472
                  %p469 = scmp.ge.s32.totalorder %s468, 1
                  %s473 = sphi %s444, %s444
                  %s474 = sphi %s440, %s440
                $region144: #{transformer_model.14} parent=140 // loop_header_branch
                  %471 = sbr.rel (%p469) target = $region148
                $region145: #{transformer_model.14} parent=140 // loop_body
                  _
                $region146: #{transformer_model.14} parent=140 // loop_footer
                  %s472 = sadd.s32 1, %s468
                $region147: #{transformer_model.14} parent=140 // loop_footer_branch
                  %467 = sbr.rel target = $region143
                $region148: #{transformer_model.14} parent=140 // loop_exit
                  _
                %s476 = ssub.s32 16, 1
                loop: start=0, step=1, limit=1
                $region149: #{transformer_model.14} parent=140 // loop_pre_header
                  _
                $region150: #{transformer_model.14} parent=140 // loop_header
                  %s478 = sphi 0, %s482
                  %p479 = scmp.ge.s32.totalorder %s478, 1
                  %s483 = sphi %s444, %s444
                  %s484 = sphi %s440, %s440
                $region151: #{transformer_model.14} parent=140 // loop_header_branch
                  %481 = sbr.rel (%p479) target = $region155
                $region152: #{transformer_model.14} parent=140 // loop_body
                  %v485 = vld [vmem:[%s483] sm:%s476]
                  %486 = vst [vmem:[%s484] sm:%s476] %v485
                  %v487 = vld [vmem:[%s483 + $0xc] sm:%s476]
                  %488 = vst [vmem:[%s484 + $0x4] sm:%s476] %v487
                $region153: #{transformer_model.14} parent=140 // loop_footer
                  %s482 = sadd.s32 1, %s478
                $region154: #{transformer_model.14} parent=140 // loop_footer_branch
                  %477 = sbr.rel target = $region150
                $region155: #{transformer_model.14} parent=140 // loop_exit
                  _
              $region141: #{transformer_model.14} parent=125 // pred_fallthru
                _
            $region126: #{transformer_model.14} parent=121 // pred_fallthru
              _
            // Predicated region
            $region127: #{transformer_model.14} parent=121 // pred_check
              _
            $region128: #{transformer_model.14} parent=121 // pred_check_branch
              %450 = sbr.rel (0) target = $region130
            $region129: #{transformer_model.14} parent=121 // pred_region
              %s452 = ssub.s32 16, 1
              loop: start=0, step=1, limit=1
              $region131: #{transformer_model.14} parent=129 // loop_pre_header
                _
              $region132: #{transformer_model.14} parent=129 // loop_header
                %s454 = sphi 0, %s458
                %p455 = scmp.ge.s32.totalorder %s454, 1
                %s459 = sphi %s444, %s444
                %s460 = sphi %s440, %s440
              $region133: #{transformer_model.14} parent=129 // loop_header_branch
                %457 = sbr.rel (%p455) target = $region137
              $region134: #{transformer_model.14} parent=129 // loop_body
                %v461 = vld [vmem:[%s459] sm:%s452]
                %462 = vst [vmem:[%s460] sm:%s452] %v461
                %v463 = vld [vmem:[%s459 + $0xc] sm:%s452]
                %464 = vst [vmem:[%s460 + $0x4] sm:%s452] %v463
              $region135: #{transformer_model.14} parent=129 // loop_footer
                %s458 = sadd.s32 1, %s454
              $region136: #{transformer_model.14} parent=129 // loop_footer_branch
                %453 = sbr.rel target = $region132
              $region137: #{transformer_model.14} parent=129 // loop_exit
                _
            $region130: #{transformer_model.14} parent=121 // pred_fallthru
              _
          $region122: #{transformer_model.14} parent=117 // pred_fallthru
            _
          %489 = vnop
        $region118: #{transformer_model.14} parent=31 // pred_fallthru
          _
        // Predicated region
        $region156: #{transformer_model.14} parent=31 // pred_check
          %p490 = pneg %p176
        $region157: #{transformer_model.14} parent=31 // pred_check_branch
          %492 = sbr.rel (%p490) target = $region159
        $region158: #{transformer_model.14} parent=31 // pred_region
          %s493 = smul.u32 2, %s28
          %p494 = scmp.lt.s32.totalorder %s27, 1
          %s495 = scalar_select %p494, %s27, 1
          %p496 = scmp.lt.s32.totalorder %s493, 1
          %s497 = scalar_select %p496, %s493, 1
          %s498 = smul.addr %s495, 2
          %s499 = sadd.s32 %s497, %s498
          %s500 = smul.addr %s499, 4
          %s501 = scalar_lea.vmem %s5, %s500
          %s502 = smul.u32 2, %s28
        $region159: #{transformer_model.14} parent=31 // pred_fallthru
          _
      $region32: #{transformer_model.14} parent=5 // pred_fallthru
        _
      %p503 = scmp.le.s32.totalorder 1, %s20
      %p504 = scmp.lt.s32.totalorder %s20, 3
      %p505 = pnand %p503, %p504
      %p506 = pneg %p505
      // Predicated region
      $region160: #{transformer_model.14} parent=5 // pred_check
        _
      $region161: #{transformer_model.14} parent=5 // pred_check_branch
        %508 = sbr.rel (%p505) target = $region163
      $region162: #{transformer_model.14} parent=5 // pred_region
        %s509 = ssub.s32 %s20, 1
        %s510 = sand.u32 %s47, 1
        %s511 = sand.u32 %s47, 1
        %s512 = smul.addr %s511, 8
        %s513 = scalar_lea.vmem [#allocation3], %s512
        // Predicated region
        $region164: #{transformer_model.14} parent=162 // pred_check
          %p514 = pneg %p60
        $region165: #{transformer_model.14} parent=162 // pred_check_branch
          %516 = sbr.rel (%p514) target = $region167
        $region166: #{transformer_model.14} parent=162 // pred_region
          _
        $region167: #{transformer_model.14} parent=162 // pred_fallthru
          _
        %s517 = sand.u32 %s73, 1
        %s518 = sand.u32 %s73, 1
        %s519 = smul.addr %s518, 8
        %s520 = scalar_lea.vmem [#allocation4], %s519
        // Predicated region
        $region168: #{transformer_model.14} parent=162 // pred_check
          %p521 = pneg %p86
        $region169: #{transformer_model.14} parent=162 // pred_check_branch
          %523 = sbr.rel (%p521) target = $region171
        $region170: #{transformer_model.14} parent=162 // pred_region
          _
        $region171: #{transformer_model.14} parent=162 // pred_fallthru
          _
        %s524 = sand.u32 %s99, 1
        %s525 = sand.u32 %s99, 1
        %s526 = smul.addr %s525, 8
        %s527 = scalar_lea.vmem [#allocation5], %s526
        // Predicated region
        $region172: #{transformer_model.14} parent=162 // pred_check
          %p528 = pneg %p112
        $region173: #{transformer_model.14} parent=162 // pred_check_branch
          %530 = sbr.rel (%p528) target = $region175
        $region174: #{transformer_model.14} parent=162 // pred_region
          _
        $region175: #{transformer_model.14} parent=162 // pred_fallthru
          _
        // Predicated region
        $region176: #{transformer_model.14} parent=162 // pred_check
          %p531 = pneg %p224
        $region177: #{transformer_model.14} parent=162 // pred_check_branch
          %533 = sbr.rel (%p531) target = $region179
        $region178: #{transformer_model.14} parent=162 // pred_region
          %535 = dma.done [#allocation7], 16
        $region179: #{transformer_model.14} parent=162 // pred_fallthru
          _
        %s536 = sand.u32 %s47, 1
        %s537 = sand.u32 %s47, 1
        %s538 = smul.addr %s537, 8
        %s539 = scalar_lea.vmem [#allocation3], %s538
        %p540 = pneg %p60
        %p541 = pneg %p57
        %s542 = sand.u32 %s73, 1
        %s543 = sand.u32 %s73, 1
        %s544 = smul.addr %s543, 8
        %s545 = scalar_lea.vmem [#allocation4], %s544
        %p546 = pneg %p86
        %p547 = pneg %p83
        %s548 = sand.u32 %s99, 1
        %s549 = sand.u32 %s99, 1
        %s550 = smul.addr %s549, 8
        %s551 = scalar_lea.vmem [#allocation5], %s550
        %p552 = pneg %p112
        %p553 = pneg %p109
        %p554 = pneg %p133
        %p555 = pneg %p130
        %p556 = pneg %p154
        %p557 = pneg %p151
        %s558 = smul.u32 2, %s30
        %p559 = scmp.lt.s32.totalorder %s29, 1
        %s560 = scalar_select %p559, %s29, 1
        %p561 = scmp.lt.s32.totalorder %s558, 1
        %s562 = scalar_select %p561, %s558, 1
        %s563 = smul.addr %s560, 2
        %s564 = sadd.s32 %s562, %s563
        %s565 = smul.addr %s564, 4
        %s566 = scalar_lea.vmem %s5, %s565
        %p567 = pneg %p182
        %p568 = pneg %p179
        %p569 = pneg %p203
        %p570 = pneg %p200
        %p571 = pneg %p224
        %p572 = pneg %p221
        %p573 = pneg %p252
        %p574 = pneg %p249
        %s575 = smul.u32 2, %s30
        %p576 = scmp.lt.s32.totalorder %s29, 1
        %s577 = scalar_select %p576, %s29, 1
        %p578 = scmp.lt.s32.totalorder %s575, 1
        %s579 = scalar_select %p578, %s575, 1
        %s580 = smul.addr %s577, 2
        %s581 = sadd.s32 %s579, %s580
        %s582 = smul.addr %s581, 4
        %s583 = scalar_lea.vmem %s8, %s582
        %p584 = pneg %p280
        %p585 = pneg %p277
        %s586 = sand.u32 %s267, 1
        %s587 = scalar_lea.sflag [#allocation8], %s586
        %s588 = sand.u32 %s267, 1
        %s589 = smul.addr %s588, 16
        %s590 = scalar_lea.vmem [#allocation9], %s589
        %s591 = smul.u32 2, %s30
        %s592 = smul.u32 2, %s30
        %p593 = scmp.lt.s32.totalorder %s29, 1
        %s594 = scalar_select %p593, %s29, 1
        %p595 = scmp.lt.s32.totalorder %s592, 1
        %s596 = scalar_select %p595, %s592, 1
        %s597 = smul.addr %s594, 2
        %s598 = sadd.s32 %s596, %s597
        %s599 = smul.addr %s598, 4
        %s600 = scalar_lea.vmem %s5, %s599
        %s601 = smul.u32 2, %s30
        %s602 = smul.u32 2, %s30
        %p603 = scmp.lt.s32.totalorder %s29, 1
        %s604 = scalar_select %p603, %s29, 1
        %p605 = scmp.lt.s32.totalorder %s602, 1
        %s606 = scalar_select %p605, %s602, 1
        %s607 = smul.addr %s604, 2
        %s608 = sadd.s32 %s606, %s607
        %s609 = smul.addr %s608, 4
        %s610 = scalar_lea.vmem %s8, %s609
        %s611 = smul.u32 2, %s30
        %s612 = smul.u32 2, %s30
        %v614 = vld [vmem:[%s513] sm:$0xf]
        %v615 = vld [vmem:[%s513 + $0x4] sm:$0xf]
        %v616 = vunpack.c.l.bf16 %v614
        %v617 = vunpack.c.l.bf16 %v615
        %v618 = vmul.f32 %v616, 0.17675781
        %v619 = vmul.f32 %v617, 0.17675781
        %v620 = vpack.c.bf16 %v618, %v618
        %v621 = vpack.c.bf16 %v619, %v619
        %v622 = vld [vmem:[%s520] sm:$0xf]
        %v623 = vld [vmem:[%s520 + $0x4] sm:$0xf]
        %v624 = vld [vmem:[%s527] sm:$0xf]
        %v625 = vld [vmem:[%s527 + $0x4] sm:$0xf]
        %v628 = vunpack.c.l.b16 %v620
        %v629 = vunpack.c.l.b16 %v621
        %v630 = vpack.c.b16 %v629, %v628
        %v633 = vunpack.c.l.b16 %v622
        %v634 = vunpack.c.l.b16 %v623
        %v635 = vpack.c.b16 %v634, %v633
        %vm636 = vcmask 261120
        %v638 = vsel %vm636, %v630, 0
        %v641 = vsel %vm636, %v635, 0
        %643 = vmatpush.bf16.xpose.msra.mxu0 0
        %644 = vmatpush.bf16.xpose.msra.mxu0 0
        %645 = vmatpush.bf16.xpose.msra.mxu0 0
        %646 = vmatpush.bf16.xpose.msra.mxu0 0
        %647 = vmatpush.bf16.xpose.msra.mxu0 0
        %648 = vmatpush.bf16.xpose.msra.mxu0 0
        %649 = vmatpush.bf16.xpose.msra.mxu0 0
        %650 = vmatpush.bf16.xpose.msra.mxu0 %v641
        %651 = vmatmul.bf16.gmra.mxu0 %v638
        %v652 = vpop.f32.mrf.mxu0
        %v653 = vadd.f32 0.0, %v652
        %v654 = vpop.f32.mrf.mxu0
        %v655 = vadd.f32 0.0, %v654
        %656 = vdwg.mxu0
        %vm657 = vcmask 130048
        %v658 = vsel %vm657, %v653, -inf
        %659 = vmax.xlane.f32.xlu0 %v658
        %v660 = vpop.xlane.xlu0 %659
        %v661 = vsel %vm657, %v655, -inf
        %662 = vmax.xlane.f32.xlu0 %v661
        %v663 = vpop.xlane.xlu0 %662
        %v664 = vsub.f32 %v653, %v660
        %v665 = vsub.f32 %v655, %v663
        %v666 = vmul.f32 %v664, 1.442695
        %v667 = vpow.pop %v666
        %v668 = vmul.f32 %v665, 1.442695
        %v669 = vpow.pop %v668
        %v670 = vsel %vm657, %v667, 0.0
        %671 = vadd.xlane.f32.xlu0 %v670
        %v672 = vpop.xlane.xlu0 %671
        %v673 = vsel %vm657, %v669, 0.0
        %674 = vadd.xlane.f32.xlu0 %v673
        %v675 = vpop.xlane.xlu0 %674
        %v676 = vrcp.pop %v672
        %v677 = vmul.f32 %v672, %v676
        %v678 = vsub.f32 1.0, %v677
        %v679 = vmul.f32 %v676, %v678
        %v680 = vadd.f32 %v676, %v679
        %vm681 = vweird.f32 %v672
        %vm682 = vweird.f32 %v676
        %vm683 = vmor %vm681, %vm682
        %v684 = vsel %vm683, %v676, %v680
        %v685 = vand.u32 2147483647, %v672
        %vm686 = vcmp.eq.f32.partialorder %v685, 8.507059e+37
        %v687 = vand.u32 %v672, 2147483648
        %v688 = vor.u32 1.1754944e-38, %v687
        %v689 = vsel %vm686, %v688, %v684
        %v690 = vrcp.pop %v675
        %v691 = vmul.f32 %v675, %v690
        %v692 = vsub.f32 1.0, %v691
        %v693 = vmul.f32 %v690, %v692
        %v694 = vadd.f32 %v690, %v693
        %vm695 = vweird.f32 %v675
        %vm696 = vweird.f32 %v690
        %vm697 = vmor %vm695, %vm696
        %v698 = vsel %vm697, %v690, %v694
        %v699 = vand.u32 2147483647, %v675
        %vm700 = vcmp.eq.f32.partialorder %v699, 8.507059e+37
        %v701 = vand.u32 %v675, 2147483648
        %v702 = vor.u32 1.1754944e-38, %v701
        %v703 = vsel %vm700, %v702, %v698
        %v704 = vmul.f32 %v667, %v689
        %v705 = vmul.f32 %v669, %v703
        %v706 = vadd.f32 %v704, 0.0
        %v707 = vadd.f32 %v705, 0.0
        %v708 = vpack.c.bf16 %v705, %v704
        %v711 = vunpack.c.l.b16 %v624
        %v712 = vunpack.c.l.b16 %v625
        %v713 = vpack.c.b16 %v712, %v711
        %v716 = vsel %vm657, %v708, 0
        %718 = vmatpush.bf16.msra.mxu0 0
        %719 = vmatpush.bf16.msra.mxu0 0
        %720 = vmatpush.bf16.msra.mxu0 0
        %721 = vmatpush.bf16.msra.mxu0 0
        %722 = vmatpush.bf16.msra.mxu0 0
        %723 = vmatpush.bf16.msra.mxu0 0
        %724 = vmatpush.bf16.msra.mxu0 0
        %725 = vmatpush.bf16.msra.mxu0 %v713
        %726 = vmatmul.bf16.gmra.mxu0 %v716
        %v727 = vpop.f32.mrf.mxu0
        %v728 = vadd.f32 0.0, %v727
        %v729 = vpop.f32.mrf.mxu0
        %v730 = vadd.f32 0.0, %v729
        %731 = vdwg.mxu0
        %v732 = vpack.c.bf16 %v728, %v728
        %v733 = vpack.c.bf16 %v730, %v730
        %vm734 = vcmask 257024
        %735 = vst.msk [vmem:[#allocation2] sm:$0xf] %vm734, %v732
        %736 = vst.msk [vmem:[#allocation2 + $0x4] sm:$0xf] %vm734, %v733
        %v737 = vld [vmem:[%s520] sm:$0xf]
        %v738 = vld [vmem:[%s520 + $0x4] sm:$0xf]
        %v739 = vld [vmem:[%s527] sm:$0xf]
        %v740 = vld [vmem:[%s527 + $0x4] sm:$0xf]
        %741 = vrot.lane.b32.xlu0 %v630, 96
        %v742 = vpop.permute.xlu0 %741
        %v745 = vunpack.c.l.b16 %v737
        %v746 = vunpack.c.l.b16 %v738
        %v747 = vpack.c.b16 %v746, %v745
        %748 = vrot.lane.b32.xlu0 %v747, 96
        %v749 = vpop.permute.xlu0 %748
        %v751 = vsel %vm636, %v742, 0
        %v754 = vsel %vm636, %v749, 0
        %756 = vmatpush.bf16.xpose.msra.mxu0 0
        %757 = vmatpush.bf16.xpose.msra.mxu0 0
        %758 = vmatpush.bf16.xpose.msra.mxu0 0
        %759 = vmatpush.bf16.xpose.msra.mxu0 0
        %760 = vmatpush.bf16.xpose.msra.mxu0 0
        %761 = vmatpush.bf16.xpose.msra.mxu0 0
        %762 = vmatpush.bf16.xpose.msra.mxu0 0
        %763 = vmatpush.bf16.xpose.msra.mxu0 %v754
        %764 = vmatmul.bf16.gmra.mxu0 %v751
        %v765 = vpop.f32.mrf.mxu0
        %v766 = vadd.f32 0.0, %v765
        %v767 = vpop.f32.mrf.mxu0
        %v768 = vadd.f32 0.0, %v767
        %769 = vdwg.mxu0
        %v770 = vsel %vm657, %v766, -inf
        %771 = vmax.xlane.f32.xlu0 %v770
        %v772 = vpop.xlane.xlu0 %771
        %v773 = vsel %vm657, %v768, -inf
        %774 = vmax.xlane.f32.xlu0 %v773
        %v775 = vpop.xlane.xlu0 %774
        %v776 = vsub.f32 %v766, %v772
        %v777 = vsub.f32 %v768, %v775
        %v778 = vmul.f32 %v776, 1.442695
        %v779 = vpow.pop %v778
        %v780 = vmul.f32 %v777, 1.442695
        %v781 = vpow.pop %v780
        %v782 = vsel %vm657, %v779, 0.0
        %783 = vadd.xlane.f32.xlu0 %v782
        %v784 = vpop.xlane.xlu0 %783
        %v785 = vsel %vm657, %v781, 0.0
        %786 = vadd.xlane.f32.xlu0 %v785
        %v787 = vpop.xlane.xlu0 %786
        %v788 = vrcp.pop %v784
        %v789 = vmul.f32 %v784, %v788
        %v790 = vsub.f32 1.0, %v789
        %v791 = vmul.f32 %v788, %v790
        %v792 = vadd.f32 %v788, %v791
        %vm793 = vweird.f32 %v784
        %vm794 = vweird.f32 %v788
        %vm795 = vmor %vm793, %vm794
        %v796 = vsel %vm795, %v788, %v792
        %v797 = vand.u32 2147483647, %v784
        %vm798 = vcmp.eq.f32.partialorder %v797, 8.507059e+37
        %v799 = vand.u32 %v784, 2147483648
        %v800 = vor.u32 1.1754944e-38, %v799
        %v801 = vsel %vm798, %v800, %v796
        %v802 = vrcp.pop %v787
        %v803 = vmul.f32 %v787, %v802
        %v804 = vsub.f32 1.0, %v803
        %v805 = vmul.f32 %v802, %v804
        %v806 = vadd.f32 %v802, %v805
        %vm807 = vweird.f32 %v787
        %vm808 = vweird.f32 %v802
        %vm809 = vmor %vm807, %vm808
        %v810 = vsel %vm809, %v802, %v806
        %v811 = vand.u32 2147483647, %v787
        %vm812 = vcmp.eq.f32.partialorder %v811, 8.507059e+37
        %v813 = vand.u32 %v787, 2147483648
        %v814 = vor.u32 1.1754944e-38, %v813
        %v815 = vsel %vm812, %v814, %v810
        %v816 = vmul.f32 %v779, %v801
        %v817 = vmul.f32 %v781, %v815
        %v818 = vadd.f32 %v706, %v816
        %v819 = vadd.f32 %v707, %v817
        %v820 = vpack.c.bf16 %v817, %v816
        %v823 = vunpack.c.l.b16 %v739
        %v824 = vunpack.c.l.b16 %v740
        %v825 = vpack.c.b16 %v824, %v823
        %826 = vrot.lane.b32.xlu0 %v825, 96
        %v827 = vpop.permute.xlu0 %826
        %v830 = vsel %vm657, %v820, 0
        %832 = vmatpush.bf16.msra.mxu0 0
        %833 = vmatpush.bf16.msra.mxu0 0
        %834 = vmatpush.bf16.msra.mxu0 0
        %835 = vmatpush.bf16.msra.mxu0 0
        %836 = vmatpush.bf16.msra.mxu0 0
        %837 = vmatpush.bf16.msra.mxu0 0
        %838 = vmatpush.bf16.msra.mxu0 0
        %839 = vmatpush.bf16.msra.mxu0 %v827
        %840 = vmatmul.bf16.gmra.mxu0 %v830
        %v841 = vpop.f32.mrf.mxu0
        %v842 = vadd.f32 0.0, %v841
        %v843 = vpop.f32.mrf.mxu0
        %v844 = vadd.f32 0.0, %v843
        %845 = vdwg.mxu0
        %v846 = vpack.c.bf16 %v842, %v842
        %v847 = vpack.c.bf16 %v844, %v844
        %850 = vrot.lane.b32.xlu0 %v846, 32
        %v851 = vpop.permute.xlu0 %850
        %852 = vrot.lane.b32.xlu0 %v847, 32
        %v853 = vpop.permute.xlu0 %852
        %vm856 = vcmask 519424
        %857 = vst.msk [vmem:[#allocation2] sm:$0xf] %vm856, %v851
        %858 = vst.msk [vmem:[#allocation2 + $0x4] sm:$0xf] %vm856, %v853
        %v859 = vld [vmem:[%s520] sm:$0xf]
        %v860 = vld [vmem:[%s520 + $0x4] sm:$0xf]
        %v861 = vld [vmem:[%s527] sm:$0xf]
        %v862 = vld [vmem:[%s527 + $0x4] sm:$0xf]
        %863 = vrot.lane.b32.xlu0 %v630, 64
        %v864 = vpop.permute.xlu0 %863
        %v867 = vunpack.c.l.b16 %v859
        %v868 = vunpack.c.l.b16 %v860
        %v869 = vpack.c.b16 %v868, %v867
        %870 = vrot.lane.b32.xlu0 %v869, 64
        %v871 = vpop.permute.xlu0 %870
        %v873 = vsel %vm636, %v864, 0
        %v876 = vsel %vm636, %v871, 0
        %878 = vmatpush.bf16.xpose.msra.mxu0 0
        %879 = vmatpush.bf16.xpose.msra.mxu0 0
        %880 = vmatpush.bf16.xpose.msra.mxu0 0
        %881 = vmatpush.bf16.xpose.msra.mxu0 0
        %882 = vmatpush.bf16.xpose.msra.mxu0 0
        %883 = vmatpush.bf16.xpose.msra.mxu0 0
        %884 = vmatpush.bf16.xpose.msra.mxu0 0
        %885 = vmatpush.bf16.xpose.msra.mxu0 %v876
        %886 = vmatmul.bf16.gmra.mxu0 %v873
        %v887 = vpop.f32.mrf.mxu0
        %v888 = vadd.f32 0.0, %v887
        %v889 = vpop.f32.mrf.mxu0
        %v890 = vadd.f32 0.0, %v889
        %891 = vdwg.mxu0
        %v892 = vsel %vm657, %v888, -inf
        %893 = vmax.xlane.f32.xlu0 %v892
        %v894 = vpop.xlane.xlu0 %893
        %v895 = vsel %vm657, %v890, -inf
        %896 = vmax.xlane.f32.xlu0 %v895
        %v897 = vpop.xlane.xlu0 %896
        %v898 = vsub.f32 %v888, %v894
        %v899 = vsub.f32 %v890, %v897
        %v900 = vmul.f32 %v898, 1.442695
        %v901 = vpow.pop %v900
        %v902 = vmul.f32 %v899, 1.442695
        %v903 = vpow.pop %v902
        %v904 = vsel %vm657, %v901, 0.0
        %905 = vadd.xlane.f32.xlu0 %v904
        %v906 = vpop.xlane.xlu0 %905
        %v907 = vsel %vm657, %v903, 0.0
        %908 = vadd.xlane.f32.xlu0 %v907
        %v909 = vpop.xlane.xlu0 %908
        %v910 = vrcp.pop %v906
        %v911 = vmul.f32 %v906, %v910
        %v912 = vsub.f32 1.0, %v911
        %v913 = vmul.f32 %v910, %v912
        %v914 = vadd.f32 %v910, %v913
        %vm915 = vweird.f32 %v906
        %vm916 = vweird.f32 %v910
        %vm917 = vmor %vm915, %vm916
        %v918 = vsel %vm917, %v910, %v914
        %v919 = vand.u32 2147483647, %v906
        %vm920 = vcmp.eq.f32.partialorder %v919, 8.507059e+37
        %v921 = vand.u32 %v906, 2147483648
        %v922 = vor.u32 1.1754944e-38, %v921
        %v923 = vsel %vm920, %v922, %v918
        %v924 = vrcp.pop %v909
        %v925 = vmul.f32 %v909, %v924
        %v926 = vsub.f32 1.0, %v925
        %v927 = vmul.f32 %v924, %v926
        %v928 = vadd.f32 %v924, %v927
        %vm929 = vweird.f32 %v909
        %vm930 = vweird.f32 %v924
        %vm931 = vmor %vm929, %vm930
        %v932 = vsel %vm931, %v924, %v928
        %v933 = vand.u32 2147483647, %v909
        %vm934 = vcmp.eq.f32.partialorder %v933, 8.507059e+37
        %v935 = vand.u32 %v909, 2147483648
        %v936 = vor.u32 1.1754944e-38, %v935
        %v937 = vsel %vm934, %v936, %v932
        %v938 = vmul.f32 %v901, %v923
        %v939 = vmul.f32 %v903, %v937
        %v940 = vadd.f32 %v818, %v938
        %v941 = vadd.f32 %v819, %v939
        %v942 = vpack.c.bf16 %v939, %v938
        %v945 = vunpack.c.l.b16 %v861
        %v946 = vunpack.c.l.b16 %v862
        %v947 = vpack.c.b16 %v946, %v945
        %948 = vrot.lane.b32.xlu0 %v947, 64
        %v949 = vpop.permute.xlu0 %948
        %v952 = vsel %vm657, %v942, 0
        %954 = vmatpush.bf16.msra.mxu0 0
        %955 = vmatpush.bf16.msra.mxu0 0
        %956 = vmatpush.bf16.msra.mxu0 0
        %957 = vmatpush.bf16.msra.mxu0 0
        %958 = vmatpush.bf16.msra.mxu0 0
        %959 = vmatpush.bf16.msra.mxu0 0
        %960 = vmatpush.bf16.msra.mxu0 0
        %961 = vmatpush.bf16.msra.mxu0 %v949
        %962 = vmatmul.bf16.gmra.mxu0 %v952
        %v963 = vpop.f32.mrf.mxu0
        %v964 = vadd.f32 0.0, %v963
        %v965 = vpop.f32.mrf.mxu0
        %v966 = vadd.f32 0.0, %v965
        %967 = vdwg.mxu0
        %v968 = vpack.c.bf16 %v964, %v964
        %v969 = vpack.c.bf16 %v966, %v966
        %972 = vrot.lane.b32.xlu0 %v968, 64
        %v973 = vpop.permute.xlu0 %972
        %974 = vrot.lane.b32.xlu0 %v969, 64
        %v975 = vpop.permute.xlu0 %974
        %vm978 = vcmask 781824
        %979 = vst.msk [vmem:[#allocation2] sm:$0xf] %vm978, %v973
        %980 = vst.msk [vmem:[#allocation2 + $0x4] sm:$0xf] %vm978, %v975
        %v981 = vld [vmem:[%s520] sm:$0xf]
        %v982 = vld [vmem:[%s520 + $0x4] sm:$0xf]
        %v983 = vld [vmem:[%s527] sm:$0xf]
        %v984 = vld [vmem:[%s527 + $0x4] sm:$0xf]
        %985 = vrot.lane.b32.xlu0 %v630, 32
        %v986 = vpop.permute.xlu0 %985
        %v989 = vunpack.c.l.b16 %v981
        %v990 = vunpack.c.l.b16 %v982
        %v991 = vpack.c.b16 %v990, %v989
        %992 = vrot.lane.b32.xlu0 %v991, 32
        %v993 = vpop.permute.xlu0 %992
        %v995 = vsel %vm636, %v986, 0
        %v998 = vsel %vm636, %v993, 0
        %1000 = vmatpush.bf16.xpose.msra.mxu0 0
        %1001 = vmatpush.bf16.xpose.msra.mxu0 0
        %1002 = vmatpush.bf16.xpose.msra.mxu0 0
        %1003 = vmatpush.bf16.xpose.msra.mxu0 0
        %1004 = vmatpush.bf16.xpose.msra.mxu0 0
        %1005 = vmatpush.bf16.xpose.msra.mxu0 0
        %1006 = vmatpush.bf16.xpose.msra.mxu0 0
        %1007 = vmatpush.bf16.xpose.msra.mxu0 %v998
        %1008 = vmatmul.bf16.gmra.mxu0 %v995
        %v1009 = vpop.f32.mrf.mxu0
        %v1010 = vadd.f32 0.0, %v1009
        %v1011 = vpop.f32.mrf.mxu0
        %v1012 = vadd.f32 0.0, %v1011
        %1013 = vdwg.mxu0
        %v1014 = vsel %vm657, %v1010, -inf
        %1015 = vmax.xlane.f32.xlu0 %v1014
        %v1016 = vpop.xlane.xlu0 %1015
        %v1017 = vsel %vm657, %v1012, -inf
        %1018 = vmax.xlane.f32.xlu0 %v1017
        %v1019 = vpop.xlane.xlu0 %1018
        %v1020 = vsub.f32 %v1010, %v1016
        %v1021 = vsub.f32 %v1012, %v1019
        %v1022 = vmul.f32 %v1020, 1.442695
        %v1023 = vpow.pop %v1022
        %v1024 = vmul.f32 %v1021, 1.442695
        %v1025 = vpow.pop %v1024
        %v1026 = vsel %vm657, %v1023, 0.0
        %1027 = vadd.xlane.f32.xlu0 %v1026
        %v1028 = vpop.xlane.xlu0 %1027
        %v1029 = vsel %vm657, %v1025, 0.0
        %1030 = vadd.xlane.f32.xlu0 %v1029
        %v1031 = vpop.xlane.xlu0 %1030
        %v1032 = vrcp.pop %v1028
        %v1033 = vmul.f32 %v1028, %v1032
        %v1034 = vsub.f32 1.0, %v1033
        %v1035 = vmul.f32 %v1032, %v1034
        %v1036 = vadd.f32 %v1032, %v1035
        %vm1037 = vweird.f32 %v1028
        %vm1038 = vweird.f32 %v1032
        %vm1039 = vmor %vm1037, %vm1038
        %v1040 = vsel %vm1039, %v1032, %v1036
        %v1041 = vand.u32 2147483647, %v1028
        %vm1042 = vcmp.eq.f32.partialorder %v1041, 8.507059e+37
        %v1043 = vand.u32 %v1028, 2147483648
        %v1044 = vor.u32 1.1754944e-38, %v1043
        %v1045 = vsel %vm1042, %v1044, %v1040
        %v1046 = vrcp.pop %v1031
        %v1047 = vmul.f32 %v1031, %v1046
        %v1048 = vsub.f32 1.0, %v1047
        %v1049 = vmul.f32 %v1046, %v1048
        %v1050 = vadd.f32 %v1046, %v1049
        %vm1051 = vweird.f32 %v1031
        %vm1052 = vweird.f32 %v1046
        %vm1053 = vmor %vm1051, %vm1052
        %v1054 = vsel %vm1053, %v1046, %v1050
        %v1055 = vand.u32 2147483647, %v1031
        %vm1056 = vcmp.eq.f32.partialorder %v1055, 8.507059e+37
        %v1057 = vand.u32 %v1031, 2147483648
        %v1058 = vor.u32 1.1754944e-38, %v1057
        %v1059 = vsel %vm1056, %v1058, %v1054
        %v1060 = vmul.f32 %v1023, %v1045
        %v1061 = vmul.f32 %v1025, %v1059
        %v1062 = vadd.f32 %v940, %v1060
        %v1063 = vadd.f32 %v941, %v1061
        %v1064 = vpack.c.bf16 %v1061, %v1060
        %v1067 = vunpack.c.l.b16 %v983
        %v1068 = vunpack.c.l.b16 %v984
        %v1069 = vpack.c.b16 %v1068, %v1067
        %1070 = vrot.lane.b32.xlu0 %v1069, 32
        %v1071 = vpop.permute.xlu0 %1070
        %v1074 = vsel %vm657, %v1064, 0
        %1076 = vmatpush.bf16.msra.mxu0 0
        %1077 = vmatpush.bf16.msra.mxu0 0
        %1078 = vmatpush.bf16.msra.mxu0 0
        %1079 = vmatpush.bf16.msra.mxu0 0
        %1080 = vmatpush.bf16.msra.mxu0 0
        %1081 = vmatpush.bf16.msra.mxu0 0
        %1082 = vmatpush.bf16.msra.mxu0 0
        %1083 = vmatpush.bf16.msra.mxu0 %v1071
        %1084 = vmatmul.bf16.gmra.mxu0 %v1074
        %v1085 = vpop.f32.mrf.mxu0
        %v1086 = vadd.f32 0.0, %v1085
        %v1087 = vpop.f32.mrf.mxu0
        %v1088 = vadd.f32 0.0, %v1087
        %1089 = vdwg.mxu0
        %v1090 = vpack.c.bf16 %v1086, %v1086
        %v1091 = vpack.c.bf16 %v1088, %v1088
        %1094 = vrot.lane.b32.xlu0 %v1090, 96
        %v1095 = vpop.permute.xlu0 %1094
        %1096 = vrot.lane.b32.xlu0 %v1091, 96
        %v1097 = vpop.permute.xlu0 %1096
        %vm1100 = vcmask 1044224
        %1101 = vst.msk [vmem:[#allocation2] sm:$0xf] %vm1100, %v1095
        %1102 = vst.msk [vmem:[#allocation2 + $0x4] sm:$0xf] %vm1100, %v1097
        %v1103 = vmul.f32 %v1062, 0.25
        %v1104 = vmul.f32 %v1063, 0.25
        %1105 = vst.msk [vmem:[%s590] sm:$0xff] %vm657, %v1103
        %1106 = vst.msk [vmem:[%s590 + $0x8] sm:$0xff] %vm657, %v1104
        %v1107 = vld [vmem:[#allocation2] sm:$0xf]
        %v1108 = vld [vmem:[#allocation2 + $0x4] sm:$0xf]
        %v1109 = vld [vmem:[%s3] sm:$0xf]
        %v1110 = vld [vmem:[%s3 + $0x4] sm:$0xf]
        %v1111 = vld [vmem:[%s3 + $0x8] sm:$0xf]
        %v1112 = vld [vmem:[%s3 + $0xc] sm:$0xf]
        %v1113 = vld [vmem:[%s3 + $0x10] sm:$0xf]
        %v1114 = vld [vmem:[%s3 + $0x14] sm:$0xf]
        %v1115 = vld [vmem:[%s3 + $0x18] sm:$0xf]
        %v1116 = vld [vmem:[%s3 + $0x1c] sm:$0xf]
        %v1117 = vld [vmem:[%s3 + $0x20] sm:$0xf]
        %v1118 = vld [vmem:[%s3 + $0x24] sm:$0xf]
        %v1119 = vld [vmem:[%s3 + $0x28] sm:$0xf]
        %v1120 = vld [vmem:[%s3 + $0x2c] sm:$0xf]
        %v1121 = vld [vmem:[%s3 + $0x30] sm:$0xf]
        %v1122 = vld [vmem:[%s3 + $0x34] sm:$0xf]
        %v1123 = vld [vmem:[%s3 + $0x38] sm:$0xf]
        %v1124 = vld [vmem:[%s3 + $0x3c] sm:$0xf]
        %v1125 = vld [vmem:[%s4] sm:$0x1]
        %v1127 = vperm.slane %v1125, 0
        %v1131 = vunpack.c.l.b16 %v1107
        %v1132 = vunpack.c.l.b16 %v1108
        %v1133 = vpack.c.b16 %v1132, %v1131
        %v1151 = vunpack.c.l.b16 %v1109
        %v1152 = vunpack.c.l.b16 %v1110
        %v1153 = vunpack.c.l.b16 %v1111
        %v1154 = vunpack.c.l.b16 %v1112
        %v1155 = vunpack.c.l.b16 %v1113
        %v1156 = vunpack.c.l.b16 %v1114
        %v1157 = vunpack.c.l.b16 %v1115
        %v1158 = vunpack.c.l.b16 %v1116
        %v1159 = vunpack.c.l.b16 %v1117
        %v1160 = vunpack.c.l.b16 %v1118
        %v1161 = vunpack.c.l.b16 %v1119
        %v1162 = vunpack.c.l.b16 %v1120
        %v1163 = vunpack.c.l.b16 %v1121
        %v1164 = vunpack.c.l.b16 %v1122
        %v1165 = vunpack.c.l.b16 %v1123
        %v1166 = vunpack.c.l.b16 %v1124
        %v1167 = vpack.c.b16 %v1152, %v1151
        %v1168 = vpack.c.b16 %v1154, %v1153
        %v1169 = vpack.c.b16 %v1156, %v1155
        %v1170 = vpack.c.b16 %v1158, %v1157
        %v1171 = vpack.c.b16 %v1160, %v1159
        %v1172 = vpack.c.b16 %v1162, %v1161
        %v1173 = vpack.c.b16 %v1164, %v1163
        %v1174 = vpack.c.b16 %v1166, %v1165
        %1183 = vmatpush.bf16.msra.mxu0 %v1174
        %1184 = vmatpush.bf16.msra.mxu0 %v1173
        %1185 = vmatpush.bf16.msra.mxu0 %v1172
        %1186 = vmatpush.bf16.msra.mxu0 %v1171
        %1187 = vmatpush.bf16.msra.mxu0 %v1170
        %1188 = vmatpush.bf16.msra.mxu0 %v1169
        %1189 = vmatpush.bf16.msra.mxu0 %v1168
        %1190 = vmatpush.bf16.msra.mxu0 %v1167
        %1191 = vmatmul.bf16.gmra.mxu0 %v1133
        %v1192 = vpop.f32.mrf.mxu0
        %v1193 = vadd.f32 %v1127, %v1192
        %v1194 = vpop.f32.mrf.mxu0
        %v1195 = vadd.f32 %v1127, %v1194
        %1196 = vdwg.mxu0
        %v1197 = vld [vmem:[%s600] sm:$0xf]
        %v1198 = vld [vmem:[%s600 + $0x4] sm:$0xf]
        %v1199 = vunpack.c.l.bf16 %v1197
        %v1200 = vunpack.c.l.bf16 %v1198
        %v1201 = vadd.f32 %v1193, %v1199
        %v1202 = vadd.f32 %v1195, %v1200
        %1203 = vadd.xlane.f32.xlu0 %v1201
        %v1204 = vpop.xlane.xlu0 %1203
        %1205 = vadd.xlane.f32.xlu0 %v1202
        %v1206 = vpop.xlane.xlu0 %1205
        %v1207 = vrcp.pop 128.0
        %v1208 = vmul.f32 128.0, %v1207
        %v1209 = vsub.f32 1.0, %v1208
        %v1210 = vmul.f32 %v1207, %v1209
        %v1211 = vadd.f32 %v1207, %v1210
        %vm1212 = vweird.f32 %v1207
        %v1213 = vsel %vm1212, %v1207, %v1211
        %v1214 = vmul.f32 %v1204, %v1213
        %v1215 = vmul.f32 %v1206, %v1213
        %v1216 = vsub.f32 %v1201, %v1214
        %v1217 = vsub.f32 %v1202, %v1215
        %v1218 = vmul.f32 %v1216, %v1216
        %v1219 = vmul.f32 %v1217, %v1217
        %1220 = vadd.xlane.f32.xlu0 %v1218
        %v1221 = vpop.xlane.xlu0 %1220
        %1222 = vadd.xlane.f32.xlu0 %v1219
        %v1223 = vpop.xlane.xlu0 %1222
        %v1224 = vmul.f32 %v1221, %v1213
        %v1225 = vmul.f32 %v1223, %v1213
        %v1226 = vadd.f32 %v1224, 1e-05
        %v1227 = vadd.f32 %v1225, 1e-05
        %v1228 = vrsqrt.pop %v1226
        %v1229 = vmul.f32 %v1228, %v1226
        %v1230 = vmul.f32 %v1229, %v1228
        %v1231 = vmul.f32 0.5, %v1230
        %v1232 = vsub.f32 1.5, %v1231
        %v1233 = vmul.f32 %v1228, %v1232
        %vm1234 = vweird.f32 %v1226
        %vm1235 = vweird.f32 %v1228
        %vm1236 = vmor %vm1234, %vm1235
        %v1237 = vsel %vm1236, %v1228, %v1233
        %v1238 = vrsqrt.pop %v1227
        %v1239 = vmul.f32 %v1238, %v1227
        %v1240 = vmul.f32 %v1239, %v1238
        %v1241 = vmul.f32 0.5, %v1240
        %v1242 = vsub.f32 1.5, %v1241
        %v1243 = vmul.f32 %v1238, %v1242
        %vm1244 = vweird.f32 %v1227
        %vm1245 = vweird.f32 %v1238
        %vm1246 = vmor %vm1244, %vm1245
        %v1247 = vsel %vm1246, %v1238, %v1243
        %v1248 = vmul.f32 %v1216, %v1237
        %v1249 = vmul.f32 %v1217, %v1247
        %v1250 = vld [vmem:[%s6] sm:$0x1]
        %v1252 = vperm.slane %v1250, 0
        %v1254 = vmul.f32 %v1248, %v1252
        %v1255 = vmul.f32 %v1249, %v1252
        %v1256 = vld [vmem:[#allocation6] sm:$0x1]
        %v1258 = vperm.slane %v1256, 0
        %v1260 = vadd.f32 %v1254, %v1258
        %v1261 = vadd.f32 %v1255, %v1258
        %v1262 = vpack.c.bf16 %v1260, %v1260
        %v1263 = vpack.c.bf16 %v1261, %v1261
        %1264 = vst [vmem:[%s610] sm:$0xf] %v1262
        %1265 = vst [vmem:[%s610 + $0x4] sm:$0xf] %v1263
        %s1266 = smul.u32 2, %s30
        %p1267 = scmp.lt.s32.totalorder %s29, 1
        %s1268 = scalar_select %p1267, %s29, 1
        %p1269 = scmp.lt.s32.totalorder %s1266, 1
        %s1270 = scalar_select %p1269, %s1266, 1
        %s1271 = smul.addr %s1268, 2
        %s1272 = sadd.s32 %s1270, %s1271
        %s1273 = smul.addr %s1272, 4
        %s1274 = scalar_lea.vmem %s8, %s1273
        %s1275 = sand.u32 %s267, 1
        %s1276 = scalar_lea.sflag [#allocation8], %s1275
        %s1277 = sand.u32 %s267, 1
        %s1278 = smul.addr %s1277, 16
        %s1279 = scalar_lea.vmem [#allocation9], %s1278
        // Predicated region
        $region180: #{transformer_model.14} parent=162 // pred_check
          %p1280 = pneg %p249
        $region181: #{transformer_model.14} parent=162 // pred_check_branch
          %1282 = sbr.rel (%p1280) target = $region183
        $region182: #{transformer_model.14} parent=162 // pred_region
          %s1283 = smul.u32 2, %s30
        $region183: #{transformer_model.14} parent=162 // pred_fallthru
          _
        // Predicated region
        $region184: #{transformer_model.14} parent=162 // pred_check
          %p1284 = pneg %p277
        $region185: #{transformer_model.14} parent=162 // pred_check_branch
          %1286 = sbr.rel (%p1284) target = $region187
        $region186: #{transformer_model.14} parent=162 // pred_region
          %s1287 = smul.u32 2, %s30
          %1289 = vsyncadd %s1276, 0
          %s1290 = smul.addr %s29, 2
          %s1291 = sadd.s32 %s1287, %s1290
          %s1292 = smul.addr %s1291, 8
          %s1293 = scalar_lea.hbm %s9, %s1292
          %s1294 = sshll.u32 %s1279, 4
          %s1295 = int_to_ptr.vmem [resolvable:$true] %s1294
          %s1296 = sshll.u32 %s1293, 4
          %s1297 = int_to_ptr.hbm [resolvable:$true] %s1296
          %1302 = dma.vmem_to_hbm [thread:$0]  %s1295, 256, %s1297, %s1276, 128, 128, 8
        $region187: #{transformer_model.14} parent=162 // pred_fallthru
          _
      $region163: #{transformer_model.14} parent=5 // pred_fallthru
        _
      %p1303 = scmp.le.s32.totalorder 2, %s20
      // Predicated region
      $region188: #{transformer_model.14} parent=5 // pred_check
        %p1304 = pneg %p1303
      $region189: #{transformer_model.14} parent=5 // pred_check_branch
        %1306 = sbr.rel (%p1304) target = $region191
      $region190: #{transformer_model.14} parent=5 // pred_region
        %s1307 = ssub.s32 %s20, 2
        // Predicated region
        $region192: #{transformer_model.14} parent=190 // pred_check
          %p1308 = pneg %p255
        $region193: #{transformer_model.14} parent=190 // pred_check_branch
          %1310 = sbr.rel (%p1308) target = $region195
        $region194: #{transformer_model.14} parent=190 // pred_region
          %s1311 = smul.u32 2, %s32
          %p1312 = scmp.lt.s32.totalorder %s31, 1
          %s1313 = scalar_select %p1312, %s31, 1
          %p1314 = scmp.lt.s32.totalorder %s1311, 1
          %s1315 = scalar_select %p1314, %s1311, 1
          %s1316 = smul.addr %s1313, 2
          %s1317 = sadd.s32 %s1315, %s1316
          %s1318 = smul.addr %s1317, 4
          %s1319 = scalar_lea.vmem %s8, %s1318
        $region195: #{transformer_model.14} parent=190 // pred_fallthru
          _
        // Predicated region
        $region196: #{transformer_model.14} parent=190 // pred_check
          %p1320 = pneg %p283
        $region197: #{transformer_model.14} parent=190 // pred_check_branch
          %1322 = sbr.rel (%p1320) target = $region199
        $region198: #{transformer_model.14} parent=190 // pred_region
          %s1323 = sand.u32 %s268, 1
          %s1324 = scalar_lea.sflag [#allocation8], %s1323
          %s1325 = sand.u32 %s268, 1
          %s1326 = smul.addr %s1325, 16
          %s1327 = scalar_lea.vmem [#allocation9], %s1326
          %1329 = dma.done %s1324, 256
        $region199: #{transformer_model.14} parent=190 // pred_fallthru
          _
      $region191: #{transformer_model.14} parent=5 // pred_fallthru
        _
    $region6: #{transformer_model.14} parent=1 // loop_footer
      %s24 = sadd.s32 1, %s20
    $region7: #{transformer_model.14} parent=1 // loop_footer_branch
      %19 = sbr.rel target = $region3
    $region8: #{transformer_model.14} parent=1 // loop_exit
      _
    %1330 = vsyncpa [#allocation7], 1
    %s1331 = scalar_lea.sflag [#allocation7], 1
    %1332 = vsyncpa %s1331, 1
    %1333 = vsyncpa [#allocation8], 1
    %s1334 = scalar_lea.sflag [#allocation8], 1
    %1335 = vsyncpa %s1334, 1

// kernel: transformer_model.15
$region0: #{transformer_model.15}
  #allocation0 [shape = 'u32[]', space=smem, size = 0x4, offset = 0x4, fixed_abs, tag = 'smem constant byte address 0x4 - core index']
  #allocation1 [shape = 'u32[72,128]{1,0:T(1,128)}', space=vmem, size = 0x9000, scoped, tag = 'internal scratch']
  #allocation2 [shape = 'f32[32,128]{1,0:T(8,128)}', space=vmem, size = 0x4000, scoped, tag = 'scratch operand']
  %s0 = inlined_call_operand.vmem [shape: bf16[32,128], index: 0, kind: input, shape index: {}]
  %s1 = inlined_call_operand.hbm [shape: bf16[128,128], index: 1, kind: input, shape index: {}]
  %s2 = inlined_call_operand.vmem [shape: f32[1,128], index: 2, kind: input, shape index: {}]
  %s3 = inlined_call_operand.vmem [shape: bf16[32,128], index: 3, kind: output, shape index: {}]
  %s4 = sld [smem:[#allocation0]]
  $region34: #{transformer_model.15} parent=0
    _
  %s6 = ssub.s32 1, %s4
  %s7 = scalar_select 0, %s6, %s4
  $region1: #{transformer_model.15} parent=0
    #allocation3 [shape = 'u8[32768]{0}', space=vmem, size = 0x8000, scoped, tag = 'input window, operand 1, single buffered']
    #allocation4 [shape = 's32[1]{0}', space=sflag, size = 0x4, scoped, tag = 'scoped memory for transformer_model.15']
    %8 = vsyncpa [#allocation4], 0
    // Predicated region
    $region2: #{transformer_model.15} parent=1 // pred_check
      _
    $region3: #{transformer_model.15} parent=1 // pred_check_branch
      %10 = sbr.rel (0) target = $region5
    $region4: #{transformer_model.15} parent=1 // pred_region
      _
    $region5: #{transformer_model.15} parent=1 // pred_fallthru
      _
    // Predicated region
    $region6: #{transformer_model.15} parent=1 // pred_check
      _
    $region7: #{transformer_model.15} parent=1 // pred_check_branch
      %12 = sbr.rel (0) target = $region9
    $region8: #{transformer_model.15} parent=1 // pred_region
      %14 = vsyncadd [#allocation4], 0
      %s15 = sshll.u32 %s1, 4
      %s16 = int_to_ptr.hbm [resolvable:$true] %s15
      %s17 = sshll.u32 [#allocation3], 4
      %s18 = int_to_ptr.vmem [resolvable:$true] %s17
      %23 = dma.hbm_to_vmem [thread:$0]  %s16, 1024, %s18, [#allocation4], 64, 64, 4
    $region9: #{transformer_model.15} parent=1 // pred_fallthru
      _
    // Predicated region
    $region10: #{transformer_model.15} parent=1 // pred_check
      _
    $region11: #{transformer_model.15} parent=1 // pred_check_branch
      %25 = sbr.rel (0) target = $region13
    $region12: #{transformer_model.15} parent=1 // pred_region
      _
    $region13: #{transformer_model.15} parent=1 // pred_fallthru
      _
    // Predicated region
    $region14: #{transformer_model.15} parent=1 // pred_check
      _
    $region15: #{transformer_model.15} parent=1 // pred_check_branch
      %27 = sbr.rel (0) target = $region17
    $region16: #{transformer_model.15} parent=1 // pred_region
      %29 = dma.done [#allocation4], 1024
    $region17: #{transformer_model.15} parent=1 // pred_fallthru
      _
    %p30 = scmp.eq.s32.totalorder 0, 0
    // Predicated region
    $region18: #{transformer_model.15} parent=1 // pred_check
      %p31 = pneg %p30
    $region19: #{transformer_model.15} parent=1 // pred_check_branch
      %33 = sbr.rel (%p31) target = $region21
    $region20: #{transformer_model.15} parent=1 // pred_region
      %34 = vst [vmem:[#allocation2] sm:$0xff] 0.0
      %35 = vst [vmem:[#allocation2 + $0x8] sm:$0xff] 0.0
      %36 = vst [vmem:[#allocation2 + $0x10] sm:$0xff] 0.0
      %37 = vst [vmem:[#allocation2 + $0x18] sm:$0xff] 0.0
    $region21: #{transformer_model.15} parent=1 // pred_fallthru
      _
    %v38 = vld [vmem:[#allocation2] sm:$0xff]
    %v39 = vld [vmem:[#allocation2 + $0x8] sm:$0xff]
    %v40 = vld [vmem:[#allocation2 + $0x10] sm:$0xff]
    %v41 = vld [vmem:[#allocation2 + $0x18] sm:$0xff]
    %v42 = vld [vmem:[%s0] sm:$0xf]
    %v43 = vld [vmem:[%s0 + $0x4] sm:$0xf]
    %v44 = vld [vmem:[%s0 + $0x8] sm:$0xf]
    %v45 = vld [vmem:[%s0 + $0xc] sm:$0xf]
    %v46 = vld [vmem:[#allocation3] sm:$0xf]
    %v47 = vld [vmem:[#allocation3 + $0x4] sm:$0xf]
    %v48 = vld [vmem:[#allocation3 + $0x8] sm:$0xf]
    %v49 = vld [vmem:[#allocation3 + $0xc] sm:$0xf]
    %v50 = vld [vmem:[#allocation3 + $0x10] sm:$0xf]
    %v51 = vld [vmem:[#allocation3 + $0x14] sm:$0xf]
    %v52 = vld [vmem:[#allocation3 + $0x18] sm:$0xf]
    %v53 = vld [vmem:[#allocation3 + $0x1c] sm:$0xf]
    %v54 = vld [vmem:[#allocation3 + $0x20] sm:$0xf]
    %v55 = vld [vmem:[#allocation3 + $0x24] sm:$0xf]
    %v56 = vld [vmem:[#allocation3 + $0x28] sm:$0xf]
    %v57 = vld [vmem:[#allocation3 + $0x2c] sm:$0xf]
    %v58 = vld [vmem:[#allocation3 + $0x30] sm:$0xf]
    %v59 = vld [vmem:[#allocation3 + $0x34] sm:$0xf]
    %v60 = vld [vmem:[#allocation3 + $0x38] sm:$0xf]
    %v61 = vld [vmem:[#allocation3 + $0x3c] sm:$0xf]
    %v66 = vunpack.c.l.b16 %v42
    %v67 = vunpack.c.l.b16 %v43
    %v68 = vunpack.c.l.b16 %v44
    %v69 = vunpack.c.l.b16 %v45
    %v70 = vpack.c.b16 %v67, %v66
    %v71 = vpack.c.b16 %v69, %v68
    %v90 = vunpack.c.l.b16 %v46
    %v91 = vunpack.c.l.b16 %v47
    %v92 = vunpack.c.l.b16 %v48
    %v93 = vunpack.c.l.b16 %v49
    %v94 = vunpack.c.l.b16 %v50
    %v95 = vunpack.c.l.b16 %v51
    %v96 = vunpack.c.l.b16 %v52
    %v97 = vunpack.c.l.b16 %v53
    %v98 = vunpack.c.l.b16 %v54
    %v99 = vunpack.c.l.b16 %v55
    %v100 = vunpack.c.l.b16 %v56
    %v101 = vunpack.c.l.b16 %v57
    %v102 = vunpack.c.l.b16 %v58
    %v103 = vunpack.c.l.b16 %v59
    %v104 = vunpack.c.l.b16 %v60
    %v105 = vunpack.c.l.b16 %v61
    %v106 = vpack.c.b16 %v91, %v90
    %v107 = vpack.c.b16 %v93, %v92
    %v108 = vpack.c.b16 %v95, %v94
    %v109 = vpack.c.b16 %v97, %v96
    %v110 = vpack.c.b16 %v99, %v98
    %v111 = vpack.c.b16 %v101, %v100
    %v112 = vpack.c.b16 %v103, %v102
    %v113 = vpack.c.b16 %v105, %v104
    %122 = vmatpush.bf16.msra.mxu0 %v113
    %123 = vmatpush.bf16.msra.mxu0 %v112
    %124 = vmatpush.bf16.msra.mxu0 %v111
    %125 = vmatpush.bf16.msra.mxu0 %v110
    %126 = vmatpush.bf16.msra.mxu0 %v109
    %127 = vmatpush.bf16.msra.mxu0 %v108
    %128 = vmatpush.bf16.msra.mxu0 %v107
    %129 = vmatpush.bf16.msra.mxu0 %v106
    %130 = vmatmul.bf16.gmra.mxu0 %v70
    %v131 = vpop.f32.mrf.mxu0
    %v132 = vadd.f32 0.0, %v131
    %v133 = vpop.f32.mrf.mxu0
    %v134 = vadd.f32 0.0, %v133
    %135 = vmatmul.bf16.gmra.mxu0 %v71
    %v136 = vpop.f32.mrf.mxu0
    %v137 = vadd.f32 0.0, %v136
    %v138 = vpop.f32.mrf.mxu0
    %v139 = vadd.f32 0.0, %v138
    %140 = vdwg.mxu0
    %v141 = vadd.f32 %v38, %v132
    %v142 = vadd.f32 %v39, %v134
    %v143 = vadd.f32 %v40, %v137
    %v144 = vadd.f32 %v41, %v139
    %145 = vst [vmem:[#allocation2] sm:$0xff] %v141
    %146 = vst [vmem:[#allocation2 + $0x8] sm:$0xff] %v142
    %147 = vst [vmem:[#allocation2 + $0x10] sm:$0xff] %v143
    %148 = vst [vmem:[#allocation2 + $0x18] sm:$0xff] %v144
    // Predicated region
    $region22: #{transformer_model.15} parent=1 // pred_check
      %p149 = pneg %p30
    $region23: #{transformer_model.15} parent=1 // pred_check_branch
      %151 = sbr.rel (%p149) target = $region25
    $region24: #{transformer_model.15} parent=1 // pred_region
      %v152 = vld [vmem:[#allocation2] sm:$0xff]
      %v153 = vld [vmem:[#allocation2 + $0x8] sm:$0xff]
      %v154 = vld [vmem:[#allocation2 + $0x10] sm:$0xff]
      %v155 = vld [vmem:[#allocation2 + $0x18] sm:$0xff]
      %v156 = vld [vmem:[%s2] sm:$0x1]
      %v158 = vperm.slane %v156, 0
      %v160 = vadd.f32 %v152, %v158
      %v161 = vadd.f32 %v153, %v158
      %v162 = vadd.f32 %v154, %v158
      %v163 = vadd.f32 %v155, %v158
      %v164 = vpack.c.bf16 %v160, %v160
      %v165 = vpack.c.bf16 %v161, %v161
      %v166 = vpack.c.bf16 %v162, %v162
      %v167 = vpack.c.bf16 %v163, %v163
      %168 = vst [vmem:[%s3] sm:$0xf] %v164
      %169 = vst [vmem:[%s3 + $0x4] sm:$0xf] %v165
      %170 = vst [vmem:[%s3 + $0x8] sm:$0xf] %v166
      %171 = vst [vmem:[%s3 + $0xc] sm:$0xf] %v167
    $region25: #{transformer_model.15} parent=1 // pred_fallthru
      _
    // Predicated region
    $region26: #{transformer_model.15} parent=1 // pred_check
      _
    $region27: #{transformer_model.15} parent=1 // pred_check_branch
      %173 = sbr.rel (0) target = $region29
    $region28: #{transformer_model.15} parent=1 // pred_region
      _
    $region29: #{transformer_model.15} parent=1 // pred_fallthru
      _
    // Predicated region
    $region30: #{transformer_model.15} parent=1 // pred_check
      _
    $region31: #{transformer_model.15} parent=1 // pred_check_branch
      %175 = sbr.rel (0) target = $region33
    $region32: #{transformer_model.15} parent=1 // pred_region
      _
    $region33: #{transformer_model.15} parent=1 // pred_fallthru
      _
    %176 = vsyncpa [#allocation4], 1

// kernel: transformer_model.18
$region0: #{transformer_model.18}
  #allocation0 [shape = 'u32[]', space=smem, size = 0x4, offset = 0x4, fixed_abs, tag = 'smem constant byte address 0x4 - core index']
  #allocation1 [shape = 'u32[72,128]{1,0:T(1,128)}', space=vmem, size = 0x9000, scoped, tag = 'internal scratch']
  #allocation2 [shape = 'f32[32,128]{1,0:T(8,128)}', space=vmem, size = 0x4000, scoped, tag = 'scratch operand']
  %s0 = inlined_call_operand.vmem [shape: bf16[32,128], index: 0, kind: input, shape index: {}]
  %s1 = inlined_call_operand.hbm [shape: bf16[128,256], index: 1, kind: input, shape index: {}]
  %s2 = inlined_call_operand.vmem [shape: f32[1,256], index: 2, kind: input, shape index: {}]
  %s3 = inlined_call_operand.hbm [shape: bf16[256,128], index: 3, kind: input, shape index: {}]
  %s4 = inlined_call_operand.vmem [shape: f32[1,128], index: 4, kind: input, shape index: {}]
  %s5 = inlined_call_operand.vmem [shape: f32[1,128], index: 5, kind: input, shape index: {}]
  %s6 = inlined_call_operand.hbm [shape: f32[1,128], index: 6, kind: input, shape index: {}]
  %s7 = inlined_call_operand.vmem [shape: bf16[32,128], index: 7, kind: output, shape index: {}]
  %s8 = sld [smem:[#allocation0]]
  $region58: #{transformer_model.18} parent=0
    _
  %s10 = ssub.s32 1, %s8
  %s11 = scalar_select 0, %s10, %s8
  $region1: #{transformer_model.18} parent=0
    #allocation3 [shape = 'u8[65536]{0}', space=vmem, size = 0x10000, scoped, tag = 'input window, operand 1, single buffered']
    #allocation4 [shape = 's32[1]{0}', space=sflag, size = 0x4, scoped, tag = 'scoped memory for transformer_model.18']
    #allocation5 [shape = 'u8[65536]{0}', space=vmem, size = 0x10000, scoped, tag = 'input window, operand 3, single buffered']
    #allocation6 [shape = 's32[1]{0}', space=sflag, size = 0x4, scoped, tag = 'scoped memory for transformer_model.18']
    #allocation7 [shape = 'u8[512]{0}', space=vmem, size = 0x400, scoped, tag = 'input window, operand 6, single buffered']
    %12 = vsyncpa [#allocation4], 0
    %13 = vsyncpa [#allocation6], 0
    // Predicated region
    $region2: #{transformer_model.18} parent=1 // pred_check
      _
    $region3: #{transformer_model.18} parent=1 // pred_check_branch
      %15 = sbr.rel (0) target = $region5
    $region4: #{transformer_model.18} parent=1 // pred_region
      _
    $region5: #{transformer_model.18} parent=1 // pred_fallthru
      _
    // Predicated region
    $region6: #{transformer_model.18} parent=1 // pred_check
      _
    $region7: #{transformer_model.18} parent=1 // pred_check_branch
      %17 = sbr.rel (0) target = $region9
    $region8: #{transformer_model.18} parent=1 // pred_region
      %19 = vsyncadd [#allocation4], 0
      %s20 = sshll.u32 %s1, 4
      %s21 = int_to_ptr.hbm [resolvable:$true] %s20
      %s22 = sshll.u32 [#allocation3], 4
      %s23 = int_to_ptr.vmem [resolvable:$true] %s22
      %28 = dma.hbm_to_vmem [thread:$0]  %s21, 2048, %s23, [#allocation4], 128, 128, 8
    $region9: #{transformer_model.18} parent=1 // pred_fallthru
      _
    // Predicated region
    $region10: #{transformer_model.18} parent=1 // pred_check
      _
    $region11: #{transformer_model.18} parent=1 // pred_check_branch
      %30 = sbr.rel (0) target = $region13
    $region12: #{transformer_model.18} parent=1 // pred_region
      _
    $region13: #{transformer_model.18} parent=1 // pred_fallthru
      _
    // Predicated region
    $region14: #{transformer_model.18} parent=1 // pred_check
      _
    $region15: #{transformer_model.18} parent=1 // pred_check_branch
      %32 = sbr.rel (0) target = $region17
    $region16: #{transformer_model.18} parent=1 // pred_region
      %34 = vsyncadd [#allocation6], 0
      %s35 = sshll.u32 %s3, 4
      %s36 = int_to_ptr.hbm [resolvable:$true] %s35
      %s37 = sshll.u32 [#allocation5], 4
      %s38 = int_to_ptr.vmem [resolvable:$true] %s37
      %43 = dma.hbm_to_vmem [thread:$0]  %s36, 2048, %s38, [#allocation6], 64, 64, 4
    $region17: #{transformer_model.18} parent=1 // pred_fallthru
      _
    // Predicated region
    $region18: #{transformer_model.18} parent=1 // pred_check
      _
    $region19: #{transformer_model.18} parent=1 // pred_check_branch
      %45 = sbr.rel (0) target = $region21
    $region20: #{transformer_model.18} parent=1 // pred_region
      _
    $region21: #{transformer_model.18} parent=1 // pred_fallthru
      _
    // Predicated region
    $region22: #{transformer_model.18} parent=1 // pred_check
      _
    $region23: #{transformer_model.18} parent=1 // pred_check_branch
      %47 = sbr.rel (0) target = $region25
    $region24: #{transformer_model.18} parent=1 // pred_region
      _
    $region25: #{transformer_model.18} parent=1 // pred_fallthru
      _
    // Predicated region
    $region26: #{transformer_model.18} parent=1 // pred_check
      _
    $region27: #{transformer_model.18} parent=1 // pred_check_branch
      %49 = sbr.rel (0) target = $region29
    $region28: #{transformer_model.18} parent=1 // pred_region
      %51 = vsyncadd [#allocation6], 0
      %s53 = sshll.u32 %s6, 4
      %s54 = int_to_ptr.hbm [resolvable:$true] %s53
      %s55 = sshll.u32 [#allocation7], 4
      %s56 = int_to_ptr.vmem [resolvable:$true] %s55
      %58 = dma.hbm_to_vmem [thread:$0]  %s54, 16, %s56, [#allocation6]
    $region29: #{transformer_model.18} parent=1 // pred_fallthru
      _
    // Predicated region
    $region30: #{transformer_model.18} parent=1 // pred_check
      _
    $region31: #{transformer_model.18} parent=1 // pred_check_branch
      %60 = sbr.rel (0) target = $region33
    $region32: #{transformer_model.18} parent=1 // pred_region
      %62 = dma.done [#allocation4], 2048
    $region33: #{transformer_model.18} parent=1 // pred_fallthru
      _
    // Predicated region
    $region34: #{transformer_model.18} parent=1 // pred_check
      _
    $region35: #{transformer_model.18} parent=1 // pred_check_branch
      %64 = sbr.rel (0) target = $region37
    $region36: #{transformer_model.18} parent=1 // pred_region
      %66 = dma.done [#allocation6], 2048
    $region37: #{transformer_model.18} parent=1 // pred_fallthru
      _
    // Predicated region
    $region38: #{transformer_model.18} parent=1 // pred_check
      _
    $region39: #{transformer_model.18} parent=1 // pred_check_branch
      %68 = sbr.rel (0) target = $region41
    $region40: #{transformer_model.18} parent=1 // pred_region
      %70 = dma.done [#allocation6], 16
    $region41: #{transformer_model.18} parent=1 // pred_fallthru
      _
    %p71 = scmp.eq.s32.totalorder 0, 0
    // Predicated region
    $region42: #{transformer_model.18} parent=1 // pred_check
      %p72 = pneg %p71
    $region43: #{transformer_model.18} parent=1 // pred_check_branch
      %74 = sbr.rel (%p72) target = $region45
    $region44: #{transformer_model.18} parent=1 // pred_region
      %75 = vst [vmem:[#allocation2] sm:$0xff] 0.0
      %76 = vst [vmem:[#allocation2 + $0x8] sm:$0xff] 0.0
      %77 = vst [vmem:[#allocation2 + $0x10] sm:$0xff] 0.0
      %78 = vst [vmem:[#allocation2 + $0x18] sm:$0xff] 0.0
    $region45: #{transformer_model.18} parent=1 // pred_fallthru
      _
    %v79 = vld [vmem:[%s0] sm:$0xf]
    %v80 = vld [vmem:[%s0 + $0x4] sm:$0xf]
    %v81 = vld [vmem:[%s0 + $0x8] sm:$0xf]
    %v82 = vld [vmem:[%s0 + $0xc] sm:$0xf]
    %v83 = vld [vmem:[#allocation3] sm:$0xff]
    %v84 = vld [vmem:[#allocation3 + $0x8] sm:$0xff]
    %v85 = vld [vmem:[#allocation3 + $0x10] sm:$0xff]
    %v86 = vld [vmem:[#allocation3 + $0x18] sm:$0xff]
    %v87 = vld [vmem:[#allocation3 + $0x20] sm:$0xff]
    %v88 = vld [vmem:[#allocation3 + $0x28] sm:$0xff]
    %v89 = vld [vmem:[#allocation3 + $0x30] sm:$0xff]
    %v90 = vld [vmem:[#allocation3 + $0x38] sm:$0xff]
    %v91 = vld [vmem:[#allocation3 + $0x40] sm:$0xff]
    %v92 = vld [vmem:[#allocation3 + $0x48] sm:$0xff]
    %v93 = vld [vmem:[#allocation3 + $0x50] sm:$0xff]
    %v94 = vld [vmem:[#allocation3 + $0x58] sm:$0xff]
    %v95 = vld [vmem:[#allocation3 + $0x60] sm:$0xff]
    %v96 = vld [vmem:[#allocation3 + $0x68] sm:$0xff]
    %v97 = vld [vmem:[#allocation3 + $0x70] sm:$0xff]
    %v98 = vld [vmem:[#allocation3 + $0x78] sm:$0xff]
    %v99 = vld [vmem:[%s2] sm:$0x3]
    %v101 = vperm.slane %v99, 0
    %v102 = vperm.slane %v99, 1
    %v109 = vunpack.c.l.b16 %v79
    %v110 = vunpack.c.l.b16 %v80
    %v111 = vunpack.c.l.b16 %v81
    %v112 = vunpack.c.l.b16 %v82
    %v113 = vpack.c.b16 %v110, %v109
    %v114 = vpack.c.b16 %v112, %v111
    %v133 = vunpack.c.l.b16 %v83
    %v134 = vunpack.c.h.b16 %v83
    %v135 = vunpack.c.l.b16 %v84
    %v136 = vunpack.c.h.b16 %v84
    %v137 = vunpack.c.l.b16 %v85
    %v138 = vunpack.c.h.b16 %v85
    %v139 = vunpack.c.l.b16 %v86
    %v140 = vunpack.c.h.b16 %v86
    %v141 = vunpack.c.l.b16 %v87
    %v142 = vunpack.c.h.b16 %v87
    %v143 = vunpack.c.l.b16 %v88
    %v144 = vunpack.c.h.b16 %v88
    %v145 = vunpack.c.l.b16 %v89
    %v146 = vunpack.c.h.b16 %v89
    %v147 = vunpack.c.l.b16 %v90
    %v148 = vunpack.c.h.b16 %v90
    %v149 = vunpack.c.l.b16 %v91
    %v150 = vunpack.c.h.b16 %v91
    %v151 = vunpack.c.l.b16 %v92
    %v152 = vunpack.c.h.b16 %v92
    %v153 = vunpack.c.l.b16 %v93
    %v154 = vunpack.c.h.b16 %v93
    %v155 = vunpack.c.l.b16 %v94
    %v156 = vunpack.c.h.b16 %v94
    %v157 = vunpack.c.l.b16 %v95
    %v158 = vunpack.c.h.b16 %v95
    %v159 = vunpack.c.l.b16 %v96
    %v160 = vunpack.c.h.b16 %v96
    %v161 = vunpack.c.l.b16 %v97
    %v162 = vunpack.c.h.b16 %v97
    %v163 = vunpack.c.l.b16 %v98
    %v164 = vunpack.c.h.b16 %v98
    %v165 = vpack.c.b16 %v135, %v133
    %v166 = vpack.c.b16 %v136, %v134
    %v167 = vpack.c.b16 %v139, %v137
    %v168 = vpack.c.b16 %v140, %v138
    %v169 = vpack.c.b16 %v143, %v141
    %v170 = vpack.c.b16 %v144, %v142
    %v171 = vpack.c.b16 %v147, %v145
    %v172 = vpack.c.b16 %v148, %v146
    %v173 = vpack.c.b16 %v151, %v149
    %v174 = vpack.c.b16 %v152, %v150
    %v175 = vpack.c.b16 %v155, %v153
    %v176 = vpack.c.b16 %v156, %v154
    %v177 = vpack.c.b16 %v159, %v157
    %v178 = vpack.c.b16 %v160, %v158
    %v179 = vpack.c.b16 %v163, %v161
    %v180 = vpack.c.b16 %v164, %v162
    %197 = vmatpush.bf16.msra.mxu0 %v179
    %198 = vmatpush.bf16.msra.mxu0 %v177
    %199 = vmatpush.bf16.msra.mxu0 %v175
    %200 = vmatpush.bf16.msra.mxu0 %v173
    %201 = vmatpush.bf16.msra.mxu0 %v171
    %202 = vmatpush.bf16.msra.mxu0 %v169
    %203 = vmatpush.bf16.msra.mxu0 %v167
    %204 = vmatpush.bf16.msra.mxu0 %v165
    %205 = vmatmul.bf16.gmra.mxu0 %v113
    %v206 = vpop.f32.mrf.mxu0
    %v207 = vadd.f32 %v101, %v206
    %v208 = vpop.f32.mrf.mxu0
    %v209 = vadd.f32 %v101, %v208
    %210 = vmatmul.bf16.gmra.mxu0 %v114
    %v211 = vpop.f32.mrf.mxu0
    %v212 = vadd.f32 %v101, %v211
    %v213 = vpop.f32.mrf.mxu0
    %v214 = vadd.f32 %v101, %v213
    %215 = vdwg.mxu0
    %216 = vmatpush.bf16.msra.mxu0 %v180
    %217 = vmatpush.bf16.msra.mxu0 %v178
    %218 = vmatpush.bf16.msra.mxu0 %v176
    %219 = vmatpush.bf16.msra.mxu0 %v174
    %220 = vmatpush.bf16.msra.mxu0 %v172
    %221 = vmatpush.bf16.msra.mxu0 %v170
    %222 = vmatpush.bf16.msra.mxu0 %v168
    %223 = vmatpush.bf16.msra.mxu0 %v166
    %224 = vmatmul.bf16.gmra.mxu0 %v113
    %v225 = vpop.f32.mrf.mxu0
    %v226 = vadd.f32 %v102, %v225
    %v227 = vpop.f32.mrf.mxu0
    %v228 = vadd.f32 %v102, %v227
    %229 = vmatmul.bf16.gmra.mxu0 %v114
    %v230 = vpop.f32.mrf.mxu0
    %v231 = vadd.f32 %v102, %v230
    %v232 = vpop.f32.mrf.mxu0
    %v233 = vadd.f32 %v102, %v232
    %234 = vdwg.mxu0
    %v235 = vmax.f32 %v207, 0.0
    %v236 = vmax.f32 %v226, 0.0
    %v237 = vmax.f32 %v209, 0.0
    %v238 = vmax.f32 %v228, 0.0
    %v239 = vmax.f32 %v212, 0.0
    %v240 = vmax.f32 %v231, 0.0
    %v241 = vmax.f32 %v214, 0.0
    %v242 = vmax.f32 %v233, 0.0
    %v243 = vld [vmem:[#allocation2] sm:$0xff]
    %v244 = vld [vmem:[#allocation2 + $0x8] sm:$0xff]
    %v245 = vld [vmem:[#allocation2 + $0x10] sm:$0xff]
    %v246 = vld [vmem:[#allocation2 + $0x18] sm:$0xff]
    %v247 = vpack.c.bf16 %v237, %v235
    %v248 = vpack.c.bf16 %v238, %v236
    %v249 = vpack.c.bf16 %v241, %v239
    %v250 = vpack.c.bf16 %v242, %v240
    %v251 = vld [vmem:[#allocation5] sm:$0xf]
    %v252 = vld [vmem:[#allocation5 + $0x4] sm:$0xf]
    %v253 = vld [vmem:[#allocation5 + $0x8] sm:$0xf]
    %v254 = vld [vmem:[#allocation5 + $0xc] sm:$0xf]
    %v255 = vld [vmem:[#allocation5 + $0x10] sm:$0xf]
    %v256 = vld [vmem:[#allocation5 + $0x14] sm:$0xf]
    %v257 = vld [vmem:[#allocation5 + $0x18] sm:$0xf]
    %v258 = vld [vmem:[#allocation5 + $0x1c] sm:$0xf]
    %v259 = vld [vmem:[#allocation5 + $0x20] sm:$0xf]
    %v260 = vld [vmem:[#allocation5 + $0x24] sm:$0xf]
    %v261 = vld [vmem:[#allocation5 + $0x28] sm:$0xf]
    %v262 = vld [vmem:[#allocation5 + $0x2c] sm:$0xf]
    %v263 = vld [vmem:[#allocation5 + $0x30] sm:$0xf]
    %v264 = vld [vmem:[#allocation5 + $0x34] sm:$0xf]
    %v265 = vld [vmem:[#allocation5 + $0x38] sm:$0xf]
    %v266 = vld [vmem:[#allocation5 + $0x3c] sm:$0xf]
    %v267 = vld [vmem:[#allocation5 + $0x40] sm:$0xf]
    %v268 = vld [vmem:[#allocation5 + $0x44] sm:$0xf]
    %v269 = vld [vmem:[#allocation5 + $0x48] sm:$0xf]
    %v270 = vld [vmem:[#allocation5 + $0x4c] sm:$0xf]
    %v271 = vld [vmem:[#allocation5 + $0x50] sm:$0xf]
    %v272 = vld [vmem:[#allocation5 + $0x54] sm:$0xf]
    %v273 = vld [vmem:[#allocation5 + $0x58] sm:$0xf]
    %v274 = vld [vmem:[#allocation5 + $0x5c] sm:$0xf]
    %v275 = vld [vmem:[#allocation5 + $0x60] sm:$0xf]
    %v276 = vld [vmem:[#allocation5 + $0x64] sm:$0xf]
    %v277 = vld [vmem:[#allocation5 + $0x68] sm:$0xf]
    %v278 = vld [vmem:[#allocation5 + $0x6c] sm:$0xf]
    %v279 = vld [vmem:[#allocation5 + $0x70] sm:$0xf]
    %v280 = vld [vmem:[#allocation5 + $0x74] sm:$0xf]
    %v281 = vld [vmem:[#allocation5 + $0x78] sm:$0xf]
    %v282 = vld [vmem:[#allocation5 + $0x7c] sm:$0xf]
    %v315 = vunpack.c.l.b16 %v251
    %v316 = vunpack.c.l.b16 %v252
    %v317 = vunpack.c.l.b16 %v253
    %v318 = vunpack.c.l.b16 %v254
    %v319 = vunpack.c.l.b16 %v255
    %v320 = vunpack.c.l.b16 %v256
    %v321 = vunpack.c.l.b16 %v257
    %v322 = vunpack.c.l.b16 %v258
    %v323 = vunpack.c.l.b16 %v259
    %v324 = vunpack.c.l.b16 %v260
    %v325 = vunpack.c.l.b16 %v261
    %v326 = vunpack.c.l.b16 %v262
    %v327 = vunpack.c.l.b16 %v263
    %v328 = vunpack.c.l.b16 %v264
    %v329 = vunpack.c.l.b16 %v265
    %v330 = vunpack.c.l.b16 %v266
    %v331 = vunpack.c.l.b16 %v267
    %v332 = vunpack.c.l.b16 %v268
    %v333 = vunpack.c.l.b16 %v269
    %v334 = vunpack.c.l.b16 %v270
    %v335 = vunpack.c.l.b16 %v271
    %v336 = vunpack.c.l.b16 %v272
    %v337 = vunpack.c.l.b16 %v273
    %v338 = vunpack.c.l.b16 %v274
    %v339 = vunpack.c.l.b16 %v275
    %v340 = vunpack.c.l.b16 %v276
    %v341 = vunpack.c.l.b16 %v277
    %v342 = vunpack.c.l.b16 %v278
    %v343 = vunpack.c.l.b16 %v279
    %v344 = vunpack.c.l.b16 %v280
    %v345 = vunpack.c.l.b16 %v281
    %v346 = vunpack.c.l.b16 %v282
    %v347 = vpack.c.b16 %v316, %v315
    %v348 = vpack.c.b16 %v318, %v317
    %v349 = vpack.c.b16 %v320, %v319
    %v350 = vpack.c.b16 %v322, %v321
    %v351 = vpack.c.b16 %v324, %v323
    %v352 = vpack.c.b16 %v326, %v325
    %v353 = vpack.c.b16 %v328, %v327
    %v354 = vpack.c.b16 %v330, %v329
    %v355 = vpack.c.b16 %v332, %v331
    %v356 = vpack.c.b16 %v334, %v333
    %v357 = vpack.c.b16 %v336, %v335
    %v358 = vpack.c.b16 %v338, %v337
    %v359 = vpack.c.b16 %v340, %v339
    %v360 = vpack.c.b16 %v342, %v341
    %v361 = vpack.c.b16 %v344, %v343
    %v362 = vpack.c.b16 %v346, %v345
    %379 = vmatpush.bf16.msra.mxu0 %v354
    %380 = vmatpush.bf16.msra.mxu0 %v353
    %381 = vmatpush.bf16.msra.mxu0 %v352
    %382 = vmatpush.bf16.msra.mxu0 %v351
    %383 = vmatpush.bf16.msra.mxu0 %v350
    %384 = vmatpush.bf16.msra.mxu0 %v349
    %385 = vmatpush.bf16.msra.mxu0 %v348
    %386 = vmatpush.bf16.msra.mxu0 %v347
    %387 = vmatmul.bf16.gmra.mxu0 %v247
    %v388 = vpop.f32.mrf.mxu0
    %v389 = vadd.f32 0.0, %v388
    %v390 = vpop.f32.mrf.mxu0
    %v391 = vadd.f32 0.0, %v390
    %392 = vmatmul.bf16.gmra.mxu0 %v249
    %v393 = vpop.f32.mrf.mxu0
    %v394 = vadd.f32 0.0, %v393
    %v395 = vpop.f32.mrf.mxu0
    %v396 = vadd.f32 0.0, %v395
    %397 = vdwg.mxu0
    %398 = vmatpush.bf16.msra.mxu0 %v362
    %399 = vmatpush.bf16.msra.mxu0 %v361
    %400 = vmatpush.bf16.msra.mxu0 %v360
    %401 = vmatpush.bf16.msra.mxu0 %v359
    %402 = vmatpush.bf16.msra.mxu0 %v358
    %403 = vmatpush.bf16.msra.mxu0 %v357
    %404 = vmatpush.bf16.msra.mxu0 %v356
    %405 = vmatpush.bf16.msra.mxu0 %v355
    %406 = vmatmul.bf16.gmra.mxu0 %v248
    %v407 = vpop.f32.mrf.mxu0
    %v408 = vadd.f32 %v389, %v407
    %v409 = vpop.f32.mrf.mxu0
    %v410 = vadd.f32 %v391, %v409
    %411 = vmatmul.bf16.gmra.mxu0 %v250
    %v412 = vpop.f32.mrf.mxu0
    %v413 = vadd.f32 %v394, %v412
    %v414 = vpop.f32.mrf.mxu0
    %v415 = vadd.f32 %v396, %v414
    %416 = vdwg.mxu0
    %v417 = vadd.f32 %v243, %v408
    %v418 = vadd.f32 %v244, %v410
    %v419 = vadd.f32 %v245, %v413
    %v420 = vadd.f32 %v246, %v415
    %421 = vst [vmem:[#allocation2] sm:$0xff] %v417
    %422 = vst [vmem:[#allocation2 + $0x8] sm:$0xff] %v418
    %423 = vst [vmem:[#allocation2 + $0x10] sm:$0xff] %v419
    %424 = vst [vmem:[#allocation2 + $0x18] sm:$0xff] %v420
    // Predicated region
    $region46: #{transformer_model.18} parent=1 // pred_check
      %p425 = pneg %p71
    $region47: #{transformer_model.18} parent=1 // pred_check_branch
      %427 = sbr.rel (%p425) target = $region49
    $region48: #{transformer_model.18} parent=1 // pred_region
      %v428 = vld [vmem:[#allocation2] sm:$0xff]
      %v429 = vld [vmem:[#allocation2 + $0x8] sm:$0xff]
      %v430 = vld [vmem:[#allocation2 + $0x10] sm:$0xff]
      %v431 = vld [vmem:[#allocation2 + $0x18] sm:$0xff]
      %v432 = vld [vmem:[%s4] sm:$0x1]
      %v434 = vperm.slane %v432, 0
      %v436 = vadd.f32 %v428, %v434
      %v437 = vadd.f32 %v429, %v434
      %v438 = vadd.f32 %v430, %v434
      %v439 = vadd.f32 %v431, %v434
      %v440 = vld [vmem:[%s0] sm:$0xf]
      %v441 = vld [vmem:[%s0 + $0x4] sm:$0xf]
      %v442 = vld [vmem:[%s0 + $0x8] sm:$0xf]
      %v443 = vld [vmem:[%s0 + $0xc] sm:$0xf]
      %v444 = vunpack.c.l.bf16 %v440
      %v445 = vunpack.c.l.bf16 %v441
      %v446 = vunpack.c.l.bf16 %v442
      %v447 = vunpack.c.l.bf16 %v443
      %v448 = vadd.f32 %v436, %v444
      %v449 = vadd.f32 %v437, %v445
      %v450 = vadd.f32 %v438, %v446
      %v451 = vadd.f32 %v439, %v447
      %452 = vadd.xlane.f32.xlu0 %v448
      %v453 = vpop.xlane.xlu0 %452
      %454 = vadd.xlane.f32.xlu0 %v449
      %v455 = vpop.xlane.xlu0 %454
      %456 = vadd.xlane.f32.xlu0 %v450
      %v457 = vpop.xlane.xlu0 %456
      %458 = vadd.xlane.f32.xlu0 %v451
      %v459 = vpop.xlane.xlu0 %458
      %v460 = vrcp.pop 128.0
      %v461 = vmul.f32 128.0, %v460
      %v462 = vsub.f32 1.0, %v461
      %v463 = vmul.f32 %v460, %v462
      %v464 = vadd.f32 %v460, %v463
      %vm465 = vweird.f32 %v460
      %v466 = vsel %vm465, %v460, %v464
      %v467 = vmul.f32 %v453, %v466
      %v468 = vmul.f32 %v455, %v466
      %v469 = vmul.f32 %v457, %v466
      %v470 = vmul.f32 %v459, %v466
      %v471 = vsub.f32 %v448, %v467
      %v472 = vsub.f32 %v449, %v468
      %v473 = vsub.f32 %v450, %v469
      %v474 = vsub.f32 %v451, %v470
      %v475 = vmul.f32 %v471, %v471
      %v476 = vmul.f32 %v472, %v472
      %v477 = vmul.f32 %v473, %v473
      %v478 = vmul.f32 %v474, %v474
      %479 = vadd.xlane.f32.xlu0 %v475
      %v480 = vpop.xlane.xlu0 %479
      %481 = vadd.xlane.f32.xlu0 %v476
      %v482 = vpop.xlane.xlu0 %481
      %483 = vadd.xlane.f32.xlu0 %v477
      %v484 = vpop.xlane.xlu0 %483
      %485 = vadd.xlane.f32.xlu0 %v478
      %v486 = vpop.xlane.xlu0 %485
      %v487 = vmul.f32 %v480, %v466
      %v488 = vmul.f32 %v482, %v466
      %v489 = vmul.f32 %v484, %v466
      %v490 = vmul.f32 %v486, %v466
      %v491 = vadd.f32 %v487, 1e-05
      %v492 = vadd.f32 %v488, 1e-05
      %v493 = vadd.f32 %v489, 1e-05
      %v494 = vadd.f32 %v490, 1e-05
      %v495 = vrsqrt.pop %v491
      %v496 = vmul.f32 %v495, %v491
      %v497 = vmul.f32 %v496, %v495
      %v498 = vmul.f32 0.5, %v497
      %v499 = vsub.f32 1.5, %v498
      %v500 = vmul.f32 %v495, %v499
      %vm501 = vweird.f32 %v491
      %vm502 = vweird.f32 %v495
      %vm503 = vmor %vm501, %vm502
      %v504 = vsel %vm503, %v495, %v500
      %v505 = vrsqrt.pop %v492
      %v506 = vmul.f32 %v505, %v492
      %v507 = vmul.f32 %v506, %v505
      %v508 = vmul.f32 0.5, %v507
      %v509 = vsub.f32 1.5, %v508
      %v510 = vmul.f32 %v505, %v509
      %vm511 = vweird.f32 %v492
      %vm512 = vweird.f32 %v505
      %vm513 = vmor %vm511, %vm512
      %v514 = vsel %vm513, %v505, %v510
      %v515 = vrsqrt.pop %v493
      %v516 = vmul.f32 %v515, %v493
      %v517 = vmul.f32 %v516, %v515
      %v518 = vmul.f32 0.5, %v517
      %v519 = vsub.f32 1.5, %v518
      %v520 = vmul.f32 %v515, %v519
      %vm521 = vweird.f32 %v493
      %vm522 = vweird.f32 %v515
      %vm523 = vmor %vm521, %vm522
      %v524 = vsel %vm523, %v515, %v520
      %v525 = vrsqrt.pop %v494
      %v526 = vmul.f32 %v525, %v494
      %v527 = vmul.f32 %v526, %v525
      %v528 = vmul.f32 0.5, %v527
      %v529 = vsub.f32 1.5, %v528
      %v530 = vmul.f32 %v525, %v529
      %vm531 = vweird.f32 %v494
      %vm532 = vweird.f32 %v525
      %vm533 = vmor %vm531, %vm532
      %v534 = vsel %vm533, %v525, %v530
      %v535 = vmul.f32 %v471, %v504
      %v536 = vmul.f32 %v472, %v514
      %v537 = vmul.f32 %v473, %v524
      %v538 = vmul.f32 %v474, %v534
      %v539 = vld [vmem:[%s5] sm:$0x1]
      %v541 = vperm.slane %v539, 0
      %v543 = vmul.f32 %v535, %v541
      %v544 = vmul.f32 %v536, %v541
      %v545 = vmul.f32 %v537, %v541
      %v546 = vmul.f32 %v538, %v541
      %v547 = vld [vmem:[#allocation7] sm:$0x1]
      %v549 = vperm.slane %v547, 0
      %v551 = vadd.f32 %v543, %v549
      %v552 = vadd.f32 %v544, %v549
      %v553 = vadd.f32 %v545, %v549
      %v554 = vadd.f32 %v546, %v549
      %v555 = vpack.c.bf16 %v551, %v551
      %v556 = vpack.c.bf16 %v552, %v552
      %v557 = vpack.c.bf16 %v553, %v553
      %v558 = vpack.c.bf16 %v554, %v554
      %559 = vst [vmem:[%s7] sm:$0xf] %v555
      %560 = vst [vmem:[%s7 + $0x4] sm:$0xf] %v556
      %561 = vst [vmem:[%s7 + $0x8] sm:$0xf] %v557
      %562 = vst [vmem:[%s7 + $0xc] sm:$0xf] %v558
    $region49: #{transformer_model.18} parent=1 // pred_fallthru
      _
    // Predicated region
    $region50: #{transformer_model.18} parent=1 // pred_check
      _
    $region51: #{transformer_model.18} parent=1 // pred_check_branch
      %564 = sbr.rel (0) target = $region53
    $region52: #{transformer_model.18} parent=1 // pred_region
      _
    $region53: #{transformer_model.18} parent=1 // pred_fallthru
      _
    // Predicated region
    $region54: #{transformer_model.18} parent=1 // pred_check
      _
    $region55: #{transformer_model.18} parent=1 // pred_check_branch
      %566 = sbr.rel (0) target = $region57
    $region56: #{transformer_model.18} parent=1 // pred_region
      _
    $region57: #{transformer_model.18} parent=1 // pred_fallthru
      _
    %567 = vsyncpa [#allocation4], 1
    %568 = vsyncpa [#allocation6], 1

// kernel: transformer_model.17
$region0: #{transformer_model.17}
  #allocation0 [shape = 'u32[]', space=smem, size = 0x4, offset = 0x4, fixed_abs, tag = 'smem constant byte address 0x4 - core index']
  #allocation1 [shape = 'u32[72,128]{1,0:T(1,128)}', space=vmem, size = 0x9000, scoped, tag = 'internal scratch']
  #allocation2 [shape = 'bf16[16,128]{1,0:T(8,128)(2,1)}', space=vmem, size = 0x1000, scoped, tag = 'scratch operand']
  %s0 = inlined_call_operand.vmem [shape: bf16[2,16,128], index: 0, kind: input, shape index: {}]
  %s1 = inlined_call_operand.vmem [shape: bf16[2,16,256], index: 1, kind: input, shape index: {}, may-alias: {1,2}]
  %s2 = inlined_call_operand.vmem [shape: bf16[2,16,256], index: 2, kind: input, shape index: {}, may-alias: {1,2}]
  %s3 = inlined_call_operand.hbm [shape: bf16[128,128], index: 3, kind: input, shape index: {}]
  %s4 = inlined_call_operand.vmem [shape: f32[1,128], index: 4, kind: input, shape index: {}]
  %s5 = inlined_call_operand.vmem [shape: bf16[2,16,128], index: 5, kind: input, shape index: {}]
  %s6 = inlined_call_operand.vmem [shape: f32[1,128], index: 6, kind: input, shape index: {}]
  %s7 = inlined_call_operand.vmem [shape: f32[1,128], index: 7, kind: input, shape index: {}]
  %s8 = inlined_call_operand.vmem [shape: bf16[2,16,128], index: 8, kind: output, shape index: {0}]
  %s9 = inlined_call_operand.hbm [shape: f32[2,16,16], index: 9, kind: output, shape index: {1}]
  %10 = xla_tuple %s8, %s9
  %s11 = sld [smem:[#allocation0]]
  $region159: #{transformer_model.17} parent=0
    _
  %s13 = ssub.s32 1, %s11
  %s14 = scalar_select 0, %s13, %s11
  $region1: #{transformer_model.17} parent=0
    #allocation3 [shape = 'u8[8192]{0}', space=vmem, size = 0x2000, scoped, tag = 'input window, operand 1']
    #allocation4 [shape = 'u8[8192]{0}', space=vmem, size = 0x2000, scoped, tag = 'input window, operand 2']
    #allocation5 [shape = 'u8[32768]{0}', space=vmem, size = 0x8000, scoped, tag = 'input window, operand 3, single buffered']
    #allocation6 [shape = 's32[2]{0}', space=sflag, size = 0x8, scoped, tag = 'scoped memory for transformer_model.17']
    #allocation7 [shape = 's32[2]{0}', space=sflag, size = 0x8, scoped, tag = 'scoped memory for transformer_model.17']
    #allocation8 [shape = 'u8[16384]{0}', space=vmem, size = 0x4000, scoped, tag = 'output window, operand 1']
    %15 = vsyncpa [#allocation6], 0
    %16 = vsyncpa [#allocation7], 0
    %s17 = scalar_lea.sflag [#allocation7], 1
    %18 = vsyncpa %s17, 0
    loop: start=0, step=1, limit=4
    $region2: #{transformer_model.17} parent=1 // loop_pre_header
      _
    $region3: #{transformer_model.17} parent=1 // loop_header
      %s20 = sphi 0, %s24
      %p21 = scmp.ge.s32.totalorder %s20, 4
      %s27 = sphi 0, %s39
      %s28 = sphi 0, %s35
      %s29 = sphi 0, %s27
      %s30 = sphi 0, %s28
      %s31 = sphi 0, %s29
      %s32 = sphi 0, %s30
      %s44 = sphi 0, %s46
      %s47 = sphi 0, %s44
      %s48 = sphi 0, %s47
      %s64 = sphi 0, %s48
      %s70 = sphi 0, %s72
      %s73 = sphi 0, %s70
      %s74 = sphi 0, %s73
      %s90 = sphi 0, %s74
      %s96 = sphi 0, %s98
      %s99 = sphi 0, %s96
      %s100 = sphi 0, %s99
      %s116 = sphi 0, %s100
      %s120 = sphi 0, %s120
      %s122 = sphi 0, %s120
      %s123 = sphi 0, %s122
      %s137 = sphi 0, %s123
      %s141 = sphi 0, %s141
      %s143 = sphi 0, %s141
      %s144 = sphi 0, %s143
      %s158 = sphi 0, %s144
      %s166 = sphi 0, %s168
      %s169 = sphi 0, %s166
      %s170 = sphi 0, %s169
      %s186 = sphi 0, %s170
      %s190 = sphi 0, %s190
      %s192 = sphi 0, %s190
      %s193 = sphi 0, %s192
      %s207 = sphi 0, %s193
      %s211 = sphi 0, %s211
      %s213 = sphi 0, %s211
      %s214 = sphi 0, %s213
      %s228 = sphi 0, %s214
      %s236 = sphi 0, %s238
      %s239 = sphi 0, %s236
      %s240 = sphi 0, %s239
      %s256 = sphi 0, %s240
      %s264 = sphi 0, %s266
      %s267 = sphi 0, %s264
      %s268 = sphi 0, %s267
      %s284 = sphi 0, %s268
    $region4: #{transformer_model.17} parent=1 // loop_header_branch
      %23 = sbr.rel (%p21) target = $region8
    $region5: #{transformer_model.17} parent=1 // loop_body
      %s25 = ssub.s32 %s20, 1
      %s26 = ssub.s32 %s20, 2
      %s33 = sadd.s32 1, %s28
      %p34 = scmp.ge.s32.totalorder %s33, 1
      %s35 = scalar_select %p34, 0, %s33
      %s36 = sadd.s32 1, %s27
      %s37 = scalar_select %p34, %s36, %s27
      %p38 = scmp.ge.s32.totalorder %s37, 2
      %s39 = scalar_select %p38, 0, %s37
      %s40 = ssub.s32 %s27, %s39
      %s41 = ssub.s32 %s28, %s35
      %s42 = sor.u32 %s40, %s41
      %p43 = scmp.eq.s32.totalorder %s42, 0
      %s45 = sadd.s32 %s44, 1
      %s46 = scalar_select %p43, %s44, %s45
      %p49 = pneg %p43
      %p50 = scmp.eq.s32.totalorder %s20, 1
      %p51 = por %p49, %p50
      %p52 = scmp.ne.s32.totalorder %s44, %s47
      %p53 = scmp.eq.s32.totalorder %s20, 0
      %p54 = por %p52, %p53
      %p55 = scmp.ne.s32.totalorder %s44, %s47
      %p56 = scmp.eq.s32.totalorder %s25, 1
      %p57 = por %p55, %p56
      %p58 = scmp.ne.s32.totalorder %s47, %s48
      %p59 = scmp.eq.s32.totalorder %s25, 0
      %p60 = por %p58, %p59
      %p61 = scmp.ne.s32.totalorder %s47, %s48
      %p62 = scmp.eq.s32.totalorder %s26, 1
      %p63 = por %p61, %p62
      %p65 = scmp.ne.s32.totalorder %s48, %s64
      %p66 = scmp.eq.s32.totalorder %s26, 0
      %p67 = por %p65, %p66
      %s68 = ssub.s32 %s27, %s39
      %p69 = scmp.eq.s32.totalorder %s68, 0
      %s71 = sadd.s32 %s70, 1
      %s72 = scalar_select %p69, %s70, %s71
      %p75 = pneg %p69
      %p76 = scmp.eq.s32.totalorder %s20, 1
      %p77 = por %p75, %p76
      %p78 = scmp.ne.s32.totalorder %s70, %s73
      %p79 = scmp.eq.s32.totalorder %s20, 0
      %p80 = por %p78, %p79
      %p81 = scmp.ne.s32.totalorder %s70, %s73
      %p82 = scmp.eq.s32.totalorder %s25, 1
      %p83 = por %p81, %p82
      %p84 = scmp.ne.s32.totalorder %s73, %s74
      %p85 = scmp.eq.s32.totalorder %s25, 0
      %p86 = por %p84, %p85
      %p87 = scmp.ne.s32.totalorder %s73, %s74
      %p88 = scmp.eq.s32.totalorder %s26, 1
      %p89 = por %p87, %p88
      %p91 = scmp.ne.s32.totalorder %s74, %s90
      %p92 = scmp.eq.s32.totalorder %s26, 0
      %p93 = por %p91, %p92
      %s94 = ssub.s32 %s27, %s39
      %p95 = scmp.eq.s32.totalorder %s94, 0
      %s97 = sadd.s32 %s96, 1
      %s98 = scalar_select %p95, %s96, %s97
      %p101 = pneg %p95
      %p102 = scmp.eq.s32.totalorder %s20, 1
      %p103 = por %p101, %p102
      %p104 = scmp.ne.s32.totalorder %s96, %s99
      %p105 = scmp.eq.s32.totalorder %s20, 0
      %p106 = por %p104, %p105
      %p107 = scmp.ne.s32.totalorder %s96, %s99
      %p108 = scmp.eq.s32.totalorder %s25, 1
      %p109 = por %p107, %p108
      %p110 = scmp.ne.s32.totalorder %s99, %s100
      %p111 = scmp.eq.s32.totalorder %s25, 0
      %p112 = por %p110, %p111
      %p113 = scmp.ne.s32.totalorder %s99, %s100
      %p114 = scmp.eq.s32.totalorder %s26, 1
      %p115 = por %p113, %p114
      %p117 = scmp.ne.s32.totalorder %s100, %s116
      %p118 = scmp.eq.s32.totalorder %s26, 0
      %p119 = por %p117, %p118
      %s121 = sadd.s32 %s120, 1
      %p124 = scmp.eq.s32.totalorder %s20, 1
      %p125 = scmp.ne.s32.totalorder %s120, %s122
      %p126 = scmp.eq.s32.totalorder %s20, 0
      %p127 = por %p125, %p126
      %p128 = scmp.ne.s32.totalorder %s120, %s122
      %p129 = scmp.eq.s32.totalorder %s25, 1
      %p130 = por %p128, %p129
      %p131 = scmp.ne.s32.totalorder %s122, %s123
      %p132 = scmp.eq.s32.totalorder %s25, 0
      %p133 = por %p131, %p132
      %p134 = scmp.ne.s32.totalorder %s122, %s123
      %p135 = scmp.eq.s32.totalorder %s26, 1
      %p136 = por %p134, %p135
      %p138 = scmp.ne.s32.totalorder %s123, %s137
      %p139 = scmp.eq.s32.totalorder %s26, 0
      %p140 = por %p138, %p139
      %s142 = sadd.s32 %s141, 1
      %p145 = scmp.eq.s32.totalorder %s20, 1
      %p146 = scmp.ne.s32.totalorder %s141, %s143
      %p147 = scmp.eq.s32.totalorder %s20, 0
      %p148 = por %p146, %p147
      %p149 = scmp.ne.s32.totalorder %s141, %s143
      %p150 = scmp.eq.s32.totalorder %s25, 1
      %p151 = por %p149, %p150
      %p152 = scmp.ne.s32.totalorder %s143, %s144
      %p153 = scmp.eq.s32.totalorder %s25, 0
      %p154 = por %p152, %p153
      %p155 = scmp.ne.s32.totalorder %s143, %s144
      %p156 = scmp.eq.s32.totalorder %s26, 1
      %p157 = por %p155, %p156
      %p159 = scmp.ne.s32.totalorder %s144, %s158
      %p160 = scmp.eq.s32.totalorder %s26, 0
      %p161 = por %p159, %p160
      %s162 = ssub.s32 %s27, %s39
      %s163 = ssub.s32 %s28, %s35
      %s164 = sor.u32 %s162, %s163
      %p165 = scmp.eq.s32.totalorder %s164, 0
      %s167 = sadd.s32 %s166, 1
      %s168 = scalar_select %p165, %s166, %s167
      %p171 = pneg %p165
      %p172 = scmp.eq.s32.totalorder %s20, 1
      %p173 = por %p171, %p172
      %p174 = scmp.ne.s32.totalorder %s166, %s169
      %p175 = scmp.eq.s32.totalorder %s20, 0
      %p176 = por %p174, %p175
      %p177 = scmp.ne.s32.totalorder %s166, %s169
      %p178 = scmp.eq.s32.totalorder %s25, 1
      %p179 = por %p177, %p178
      %p180 = scmp.ne.s32.totalorder %s169, %s170
      %p181 = scmp.eq.s32.totalorder %s25, 0
      %p182 = por %p180, %p181
      %p183 = scmp.ne.s32.totalorder %s169, %s170
      %p184 = scmp.eq.s32.totalorder %s26, 1
      %p185 = por %p183, %p184
      %p187 = scmp.ne.s32.totalorder %s170, %s186
      %p188 = scmp.eq.s32.totalorder %s26, 0
      %p189 = por %p187, %p188
      %s191 = sadd.s32 %s190, 1
      %p194 = scmp.eq.s32.totalorder %s20, 1
      %p195 = scmp.ne.s32.totalorder %s190, %s192
      %p196 = scmp.eq.s32.totalorder %s20, 0
      %p197 = por %p195, %p196
      %p198 = scmp.ne.s32.totalorder %s190, %s192
      %p199 = scmp.eq.s32.totalorder %s25, 1
      %p200 = por %p198, %p199
      %p201 = scmp.ne.s32.totalorder %s192, %s193
      %p202 = scmp.eq.s32.totalorder %s25, 0
      %p203 = por %p201, %p202
      %p204 = scmp.ne.s32.totalorder %s192, %s193
      %p205 = scmp.eq.s32.totalorder %s26, 1
      %p206 = por %p204, %p205
      %p208 = scmp.ne.s32.totalorder %s193, %s207
      %p209 = scmp.eq.s32.totalorder %s26, 0
      %p210 = por %p208, %p209
      %s212 = sadd.s32 %s211, 1
      %p215 = scmp.eq.s32.totalorder %s20, 1
      %p216 = scmp.ne.s32.totalorder %s211, %s213
      %p217 = scmp.eq.s32.totalorder %s20, 0
      %p218 = por %p216, %p217
      %p219 = scmp.ne.s32.totalorder %s211, %s213
      %p220 = scmp.eq.s32.totalorder %s25, 1
      %p221 = por %p219, %p220
      %p222 = scmp.ne.s32.totalorder %s213, %s214
      %p223 = scmp.eq.s32.totalorder %s25, 0
      %p224 = por %p222, %p223
      %p225 = scmp.ne.s32.totalorder %s213, %s214
      %p226 = scmp.eq.s32.totalorder %s26, 1
      %p227 = por %p225, %p226
      %p229 = scmp.ne.s32.totalorder %s214, %s228
      %p230 = scmp.eq.s32.totalorder %s26, 0
      %p231 = por %p229, %p230
      %s232 = ssub.s32 %s27, %s39
      %s233 = ssub.s32 %s28, %s35
      %s234 = sor.u32 %s232, %s233
      %p235 = scmp.eq.s32.totalorder %s234, 0
      %s237 = sadd.s32 %s236, 1
      %s238 = scalar_select %p235, %s236, %s237
      %p241 = pneg %p235
      %p242 = scmp.eq.s32.totalorder %s20, 1
      %p243 = por %p241, %p242
      %p244 = scmp.ne.s32.totalorder %s236, %s239
      %p245 = scmp.eq.s32.totalorder %s20, 0
      %p246 = por %p244, %p245
      %p247 = scmp.ne.s32.totalorder %s236, %s239
      %p248 = scmp.eq.s32.totalorder %s25, 1
      %p249 = por %p247, %p248
      %p250 = scmp.ne.s32.totalorder %s239, %s240
      %p251 = scmp.eq.s32.totalorder %s25, 0
      %p252 = por %p250, %p251
      %p253 = scmp.ne.s32.totalorder %s239, %s240
      %p254 = scmp.eq.s32.totalorder %s26, 1
      %p255 = por %p253, %p254
      %p257 = scmp.ne.s32.totalorder %s240, %s256
      %p258 = scmp.eq.s32.totalorder %s26, 0
      %p259 = por %p257, %p258
      %s260 = ssub.s32 %s27, %s39
      %s261 = ssub.s32 %s28, %s35
      %s262 = sor.u32 %s260, %s261
      %p263 = scmp.eq.s32.totalorder %s262, 0
      %s265 = sadd.s32 %s264, 1
      %s266 = scalar_select %p263, %s264, %s265
      %p269 = pneg %p263
      %p270 = scmp.eq.s32.totalorder %s20, 1
      %p271 = por %p269, %p270
      %p272 = scmp.ne.s32.totalorder %s264, %s267
      %p273 = scmp.eq.s32.totalorder %s20, 0
      %p274 = por %p272, %p273
      %p275 = scmp.ne.s32.totalorder %s264, %s267
      %p276 = scmp.eq.s32.totalorder %s25, 1
      %p277 = por %p275, %p276
      %p278 = scmp.ne.s32.totalorder %s267, %s268
      %p279 = scmp.eq.s32.totalorder %s25, 0
      %p280 = por %p278, %p279
      %p281 = scmp.ne.s32.totalorder %s267, %s268
      %p282 = scmp.eq.s32.totalorder %s26, 1
      %p283 = por %p281, %p282
      %p285 = scmp.ne.s32.totalorder %s268, %s284
      %p286 = scmp.eq.s32.totalorder %s26, 0
      %p287 = por %p285, %p286
      %p288 = scmp.le.s32.totalorder 1, %s20
      %p289 = scmp.lt.s32.totalorder %s20, 3
      %p290 = pnand %p288, %p289
      %p291 = pneg %p290
      // Predicated region
      $region9: #{transformer_model.17} parent=5 // pred_check
        _
      $region10: #{transformer_model.17} parent=5 // pred_check_branch
        %293 = sbr.rel (%p290) target = $region12
      $region11: #{transformer_model.17} parent=5 // pred_region
        %s294 = ssub.s32 %s20, 1
        // Predicated region
        $region13: #{transformer_model.17} parent=11 // pred_check
          %p295 = pneg %p133
        $region14: #{transformer_model.17} parent=11 // pred_check_branch
          %297 = sbr.rel (%p295) target = $region16
        $region15: #{transformer_model.17} parent=11 // pred_region
          %299 = vsyncadd [#allocation6], 0
          %s300 = sshll.u32 %s3, 4
          %s301 = int_to_ptr.hbm [resolvable:$true] %s300
          %s302 = sshll.u32 [#allocation5], 4
          %s303 = int_to_ptr.vmem [resolvable:$true] %s302
          %308 = dma.hbm_to_vmem [thread:$0]  %s301, 1024, %s303, [#allocation6], 64, 64, 4
        $region16: #{transformer_model.17} parent=11 // pred_fallthru
          _
        // Predicated region
        $region17: #{transformer_model.17} parent=11 // pred_check
          %p309 = pneg %p154
        $region18: #{transformer_model.17} parent=11 // pred_check_branch
          %311 = sbr.rel (%p309) target = $region20
        $region19: #{transformer_model.17} parent=11 // pred_region
          _
        $region20: #{transformer_model.17} parent=11 // pred_fallthru
          _
        // Predicated region
        $region21: #{transformer_model.17} parent=11 // pred_check
          %p312 = pneg %p203
        $region22: #{transformer_model.17} parent=11 // pred_check_branch
          %314 = sbr.rel (%p312) target = $region24
        $region23: #{transformer_model.17} parent=11 // pred_region
          _
        $region24: #{transformer_model.17} parent=11 // pred_fallthru
          _
        // Predicated region
        $region25: #{transformer_model.17} parent=11 // pred_check
          %p315 = pneg %p224
        $region26: #{transformer_model.17} parent=11 // pred_check_branch
          %317 = sbr.rel (%p315) target = $region28
        $region27: #{transformer_model.17} parent=11 // pred_region
          _
        $region28: #{transformer_model.17} parent=11 // pred_fallthru
          _
      $region12: #{transformer_model.17} parent=5 // pred_fallthru
        _
      %p318 = scmp.lt.s32.totalorder %s20, 2
      // Predicated region
      $region29: #{transformer_model.17} parent=5 // pred_check
        %p319 = pneg %p318
      $region30: #{transformer_model.17} parent=5 // pred_check_branch
        %321 = sbr.rel (%p319) target = $region32
      $region31: #{transformer_model.17} parent=5 // pred_region
        // Predicated region
        $region33: #{transformer_model.17} parent=31 // pred_check
          %p322 = pneg %p54
        $region34: #{transformer_model.17} parent=31 // pred_check_branch
          %324 = sbr.rel (%p322) target = $region36
        $region35: #{transformer_model.17} parent=31 // pred_region
          %s325 = smul.u32 2, %s28
          %p326 = scmp.lt.s32.totalorder %s27, 1
          %s327 = scalar_select %p326, %s27, 1
          %p328 = scmp.lt.s32.totalorder %s325, 1
          %s329 = scalar_select %p328, %s325, 1
          %s330 = smul.addr %s327, 2
          %s331 = sadd.s32 %s329, %s330
          %s332 = smul.addr %s331, 4
          %s333 = scalar_lea.vmem %s0, %s332
          %s334 = smul.u32 2, %s28
        $region36: #{transformer_model.17} parent=31 // pred_fallthru
          _
        // Predicated region
        $region37: #{transformer_model.17} parent=31 // pred_check
          %p335 = pneg %p80
        $region38: #{transformer_model.17} parent=31 // pred_check_branch
          %337 = sbr.rel (%p335) target = $region40
        $region39: #{transformer_model.17} parent=31 // pred_region
          %s338 = sand.u32 %s70, 1
          %s339 = sand.u32 %s70, 1
          %s340 = smul.addr %s339, 8
          %s341 = scalar_lea.vmem [#allocation3], %s340
          %s342 = smul.addr %s27, 4
          %s343 = smul.addr %s342, 4
          %s344 = scalar_lea.vmem %s1, %s343
          // Predicated region
          $region41: #{transformer_model.17} parent=39 // pred_check
            _
          $region42: #{transformer_model.17} parent=39 // pred_check_branch
            %346 = sbr.rel (0) target = $region44
          $region43: #{transformer_model.17} parent=39 // pred_region
            // Predicated region
            $region45: #{transformer_model.17} parent=43 // pred_check
              _
            $region46: #{transformer_model.17} parent=43 // pred_check_branch
              %348 = sbr.rel target = $region48
            $region47: #{transformer_model.17} parent=43 // pred_region
              // Predicated region
              $region60: #{transformer_model.17} parent=47 // pred_check
                _
              $region61: #{transformer_model.17} parent=47 // pred_check_branch
                %366 = sbr.rel (0) target = $region63
              $region62: #{transformer_model.17} parent=47 // pred_region
                loop: start=0, step=1, limit=1
                $region64: #{transformer_model.17} parent=62 // loop_pre_header
                  _
                $region65: #{transformer_model.17} parent=62 // loop_header
                  %s368 = sphi 0, %s372
                  %p369 = scmp.ge.s32.totalorder %s368, 1
                  %s373 = sphi %s344, %s344
                  %s374 = sphi %s341, %s341
                $region66: #{transformer_model.17} parent=62 // loop_header_branch
                  %371 = sbr.rel (%p369) target = $region70
                $region67: #{transformer_model.17} parent=62 // loop_body
                  _
                $region68: #{transformer_model.17} parent=62 // loop_footer
                  %s372 = sadd.s32 1, %s368
                $region69: #{transformer_model.17} parent=62 // loop_footer_branch
                  %367 = sbr.rel target = $region65
                $region70: #{transformer_model.17} parent=62 // loop_exit
                  _
                %s376 = ssub.s32 16, 1
                loop: start=0, step=1, limit=1
                $region71: #{transformer_model.17} parent=62 // loop_pre_header
                  _
                $region72: #{transformer_model.17} parent=62 // loop_header
                  %s378 = sphi 0, %s382
                  %p379 = scmp.ge.s32.totalorder %s378, 1
                  %s383 = sphi %s344, %s344
                  %s384 = sphi %s341, %s341
                $region73: #{transformer_model.17} parent=62 // loop_header_branch
                  %381 = sbr.rel (%p379) target = $region77
                $region74: #{transformer_model.17} parent=62 // loop_body
                  %v385 = vld [vmem:[%s383] sm:%s376]
                  %386 = vst [vmem:[%s384] sm:%s376] %v385
                  %v387 = vld [vmem:[%s383 + $0x8] sm:%s376]
                  %388 = vst [vmem:[%s384 + $0x4] sm:%s376] %v387
                $region75: #{transformer_model.17} parent=62 // loop_footer
                  %s382 = sadd.s32 1, %s378
                $region76: #{transformer_model.17} parent=62 // loop_footer_branch
                  %377 = sbr.rel target = $region72
                $region77: #{transformer_model.17} parent=62 // loop_exit
                  _
              $region63: #{transformer_model.17} parent=47 // pred_fallthru
                _
            $region48: #{transformer_model.17} parent=43 // pred_fallthru
              _
            // Predicated region
            $region49: #{transformer_model.17} parent=43 // pred_check
              _
            $region50: #{transformer_model.17} parent=43 // pred_check_branch
              %350 = sbr.rel (0) target = $region52
            $region51: #{transformer_model.17} parent=43 // pred_region
              %s352 = ssub.s32 16, 1
              loop: start=0, step=1, limit=1
              $region53: #{transformer_model.17} parent=51 // loop_pre_header
                _
              $region54: #{transformer_model.17} parent=51 // loop_header
                %s354 = sphi 0, %s358
                %p355 = scmp.ge.s32.totalorder %s354, 1
                %s359 = sphi %s344, %s344
                %s360 = sphi %s341, %s341
              $region55: #{transformer_model.17} parent=51 // loop_header_branch
                %357 = sbr.rel (%p355) target = $region59
              $region56: #{transformer_model.17} parent=51 // loop_body
                %v361 = vld [vmem:[%s359] sm:%s352]
                %362 = vst [vmem:[%s360] sm:%s352] %v361
                %v363 = vld [vmem:[%s359 + $0x8] sm:%s352]
                %364 = vst [vmem:[%s360 + $0x4] sm:%s352] %v363
              $region57: #{transformer_model.17} parent=51 // loop_footer
                %s358 = sadd.s32 1, %s354
              $region58: #{transformer_model.17} parent=51 // loop_footer_branch
                %353 = sbr.rel target = $region54
              $region59: #{transformer_model.17} parent=51 // loop_exit
                _
            $region52: #{transformer_model.17} parent=43 // pred_fallthru
              _
          $region44: #{transformer_model.17} parent=39 // pred_fallthru
            _
          %389 = vnop
        $region40: #{transformer_model.17} parent=31 // pred_fallthru
          _
        // Predicated region
        $region78: #{transformer_model.17} parent=31 // pred_check
          %p390 = pneg %p106
        $region79: #{transformer_model.17} parent=31 // pred_check_branch
          %392 = sbr.rel (%p390) target = $region81
        $region80: #{transformer_model.17} parent=31 // pred_region
          %s393 = sand.u32 %s96, 1
          %s394 = sand.u32 %s96, 1
          %s395 = smul.addr %s394, 8
          %s396 = scalar_lea.vmem [#allocation4], %s395
          %s397 = smul.addr %s27, 4
          %s398 = sadd.s32 1, %s397
          %s399 = smul.addr %s398, 4
          %s400 = scalar_lea.vmem %s2, %s399
          // Predicated region
          $region82: #{transformer_model.17} parent=80 // pred_check
            _
          $region83: #{transformer_model.17} parent=80 // pred_check_branch
            %402 = sbr.rel (0) target = $region85
          $region84: #{transformer_model.17} parent=80 // pred_region
            // Predicated region
            $region86: #{transformer_model.17} parent=84 // pred_check
              _
            $region87: #{transformer_model.17} parent=84 // pred_check_branch
              %404 = sbr.rel target = $region89
            $region88: #{transformer_model.17} parent=84 // pred_region
              // Predicated region
              $region101: #{transformer_model.17} parent=88 // pred_check
                _
              $region102: #{transformer_model.17} parent=88 // pred_check_branch
                %422 = sbr.rel (0) target = $region104
              $region103: #{transformer_model.17} parent=88 // pred_region
                loop: start=0, step=1, limit=1
                $region105: #{transformer_model.17} parent=103 // loop_pre_header
                  _
                $region106: #{transformer_model.17} parent=103 // loop_header
                  %s424 = sphi 0, %s428
                  %p425 = scmp.ge.s32.totalorder %s424, 1
                  %s429 = sphi %s400, %s400
                  %s430 = sphi %s396, %s396
                $region107: #{transformer_model.17} parent=103 // loop_header_branch
                  %427 = sbr.rel (%p425) target = $region111
                $region108: #{transformer_model.17} parent=103 // loop_body
                  _
                $region109: #{transformer_model.17} parent=103 // loop_footer
                  %s428 = sadd.s32 1, %s424
                $region110: #{transformer_model.17} parent=103 // loop_footer_branch
                  %423 = sbr.rel target = $region106
                $region111: #{transformer_model.17} parent=103 // loop_exit
                  _
                %s432 = ssub.s32 16, 1
                loop: start=0, step=1, limit=1
                $region112: #{transformer_model.17} parent=103 // loop_pre_header
                  _
                $region113: #{transformer_model.17} parent=103 // loop_header
                  %s434 = sphi 0, %s438
                  %p435 = scmp.ge.s32.totalorder %s434, 1
                  %s439 = sphi %s400, %s400
                  %s440 = sphi %s396, %s396
                $region114: #{transformer_model.17} parent=103 // loop_header_branch
                  %437 = sbr.rel (%p435) target = $region118
                $region115: #{transformer_model.17} parent=103 // loop_body
                  %v441 = vld [vmem:[%s439] sm:%s432]
                  %442 = vst [vmem:[%s440] sm:%s432] %v441
                  %v443 = vld [vmem:[%s439 + $0x8] sm:%s432]
                  %444 = vst [vmem:[%s440 + $0x4] sm:%s432] %v443
                $region116: #{transformer_model.17} parent=103 // loop_footer
                  %s438 = sadd.s32 1, %s434
                $region117: #{transformer_model.17} parent=103 // loop_footer_branch
                  %433 = sbr.rel target = $region113
                $region118: #{transformer_model.17} parent=103 // loop_exit
                  _
              $region104: #{transformer_model.17} parent=88 // pred_fallthru
                _
            $region89: #{transformer_model.17} parent=84 // pred_fallthru
              _
            // Predicated region
            $region90: #{transformer_model.17} parent=84 // pred_check
              _
            $region91: #{transformer_model.17} parent=84 // pred_check_branch
              %406 = sbr.rel (0) target = $region93
            $region92: #{transformer_model.17} parent=84 // pred_region
              %s408 = ssub.s32 16, 1
              loop: start=0, step=1, limit=1
              $region94: #{transformer_model.17} parent=92 // loop_pre_header
                _
              $region95: #{transformer_model.17} parent=92 // loop_header
                %s410 = sphi 0, %s414
                %p411 = scmp.ge.s32.totalorder %s410, 1
                %s415 = sphi %s400, %s400
                %s416 = sphi %s396, %s396
              $region96: #{transformer_model.17} parent=92 // loop_header_branch
                %413 = sbr.rel (%p411) target = $region100
              $region97: #{transformer_model.17} parent=92 // loop_body
                %v417 = vld [vmem:[%s415] sm:%s408]
                %418 = vst [vmem:[%s416] sm:%s408] %v417
                %v419 = vld [vmem:[%s415 + $0x8] sm:%s408]
                %420 = vst [vmem:[%s416 + $0x4] sm:%s408] %v419
              $region98: #{transformer_model.17} parent=92 // loop_footer
                %s414 = sadd.s32 1, %s410
              $region99: #{transformer_model.17} parent=92 // loop_footer_branch
                %409 = sbr.rel target = $region95
              $region100: #{transformer_model.17} parent=92 // loop_exit
                _
            $region93: #{transformer_model.17} parent=84 // pred_fallthru
              _
          $region85: #{transformer_model.17} parent=80 // pred_fallthru
            _
          %445 = vnop
        $region81: #{transformer_model.17} parent=31 // pred_fallthru
          _
        // Predicated region
        $region119: #{transformer_model.17} parent=31 // pred_check
          %p446 = pneg %p176
        $region120: #{transformer_model.17} parent=31 // pred_check_branch
          %448 = sbr.rel (%p446) target = $region122
        $region121: #{transformer_model.17} parent=31 // pred_region
          %s449 = smul.u32 2, %s28
          %p450 = scmp.lt.s32.totalorder %s27, 1
          %s451 = scalar_select %p450, %s27, 1
          %p452 = scmp.lt.s32.totalorder %s449, 1
          %s453 = scalar_select %p452, %s449, 1
          %s454 = smul.addr %s451, 2
          %s455 = sadd.s32 %s453, %s454
          %s456 = smul.addr %s455, 4
          %s457 = scalar_lea.vmem %s5, %s456
          %s458 = smul.u32 2, %s28
        $region122: #{transformer_model.17} parent=31 // pred_fallthru
          _
      $region32: #{transformer_model.17} parent=5 // pred_fallthru
        _
      %p459 = scmp.le.s32.totalorder 1, %s20
      %p460 = scmp.lt.s32.totalorder %s20, 3
      %p461 = pnand %p459, %p460
      %p462 = pneg %p461
      // Predicated region
      $region123: #{transformer_model.17} parent=5 // pred_check
        _
      $region124: #{transformer_model.17} parent=5 // pred_check_branch
        %464 = sbr.rel (%p461) target = $region126
      $region125: #{transformer_model.17} parent=5 // pred_region
        %s465 = ssub.s32 %s20, 1
        %s466 = sand.u32 %s73, 1
        %s467 = sand.u32 %s73, 1
        %s468 = smul.addr %s467, 8
        %s469 = scalar_lea.vmem [#allocation3], %s468
        // Predicated region
        $region127: #{transformer_model.17} parent=125 // pred_check
          %p470 = pneg %p86
        $region128: #{transformer_model.17} parent=125 // pred_check_branch
          %472 = sbr.rel (%p470) target = $region130
        $region129: #{transformer_model.17} parent=125 // pred_region
          _
        $region130: #{transformer_model.17} parent=125 // pred_fallthru
          _
        %s473 = sand.u32 %s99, 1
        %s474 = sand.u32 %s99, 1
        %s475 = smul.addr %s474, 8
        %s476 = scalar_lea.vmem [#allocation4], %s475
        // Predicated region
        $region131: #{transformer_model.17} parent=125 // pred_check
          %p477 = pneg %p112
        $region132: #{transformer_model.17} parent=125 // pred_check_branch
          %479 = sbr.rel (%p477) target = $region134
        $region133: #{transformer_model.17} parent=125 // pred_region
          _
        $region134: #{transformer_model.17} parent=125 // pred_fallthru
          _
        // Predicated region
        $region135: #{transformer_model.17} parent=125 // pred_check
          %p480 = pneg %p133
        $region136: #{transformer_model.17} parent=125 // pred_check_branch
          %482 = sbr.rel (%p480) target = $region138
        $region137: #{transformer_model.17} parent=125 // pred_region
          %484 = dma.done [#allocation6], 1024
        $region138: #{transformer_model.17} parent=125 // pred_fallthru
          _
        %s485 = smul.u32 2, %s30
        %p486 = scmp.lt.s32.totalorder %s29, 1
        %s487 = scalar_select %p486, %s29, 1
        %p488 = scmp.lt.s32.totalorder %s485, 1
        %s489 = scalar_select %p488, %s485, 1
        %s490 = smul.addr %s487, 2
        %s491 = sadd.s32 %s489, %s490
        %s492 = smul.addr %s491, 4
        %s493 = scalar_lea.vmem %s0, %s492
        %p494 = pneg %p60
        %p495 = pneg %p57
        %s496 = sand.u32 %s73, 1
        %s497 = sand.u32 %s73, 1
        %s498 = smul.addr %s497, 8
        %s499 = scalar_lea.vmem [#allocation3], %s498
        %p500 = pneg %p86
        %p501 = pneg %p83
        %s502 = sand.u32 %s99, 1
        %s503 = sand.u32 %s99, 1
        %s504 = smul.addr %s503, 8
        %s505 = scalar_lea.vmem [#allocation4], %s504
        %p506 = pneg %p112
        %p507 = pneg %p109
        %p508 = pneg %p133
        %p509 = pneg %p130
        %p510 = pneg %p154
        %p511 = pneg %p151
        %s512 = smul.u32 2, %s30
        %p513 = scmp.lt.s32.totalorder %s29, 1
        %s514 = scalar_select %p513, %s29, 1
        %p515 = scmp.lt.s32.totalorder %s512, 1
        %s516 = scalar_select %p515, %s512, 1
        %s517 = smul.addr %s514, 2
        %s518 = sadd.s32 %s516, %s517
        %s519 = smul.addr %s518, 4
        %s520 = scalar_lea.vmem %s5, %s519
        %p521 = pneg %p182
        %p522 = pneg %p179
        %p523 = pneg %p203
        %p524 = pneg %p200
        %p525 = pneg %p224
        %p526 = pneg %p221
        %p527 = pneg %p252
        %p528 = pneg %p249
        %s529 = smul.u32 2, %s30
        %p530 = scmp.lt.s32.totalorder %s29, 1
        %s531 = scalar_select %p530, %s29, 1
        %p532 = scmp.lt.s32.totalorder %s529, 1
        %s533 = scalar_select %p532, %s529, 1
        %s534 = smul.addr %s531, 2
        %s535 = sadd.s32 %s533, %s534
        %s536 = smul.addr %s535, 4
        %s537 = scalar_lea.vmem %s8, %s536
        %p538 = pneg %p280
        %p539 = pneg %p277
        %s540 = sand.u32 %s267, 1
        %s541 = scalar_lea.sflag [#allocation7], %s540
        %s542 = sand.u32 %s267, 1
        %s543 = smul.addr %s542, 16
        %s544 = scalar_lea.vmem [#allocation8], %s543
        %s545 = smul.u32 2, %s30
        %p546 = scmp.lt.s32.totalorder %s29, 1
        %s547 = scalar_select %p546, %s29, 1
        %p548 = scmp.lt.s32.totalorder %s545, 1
        %s549 = scalar_select %p548, %s545, 1
        %s550 = smul.addr %s547, 2
        %s551 = sadd.s32 %s549, %s550
        %s552 = smul.addr %s551, 4
        %s553 = scalar_lea.vmem %s0, %s552
        %s554 = smul.u32 2, %s30
        %s555 = smul.u32 2, %s30
        %p556 = scmp.lt.s32.totalorder %s29, 1
        %s557 = scalar_select %p556, %s29, 1
        %p558 = scmp.lt.s32.totalorder %s555, 1
        %s559 = scalar_select %p558, %s555, 1
        %s560 = smul.addr %s557, 2
        %s561 = sadd.s32 %s559, %s560
        %s562 = smul.addr %s561, 4
        %s563 = scalar_lea.vmem %s5, %s562
        %s564 = smul.u32 2, %s30
        %s565 = smul.u32 2, %s30
        %p566 = scmp.lt.s32.totalorder %s29, 1
        %s567 = scalar_select %p566, %s29, 1
        %p568 = scmp.lt.s32.totalorder %s565, 1
        %s569 = scalar_select %p568, %s565, 1
        %s570 = smul.addr %s567, 2
        %s571 = sadd.s32 %s569, %s570
        %s572 = smul.addr %s571, 4
        %s573 = scalar_lea.vmem %s8, %s572
        %s574 = smul.u32 2, %s30
        %s575 = smul.u32 2, %s30
        %v577 = vld [vmem:[%s553] sm:$0xf]
        %v578 = vld [vmem:[%s553 + $0x4] sm:$0xf]
        %v579 = vunpack.c.l.bf16 %v577
        %v580 = vunpack.c.l.bf16 %v578
        %v581 = vmul.f32 %v579, 0.17675781
        %v582 = vmul.f32 %v580, 0.17675781
        %v583 = vpack.c.bf16 %v581, %v581
        %v584 = vpack.c.bf16 %v582, %v582
        %v585 = vld [vmem:[%s469] sm:$0xf]
        %v586 = vld [vmem:[%s469 + $0x4] sm:$0xf]
        %v587 = vld [vmem:[%s476] sm:$0xf]
        %v588 = vld [vmem:[%s476 + $0x4] sm:$0xf]
        %v591 = vunpack.c.l.b16 %v583
        %v592 = vunpack.c.l.b16 %v584
        %v593 = vpack.c.b16 %v592, %v591
        %v596 = vunpack.c.l.b16 %v585
        %v597 = vunpack.c.l.b16 %v586
        %v598 = vpack.c.b16 %v597, %v596
        %vm599 = vcmask 261120
        %v601 = vsel %vm599, %v593, 0
        %v604 = vsel %vm599, %v598, 0
        %606 = vmatpush.bf16.xpose.msra.mxu0 0
        %607 = vmatpush.bf16.xpose.msra.mxu0 0
        %608 = vmatpush.bf16.xpose.msra.mxu0 0
        %609 = vmatpush.bf16.xpose.msra.mxu0 0
        %610 = vmatpush.bf16.xpose.msra.mxu0 0
        %611 = vmatpush.bf16.xpose.msra.mxu0 0
        %612 = vmatpush.bf16.xpose.msra.mxu0 0
        %613 = vmatpush.bf16.xpose.msra.mxu0 %v604
        %614 = vmatmul.bf16.gmra.mxu0 %v601
        %v615 = vpop.f32.mrf.mxu0
        %v616 = vadd.f32 0.0, %v615
        %v617 = vpop.f32.mrf.mxu0
        %v618 = vadd.f32 0.0, %v617
        %619 = vdwg.mxu0
        %vm620 = vcmask 130048
        %v621 = vsel %vm620, %v616, -inf
        %622 = vmax.xlane.f32.xlu0 %v621
        %v623 = vpop.xlane.xlu0 %622
        %v624 = vsel %vm620, %v618, -inf
        %625 = vmax.xlane.f32.xlu0 %v624
        %v626 = vpop.xlane.xlu0 %625
        %v627 = vsub.f32 %v616, %v623
        %v628 = vsub.f32 %v618, %v626
        %v629 = vmul.f32 %v627, 1.442695
        %v630 = vpow.pop %v629
        %v631 = vmul.f32 %v628, 1.442695
        %v632 = vpow.pop %v631
        %v633 = vsel %vm620, %v630, 0.0
        %634 = vadd.xlane.f32.xlu0 %v633
        %v635 = vpop.xlane.xlu0 %634
        %v636 = vsel %vm620, %v632, 0.0
        %637 = vadd.xlane.f32.xlu0 %v636
        %v638 = vpop.xlane.xlu0 %637
        %v639 = vrcp.pop %v635
        %v640 = vmul.f32 %v635, %v639
        %v641 = vsub.f32 1.0, %v640
        %v642 = vmul.f32 %v639, %v641
        %v643 = vadd.f32 %v639, %v642
        %vm644 = vweird.f32 %v635
        %vm645 = vweird.f32 %v639
        %vm646 = vmor %vm644, %vm645
        %v647 = vsel %vm646, %v639, %v643
        %v648 = vand.u32 2147483647, %v635
        %vm649 = vcmp.eq.f32.partialorder %v648, 8.507059e+37
        %v650 = vand.u32 %v635, 2147483648
        %v651 = vor.u32 1.1754944e-38, %v650
        %v652 = vsel %vm649, %v651, %v647
        %v653 = vrcp.pop %v638
        %v654 = vmul.f32 %v638, %v653
        %v655 = vsub.f32 1.0, %v654
        %v656 = vmul.f32 %v653, %v655
        %v657 = vadd.f32 %v653, %v656
        %vm658 = vweird.f32 %v638
        %vm659 = vweird.f32 %v653
        %vm660 = vmor %vm658, %vm659
        %v661 = vsel %vm660, %v653, %v657
        %v662 = vand.u32 2147483647, %v638
        %vm663 = vcmp.eq.f32.partialorder %v662, 8.507059e+37
        %v664 = vand.u32 %v638, 2147483648
        %v665 = vor.u32 1.1754944e-38, %v664
        %v666 = vsel %vm663, %v665, %v661
        %v667 = vmul.f32 %v630, %v652
        %v668 = vmul.f32 %v632, %v666
        %v669 = vadd.f32 %v667, 0.0
        %v670 = vadd.f32 %v668, 0.0
        %v671 = vpack.c.bf16 %v668, %v667
        %v674 = vunpack.c.l.b16 %v587
        %v675 = vunpack.c.l.b16 %v588
        %v676 = vpack.c.b16 %v675, %v674
        %v679 = vsel %vm620, %v671, 0
        %681 = vmatpush.bf16.msra.mxu0 0
        %682 = vmatpush.bf16.msra.mxu0 0
        %683 = vmatpush.bf16.msra.mxu0 0
        %684 = vmatpush.bf16.msra.mxu0 0
        %685 = vmatpush.bf16.msra.mxu0 0
        %686 = vmatpush.bf16.msra.mxu0 0
        %687 = vmatpush.bf16.msra.mxu0 0
        %688 = vmatpush.bf16.msra.mxu0 %v676
        %689 = vmatmul.bf16.gmra.mxu0 %v679
        %v690 = vpop.f32.mrf.mxu0
        %v691 = vadd.f32 0.0, %v690
        %v692 = vpop.f32.mrf.mxu0
        %v693 = vadd.f32 0.0, %v692
        %694 = vdwg.mxu0
        %v695 = vpack.c.bf16 %v691, %v691
        %v696 = vpack.c.bf16 %v693, %v693
        %vm697 = vcmask 257024
        %698 = vst.msk [vmem:[#allocation2] sm:$0xf] %vm697, %v695
        %699 = vst.msk [vmem:[#allocation2 + $0x4] sm:$0xf] %vm697, %v696
        %v700 = vld [vmem:[%s469] sm:$0xf]
        %v701 = vld [vmem:[%s469 + $0x4] sm:$0xf]
        %v702 = vld [vmem:[%s476] sm:$0xf]
        %v703 = vld [vmem:[%s476 + $0x4] sm:$0xf]
        %704 = vrot.lane.b32.xlu0 %v593, 96
        %v705 = vpop.permute.xlu0 %704
        %v708 = vunpack.c.l.b16 %v700
        %v709 = vunpack.c.l.b16 %v701
        %v710 = vpack.c.b16 %v709, %v708
        %711 = vrot.lane.b32.xlu0 %v710, 96
        %v712 = vpop.permute.xlu0 %711
        %v714 = vsel %vm599, %v705, 0
        %v717 = vsel %vm599, %v712, 0
        %719 = vmatpush.bf16.xpose.msra.mxu0 0
        %720 = vmatpush.bf16.xpose.msra.mxu0 0
        %721 = vmatpush.bf16.xpose.msra.mxu0 0
        %722 = vmatpush.bf16.xpose.msra.mxu0 0
        %723 = vmatpush.bf16.xpose.msra.mxu0 0
        %724 = vmatpush.bf16.xpose.msra.mxu0 0
        %725 = vmatpush.bf16.xpose.msra.mxu0 0
        %726 = vmatpush.bf16.xpose.msra.mxu0 %v717
        %727 = vmatmul.bf16.gmra.mxu0 %v714
        %v728 = vpop.f32.mrf.mxu0
        %v729 = vadd.f32 0.0, %v728
        %v730 = vpop.f32.mrf.mxu0
        %v731 = vadd.f32 0.0, %v730
        %732 = vdwg.mxu0
        %v733 = vsel %vm620, %v729, -inf
        %734 = vmax.xlane.f32.xlu0 %v733
        %v735 = vpop.xlane.xlu0 %734
        %v736 = vsel %vm620, %v731, -inf
        %737 = vmax.xlane.f32.xlu0 %v736
        %v738 = vpop.xlane.xlu0 %737
        %v739 = vsub.f32 %v729, %v735
        %v740 = vsub.f32 %v731, %v738
        %v741 = vmul.f32 %v739, 1.442695
        %v742 = vpow.pop %v741
        %v743 = vmul.f32 %v740, 1.442695
        %v744 = vpow.pop %v743
        %v745 = vsel %vm620, %v742, 0.0
        %746 = vadd.xlane.f32.xlu0 %v745
        %v747 = vpop.xlane.xlu0 %746
        %v748 = vsel %vm620, %v744, 0.0
        %749 = vadd.xlane.f32.xlu0 %v748
        %v750 = vpop.xlane.xlu0 %749
        %v751 = vrcp.pop %v747
        %v752 = vmul.f32 %v747, %v751
        %v753 = vsub.f32 1.0, %v752
        %v754 = vmul.f32 %v751, %v753
        %v755 = vadd.f32 %v751, %v754
        %vm756 = vweird.f32 %v747
        %vm757 = vweird.f32 %v751
        %vm758 = vmor %vm756, %vm757
        %v759 = vsel %vm758, %v751, %v755
        %v760 = vand.u32 2147483647, %v747
        %vm761 = vcmp.eq.f32.partialorder %v760, 8.507059e+37
        %v762 = vand.u32 %v747, 2147483648
        %v763 = vor.u32 1.1754944e-38, %v762
        %v764 = vsel %vm761, %v763, %v759
        %v765 = vrcp.pop %v750
        %v766 = vmul.f32 %v750, %v765
        %v767 = vsub.f32 1.0, %v766
        %v768 = vmul.f32 %v765, %v767
        %v769 = vadd.f32 %v765, %v768
        %vm770 = vweird.f32 %v750
        %vm771 = vweird.f32 %v765
        %vm772 = vmor %vm770, %vm771
        %v773 = vsel %vm772, %v765, %v769
        %v774 = vand.u32 2147483647, %v750
        %vm775 = vcmp.eq.f32.partialorder %v774, 8.507059e+37
        %v776 = vand.u32 %v750, 2147483648
        %v777 = vor.u32 1.1754944e-38, %v776
        %v778 = vsel %vm775, %v777, %v773
        %v779 = vmul.f32 %v742, %v764
        %v780 = vmul.f32 %v744, %v778
        %v781 = vadd.f32 %v669, %v779
        %v782 = vadd.f32 %v670, %v780
        %v783 = vpack.c.bf16 %v780, %v779
        %v786 = vunpack.c.l.b16 %v702
        %v787 = vunpack.c.l.b16 %v703
        %v788 = vpack.c.b16 %v787, %v786
        %789 = vrot.lane.b32.xlu0 %v788, 96
        %v790 = vpop.permute.xlu0 %789
        %v793 = vsel %vm620, %v783, 0
        %795 = vmatpush.bf16.msra.mxu0 0
        %796 = vmatpush.bf16.msra.mxu0 0
        %797 = vmatpush.bf16.msra.mxu0 0
        %798 = vmatpush.bf16.msra.mxu0 0
        %799 = vmatpush.bf16.msra.mxu0 0
        %800 = vmatpush.bf16.msra.mxu0 0
        %801 = vmatpush.bf16.msra.mxu0 0
        %802 = vmatpush.bf16.msra.mxu0 %v790
        %803 = vmatmul.bf16.gmra.mxu0 %v793
        %v804 = vpop.f32.mrf.mxu0
        %v805 = vadd.f32 0.0, %v804
        %v806 = vpop.f32.mrf.mxu0
        %v807 = vadd.f32 0.0, %v806
        %808 = vdwg.mxu0
        %v809 = vpack.c.bf16 %v805, %v805
        %v810 = vpack.c.bf16 %v807, %v807
        %813 = vrot.lane.b32.xlu0 %v809, 32
        %v814 = vpop.permute.xlu0 %813
        %815 = vrot.lane.b32.xlu0 %v810, 32
        %v816 = vpop.permute.xlu0 %815
        %vm819 = vcmask 519424
        %820 = vst.msk [vmem:[#allocation2] sm:$0xf] %vm819, %v814
        %821 = vst.msk [vmem:[#allocation2 + $0x4] sm:$0xf] %vm819, %v816
        %v822 = vld [vmem:[%s469] sm:$0xf]
        %v823 = vld [vmem:[%s469 + $0x4] sm:$0xf]
        %v824 = vld [vmem:[%s476] sm:$0xf]
        %v825 = vld [vmem:[%s476 + $0x4] sm:$0xf]
        %826 = vrot.lane.b32.xlu0 %v593, 64
        %v827 = vpop.permute.xlu0 %826
        %v830 = vunpack.c.l.b16 %v822
        %v831 = vunpack.c.l.b16 %v823
        %v832 = vpack.c.b16 %v831, %v830
        %833 = vrot.lane.b32.xlu0 %v832, 64
        %v834 = vpop.permute.xlu0 %833
        %v836 = vsel %vm599, %v827, 0
        %v839 = vsel %vm599, %v834, 0
        %841 = vmatpush.bf16.xpose.msra.mxu0 0
        %842 = vmatpush.bf16.xpose.msra.mxu0 0
        %843 = vmatpush.bf16.xpose.msra.mxu0 0
        %844 = vmatpush.bf16.xpose.msra.mxu0 0
        %845 = vmatpush.bf16.xpose.msra.mxu0 0
        %846 = vmatpush.bf16.xpose.msra.mxu0 0
        %847 = vmatpush.bf16.xpose.msra.mxu0 0
        %848 = vmatpush.bf16.xpose.msra.mxu0 %v839
        %849 = vmatmul.bf16.gmra.mxu0 %v836
        %v850 = vpop.f32.mrf.mxu0
        %v851 = vadd.f32 0.0, %v850
        %v852 = vpop.f32.mrf.mxu0
        %v853 = vadd.f32 0.0, %v852
        %854 = vdwg.mxu0
        %v855 = vsel %vm620, %v851, -inf
        %856 = vmax.xlane.f32.xlu0 %v855
        %v857 = vpop.xlane.xlu0 %856
        %v858 = vsel %vm620, %v853, -inf
        %859 = vmax.xlane.f32.xlu0 %v858
        %v860 = vpop.xlane.xlu0 %859
        %v861 = vsub.f32 %v851, %v857
        %v862 = vsub.f32 %v853, %v860
        %v863 = vmul.f32 %v861, 1.442695
        %v864 = vpow.pop %v863
        %v865 = vmul.f32 %v862, 1.442695
        %v866 = vpow.pop %v865
        %v867 = vsel %vm620, %v864, 0.0
        %868 = vadd.xlane.f32.xlu0 %v867
        %v869 = vpop.xlane.xlu0 %868
        %v870 = vsel %vm620, %v866, 0.0
        %871 = vadd.xlane.f32.xlu0 %v870
        %v872 = vpop.xlane.xlu0 %871
        %v873 = vrcp.pop %v869
        %v874 = vmul.f32 %v869, %v873
        %v875 = vsub.f32 1.0, %v874
        %v876 = vmul.f32 %v873, %v875
        %v877 = vadd.f32 %v873, %v876
        %vm878 = vweird.f32 %v869
        %vm879 = vweird.f32 %v873
        %vm880 = vmor %vm878, %vm879
        %v881 = vsel %vm880, %v873, %v877
        %v882 = vand.u32 2147483647, %v869
        %vm883 = vcmp.eq.f32.partialorder %v882, 8.507059e+37
        %v884 = vand.u32 %v869, 2147483648
        %v885 = vor.u32 1.1754944e-38, %v884
        %v886 = vsel %vm883, %v885, %v881
        %v887 = vrcp.pop %v872
        %v888 = vmul.f32 %v872, %v887
        %v889 = vsub.f32 1.0, %v888
        %v890 = vmul.f32 %v887, %v889
        %v891 = vadd.f32 %v887, %v890
        %vm892 = vweird.f32 %v872
        %vm893 = vweird.f32 %v887
        %vm894 = vmor %vm892, %vm893
        %v895 = vsel %vm894, %v887, %v891
        %v896 = vand.u32 2147483647, %v872
        %vm897 = vcmp.eq.f32.partialorder %v896, 8.507059e+37
        %v898 = vand.u32 %v872, 2147483648
        %v899 = vor.u32 1.1754944e-38, %v898
        %v900 = vsel %vm897, %v899, %v895
        %v901 = vmul.f32 %v864, %v886
        %v902 = vmul.f32 %v866, %v900
        %v903 = vadd.f32 %v781, %v901
        %v904 = vadd.f32 %v782, %v902
        %v905 = vpack.c.bf16 %v902, %v901
        %v908 = vunpack.c.l.b16 %v824
        %v909 = vunpack.c.l.b16 %v825
        %v910 = vpack.c.b16 %v909, %v908
        %911 = vrot.lane.b32.xlu0 %v910, 64
        %v912 = vpop.permute.xlu0 %911
        %v915 = vsel %vm620, %v905, 0
        %917 = vmatpush.bf16.msra.mxu0 0
        %918 = vmatpush.bf16.msra.mxu0 0
        %919 = vmatpush.bf16.msra.mxu0 0
        %920 = vmatpush.bf16.msra.mxu0 0
        %921 = vmatpush.bf16.msra.mxu0 0
        %922 = vmatpush.bf16.msra.mxu0 0
        %923 = vmatpush.bf16.msra.mxu0 0
        %924 = vmatpush.bf16.msra.mxu0 %v912
        %925 = vmatmul.bf16.gmra.mxu0 %v915
        %v926 = vpop.f32.mrf.mxu0
        %v927 = vadd.f32 0.0, %v926
        %v928 = vpop.f32.mrf.mxu0
        %v929 = vadd.f32 0.0, %v928
        %930 = vdwg.mxu0
        %v931 = vpack.c.bf16 %v927, %v927
        %v932 = vpack.c.bf16 %v929, %v929
        %935 = vrot.lane.b32.xlu0 %v931, 64
        %v936 = vpop.permute.xlu0 %935
        %937 = vrot.lane.b32.xlu0 %v932, 64
        %v938 = vpop.permute.xlu0 %937
        %vm941 = vcmask 781824
        %942 = vst.msk [vmem:[#allocation2] sm:$0xf] %vm941, %v936
        %943 = vst.msk [vmem:[#allocation2 + $0x4] sm:$0xf] %vm941, %v938
        %v944 = vld [vmem:[%s469] sm:$0xf]
        %v945 = vld [vmem:[%s469 + $0x4] sm:$0xf]
        %v946 = vld [vmem:[%s476] sm:$0xf]
        %v947 = vld [vmem:[%s476 + $0x4] sm:$0xf]
        %948 = vrot.lane.b32.xlu0 %v593, 32
        %v949 = vpop.permute.xlu0 %948
        %v952 = vunpack.c.l.b16 %v944
        %v953 = vunpack.c.l.b16 %v945
        %v954 = vpack.c.b16 %v953, %v952
        %955 = vrot.lane.b32.xlu0 %v954, 32
        %v956 = vpop.permute.xlu0 %955
        %v958 = vsel %vm599, %v949, 0
        %v961 = vsel %vm599, %v956, 0
        %963 = vmatpush.bf16.xpose.msra.mxu0 0
        %964 = vmatpush.bf16.xpose.msra.mxu0 0
        %965 = vmatpush.bf16.xpose.msra.mxu0 0
        %966 = vmatpush.bf16.xpose.msra.mxu0 0
        %967 = vmatpush.bf16.xpose.msra.mxu0 0
        %968 = vmatpush.bf16.xpose.msra.mxu0 0
        %969 = vmatpush.bf16.xpose.msra.mxu0 0
        %970 = vmatpush.bf16.xpose.msra.mxu0 %v961
        %971 = vmatmul.bf16.gmra.mxu0 %v958
        %v972 = vpop.f32.mrf.mxu0
        %v973 = vadd.f32 0.0, %v972
        %v974 = vpop.f32.mrf.mxu0
        %v975 = vadd.f32 0.0, %v974
        %976 = vdwg.mxu0
        %v977 = vsel %vm620, %v973, -inf
        %978 = vmax.xlane.f32.xlu0 %v977
        %v979 = vpop.xlane.xlu0 %978
        %v980 = vsel %vm620, %v975, -inf
        %981 = vmax.xlane.f32.xlu0 %v980
        %v982 = vpop.xlane.xlu0 %981
        %v983 = vsub.f32 %v973, %v979
        %v984 = vsub.f32 %v975, %v982
        %v985 = vmul.f32 %v983, 1.442695
        %v986 = vpow.pop %v985
        %v987 = vmul.f32 %v984, 1.442695
        %v988 = vpow.pop %v987
        %v989 = vsel %vm620, %v986, 0.0
        %990 = vadd.xlane.f32.xlu0 %v989
        %v991 = vpop.xlane.xlu0 %990
        %v992 = vsel %vm620, %v988, 0.0
        %993 = vadd.xlane.f32.xlu0 %v992
        %v994 = vpop.xlane.xlu0 %993
        %v995 = vrcp.pop %v991
        %v996 = vmul.f32 %v991, %v995
        %v997 = vsub.f32 1.0, %v996
        %v998 = vmul.f32 %v995, %v997
        %v999 = vadd.f32 %v995, %v998
        %vm1000 = vweird.f32 %v991
        %vm1001 = vweird.f32 %v995
        %vm1002 = vmor %vm1000, %vm1001
        %v1003 = vsel %vm1002, %v995, %v999
        %v1004 = vand.u32 2147483647, %v991
        %vm1005 = vcmp.eq.f32.partialorder %v1004, 8.507059e+37
        %v1006 = vand.u32 %v991, 2147483648
        %v1007 = vor.u32 1.1754944e-38, %v1006
        %v1008 = vsel %vm1005, %v1007, %v1003
        %v1009 = vrcp.pop %v994
        %v1010 = vmul.f32 %v994, %v1009
        %v1011 = vsub.f32 1.0, %v1010
        %v1012 = vmul.f32 %v1009, %v1011
        %v1013 = vadd.f32 %v1009, %v1012
        %vm1014 = vweird.f32 %v994
        %vm1015 = vweird.f32 %v1009
        %vm1016 = vmor %vm1014, %vm1015
        %v1017 = vsel %vm1016, %v1009, %v1013
        %v1018 = vand.u32 2147483647, %v994
        %vm1019 = vcmp.eq.f32.partialorder %v1018, 8.507059e+37
        %v1020 = vand.u32 %v994, 2147483648
        %v1021 = vor.u32 1.1754944e-38, %v1020
        %v1022 = vsel %vm1019, %v1021, %v1017
        %v1023 = vmul.f32 %v986, %v1008
        %v1024 = vmul.f32 %v988, %v1022
        %v1025 = vadd.f32 %v903, %v1023
        %v1026 = vadd.f32 %v904, %v1024
        %v1027 = vpack.c.bf16 %v1024, %v1023
        %v1030 = vunpack.c.l.b16 %v946
        %v1031 = vunpack.c.l.b16 %v947
        %v1032 = vpack.c.b16 %v1031, %v1030
        %1033 = vrot.lane.b32.xlu0 %v1032, 32
        %v1034 = vpop.permute.xlu0 %1033
        %v1037 = vsel %vm620, %v1027, 0
        %1039 = vmatpush.bf16.msra.mxu0 0
        %1040 = vmatpush.bf16.msra.mxu0 0
        %1041 = vmatpush.bf16.msra.mxu0 0
        %1042 = vmatpush.bf16.msra.mxu0 0
        %1043 = vmatpush.bf16.msra.mxu0 0
        %1044 = vmatpush.bf16.msra.mxu0 0
        %1045 = vmatpush.bf16.msra.mxu0 0
        %1046 = vmatpush.bf16.msra.mxu0 %v1034
        %1047 = vmatmul.bf16.gmra.mxu0 %v1037
        %v1048 = vpop.f32.mrf.mxu0
        %v1049 = vadd.f32 0.0, %v1048
        %v1050 = vpop.f32.mrf.mxu0
        %v1051 = vadd.f32 0.0, %v1050
        %1052 = vdwg.mxu0
        %v1053 = vpack.c.bf16 %v1049, %v1049
        %v1054 = vpack.c.bf16 %v1051, %v1051
        %1057 = vrot.lane.b32.xlu0 %v1053, 96
        %v1058 = vpop.permute.xlu0 %1057
        %1059 = vrot.lane.b32.xlu0 %v1054, 96
        %v1060 = vpop.permute.xlu0 %1059
        %vm1063 = vcmask 1044224
        %1064 = vst.msk [vmem:[#allocation2] sm:$0xf] %vm1063, %v1058
        %1065 = vst.msk [vmem:[#allocation2 + $0x4] sm:$0xf] %vm1063, %v1060
        %v1066 = vmul.f32 %v1025, 0.25
        %v1067 = vmul.f32 %v1026, 0.25
        %1068 = vst.msk [vmem:[%s544] sm:$0xff] %vm620, %v1066
        %1069 = vst.msk [vmem:[%s544 + $0x8] sm:$0xff] %vm620, %v1067
        %v1070 = vld [vmem:[#allocation2] sm:$0xf]
        %v1071 = vld [vmem:[#allocation2 + $0x4] sm:$0xf]
        %v1072 = vld [vmem:[#allocation5] sm:$0xf]
        %v1073 = vld [vmem:[#allocation5 + $0x4] sm:$0xf]
        %v1074 = vld [vmem:[#allocation5 + $0x8] sm:$0xf]
        %v1075 = vld [vmem:[#allocation5 + $0xc] sm:$0xf]
        %v1076 = vld [vmem:[#allocation5 + $0x10] sm:$0xf]
        %v1077 = vld [vmem:[#allocation5 + $0x14] sm:$0xf]
        %v1078 = vld [vmem:[#allocation5 + $0x18] sm:$0xf]
        %v1079 = vld [vmem:[#allocation5 + $0x1c] sm:$0xf]
        %v1080 = vld [vmem:[#allocation5 + $0x20] sm:$0xf]
        %v1081 = vld [vmem:[#allocation5 + $0x24] sm:$0xf]
        %v1082 = vld [vmem:[#allocation5 + $0x28] sm:$0xf]
        %v1083 = vld [vmem:[#allocation5 + $0x2c] sm:$0xf]
        %v1084 = vld [vmem:[#allocation5 + $0x30] sm:$0xf]
        %v1085 = vld [vmem:[#allocation5 + $0x34] sm:$0xf]
        %v1086 = vld [vmem:[#allocation5 + $0x38] sm:$0xf]
        %v1087 = vld [vmem:[#allocation5 + $0x3c] sm:$0xf]
        %v1088 = vld [vmem:[%s4] sm:$0x1]
        %v1090 = vperm.slane %v1088, 0
        %v1094 = vunpack.c.l.b16 %v1070
        %v1095 = vunpack.c.l.b16 %v1071
        %v1096 = vpack.c.b16 %v1095, %v1094
        %v1114 = vunpack.c.l.b16 %v1072
        %v1115 = vunpack.c.l.b16 %v1073
        %v1116 = vunpack.c.l.b16 %v1074
        %v1117 = vunpack.c.l.b16 %v1075
        %v1118 = vunpack.c.l.b16 %v1076
        %v1119 = vunpack.c.l.b16 %v1077
        %v1120 = vunpack.c.l.b16 %v1078
        %v1121 = vunpack.c.l.b16 %v1079
        %v1122 = vunpack.c.l.b16 %v1080
        %v1123 = vunpack.c.l.b16 %v1081
        %v1124 = vunpack.c.l.b16 %v1082
        %v1125 = vunpack.c.l.b16 %v1083
        %v1126 = vunpack.c.l.b16 %v1084
        %v1127 = vunpack.c.l.b16 %v1085
        %v1128 = vunpack.c.l.b16 %v1086
        %v1129 = vunpack.c.l.b16 %v1087
        %v1130 = vpack.c.b16 %v1115, %v1114
        %v1131 = vpack.c.b16 %v1117, %v1116
        %v1132 = vpack.c.b16 %v1119, %v1118
        %v1133 = vpack.c.b16 %v1121, %v1120
        %v1134 = vpack.c.b16 %v1123, %v1122
        %v1135 = vpack.c.b16 %v1125, %v1124
        %v1136 = vpack.c.b16 %v1127, %v1126
        %v1137 = vpack.c.b16 %v1129, %v1128
        %1146 = vmatpush.bf16.msra.mxu0 %v1137
        %1147 = vmatpush.bf16.msra.mxu0 %v1136
        %1148 = vmatpush.bf16.msra.mxu0 %v1135
        %1149 = vmatpush.bf16.msra.mxu0 %v1134
        %1150 = vmatpush.bf16.msra.mxu0 %v1133
        %1151 = vmatpush.bf16.msra.mxu0 %v1132
        %1152 = vmatpush.bf16.msra.mxu0 %v1131
        %1153 = vmatpush.bf16.msra.mxu0 %v1130
        %1154 = vmatmul.bf16.gmra.mxu0 %v1096
        %v1155 = vpop.f32.mrf.mxu0
        %v1156 = vadd.f32 %v1090, %v1155
        %v1157 = vpop.f32.mrf.mxu0
        %v1158 = vadd.f32 %v1090, %v1157
        %1159 = vdwg.mxu0
        %v1160 = vld [vmem:[%s563] sm:$0xf]
        %v1161 = vld [vmem:[%s563 + $0x4] sm:$0xf]
        %v1162 = vunpack.c.l.bf16 %v1160
        %v1163 = vunpack.c.l.bf16 %v1161
        %v1164 = vadd.f32 %v1156, %v1162
        %v1165 = vadd.f32 %v1158, %v1163
        %1166 = vadd.xlane.f32.xlu0 %v1164
        %v1167 = vpop.xlane.xlu0 %1166
        %1168 = vadd.xlane.f32.xlu0 %v1165
        %v1169 = vpop.xlane.xlu0 %1168
        %v1170 = vrcp.pop 128.0
        %v1171 = vmul.f32 128.0, %v1170
        %v1172 = vsub.f32 1.0, %v1171
        %v1173 = vmul.f32 %v1170, %v1172
        %v1174 = vadd.f32 %v1170, %v1173
        %vm1175 = vweird.f32 %v1170
        %v1176 = vsel %vm1175, %v1170, %v1174
        %v1177 = vmul.f32 %v1167, %v1176
        %v1178 = vmul.f32 %v1169, %v1176
        %v1179 = vsub.f32 %v1164, %v1177
        %v1180 = vsub.f32 %v1165, %v1178
        %v1181 = vmul.f32 %v1179, %v1179
        %v1182 = vmul.f32 %v1180, %v1180
        %1183 = vadd.xlane.f32.xlu0 %v1181
        %v1184 = vpop.xlane.xlu0 %1183
        %1185 = vadd.xlane.f32.xlu0 %v1182
        %v1186 = vpop.xlane.xlu0 %1185
        %v1187 = vmul.f32 %v1184, %v1176
        %v1188 = vmul.f32 %v1186, %v1176
        %v1189 = vadd.f32 %v1187, 1e-05
        %v1190 = vadd.f32 %v1188, 1e-05
        %v1191 = vrsqrt.pop %v1189
        %v1192 = vmul.f32 %v1191, %v1189
        %v1193 = vmul.f32 %v1192, %v1191
        %v1194 = vmul.f32 0.5, %v1193
        %v1195 = vsub.f32 1.5, %v1194
        %v1196 = vmul.f32 %v1191, %v1195
        %vm1197 = vweird.f32 %v1189
        %vm1198 = vweird.f32 %v1191
        %vm1199 = vmor %vm1197, %vm1198
        %v1200 = vsel %vm1199, %v1191, %v1196
        %v1201 = vrsqrt.pop %v1190
        %v1202 = vmul.f32 %v1201, %v1190
        %v1203 = vmul.f32 %v1202, %v1201
        %v1204 = vmul.f32 0.5, %v1203
        %v1205 = vsub.f32 1.5, %v1204
        %v1206 = vmul.f32 %v1201, %v1205
        %vm1207 = vweird.f32 %v1190
        %vm1208 = vweird.f32 %v1201
        %vm1209 = vmor %vm1207, %vm1208
        %v1210 = vsel %vm1209, %v1201, %v1206
        %v1211 = vmul.f32 %v1179, %v1200
        %v1212 = vmul.f32 %v1180, %v1210
        %v1213 = vld [vmem:[%s6] sm:$0x1]
        %v1215 = vperm.slane %v1213, 0
        %v1217 = vmul.f32 %v1211, %v1215
        %v1218 = vmul.f32 %v1212, %v1215
        %v1219 = vld [vmem:[%s7] sm:$0x1]
        %v1221 = vperm.slane %v1219, 0
        %v1223 = vadd.f32 %v1217, %v1221
        %v1224 = vadd.f32 %v1218, %v1221
        %v1225 = vpack.c.bf16 %v1223, %v1223
        %v1226 = vpack.c.bf16 %v1224, %v1224
        %1227 = vst [vmem:[%s573] sm:$0xf] %v1225
        %1228 = vst [vmem:[%s573 + $0x4] sm:$0xf] %v1226
        %s1229 = smul.u32 2, %s30
        %p1230 = scmp.lt.s32.totalorder %s29, 1
        %s1231 = scalar_select %p1230, %s29, 1
        %p1232 = scmp.lt.s32.totalorder %s1229, 1
        %s1233 = scalar_select %p1232, %s1229, 1
        %s1234 = smul.addr %s1231, 2
        %s1235 = sadd.s32 %s1233, %s1234
        %s1236 = smul.addr %s1235, 4
        %s1237 = scalar_lea.vmem %s8, %s1236
        %s1238 = sand.u32 %s267, 1
        %s1239 = scalar_lea.sflag [#allocation7], %s1238
        %s1240 = sand.u32 %s267, 1
        %s1241 = smul.addr %s1240, 16
        %s1242 = scalar_lea.vmem [#allocation8], %s1241
        // Predicated region
        $region139: #{transformer_model.17} parent=125 // pred_check
          %p1243 = pneg %p249
        $region140: #{transformer_model.17} parent=125 // pred_check_branch
          %1245 = sbr.rel (%p1243) target = $region142
        $region141: #{transformer_model.17} parent=125 // pred_region
          %s1246 = smul.u32 2, %s30
        $region142: #{transformer_model.17} parent=125 // pred_fallthru
          _
        // Predicated region
        $region143: #{transformer_model.17} parent=125 // pred_check
          %p1247 = pneg %p277
        $region144: #{transformer_model.17} parent=125 // pred_check_branch
          %1249 = sbr.rel (%p1247) target = $region146
        $region145: #{transformer_model.17} parent=125 // pred_region
          %s1250 = smul.u32 2, %s30
          %1252 = vsyncadd %s1239, 0
          %s1253 = smul.addr %s29, 2
          %s1254 = sadd.s32 %s1250, %s1253
          %s1255 = smul.addr %s1254, 8
          %s1256 = scalar_lea.hbm %s9, %s1255
          %s1257 = sshll.u32 %s1242, 4
          %s1258 = int_to_ptr.vmem [resolvable:$true] %s1257
          %s1259 = sshll.u32 %s1256, 4
          %s1260 = int_to_ptr.hbm [resolvable:$true] %s1259
          %1265 = dma.vmem_to_hbm [thread:$0]  %s1258, 256, %s1260, %s1239, 128, 128, 8
        $region146: #{transformer_model.17} parent=125 // pred_fallthru
          _
      $region126: #{transformer_model.17} parent=5 // pred_fallthru
        _
      %p1266 = scmp.le.s32.totalorder 2, %s20
      // Predicated region
      $region147: #{transformer_model.17} parent=5 // pred_check
        %p1267 = pneg %p1266
      $region148: #{transformer_model.17} parent=5 // pred_check_branch
        %1269 = sbr.rel (%p1267) target = $region150
      $region149: #{transformer_model.17} parent=5 // pred_region
        %s1270 = ssub.s32 %s20, 2
        // Predicated region
        $region151: #{transformer_model.17} parent=149 // pred_check
          %p1271 = pneg %p255
        $region152: #{transformer_model.17} parent=149 // pred_check_branch
          %1273 = sbr.rel (%p1271) target = $region154
        $region153: #{transformer_model.17} parent=149 // pred_region
          %s1274 = smul.u32 2, %s32
          %p1275 = scmp.lt.s32.totalorder %s31, 1
          %s1276 = scalar_select %p1275, %s31, 1
          %p1277 = scmp.lt.s32.totalorder %s1274, 1
          %s1278 = scalar_select %p1277, %s1274, 1
          %s1279 = smul.addr %s1276, 2
          %s1280 = sadd.s32 %s1278, %s1279
          %s1281 = smul.addr %s1280, 4
          %s1282 = scalar_lea.vmem %s8, %s1281
        $region154: #{transformer_model.17} parent=149 // pred_fallthru
          _
        // Predicated region
        $region155: #{transformer_model.17} parent=149 // pred_check
          %p1283 = pneg %p283
        $region156: #{transformer_model.17} parent=149 // pred_check_branch
          %1285 = sbr.rel (%p1283) target = $region158
        $region157: #{transformer_model.17} parent=149 // pred_region
          %s1286 = sand.u32 %s268, 1
          %s1287 = scalar_lea.sflag [#allocation7], %s1286
          %s1288 = sand.u32 %s268, 1
          %s1289 = smul.addr %s1288, 16
          %s1290 = scalar_lea.vmem [#allocation8], %s1289
          %1292 = dma.done %s1287, 256
        $region158: #{transformer_model.17} parent=149 // pred_fallthru
          _
      $region150: #{transformer_model.17} parent=5 // pred_fallthru
        _
    $region6: #{transformer_model.17} parent=1 // loop_footer
      %s24 = sadd.s32 1, %s20
    $region7: #{transformer_model.17} parent=1 // loop_footer_branch
      %19 = sbr.rel target = $region3
    $region8: #{transformer_model.17} parent=1 // loop_exit
      _
    %1293 = vsyncpa [#allocation6], 1
    %s1294 = scalar_lea.sflag [#allocation6], 1
    %1295 = vsyncpa %s1294, 1
    %1296 = vsyncpa [#allocation7], 1
    %s1297 = scalar_lea.sflag [#allocation7], 1
    %1298 = vsyncpa %s1297, 1

// kernel: transformer_model.22
$region0: #{transformer_model.22}
  #allocation0 [shape = 'u32[]', space=smem, size = 0x4, offset = 0x4, fixed_abs, tag = 'smem constant byte address 0x4 - core index']
  #allocation1 [shape = 'u32[72,128]{1,0:T(1,128)}', space=vmem, size = 0x9000, scoped, tag = 'internal scratch']
  #allocation2 [shape = 'f32[32,256]{1,0:T(8,128)}', space=vmem, size = 0x8000, scoped, tag = 'scratch operand']
  %s0 = inlined_call_operand.vmem [shape: bf16[32,128], index: 0, kind: input, shape index: {}]
  %s1 = inlined_call_operand.hbm [shape: bf16[128,256], index: 1, kind: input, shape index: {}]
  %s2 = inlined_call_operand.vmem [shape: f32[1,256], index: 2, kind: input, shape index: {}]
  %s3 = inlined_call_operand.vmem [shape: bf16[32,256], index: 3, kind: output, shape index: {}]
  %s4 = sld [smem:[#allocation0]]
  $region34: #{transformer_model.22} parent=0
    _
  %s6 = ssub.s32 1, %s4
  %s7 = scalar_select 0, %s6, %s4
  $region1: #{transformer_model.22} parent=0
    #allocation3 [shape = 'u8[65536]{0}', space=vmem, size = 0x10000, scoped, tag = 'input window, operand 1, single buffered']
    #allocation4 [shape = 's32[1]{0}', space=sflag, size = 0x4, scoped, tag = 'scoped memory for transformer_model.22']
    %8 = vsyncpa [#allocation4], 0
    // Predicated region
    $region2: #{transformer_model.22} parent=1 // pred_check
      _
    $region3: #{transformer_model.22} parent=1 // pred_check_branch
      %10 = sbr.rel (0) target = $region5
    $region4: #{transformer_model.22} parent=1 // pred_region
      _
    $region5: #{transformer_model.22} parent=1 // pred_fallthru
      _
    // Predicated region
    $region6: #{transformer_model.22} parent=1 // pred_check
      _
    $region7: #{transformer_model.22} parent=1 // pred_check_branch
      %12 = sbr.rel (0) target = $region9
    $region8: #{transformer_model.22} parent=1 // pred_region
      %14 = vsyncadd [#allocation4], 0
      %s15 = sshll.u32 %s1, 4
      %s16 = int_to_ptr.hbm [resolvable:$true] %s15
      %s17 = sshll.u32 [#allocation3], 4
      %s18 = int_to_ptr.vmem [resolvable:$true] %s17
      %23 = dma.hbm_to_vmem [thread:$0]  %s16, 2048, %s18, [#allocation4], 128, 128, 8
    $region9: #{transformer_model.22} parent=1 // pred_fallthru
      _
    // Predicated region
    $region10: #{transformer_model.22} parent=1 // pred_check
      _
    $region11: #{transformer_model.22} parent=1 // pred_check_branch
      %25 = sbr.rel (0) target = $region13
    $region12: #{transformer_model.22} parent=1 // pred_region
      _
    $region13: #{transformer_model.22} parent=1 // pred_fallthru
      _
    // Predicated region
    $region14: #{transformer_model.22} parent=1 // pred_check
      _
    $region15: #{transformer_model.22} parent=1 // pred_check_branch
      %27 = sbr.rel (0) target = $region17
    $region16: #{transformer_model.22} parent=1 // pred_region
      %29 = dma.done [#allocation4], 2048
    $region17: #{transformer_model.22} parent=1 // pred_fallthru
      _
    %p30 = scmp.eq.s32.totalorder 0, 0
    // Predicated region
    $region18: #{transformer_model.22} parent=1 // pred_check
      %p31 = pneg %p30
    $region19: #{transformer_model.22} parent=1 // pred_check_branch
      %33 = sbr.rel (%p31) target = $region21
    $region20: #{transformer_model.22} parent=1 // pred_region
      %34 = vst [vmem:[#allocation2] sm:$0xff] 0.0
      %35 = vst [vmem:[#allocation2 + $0x8] sm:$0xff] 0.0
      %36 = vst [vmem:[#allocation2 + $0x10] sm:$0xff] 0.0
      %37 = vst [vmem:[#allocation2 + $0x18] sm:$0xff] 0.0
      %38 = vst [vmem:[#allocation2 + $0x20] sm:$0xff] 0.0
      %39 = vst [vmem:[#allocation2 + $0x28] sm:$0xff] 0.0
      %40 = vst [vmem:[#allocation2 + $0x30] sm:$0xff] 0.0
      %41 = vst [vmem:[#allocation2 + $0x38] sm:$0xff] 0.0
    $region21: #{transformer_model.22} parent=1 // pred_fallthru
      _
    %v42 = vld [vmem:[#allocation2] sm:$0xff]
    %v43 = vld [vmem:[#allocation2 + $0x8] sm:$0xff]
    %v44 = vld [vmem:[#allocation2 + $0x10] sm:$0xff]
    %v45 = vld [vmem:[#allocation2 + $0x18] sm:$0xff]
    %v46 = vld [vmem:[#allocation2 + $0x20] sm:$0xff]
    %v47 = vld [vmem:[#allocation2 + $0x28] sm:$0xff]
    %v48 = vld [vmem:[#allocation2 + $0x30] sm:$0xff]
    %v49 = vld [vmem:[#allocation2 + $0x38] sm:$0xff]
    %v50 = vld [vmem:[%s0] sm:$0xf]
    %v51 = vld [vmem:[%s0 + $0x4] sm:$0xf]
    %v52 = vld [vmem:[%s0 + $0x8] sm:$0xf]
    %v53 = vld [vmem:[%s0 + $0xc] sm:$0xf]
    %v54 = vld [vmem:[#allocation3] sm:$0xff]
    %v55 = vld [vmem:[#allocation3 + $0x8] sm:$0xff]
    %v56 = vld [vmem:[#allocation3 + $0x10] sm:$0xff]
    %v57 = vld [vmem:[#allocation3 + $0x18] sm:$0xff]
    %v58 = vld [vmem:[#allocation3 + $0x20] sm:$0xff]
    %v59 = vld [vmem:[#allocation3 + $0x28] sm:$0xff]
    %v60 = vld [vmem:[#allocation3 + $0x30] sm:$0xff]
    %v61 = vld [vmem:[#allocation3 + $0x38] sm:$0xff]
    %v62 = vld [vmem:[#allocation3 + $0x40] sm:$0xff]
    %v63 = vld [vmem:[#allocation3 + $0x48] sm:$0xff]
    %v64 = vld [vmem:[#allocation3 + $0x50] sm:$0xff]
    %v65 = vld [vmem:[#allocation3 + $0x58] sm:$0xff]
    %v66 = vld [vmem:[#allocation3 + $0x60] sm:$0xff]
    %v67 = vld [vmem:[#allocation3 + $0x68] sm:$0xff]
    %v68 = vld [vmem:[#allocation3 + $0x70] sm:$0xff]
    %v69 = vld [vmem:[#allocation3 + $0x78] sm:$0xff]
    %v74 = vunpack.c.l.b16 %v50
    %v75 = vunpack.c.l.b16 %v51
    %v76 = vunpack.c.l.b16 %v52
    %v77 = vunpack.c.l.b16 %v53
    %v78 = vpack.c.b16 %v75, %v74
    %v79 = vpack.c.b16 %v77, %v76
    %v98 = vunpack.c.l.b16 %v54
    %v99 = vunpack.c.h.b16 %v54
    %v100 = vunpack.c.l.b16 %v55
    %v101 = vunpack.c.h.b16 %v55
    %v102 = vunpack.c.l.b16 %v56
    %v103 = vunpack.c.h.b16 %v56
    %v104 = vunpack.c.l.b16 %v57
    %v105 = vunpack.c.h.b16 %v57
    %v106 = vunpack.c.l.b16 %v58
    %v107 = vunpack.c.h.b16 %v58
    %v108 = vunpack.c.l.b16 %v59
    %v109 = vunpack.c.h.b16 %v59
    %v110 = vunpack.c.l.b16 %v60
    %v111 = vunpack.c.h.b16 %v60
    %v112 = vunpack.c.l.b16 %v61
    %v113 = vunpack.c.h.b16 %v61
    %v114 = vunpack.c.l.b16 %v62
    %v115 = vunpack.c.h.b16 %v62
    %v116 = vunpack.c.l.b16 %v63
    %v117 = vunpack.c.h.b16 %v63
    %v118 = vunpack.c.l.b16 %v64
    %v119 = vunpack.c.h.b16 %v64
    %v120 = vunpack.c.l.b16 %v65
    %v121 = vunpack.c.h.b16 %v65
    %v122 = vunpack.c.l.b16 %v66
    %v123 = vunpack.c.h.b16 %v66
    %v124 = vunpack.c.l.b16 %v67
    %v125 = vunpack.c.h.b16 %v67
    %v126 = vunpack.c.l.b16 %v68
    %v127 = vunpack.c.h.b16 %v68
    %v128 = vunpack.c.l.b16 %v69
    %v129 = vunpack.c.h.b16 %v69
    %v130 = vpack.c.b16 %v100, %v98
    %v131 = vpack.c.b16 %v101, %v99
    %v132 = vpack.c.b16 %v104, %v102
    %v133 = vpack.c.b16 %v105, %v103
    %v134 = vpack.c.b16 %v108, %v106
    %v135 = vpack.c.b16 %v109, %v107
    %v136 = vpack.c.b16 %v112, %v110
    %v137 = vpack.c.b16 %v113, %v111
    %v138 = vpack.c.b16 %v116, %v114
    %v139 = vpack.c.b16 %v117, %v115
    %v140 = vpack.c.b16 %v120, %v118
    %v141 = vpack.c.b16 %v121, %v119
    %v142 = vpack.c.b16 %v124, %v122
    %v143 = vpack.c.b16 %v125, %v123
    %v144 = vpack.c.b16 %v128, %v126
    %v145 = vpack.c.b16 %v129, %v127
    %162 = vmatpush.bf16.msra.mxu0 %v144
    %163 = vmatpush.bf16.msra.mxu0 %v142
    %164 = vmatpush.bf16.msra.mxu0 %v140
    %165 = vmatpush.bf16.msra.mxu0 %v138
    %166 = vmatpush.bf16.msra.mxu0 %v136
    %167 = vmatpush.bf16.msra.mxu0 %v134
    %168 = vmatpush.bf16.msra.mxu0 %v132
    %169 = vmatpush.bf16.msra.mxu0 %v130
    %170 = vmatmul.bf16.gmra.mxu0 %v78
    %v171 = vpop.f32.mrf.mxu0
    %v172 = vadd.f32 0.0, %v171
    %v173 = vpop.f32.mrf.mxu0
    %v174 = vadd.f32 0.0, %v173
    %175 = vmatmul.bf16.gmra.mxu0 %v79
    %v176 = vpop.f32.mrf.mxu0
    %v177 = vadd.f32 0.0, %v176
    %v178 = vpop.f32.mrf.mxu0
    %v179 = vadd.f32 0.0, %v178
    %180 = vdwg.mxu0
    %181 = vmatpush.bf16.msra.mxu0 %v145
    %182 = vmatpush.bf16.msra.mxu0 %v143
    %183 = vmatpush.bf16.msra.mxu0 %v141
    %184 = vmatpush.bf16.msra.mxu0 %v139
    %185 = vmatpush.bf16.msra.mxu0 %v137
    %186 = vmatpush.bf16.msra.mxu0 %v135
    %187 = vmatpush.bf16.msra.mxu0 %v133
    %188 = vmatpush.bf16.msra.mxu0 %v131
    %189 = vmatmul.bf16.gmra.mxu0 %v78
    %v190 = vpop.f32.mrf.mxu0
    %v191 = vadd.f32 0.0, %v190
    %v192 = vpop.f32.mrf.mxu0
    %v193 = vadd.f32 0.0, %v192
    %194 = vmatmul.bf16.gmra.mxu0 %v79
    %v195 = vpop.f32.mrf.mxu0
    %v196 = vadd.f32 0.0, %v195
    %v197 = vpop.f32.mrf.mxu0
    %v198 = vadd.f32 0.0, %v197
    %199 = vdwg.mxu0
    %v200 = vadd.f32 %v42, %v172
    %v201 = vadd.f32 %v43, %v191
    %v202 = vadd.f32 %v44, %v174
    %v203 = vadd.f32 %v45, %v193
    %v204 = vadd.f32 %v46, %v177
    %v205 = vadd.f32 %v47, %v196
    %v206 = vadd.f32 %v48, %v179
    %v207 = vadd.f32 %v49, %v198
    %208 = vst [vmem:[#allocation2] sm:$0xff] %v200
    %209 = vst [vmem:[#allocation2 + $0x8] sm:$0xff] %v201
    %210 = vst [vmem:[#allocation2 + $0x10] sm:$0xff] %v202
    %211 = vst [vmem:[#allocation2 + $0x18] sm:$0xff] %v203
    %212 = vst [vmem:[#allocation2 + $0x20] sm:$0xff] %v204
    %213 = vst [vmem:[#allocation2 + $0x28] sm:$0xff] %v205
    %214 = vst [vmem:[#allocation2 + $0x30] sm:$0xff] %v206
    %215 = vst [vmem:[#allocation2 + $0x38] sm:$0xff] %v207
    // Predicated region
    $region22: #{transformer_model.22} parent=1 // pred_check
      %p216 = pneg %p30
    $region23: #{transformer_model.22} parent=1 // pred_check_branch
      %218 = sbr.rel (%p216) target = $region25
    $region24: #{transformer_model.22} parent=1 // pred_region
      %v219 = vld [vmem:[#allocation2] sm:$0xff]
      %v220 = vld [vmem:[#allocation2 + $0x8] sm:$0xff]
      %v221 = vld [vmem:[#allocation2 + $0x10] sm:$0xff]
      %v222 = vld [vmem:[#allocation2 + $0x18] sm:$0xff]
      %v223 = vld [vmem:[#allocation2 + $0x20] sm:$0xff]
      %v224 = vld [vmem:[#allocation2 + $0x28] sm:$0xff]
      %v225 = vld [vmem:[#allocation2 + $0x30] sm:$0xff]
      %v226 = vld [vmem:[#allocation2 + $0x38] sm:$0xff]
      %v227 = vld [vmem:[%s2] sm:$0x3]
      %v229 = vperm.slane %v227, 0
      %v230 = vperm.slane %v227, 1
      %v233 = vadd.f32 %v219, %v229
      %v234 = vadd.f32 %v220, %v230
      %v235 = vadd.f32 %v221, %v229
      %v236 = vadd.f32 %v222, %v230
      %v237 = vadd.f32 %v223, %v229
      %v238 = vadd.f32 %v224, %v230
      %v239 = vadd.f32 %v225, %v229
      %v240 = vadd.f32 %v226, %v230
      %v241 = vpack.c.bf16 %v234, %v233
      %v242 = vpack.c.bf16 %v236, %v235
      %v243 = vpack.c.bf16 %v238, %v237
      %v244 = vpack.c.bf16 %v240, %v239
      %245 = vst [vmem:[%s3] sm:$0xff] %v241
      %246 = vst [vmem:[%s3 + $0x8] sm:$0xff] %v242
      %247 = vst [vmem:[%s3 + $0x10] sm:$0xff] %v243
      %248 = vst [vmem:[%s3 + $0x18] sm:$0xff] %v244
    $region25: #{transformer_model.22} parent=1 // pred_fallthru
      _
    // Predicated region
    $region26: #{transformer_model.22} parent=1 // pred_check
      _
    $region27: #{transformer_model.22} parent=1 // pred_check_branch
      %250 = sbr.rel (0) target = $region29
    $region28: #{transformer_model.22} parent=1 // pred_region
      _
    $region29: #{transformer_model.22} parent=1 // pred_fallthru
      _
    // Predicated region
    $region30: #{transformer_model.22} parent=1 // pred_check
      _
    $region31: #{transformer_model.22} parent=1 // pred_check_branch
      %252 = sbr.rel (0) target = $region33
    $region32: #{transformer_model.22} parent=1 // pred_region
      _
    $region33: #{transformer_model.22} parent=1 // pred_fallthru
      _
    %253 = vsyncpa [#allocation4], 1

// kernel: transformer_model.20
$region0: #{transformer_model.20}
  #allocation0 [shape = 'u32[]', space=smem, size = 0x4, offset = 0x4, fixed_abs, tag = 'smem constant byte address 0x4 - core index']
  #allocation1 [shape = 'u32[72,128]{1,0:T(1,128)}', space=vmem, size = 0x9000, scoped, tag = 'internal scratch']
  #allocation2 [shape = 'bf16[16,128]{1,0:T(8,128)(2,1)}', space=vmem, size = 0x1000, scoped, tag = 'scratch operand']
  %s0 = inlined_call_operand.vmem [shape: bf16[2,16,384], index: 0, kind: input, shape index: {}, may-alias: {0,1,2}]
  %s1 = inlined_call_operand.vmem [shape: bf16[2,16,384], index: 1, kind: input, shape index: {}, may-alias: {0,1,2}]
  %s2 = inlined_call_operand.vmem [shape: bf16[2,16,384], index: 2, kind: input, shape index: {}, may-alias: {0,1,2}]
  %s3 = inlined_call_operand.hbm [shape: bf16[128,128], index: 3, kind: input, shape index: {}]
  %s4 = inlined_call_operand.vmem [shape: f32[1,128], index: 4, kind: input, shape index: {}]
  %s5 = inlined_call_operand.vmem [shape: bf16[2,16,128], index: 5, kind: input, shape index: {}]
  %s6 = inlined_call_operand.vmem [shape: f32[1,128], index: 6, kind: input, shape index: {}]
  %s7 = inlined_call_operand.vmem [shape: f32[1,128], index: 7, kind: input, shape index: {}]
  %s8 = inlined_call_operand.vmem [shape: bf16[2,16,128], index: 8, kind: output, shape index: {0}]
  %s9 = inlined_call_operand.hbm [shape: f32[2,16,16], index: 9, kind: output, shape index: {1}]
  %10 = xla_tuple %s8, %s9
  %s11 = sld [smem:[#allocation0]]
  $region200: #{transformer_model.20} parent=0
    _
  %s13 = ssub.s32 1, %s11
  %s14 = scalar_select 0, %s13, %s11
  $region1: #{transformer_model.20} parent=0
    #allocation3 [shape = 'u8[8192]{0}', space=vmem, size = 0x2000, scoped, tag = 'input window, operand 0']
    #allocation4 [shape = 'u8[8192]{0}', space=vmem, size = 0x2000, scoped, tag = 'input window, operand 1']
    #allocation5 [shape = 'u8[8192]{0}', space=vmem, size = 0x2000, scoped, tag = 'input window, operand 2']
    #allocation6 [shape = 'u8[32768]{0}', space=vmem, size = 0x8000, scoped, tag = 'input window, operand 3, single buffered']
    #allocation7 [shape = 's32[2]{0}', space=sflag, size = 0x8, scoped, tag = 'scoped memory for transformer_model.20']
    #allocation8 [shape = 's32[2]{0}', space=sflag, size = 0x8, scoped, tag = 'scoped memory for transformer_model.20']
    #allocation9 [shape = 'u8[16384]{0}', space=vmem, size = 0x4000, scoped, tag = 'output window, operand 1']
    %15 = vsyncpa [#allocation7], 0
    %16 = vsyncpa [#allocation8], 0
    %s17 = scalar_lea.sflag [#allocation8], 1
    %18 = vsyncpa %s17, 0
    loop: start=0, step=1, limit=4
    $region2: #{transformer_model.20} parent=1 // loop_pre_header
      _
    $region3: #{transformer_model.20} parent=1 // loop_header
      %s20 = sphi 0, %s24
      %p21 = scmp.ge.s32.totalorder %s20, 4
      %s27 = sphi 0, %s39
      %s28 = sphi 0, %s35
      %s29 = sphi 0, %s27
      %s30 = sphi 0, %s28
      %s31 = sphi 0, %s29
      %s32 = sphi 0, %s30
      %s44 = sphi 0, %s46
      %s47 = sphi 0, %s44
      %s48 = sphi 0, %s47
      %s64 = sphi 0, %s48
      %s70 = sphi 0, %s72
      %s73 = sphi 0, %s70
      %s74 = sphi 0, %s73
      %s90 = sphi 0, %s74
      %s96 = sphi 0, %s98
      %s99 = sphi 0, %s96
      %s100 = sphi 0, %s99
      %s116 = sphi 0, %s100
      %s120 = sphi 0, %s120
      %s122 = sphi 0, %s120
      %s123 = sphi 0, %s122
      %s137 = sphi 0, %s123
      %s141 = sphi 0, %s141
      %s143 = sphi 0, %s141
      %s144 = sphi 0, %s143
      %s158 = sphi 0, %s144
      %s166 = sphi 0, %s168
      %s169 = sphi 0, %s166
      %s170 = sphi 0, %s169
      %s186 = sphi 0, %s170
      %s190 = sphi 0, %s190
      %s192 = sphi 0, %s190
      %s193 = sphi 0, %s192
      %s207 = sphi 0, %s193
      %s211 = sphi 0, %s211
      %s213 = sphi 0, %s211
      %s214 = sphi 0, %s213
      %s228 = sphi 0, %s214
      %s236 = sphi 0, %s238
      %s239 = sphi 0, %s236
      %s240 = sphi 0, %s239
      %s256 = sphi 0, %s240
      %s264 = sphi 0, %s266
      %s267 = sphi 0, %s264
      %s268 = sphi 0, %s267
      %s284 = sphi 0, %s268
    $region4: #{transformer_model.20} parent=1 // loop_header_branch
      %23 = sbr.rel (%p21) target = $region8
    $region5: #{transformer_model.20} parent=1 // loop_body
      %s25 = ssub.s32 %s20, 1
      %s26 = ssub.s32 %s20, 2
      %s33 = sadd.s32 1, %s28
      %p34 = scmp.ge.s32.totalorder %s33, 1
      %s35 = scalar_select %p34, 0, %s33
      %s36 = sadd.s32 1, %s27
      %s37 = scalar_select %p34, %s36, %s27
      %p38 = scmp.ge.s32.totalorder %s37, 2
      %s39 = scalar_select %p38, 0, %s37
      %s40 = ssub.s32 %s27, %s39
      %s41 = ssub.s32 %s28, %s35
      %s42 = sor.u32 %s40, %s41
      %p43 = scmp.eq.s32.totalorder %s42, 0
      %s45 = sadd.s32 %s44, 1
      %s46 = scalar_select %p43, %s44, %s45
      %p49 = pneg %p43
      %p50 = scmp.eq.s32.totalorder %s20, 1
      %p51 = por %p49, %p50
      %p52 = scmp.ne.s32.totalorder %s44, %s47
      %p53 = scmp.eq.s32.totalorder %s20, 0
      %p54 = por %p52, %p53
      %p55 = scmp.ne.s32.totalorder %s44, %s47
      %p56 = scmp.eq.s32.totalorder %s25, 1
      %p57 = por %p55, %p56
      %p58 = scmp.ne.s32.totalorder %s47, %s48
      %p59 = scmp.eq.s32.totalorder %s25, 0
      %p60 = por %p58, %p59
      %p61 = scmp.ne.s32.totalorder %s47, %s48
      %p62 = scmp.eq.s32.totalorder %s26, 1
      %p63 = por %p61, %p62
      %p65 = scmp.ne.s32.totalorder %s48, %s64
      %p66 = scmp.eq.s32.totalorder %s26, 0
      %p67 = por %p65, %p66
      %s68 = ssub.s32 %s27, %s39
      %p69 = scmp.eq.s32.totalorder %s68, 0
      %s71 = sadd.s32 %s70, 1
      %s72 = scalar_select %p69, %s70, %s71
      %p75 = pneg %p69
      %p76 = scmp.eq.s32.totalorder %s20, 1
      %p77 = por %p75, %p76
      %p78 = scmp.ne.s32.totalorder %s70, %s73
      %p79 = scmp.eq.s32.totalorder %s20, 0
      %p80 = por %p78, %p79
      %p81 = scmp.ne.s32.totalorder %s70, %s73
      %p82 = scmp.eq.s32.totalorder %s25, 1
      %p83 = por %p81, %p82
      %p84 = scmp.ne.s32.totalorder %s73, %s74
      %p85 = scmp.eq.s32.totalorder %s25, 0
      %p86 = por %p84, %p85
      %p87 = scmp.ne.s32.totalorder %s73, %s74
      %p88 = scmp.eq.s32.totalorder %s26, 1
      %p89 = por %p87, %p88
      %p91 = scmp.ne.s32.totalorder %s74, %s90
      %p92 = scmp.eq.s32.totalorder %s26, 0
      %p93 = por %p91, %p92
      %s94 = ssub.s32 %s27, %s39
      %p95 = scmp.eq.s32.totalorder %s94, 0
      %s97 = sadd.s32 %s96, 1
      %s98 = scalar_select %p95, %s96, %s97
      %p101 = pneg %p95
      %p102 = scmp.eq.s32.totalorder %s20, 1
      %p103 = por %p101, %p102
      %p104 = scmp.ne.s32.totalorder %s96, %s99
      %p105 = scmp.eq.s32.totalorder %s20, 0
      %p106 = por %p104, %p105
      %p107 = scmp.ne.s32.totalorder %s96, %s99
      %p108 = scmp.eq.s32.totalorder %s25, 1
      %p109 = por %p107, %p108
      %p110 = scmp.ne.s32.totalorder %s99, %s100
      %p111 = scmp.eq.s32.totalorder %s25, 0
      %p112 = por %p110, %p111
      %p113 = scmp.ne.s32.totalorder %s99, %s100
      %p114 = scmp.eq.s32.totalorder %s26, 1
      %p115 = por %p113, %p114
      %p117 = scmp.ne.s32.totalorder %s100, %s116
      %p118 = scmp.eq.s32.totalorder %s26, 0
      %p119 = por %p117, %p118
      %s121 = sadd.s32 %s120, 1
      %p124 = scmp.eq.s32.totalorder %s20, 1
      %p125 = scmp.ne.s32.totalorder %s120, %s122
      %p126 = scmp.eq.s32.totalorder %s20, 0
      %p127 = por %p125, %p126
      %p128 = scmp.ne.s32.totalorder %s120, %s122
      %p129 = scmp.eq.s32.totalorder %s25, 1
      %p130 = por %p128, %p129
      %p131 = scmp.ne.s32.totalorder %s122, %s123
      %p132 = scmp.eq.s32.totalorder %s25, 0
      %p133 = por %p131, %p132
      %p134 = scmp.ne.s32.totalorder %s122, %s123
      %p135 = scmp.eq.s32.totalorder %s26, 1
      %p136 = por %p134, %p135
      %p138 = scmp.ne.s32.totalorder %s123, %s137
      %p139 = scmp.eq.s32.totalorder %s26, 0
      %p140 = por %p138, %p139
      %s142 = sadd.s32 %s141, 1
      %p145 = scmp.eq.s32.totalorder %s20, 1
      %p146 = scmp.ne.s32.totalorder %s141, %s143
      %p147 = scmp.eq.s32.totalorder %s20, 0
      %p148 = por %p146, %p147
      %p149 = scmp.ne.s32.totalorder %s141, %s143
      %p150 = scmp.eq.s32.totalorder %s25, 1
      %p151 = por %p149, %p150
      %p152 = scmp.ne.s32.totalorder %s143, %s144
      %p153 = scmp.eq.s32.totalorder %s25, 0
      %p154 = por %p152, %p153
      %p155 = scmp.ne.s32.totalorder %s143, %s144
      %p156 = scmp.eq.s32.totalorder %s26, 1
      %p157 = por %p155, %p156
      %p159 = scmp.ne.s32.totalorder %s144, %s158
      %p160 = scmp.eq.s32.totalorder %s26, 0
      %p161 = por %p159, %p160
      %s162 = ssub.s32 %s27, %s39
      %s163 = ssub.s32 %s28, %s35
      %s164 = sor.u32 %s162, %s163
      %p165 = scmp.eq.s32.totalorder %s164, 0
      %s167 = sadd.s32 %s166, 1
      %s168 = scalar_select %p165, %s166, %s167
      %p171 = pneg %p165
      %p172 = scmp.eq.s32.totalorder %s20, 1
      %p173 = por %p171, %p172
      %p174 = scmp.ne.s32.totalorder %s166, %s169
      %p175 = scmp.eq.s32.totalorder %s20, 0
      %p176 = por %p174, %p175
      %p177 = scmp.ne.s32.totalorder %s166, %s169
      %p178 = scmp.eq.s32.totalorder %s25, 1
      %p179 = por %p177, %p178
      %p180 = scmp.ne.s32.totalorder %s169, %s170
      %p181 = scmp.eq.s32.totalorder %s25, 0
      %p182 = por %p180, %p181
      %p183 = scmp.ne.s32.totalorder %s169, %s170
      %p184 = scmp.eq.s32.totalorder %s26, 1
      %p185 = por %p183, %p184
      %p187 = scmp.ne.s32.totalorder %s170, %s186
      %p188 = scmp.eq.s32.totalorder %s26, 0
      %p189 = por %p187, %p188
      %s191 = sadd.s32 %s190, 1
      %p194 = scmp.eq.s32.totalorder %s20, 1
      %p195 = scmp.ne.s32.totalorder %s190, %s192
      %p196 = scmp.eq.s32.totalorder %s20, 0
      %p197 = por %p195, %p196
      %p198 = scmp.ne.s32.totalorder %s190, %s192
      %p199 = scmp.eq.s32.totalorder %s25, 1
      %p200 = por %p198, %p199
      %p201 = scmp.ne.s32.totalorder %s192, %s193
      %p202 = scmp.eq.s32.totalorder %s25, 0
      %p203 = por %p201, %p202
      %p204 = scmp.ne.s32.totalorder %s192, %s193
      %p205 = scmp.eq.s32.totalorder %s26, 1
      %p206 = por %p204, %p205
      %p208 = scmp.ne.s32.totalorder %s193, %s207
      %p209 = scmp.eq.s32.totalorder %s26, 0
      %p210 = por %p208, %p209
      %s212 = sadd.s32 %s211, 1
      %p215 = scmp.eq.s32.totalorder %s20, 1
      %p216 = scmp.ne.s32.totalorder %s211, %s213
      %p217 = scmp.eq.s32.totalorder %s20, 0
      %p218 = por %p216, %p217
      %p219 = scmp.ne.s32.totalorder %s211, %s213
      %p220 = scmp.eq.s32.totalorder %s25, 1
      %p221 = por %p219, %p220
      %p222 = scmp.ne.s32.totalorder %s213, %s214
      %p223 = scmp.eq.s32.totalorder %s25, 0
      %p224 = por %p222, %p223
      %p225 = scmp.ne.s32.totalorder %s213, %s214
      %p226 = scmp.eq.s32.totalorder %s26, 1
      %p227 = por %p225, %p226
      %p229 = scmp.ne.s32.totalorder %s214, %s228
      %p230 = scmp.eq.s32.totalorder %s26, 0
      %p231 = por %p229, %p230
      %s232 = ssub.s32 %s27, %s39
      %s233 = ssub.s32 %s28, %s35
      %s234 = sor.u32 %s232, %s233
      %p235 = scmp.eq.s32.totalorder %s234, 0
      %s237 = sadd.s32 %s236, 1
      %s238 = scalar_select %p235, %s236, %s237
      %p241 = pneg %p235
      %p242 = scmp.eq.s32.totalorder %s20, 1
      %p243 = por %p241, %p242
      %p244 = scmp.ne.s32.totalorder %s236, %s239
      %p245 = scmp.eq.s32.totalorder %s20, 0
      %p246 = por %p244, %p245
      %p247 = scmp.ne.s32.totalorder %s236, %s239
      %p248 = scmp.eq.s32.totalorder %s25, 1
      %p249 = por %p247, %p248
      %p250 = scmp.ne.s32.totalorder %s239, %s240
      %p251 = scmp.eq.s32.totalorder %s25, 0
      %p252 = por %p250, %p251
      %p253 = scmp.ne.s32.totalorder %s239, %s240
      %p254 = scmp.eq.s32.totalorder %s26, 1
      %p255 = por %p253, %p254
      %p257 = scmp.ne.s32.totalorder %s240, %s256
      %p258 = scmp.eq.s32.totalorder %s26, 0
      %p259 = por %p257, %p258
      %s260 = ssub.s32 %s27, %s39
      %s261 = ssub.s32 %s28, %s35
      %s262 = sor.u32 %s260, %s261
      %p263 = scmp.eq.s32.totalorder %s262, 0
      %s265 = sadd.s32 %s264, 1
      %s266 = scalar_select %p263, %s264, %s265
      %p269 = pneg %p263
      %p270 = scmp.eq.s32.totalorder %s20, 1
      %p271 = por %p269, %p270
      %p272 = scmp.ne.s32.totalorder %s264, %s267
      %p273 = scmp.eq.s32.totalorder %s20, 0
      %p274 = por %p272, %p273
      %p275 = scmp.ne.s32.totalorder %s264, %s267
      %p276 = scmp.eq.s32.totalorder %s25, 1
      %p277 = por %p275, %p276
      %p278 = scmp.ne.s32.totalorder %s267, %s268
      %p279 = scmp.eq.s32.totalorder %s25, 0
      %p280 = por %p278, %p279
      %p281 = scmp.ne.s32.totalorder %s267, %s268
      %p282 = scmp.eq.s32.totalorder %s26, 1
      %p283 = por %p281, %p282
      %p285 = scmp.ne.s32.totalorder %s268, %s284
      %p286 = scmp.eq.s32.totalorder %s26, 0
      %p287 = por %p285, %p286
      %p288 = scmp.le.s32.totalorder 1, %s20
      %p289 = scmp.lt.s32.totalorder %s20, 3
      %p290 = pnand %p288, %p289
      %p291 = pneg %p290
      // Predicated region
      $region9: #{transformer_model.20} parent=5 // pred_check
        _
      $region10: #{transformer_model.20} parent=5 // pred_check_branch
        %293 = sbr.rel (%p290) target = $region12
      $region11: #{transformer_model.20} parent=5 // pred_region
        %s294 = ssub.s32 %s20, 1
        // Predicated region
        $region13: #{transformer_model.20} parent=11 // pred_check
          %p295 = pneg %p133
        $region14: #{transformer_model.20} parent=11 // pred_check_branch
          %297 = sbr.rel (%p295) target = $region16
        $region15: #{transformer_model.20} parent=11 // pred_region
          %299 = vsyncadd [#allocation7], 0
          %s300 = sshll.u32 %s3, 4
          %s301 = int_to_ptr.hbm [resolvable:$true] %s300
          %s302 = sshll.u32 [#allocation6], 4
          %s303 = int_to_ptr.vmem [resolvable:$true] %s302
          %308 = dma.hbm_to_vmem [thread:$0]  %s301, 1024, %s303, [#allocation7], 64, 64, 4
        $region16: #{transformer_model.20} parent=11 // pred_fallthru
          _
        // Predicated region
        $region17: #{transformer_model.20} parent=11 // pred_check
          %p309 = pneg %p154
        $region18: #{transformer_model.20} parent=11 // pred_check_branch
          %311 = sbr.rel (%p309) target = $region20
        $region19: #{transformer_model.20} parent=11 // pred_region
          _
        $region20: #{transformer_model.20} parent=11 // pred_fallthru
          _
        // Predicated region
        $region21: #{transformer_model.20} parent=11 // pred_check
          %p312 = pneg %p203
        $region22: #{transformer_model.20} parent=11 // pred_check_branch
          %314 = sbr.rel (%p312) target = $region24
        $region23: #{transformer_model.20} parent=11 // pred_region
          _
        $region24: #{transformer_model.20} parent=11 // pred_fallthru
          _
        // Predicated region
        $region25: #{transformer_model.20} parent=11 // pred_check
          %p315 = pneg %p224
        $region26: #{transformer_model.20} parent=11 // pred_check_branch
          %317 = sbr.rel (%p315) target = $region28
        $region27: #{transformer_model.20} parent=11 // pred_region
          _
        $region28: #{transformer_model.20} parent=11 // pred_fallthru
          _
      $region12: #{transformer_model.20} parent=5 // pred_fallthru
        _
      %p318 = scmp.lt.s32.totalorder %s20, 2
      // Predicated region
      $region29: #{transformer_model.20} parent=5 // pred_check
        %p319 = pneg %p318
      $region30: #{transformer_model.20} parent=5 // pred_check_branch
        %321 = sbr.rel (%p319) target = $region32
      $region31: #{transformer_model.20} parent=5 // pred_region
        // Predicated region
        $region33: #{transformer_model.20} parent=31 // pred_check
          %p322 = pneg %p54
        $region34: #{transformer_model.20} parent=31 // pred_check_branch
          %324 = sbr.rel (%p322) target = $region36
        $region35: #{transformer_model.20} parent=31 // pred_region
          %s325 = sand.u32 %s44, 1
          %s326 = sand.u32 %s44, 1
          %s327 = smul.addr %s326, 8
          %s328 = scalar_lea.vmem [#allocation3], %s327
          %s329 = smul.u32 2, %s28
          %s330 = smul.addr %s329, 3
          %s331 = smul.addr %s27, 6
          %s332 = sadd.s32 %s330, %s331
          %s333 = smul.addr %s332, 4
          %s334 = scalar_lea.vmem %s0, %s333
          // Predicated region
          $region37: #{transformer_model.20} parent=35 // pred_check
            _
          $region38: #{transformer_model.20} parent=35 // pred_check_branch
            %336 = sbr.rel (0) target = $region40
          $region39: #{transformer_model.20} parent=35 // pred_region
            // Predicated region
            $region41: #{transformer_model.20} parent=39 // pred_check
              _
            $region42: #{transformer_model.20} parent=39 // pred_check_branch
              %338 = sbr.rel target = $region44
            $region43: #{transformer_model.20} parent=39 // pred_region
              // Predicated region
              $region56: #{transformer_model.20} parent=43 // pred_check
                _
              $region57: #{transformer_model.20} parent=43 // pred_check_branch
                %356 = sbr.rel (0) target = $region59
              $region58: #{transformer_model.20} parent=43 // pred_region
                loop: start=0, step=1, limit=1
                $region60: #{transformer_model.20} parent=58 // loop_pre_header
                  _
                $region61: #{transformer_model.20} parent=58 // loop_header
                  %s358 = sphi 0, %s362
                  %p359 = scmp.ge.s32.totalorder %s358, 1
                  %s363 = sphi %s334, %s334
                  %s364 = sphi %s328, %s328
                $region62: #{transformer_model.20} parent=58 // loop_header_branch
                  %361 = sbr.rel (%p359) target = $region66
                $region63: #{transformer_model.20} parent=58 // loop_body
                  _
                $region64: #{transformer_model.20} parent=58 // loop_footer
                  %s362 = sadd.s32 1, %s358
                $region65: #{transformer_model.20} parent=58 // loop_footer_branch
                  %357 = sbr.rel target = $region61
                $region66: #{transformer_model.20} parent=58 // loop_exit
                  _
                %s366 = ssub.s32 16, 1
                loop: start=0, step=1, limit=1
                $region67: #{transformer_model.20} parent=58 // loop_pre_header
                  _
                $region68: #{transformer_model.20} parent=58 // loop_header
                  %s368 = sphi 0, %s372
                  %p369 = scmp.ge.s32.totalorder %s368, 1
                  %s373 = sphi %s334, %s334
                  %s374 = sphi %s328, %s328
                $region69: #{transformer_model.20} parent=58 // loop_header_branch
                  %371 = sbr.rel (%p369) target = $region73
                $region70: #{transformer_model.20} parent=58 // loop_body
                  %v375 = vld [vmem:[%s373] sm:%s366]
                  %376 = vst [vmem:[%s374] sm:%s366] %v375
                  %v377 = vld [vmem:[%s373 + $0xc] sm:%s366]
                  %378 = vst [vmem:[%s374 + $0x4] sm:%s366] %v377
                $region71: #{transformer_model.20} parent=58 // loop_footer
                  %s372 = sadd.s32 1, %s368
                $region72: #{transformer_model.20} parent=58 // loop_footer_branch
                  %367 = sbr.rel target = $region68
                $region73: #{transformer_model.20} parent=58 // loop_exit
                  _
              $region59: #{transformer_model.20} parent=43 // pred_fallthru
                _
            $region44: #{transformer_model.20} parent=39 // pred_fallthru
              _
            // Predicated region
            $region45: #{transformer_model.20} parent=39 // pred_check
              _
            $region46: #{transformer_model.20} parent=39 // pred_check_branch
              %340 = sbr.rel (0) target = $region48
            $region47: #{transformer_model.20} parent=39 // pred_region
              %s342 = ssub.s32 16, 1
              loop: start=0, step=1, limit=1
              $region49: #{transformer_model.20} parent=47 // loop_pre_header
                _
              $region50: #{transformer_model.20} parent=47 // loop_header
                %s344 = sphi 0, %s348
                %p345 = scmp.ge.s32.totalorder %s344, 1
                %s349 = sphi %s334, %s334
                %s350 = sphi %s328, %s328
              $region51: #{transformer_model.20} parent=47 // loop_header_branch
                %347 = sbr.rel (%p345) target = $region55
              $region52: #{transformer_model.20} parent=47 // loop_body
                %v351 = vld [vmem:[%s349] sm:%s342]
                %352 = vst [vmem:[%s350] sm:%s342] %v351
                %v353 = vld [vmem:[%s349 + $0xc] sm:%s342]
                %354 = vst [vmem:[%s350 + $0x4] sm:%s342] %v353
              $region53: #{transformer_model.20} parent=47 // loop_footer
                %s348 = sadd.s32 1, %s344
              $region54: #{transformer_model.20} parent=47 // loop_footer_branch
                %343 = sbr.rel target = $region50
              $region55: #{transformer_model.20} parent=47 // loop_exit
                _
            $region48: #{transformer_model.20} parent=39 // pred_fallthru
              _
          $region40: #{transformer_model.20} parent=35 // pred_fallthru
            _
          %379 = vnop
        $region36: #{transformer_model.20} parent=31 // pred_fallthru
          _
        // Predicated region
        $region74: #{transformer_model.20} parent=31 // pred_check
          %p380 = pneg %p80
        $region75: #{transformer_model.20} parent=31 // pred_check_branch
          %382 = sbr.rel (%p380) target = $region77
        $region76: #{transformer_model.20} parent=31 // pred_region
          %s383 = sand.u32 %s70, 1
          %s384 = sand.u32 %s70, 1
          %s385 = smul.addr %s384, 8
          %s386 = scalar_lea.vmem [#allocation4], %s385
          %s387 = smul.addr %s27, 6
          %s388 = sadd.s32 1, %s387
          %s389 = smul.addr %s388, 4
          %s390 = scalar_lea.vmem %s1, %s389
          // Predicated region
          $region78: #{transformer_model.20} parent=76 // pred_check
            _
          $region79: #{transformer_model.20} parent=76 // pred_check_branch
            %392 = sbr.rel (0) target = $region81
          $region80: #{transformer_model.20} parent=76 // pred_region
            // Predicated region
            $region82: #{transformer_model.20} parent=80 // pred_check
              _
            $region83: #{transformer_model.20} parent=80 // pred_check_branch
              %394 = sbr.rel target = $region85
            $region84: #{transformer_model.20} parent=80 // pred_region
              // Predicated region
              $region97: #{transformer_model.20} parent=84 // pred_check
                _
              $region98: #{transformer_model.20} parent=84 // pred_check_branch
                %412 = sbr.rel (0) target = $region100
              $region99: #{transformer_model.20} parent=84 // pred_region
                loop: start=0, step=1, limit=1
                $region101: #{transformer_model.20} parent=99 // loop_pre_header
                  _
                $region102: #{transformer_model.20} parent=99 // loop_header
                  %s414 = sphi 0, %s418
                  %p415 = scmp.ge.s32.totalorder %s414, 1
                  %s419 = sphi %s390, %s390
                  %s420 = sphi %s386, %s386
                $region103: #{transformer_model.20} parent=99 // loop_header_branch
                  %417 = sbr.rel (%p415) target = $region107
                $region104: #{transformer_model.20} parent=99 // loop_body
                  _
                $region105: #{transformer_model.20} parent=99 // loop_footer
                  %s418 = sadd.s32 1, %s414
                $region106: #{transformer_model.20} parent=99 // loop_footer_branch
                  %413 = sbr.rel target = $region102
                $region107: #{transformer_model.20} parent=99 // loop_exit
                  _
                %s422 = ssub.s32 16, 1
                loop: start=0, step=1, limit=1
                $region108: #{transformer_model.20} parent=99 // loop_pre_header
                  _
                $region109: #{transformer_model.20} parent=99 // loop_header
                  %s424 = sphi 0, %s428
                  %p425 = scmp.ge.s32.totalorder %s424, 1
                  %s429 = sphi %s390, %s390
                  %s430 = sphi %s386, %s386
                $region110: #{transformer_model.20} parent=99 // loop_header_branch
                  %427 = sbr.rel (%p425) target = $region114
                $region111: #{transformer_model.20} parent=99 // loop_body
                  %v431 = vld [vmem:[%s429] sm:%s422]
                  %432 = vst [vmem:[%s430] sm:%s422] %v431
                  %v433 = vld [vmem:[%s429 + $0xc] sm:%s422]
                  %434 = vst [vmem:[%s430 + $0x4] sm:%s422] %v433
                $region112: #{transformer_model.20} parent=99 // loop_footer
                  %s428 = sadd.s32 1, %s424
                $region113: #{transformer_model.20} parent=99 // loop_footer_branch
                  %423 = sbr.rel target = $region109
                $region114: #{transformer_model.20} parent=99 // loop_exit
                  _
              $region100: #{transformer_model.20} parent=84 // pred_fallthru
                _
            $region85: #{transformer_model.20} parent=80 // pred_fallthru
              _
            // Predicated region
            $region86: #{transformer_model.20} parent=80 // pred_check
              _
            $region87: #{transformer_model.20} parent=80 // pred_check_branch
              %396 = sbr.rel (0) target = $region89
            $region88: #{transformer_model.20} parent=80 // pred_region
              %s398 = ssub.s32 16, 1
              loop: start=0, step=1, limit=1
              $region90: #{transformer_model.20} parent=88 // loop_pre_header
                _
              $region91: #{transformer_model.20} parent=88 // loop_header
                %s400 = sphi 0, %s404
                %p401 = scmp.ge.s32.totalorder %s400, 1
                %s405 = sphi %s390, %s390
                %s406 = sphi %s386, %s386
              $region92: #{transformer_model.20} parent=88 // loop_header_branch
                %403 = sbr.rel (%p401) target = $region96
              $region93: #{transformer_model.20} parent=88 // loop_body
                %v407 = vld [vmem:[%s405] sm:%s398]
                %408 = vst [vmem:[%s406] sm:%s398] %v407
                %v409 = vld [vmem:[%s405 + $0xc] sm:%s398]
                %410 = vst [vmem:[%s406 + $0x4] sm:%s398] %v409
              $region94: #{transformer_model.20} parent=88 // loop_footer
                %s404 = sadd.s32 1, %s400
              $region95: #{transformer_model.20} parent=88 // loop_footer_branch
                %399 = sbr.rel target = $region91
              $region96: #{transformer_model.20} parent=88 // loop_exit
                _
            $region89: #{transformer_model.20} parent=80 // pred_fallthru
              _
          $region81: #{transformer_model.20} parent=76 // pred_fallthru
            _
          %435 = vnop
        $region77: #{transformer_model.20} parent=31 // pred_fallthru
          _
        // Predicated region
        $region115: #{transformer_model.20} parent=31 // pred_check
          %p436 = pneg %p106
        $region116: #{transformer_model.20} parent=31 // pred_check_branch
          %438 = sbr.rel (%p436) target = $region118
        $region117: #{transformer_model.20} parent=31 // pred_region
          %s439 = sand.u32 %s96, 1
          %s440 = sand.u32 %s96, 1
          %s441 = smul.addr %s440, 8
          %s442 = scalar_lea.vmem [#allocation5], %s441
          %s443 = smul.addr %s27, 6
          %s444 = sadd.s32 2, %s443
          %s445 = smul.addr %s444, 4
          %s446 = scalar_lea.vmem %s2, %s445
          // Predicated region
          $region119: #{transformer_model.20} parent=117 // pred_check
            _
          $region120: #{transformer_model.20} parent=117 // pred_check_branch
            %448 = sbr.rel (0) target = $region122
          $region121: #{transformer_model.20} parent=117 // pred_region
            // Predicated region
            $region123: #{transformer_model.20} parent=121 // pred_check
              _
            $region124: #{transformer_model.20} parent=121 // pred_check_branch
              %450 = sbr.rel target = $region126
            $region125: #{transformer_model.20} parent=121 // pred_region
              // Predicated region
              $region138: #{transformer_model.20} parent=125 // pred_check
                _
              $region139: #{transformer_model.20} parent=125 // pred_check_branch
                %468 = sbr.rel (0) target = $region141
              $region140: #{transformer_model.20} parent=125 // pred_region
                loop: start=0, step=1, limit=1
                $region142: #{transformer_model.20} parent=140 // loop_pre_header
                  _
                $region143: #{transformer_model.20} parent=140 // loop_header
                  %s470 = sphi 0, %s474
                  %p471 = scmp.ge.s32.totalorder %s470, 1
                  %s475 = sphi %s446, %s446
                  %s476 = sphi %s442, %s442
                $region144: #{transformer_model.20} parent=140 // loop_header_branch
                  %473 = sbr.rel (%p471) target = $region148
                $region145: #{transformer_model.20} parent=140 // loop_body
                  _
                $region146: #{transformer_model.20} parent=140 // loop_footer
                  %s474 = sadd.s32 1, %s470
                $region147: #{transformer_model.20} parent=140 // loop_footer_branch
                  %469 = sbr.rel target = $region143
                $region148: #{transformer_model.20} parent=140 // loop_exit
                  _
                %s478 = ssub.s32 16, 1
                loop: start=0, step=1, limit=1
                $region149: #{transformer_model.20} parent=140 // loop_pre_header
                  _
                $region150: #{transformer_model.20} parent=140 // loop_header
                  %s480 = sphi 0, %s484
                  %p481 = scmp.ge.s32.totalorder %s480, 1
                  %s485 = sphi %s446, %s446
                  %s486 = sphi %s442, %s442
                $region151: #{transformer_model.20} parent=140 // loop_header_branch
                  %483 = sbr.rel (%p481) target = $region155
                $region152: #{transformer_model.20} parent=140 // loop_body
                  %v487 = vld [vmem:[%s485] sm:%s478]
                  %488 = vst [vmem:[%s486] sm:%s478] %v487
                  %v489 = vld [vmem:[%s485 + $0xc] sm:%s478]
                  %490 = vst [vmem:[%s486 + $0x4] sm:%s478] %v489
                $region153: #{transformer_model.20} parent=140 // loop_footer
                  %s484 = sadd.s32 1, %s480
                $region154: #{transformer_model.20} parent=140 // loop_footer_branch
                  %479 = sbr.rel target = $region150
                $region155: #{transformer_model.20} parent=140 // loop_exit
                  _
              $region141: #{transformer_model.20} parent=125 // pred_fallthru
                _
            $region126: #{transformer_model.20} parent=121 // pred_fallthru
              _
            // Predicated region
            $region127: #{transformer_model.20} parent=121 // pred_check
              _
            $region128: #{transformer_model.20} parent=121 // pred_check_branch
              %452 = sbr.rel (0) target = $region130
            $region129: #{transformer_model.20} parent=121 // pred_region
              %s454 = ssub.s32 16, 1
              loop: start=0, step=1, limit=1
              $region131: #{transformer_model.20} parent=129 // loop_pre_header
                _
              $region132: #{transformer_model.20} parent=129 // loop_header
                %s456 = sphi 0, %s460
                %p457 = scmp.ge.s32.totalorder %s456, 1
                %s461 = sphi %s446, %s446
                %s462 = sphi %s442, %s442
              $region133: #{transformer_model.20} parent=129 // loop_header_branch
                %459 = sbr.rel (%p457) target = $region137
              $region134: #{transformer_model.20} parent=129 // loop_body
                %v463 = vld [vmem:[%s461] sm:%s454]
                %464 = vst [vmem:[%s462] sm:%s454] %v463
                %v465 = vld [vmem:[%s461 + $0xc] sm:%s454]
                %466 = vst [vmem:[%s462 + $0x4] sm:%s454] %v465
              $region135: #{transformer_model.20} parent=129 // loop_footer
                %s460 = sadd.s32 1, %s456
              $region136: #{transformer_model.20} parent=129 // loop_footer_branch
                %455 = sbr.rel target = $region132
              $region137: #{transformer_model.20} parent=129 // loop_exit
                _
            $region130: #{transformer_model.20} parent=121 // pred_fallthru
              _
          $region122: #{transformer_model.20} parent=117 // pred_fallthru
            _
          %491 = vnop
        $region118: #{transformer_model.20} parent=31 // pred_fallthru
          _
        // Predicated region
        $region156: #{transformer_model.20} parent=31 // pred_check
          %p492 = pneg %p176
        $region157: #{transformer_model.20} parent=31 // pred_check_branch
          %494 = sbr.rel (%p492) target = $region159
        $region158: #{transformer_model.20} parent=31 // pred_region
          %s495 = smul.u32 2, %s28
          %p496 = scmp.lt.s32.totalorder %s27, 1
          %s497 = scalar_select %p496, %s27, 1
          %p498 = scmp.lt.s32.totalorder %s495, 1
          %s499 = scalar_select %p498, %s495, 1
          %s500 = smul.addr %s497, 2
          %s501 = sadd.s32 %s499, %s500
          %s502 = smul.addr %s501, 4
          %s503 = scalar_lea.vmem %s5, %s502
          %s504 = smul.u32 2, %s28
        $region159: #{transformer_model.20} parent=31 // pred_fallthru
          _
      $region32: #{transformer_model.20} parent=5 // pred_fallthru
        _
      %p505 = scmp.le.s32.totalorder 1, %s20
      %p506 = scmp.lt.s32.totalorder %s20, 3
      %p507 = pnand %p505, %p506
      %p508 = pneg %p507
      // Predicated region
      $region160: #{transformer_model.20} parent=5 // pred_check
        _
      $region161: #{transformer_model.20} parent=5 // pred_check_branch
        %510 = sbr.rel (%p507) target = $region163
      $region162: #{transformer_model.20} parent=5 // pred_region
        %s511 = ssub.s32 %s20, 1
        %s512 = sand.u32 %s47, 1
        %s513 = sand.u32 %s47, 1
        %s514 = smul.addr %s513, 8
        %s515 = scalar_lea.vmem [#allocation3], %s514
        // Predicated region
        $region164: #{transformer_model.20} parent=162 // pred_check
          %p516 = pneg %p60
        $region165: #{transformer_model.20} parent=162 // pred_check_branch
          %518 = sbr.rel (%p516) target = $region167
        $region166: #{transformer_model.20} parent=162 // pred_region
          _
        $region167: #{transformer_model.20} parent=162 // pred_fallthru
          _
        %s519 = sand.u32 %s73, 1
        %s520 = sand.u32 %s73, 1
        %s521 = smul.addr %s520, 8
        %s522 = scalar_lea.vmem [#allocation4], %s521
        // Predicated region
        $region168: #{transformer_model.20} parent=162 // pred_check
          %p523 = pneg %p86
        $region169: #{transformer_model.20} parent=162 // pred_check_branch
          %525 = sbr.rel (%p523) target = $region171
        $region170: #{transformer_model.20} parent=162 // pred_region
          _
        $region171: #{transformer_model.20} parent=162 // pred_fallthru
          _
        %s526 = sand.u32 %s99, 1
        %s527 = sand.u32 %s99, 1
        %s528 = smul.addr %s527, 8
        %s529 = scalar_lea.vmem [#allocation5], %s528
        // Predicated region
        $region172: #{transformer_model.20} parent=162 // pred_check
          %p530 = pneg %p112
        $region173: #{transformer_model.20} parent=162 // pred_check_branch
          %532 = sbr.rel (%p530) target = $region175
        $region174: #{transformer_model.20} parent=162 // pred_region
          _
        $region175: #{transformer_model.20} parent=162 // pred_fallthru
          _
        // Predicated region
        $region176: #{transformer_model.20} parent=162 // pred_check
          %p533 = pneg %p133
        $region177: #{transformer_model.20} parent=162 // pred_check_branch
          %535 = sbr.rel (%p533) target = $region179
        $region178: #{transformer_model.20} parent=162 // pred_region
          %537 = dma.done [#allocation7], 1024
        $region179: #{transformer_model.20} parent=162 // pred_fallthru
          _
        %s538 = sand.u32 %s47, 1
        %s539 = sand.u32 %s47, 1
        %s540 = smul.addr %s539, 8
        %s541 = scalar_lea.vmem [#allocation3], %s540
        %p542 = pneg %p60
        %p543 = pneg %p57
        %s544 = sand.u32 %s73, 1
        %s545 = sand.u32 %s73, 1
        %s546 = smul.addr %s545, 8
        %s547 = scalar_lea.vmem [#allocation4], %s546
        %p548 = pneg %p86
        %p549 = pneg %p83
        %s550 = sand.u32 %s99, 1
        %s551 = sand.u32 %s99, 1
        %s552 = smul.addr %s551, 8
        %s553 = scalar_lea.vmem [#allocation5], %s552
        %p554 = pneg %p112
        %p555 = pneg %p109
        %p556 = pneg %p133
        %p557 = pneg %p130
        %p558 = pneg %p154
        %p559 = pneg %p151
        %s560 = smul.u32 2, %s30
        %p561 = scmp.lt.s32.totalorder %s29, 1
        %s562 = scalar_select %p561, %s29, 1
        %p563 = scmp.lt.s32.totalorder %s560, 1
        %s564 = scalar_select %p563, %s560, 1
        %s565 = smul.addr %s562, 2
        %s566 = sadd.s32 %s564, %s565
        %s567 = smul.addr %s566, 4
        %s568 = scalar_lea.vmem %s5, %s567
        %p569 = pneg %p182
        %p570 = pneg %p179
        %p571 = pneg %p203
        %p572 = pneg %p200
        %p573 = pneg %p224
        %p574 = pneg %p221
        %p575 = pneg %p252
        %p576 = pneg %p249
        %s577 = smul.u32 2, %s30
        %p578 = scmp.lt.s32.totalorder %s29, 1
        %s579 = scalar_select %p578, %s29, 1
        %p580 = scmp.lt.s32.totalorder %s577, 1
        %s581 = scalar_select %p580, %s577, 1
        %s582 = smul.addr %s579, 2
        %s583 = sadd.s32 %s581, %s582
        %s584 = smul.addr %s583, 4
        %s585 = scalar_lea.vmem %s8, %s584
        %p586 = pneg %p280
        %p587 = pneg %p277
        %s588 = sand.u32 %s267, 1
        %s589 = scalar_lea.sflag [#allocation8], %s588
        %s590 = sand.u32 %s267, 1
        %s591 = smul.addr %s590, 16
        %s592 = scalar_lea.vmem [#allocation9], %s591
        %s593 = smul.u32 2, %s30
        %s594 = smul.u32 2, %s30
        %p595 = scmp.lt.s32.totalorder %s29, 1
        %s596 = scalar_select %p595, %s29, 1
        %p597 = scmp.lt.s32.totalorder %s594, 1
        %s598 = scalar_select %p597, %s594, 1
        %s599 = smul.addr %s596, 2
        %s600 = sadd.s32 %s598, %s599
        %s601 = smul.addr %s600, 4
        %s602 = scalar_lea.vmem %s5, %s601
        %s603 = smul.u32 2, %s30
        %s604 = smul.u32 2, %s30
        %p605 = scmp.lt.s32.totalorder %s29, 1
        %s606 = scalar_select %p605, %s29, 1
        %p607 = scmp.lt.s32.totalorder %s604, 1
        %s608 = scalar_select %p607, %s604, 1
        %s609 = smul.addr %s606, 2
        %s610 = sadd.s32 %s608, %s609
        %s611 = smul.addr %s610, 4
        %s612 = scalar_lea.vmem %s8, %s611
        %s613 = smul.u32 2, %s30
        %s614 = smul.u32 2, %s30
        %v616 = vld [vmem:[%s515] sm:$0xf]
        %v617 = vld [vmem:[%s515 + $0x4] sm:$0xf]
        %v618 = vunpack.c.l.bf16 %v616
        %v619 = vunpack.c.l.bf16 %v617
        %v620 = vmul.f32 %v618, 0.17675781
        %v621 = vmul.f32 %v619, 0.17675781
        %v622 = vpack.c.bf16 %v620, %v620
        %v623 = vpack.c.bf16 %v621, %v621
        %v624 = vld [vmem:[%s522] sm:$0xf]
        %v625 = vld [vmem:[%s522 + $0x4] sm:$0xf]
        %v626 = vld [vmem:[%s529] sm:$0xf]
        %v627 = vld [vmem:[%s529 + $0x4] sm:$0xf]
        %v630 = vunpack.c.l.b16 %v622
        %v631 = vunpack.c.l.b16 %v623
        %v632 = vpack.c.b16 %v631, %v630
        %v635 = vunpack.c.l.b16 %v624
        %v636 = vunpack.c.l.b16 %v625
        %v637 = vpack.c.b16 %v636, %v635
        %vm638 = vcmask 261120
        %v640 = vsel %vm638, %v632, 0
        %v643 = vsel %vm638, %v637, 0
        %645 = vmatpush.bf16.xpose.msra.mxu0 0
        %646 = vmatpush.bf16.xpose.msra.mxu0 0
        %647 = vmatpush.bf16.xpose.msra.mxu0 0
        %648 = vmatpush.bf16.xpose.msra.mxu0 0
        %649 = vmatpush.bf16.xpose.msra.mxu0 0
        %650 = vmatpush.bf16.xpose.msra.mxu0 0
        %651 = vmatpush.bf16.xpose.msra.mxu0 0
        %652 = vmatpush.bf16.xpose.msra.mxu0 %v643
        %653 = vmatmul.bf16.gmra.mxu0 %v640
        %v654 = vpop.f32.mrf.mxu0
        %v655 = vadd.f32 0.0, %v654
        %v656 = vpop.f32.mrf.mxu0
        %v657 = vadd.f32 0.0, %v656
        %658 = vdwg.mxu0
        %vm659 = vcmask 130048
        %v660 = vsel %vm659, %v655, -inf
        %661 = vmax.xlane.f32.xlu0 %v660
        %v662 = vpop.xlane.xlu0 %661
        %v663 = vsel %vm659, %v657, -inf
        %664 = vmax.xlane.f32.xlu0 %v663
        %v665 = vpop.xlane.xlu0 %664
        %v666 = vsub.f32 %v655, %v662
        %v667 = vsub.f32 %v657, %v665
        %v668 = vmul.f32 %v666, 1.442695
        %v669 = vpow.pop %v668
        %v670 = vmul.f32 %v667, 1.442695
        %v671 = vpow.pop %v670
        %v672 = vsel %vm659, %v669, 0.0
        %673 = vadd.xlane.f32.xlu0 %v672
        %v674 = vpop.xlane.xlu0 %673
        %v675 = vsel %vm659, %v671, 0.0
        %676 = vadd.xlane.f32.xlu0 %v675
        %v677 = vpop.xlane.xlu0 %676
        %v678 = vrcp.pop %v674
        %v679 = vmul.f32 %v674, %v678
        %v680 = vsub.f32 1.0, %v679
        %v681 = vmul.f32 %v678, %v680
        %v682 = vadd.f32 %v678, %v681
        %vm683 = vweird.f32 %v674
        %vm684 = vweird.f32 %v678
        %vm685 = vmor %vm683, %vm684
        %v686 = vsel %vm685, %v678, %v682
        %v687 = vand.u32 2147483647, %v674
        %vm688 = vcmp.eq.f32.partialorder %v687, 8.507059e+37
        %v689 = vand.u32 %v674, 2147483648
        %v690 = vor.u32 1.1754944e-38, %v689
        %v691 = vsel %vm688, %v690, %v686
        %v692 = vrcp.pop %v677
        %v693 = vmul.f32 %v677, %v692
        %v694 = vsub.f32 1.0, %v693
        %v695 = vmul.f32 %v692, %v694
        %v696 = vadd.f32 %v692, %v695
        %vm697 = vweird.f32 %v677
        %vm698 = vweird.f32 %v692
        %vm699 = vmor %vm697, %vm698
        %v700 = vsel %vm699, %v692, %v696
        %v701 = vand.u32 2147483647, %v677
        %vm702 = vcmp.eq.f32.partialorder %v701, 8.507059e+37
        %v703 = vand.u32 %v677, 2147483648
        %v704 = vor.u32 1.1754944e-38, %v703
        %v705 = vsel %vm702, %v704, %v700
        %v706 = vmul.f32 %v669, %v691
        %v707 = vmul.f32 %v671, %v705
        %v708 = vadd.f32 %v706, 0.0
        %v709 = vadd.f32 %v707, 0.0
        %v710 = vpack.c.bf16 %v707, %v706
        %v713 = vunpack.c.l.b16 %v626
        %v714 = vunpack.c.l.b16 %v627
        %v715 = vpack.c.b16 %v714, %v713
        %v718 = vsel %vm659, %v710, 0
        %720 = vmatpush.bf16.msra.mxu0 0
        %721 = vmatpush.bf16.msra.mxu0 0
        %722 = vmatpush.bf16.msra.mxu0 0
        %723 = vmatpush.bf16.msra.mxu0 0
        %724 = vmatpush.bf16.msra.mxu0 0
        %725 = vmatpush.bf16.msra.mxu0 0
        %726 = vmatpush.bf16.msra.mxu0 0
        %727 = vmatpush.bf16.msra.mxu0 %v715
        %728 = vmatmul.bf16.gmra.mxu0 %v718
        %v729 = vpop.f32.mrf.mxu0
        %v730 = vadd.f32 0.0, %v729
        %v731 = vpop.f32.mrf.mxu0
        %v732 = vadd.f32 0.0, %v731
        %733 = vdwg.mxu0
        %v734 = vpack.c.bf16 %v730, %v730
        %v735 = vpack.c.bf16 %v732, %v732
        %vm736 = vcmask 257024
        %737 = vst.msk [vmem:[#allocation2] sm:$0xf] %vm736, %v734
        %738 = vst.msk [vmem:[#allocation2 + $0x4] sm:$0xf] %vm736, %v735
        %v739 = vld [vmem:[%s522] sm:$0xf]
        %v740 = vld [vmem:[%s522 + $0x4] sm:$0xf]
        %v741 = vld [vmem:[%s529] sm:$0xf]
        %v742 = vld [vmem:[%s529 + $0x4] sm:$0xf]
        %743 = vrot.lane.b32.xlu0 %v632, 96
        %v744 = vpop.permute.xlu0 %743
        %v747 = vunpack.c.l.b16 %v739
        %v748 = vunpack.c.l.b16 %v740
        %v749 = vpack.c.b16 %v748, %v747
        %750 = vrot.lane.b32.xlu0 %v749, 96
        %v751 = vpop.permute.xlu0 %750
        %v753 = vsel %vm638, %v744, 0
        %v756 = vsel %vm638, %v751, 0
        %758 = vmatpush.bf16.xpose.msra.mxu0 0
        %759 = vmatpush.bf16.xpose.msra.mxu0 0
        %760 = vmatpush.bf16.xpose.msra.mxu0 0
        %761 = vmatpush.bf16.xpose.msra.mxu0 0
        %762 = vmatpush.bf16.xpose.msra.mxu0 0
        %763 = vmatpush.bf16.xpose.msra.mxu0 0
        %764 = vmatpush.bf16.xpose.msra.mxu0 0
        %765 = vmatpush.bf16.xpose.msra.mxu0 %v756
        %766 = vmatmul.bf16.gmra.mxu0 %v753
        %v767 = vpop.f32.mrf.mxu0
        %v768 = vadd.f32 0.0, %v767
        %v769 = vpop.f32.mrf.mxu0
        %v770 = vadd.f32 0.0, %v769
        %771 = vdwg.mxu0
        %v772 = vsel %vm659, %v768, -inf
        %773 = vmax.xlane.f32.xlu0 %v772
        %v774 = vpop.xlane.xlu0 %773
        %v775 = vsel %vm659, %v770, -inf
        %776 = vmax.xlane.f32.xlu0 %v775
        %v777 = vpop.xlane.xlu0 %776
        %v778 = vsub.f32 %v768, %v774
        %v779 = vsub.f32 %v770, %v777
        %v780 = vmul.f32 %v778, 1.442695
        %v781 = vpow.pop %v780
        %v782 = vmul.f32 %v779, 1.442695
        %v783 = vpow.pop %v782
        %v784 = vsel %vm659, %v781, 0.0
        %785 = vadd.xlane.f32.xlu0 %v784
        %v786 = vpop.xlane.xlu0 %785
        %v787 = vsel %vm659, %v783, 0.0
        %788 = vadd.xlane.f32.xlu0 %v787
        %v789 = vpop.xlane.xlu0 %788
        %v790 = vrcp.pop %v786
        %v791 = vmul.f32 %v786, %v790
        %v792 = vsub.f32 1.0, %v791
        %v793 = vmul.f32 %v790, %v792
        %v794 = vadd.f32 %v790, %v793
        %vm795 = vweird.f32 %v786
        %vm796 = vweird.f32 %v790
        %vm797 = vmor %vm795, %vm796
        %v798 = vsel %vm797, %v790, %v794
        %v799 = vand.u32 2147483647, %v786
        %vm800 = vcmp.eq.f32.partialorder %v799, 8.507059e+37
        %v801 = vand.u32 %v786, 2147483648
        %v802 = vor.u32 1.1754944e-38, %v801
        %v803 = vsel %vm800, %v802, %v798
        %v804 = vrcp.pop %v789
        %v805 = vmul.f32 %v789, %v804
        %v806 = vsub.f32 1.0, %v805
        %v807 = vmul.f32 %v804, %v806
        %v808 = vadd.f32 %v804, %v807
        %vm809 = vweird.f32 %v789
        %vm810 = vweird.f32 %v804
        %vm811 = vmor %vm809, %vm810
        %v812 = vsel %vm811, %v804, %v808
        %v813 = vand.u32 2147483647, %v789
        %vm814 = vcmp.eq.f32.partialorder %v813, 8.507059e+37
        %v815 = vand.u32 %v789, 2147483648
        %v816 = vor.u32 1.1754944e-38, %v815
        %v817 = vsel %vm814, %v816, %v812
        %v818 = vmul.f32 %v781, %v803
        %v819 = vmul.f32 %v783, %v817
        %v820 = vadd.f32 %v708, %v818
        %v821 = vadd.f32 %v709, %v819
        %v822 = vpack.c.bf16 %v819, %v818
        %v825 = vunpack.c.l.b16 %v741
        %v826 = vunpack.c.l.b16 %v742
        %v827 = vpack.c.b16 %v826, %v825
        %828 = vrot.lane.b32.xlu0 %v827, 96
        %v829 = vpop.permute.xlu0 %828
        %v832 = vsel %vm659, %v822, 0
        %834 = vmatpush.bf16.msra.mxu0 0
        %835 = vmatpush.bf16.msra.mxu0 0
        %836 = vmatpush.bf16.msra.mxu0 0
        %837 = vmatpush.bf16.msra.mxu0 0
        %838 = vmatpush.bf16.msra.mxu0 0
        %839 = vmatpush.bf16.msra.mxu0 0
        %840 = vmatpush.bf16.msra.mxu0 0
        %841 = vmatpush.bf16.msra.mxu0 %v829
        %842 = vmatmul.bf16.gmra.mxu0 %v832
        %v843 = vpop.f32.mrf.mxu0
        %v844 = vadd.f32 0.0, %v843
        %v845 = vpop.f32.mrf.mxu0
        %v846 = vadd.f32 0.0, %v845
        %847 = vdwg.mxu0
        %v848 = vpack.c.bf16 %v844, %v844
        %v849 = vpack.c.bf16 %v846, %v846
        %852 = vrot.lane.b32.xlu0 %v848, 32
        %v853 = vpop.permute.xlu0 %852
        %854 = vrot.lane.b32.xlu0 %v849, 32
        %v855 = vpop.permute.xlu0 %854
        %vm858 = vcmask 519424
        %859 = vst.msk [vmem:[#allocation2] sm:$0xf] %vm858, %v853
        %860 = vst.msk [vmem:[#allocation2 + $0x4] sm:$0xf] %vm858, %v855
        %v861 = vld [vmem:[%s522] sm:$0xf]
        %v862 = vld [vmem:[%s522 + $0x4] sm:$0xf]
        %v863 = vld [vmem:[%s529] sm:$0xf]
        %v864 = vld [vmem:[%s529 + $0x4] sm:$0xf]
        %865 = vrot.lane.b32.xlu0 %v632, 64
        %v866 = vpop.permute.xlu0 %865
        %v869 = vunpack.c.l.b16 %v861
        %v870 = vunpack.c.l.b16 %v862
        %v871 = vpack.c.b16 %v870, %v869
        %872 = vrot.lane.b32.xlu0 %v871, 64
        %v873 = vpop.permute.xlu0 %872
        %v875 = vsel %vm638, %v866, 0
        %v878 = vsel %vm638, %v873, 0
        %880 = vmatpush.bf16.xpose.msra.mxu0 0
        %881 = vmatpush.bf16.xpose.msra.mxu0 0
        %882 = vmatpush.bf16.xpose.msra.mxu0 0
        %883 = vmatpush.bf16.xpose.msra.mxu0 0
        %884 = vmatpush.bf16.xpose.msra.mxu0 0
        %885 = vmatpush.bf16.xpose.msra.mxu0 0
        %886 = vmatpush.bf16.xpose.msra.mxu0 0
        %887 = vmatpush.bf16.xpose.msra.mxu0 %v878
        %888 = vmatmul.bf16.gmra.mxu0 %v875
        %v889 = vpop.f32.mrf.mxu0
        %v890 = vadd.f32 0.0, %v889
        %v891 = vpop.f32.mrf.mxu0
        %v892 = vadd.f32 0.0, %v891
        %893 = vdwg.mxu0
        %v894 = vsel %vm659, %v890, -inf
        %895 = vmax.xlane.f32.xlu0 %v894
        %v896 = vpop.xlane.xlu0 %895
        %v897 = vsel %vm659, %v892, -inf
        %898 = vmax.xlane.f32.xlu0 %v897
        %v899 = vpop.xlane.xlu0 %898
        %v900 = vsub.f32 %v890, %v896
        %v901 = vsub.f32 %v892, %v899
        %v902 = vmul.f32 %v900, 1.442695
        %v903 = vpow.pop %v902
        %v904 = vmul.f32 %v901, 1.442695
        %v905 = vpow.pop %v904
        %v906 = vsel %vm659, %v903, 0.0
        %907 = vadd.xlane.f32.xlu0 %v906
        %v908 = vpop.xlane.xlu0 %907
        %v909 = vsel %vm659, %v905, 0.0
        %910 = vadd.xlane.f32.xlu0 %v909
        %v911 = vpop.xlane.xlu0 %910
        %v912 = vrcp.pop %v908
        %v913 = vmul.f32 %v908, %v912
        %v914 = vsub.f32 1.0, %v913
        %v915 = vmul.f32 %v912, %v914
        %v916 = vadd.f32 %v912, %v915
        %vm917 = vweird.f32 %v908
        %vm918 = vweird.f32 %v912
        %vm919 = vmor %vm917, %vm918
        %v920 = vsel %vm919, %v912, %v916
        %v921 = vand.u32 2147483647, %v908
        %vm922 = vcmp.eq.f32.partialorder %v921, 8.507059e+37
        %v923 = vand.u32 %v908, 2147483648
        %v924 = vor.u32 1.1754944e-38, %v923
        %v925 = vsel %vm922, %v924, %v920
        %v926 = vrcp.pop %v911
        %v927 = vmul.f32 %v911, %v926
        %v928 = vsub.f32 1.0, %v927
        %v929 = vmul.f32 %v926, %v928
        %v930 = vadd.f32 %v926, %v929
        %vm931 = vweird.f32 %v911
        %vm932 = vweird.f32 %v926
        %vm933 = vmor %vm931, %vm932
        %v934 = vsel %vm933, %v926, %v930
        %v935 = vand.u32 2147483647, %v911
        %vm936 = vcmp.eq.f32.partialorder %v935, 8.507059e+37
        %v937 = vand.u32 %v911, 2147483648
        %v938 = vor.u32 1.1754944e-38, %v937
        %v939 = vsel %vm936, %v938, %v934
        %v940 = vmul.f32 %v903, %v925
        %v941 = vmul.f32 %v905, %v939
        %v942 = vadd.f32 %v820, %v940
        %v943 = vadd.f32 %v821, %v941
        %v944 = vpack.c.bf16 %v941, %v940
        %v947 = vunpack.c.l.b16 %v863
        %v948 = vunpack.c.l.b16 %v864
        %v949 = vpack.c.b16 %v948, %v947
        %950 = vrot.lane.b32.xlu0 %v949, 64
        %v951 = vpop.permute.xlu0 %950
        %v954 = vsel %vm659, %v944, 0
        %956 = vmatpush.bf16.msra.mxu0 0
        %957 = vmatpush.bf16.msra.mxu0 0
        %958 = vmatpush.bf16.msra.mxu0 0
        %959 = vmatpush.bf16.msra.mxu0 0
        %960 = vmatpush.bf16.msra.mxu0 0
        %961 = vmatpush.bf16.msra.mxu0 0
        %962 = vmatpush.bf16.msra.mxu0 0
        %963 = vmatpush.bf16.msra.mxu0 %v951
        %964 = vmatmul.bf16.gmra.mxu0 %v954
        %v965 = vpop.f32.mrf.mxu0
        %v966 = vadd.f32 0.0, %v965
        %v967 = vpop.f32.mrf.mxu0
        %v968 = vadd.f32 0.0, %v967
        %969 = vdwg.mxu0
        %v970 = vpack.c.bf16 %v966, %v966
        %v971 = vpack.c.bf16 %v968, %v968
        %974 = vrot.lane.b32.xlu0 %v970, 64
        %v975 = vpop.permute.xlu0 %974
        %976 = vrot.lane.b32.xlu0 %v971, 64
        %v977 = vpop.permute.xlu0 %976
        %vm980 = vcmask 781824
        %981 = vst.msk [vmem:[#allocation2] sm:$0xf] %vm980, %v975
        %982 = vst.msk [vmem:[#allocation2 + $0x4] sm:$0xf] %vm980, %v977
        %v983 = vld [vmem:[%s522] sm:$0xf]
        %v984 = vld [vmem:[%s522 + $0x4] sm:$0xf]
        %v985 = vld [vmem:[%s529] sm:$0xf]
        %v986 = vld [vmem:[%s529 + $0x4] sm:$0xf]
        %987 = vrot.lane.b32.xlu0 %v632, 32
        %v988 = vpop.permute.xlu0 %987
        %v991 = vunpack.c.l.b16 %v983
        %v992 = vunpack.c.l.b16 %v984
        %v993 = vpack.c.b16 %v992, %v991
        %994 = vrot.lane.b32.xlu0 %v993, 32
        %v995 = vpop.permute.xlu0 %994
        %v997 = vsel %vm638, %v988, 0
        %v1000 = vsel %vm638, %v995, 0
        %1002 = vmatpush.bf16.xpose.msra.mxu0 0
        %1003 = vmatpush.bf16.xpose.msra.mxu0 0
        %1004 = vmatpush.bf16.xpose.msra.mxu0 0
        %1005 = vmatpush.bf16.xpose.msra.mxu0 0
        %1006 = vmatpush.bf16.xpose.msra.mxu0 0
        %1007 = vmatpush.bf16.xpose.msra.mxu0 0
        %1008 = vmatpush.bf16.xpose.msra.mxu0 0
        %1009 = vmatpush.bf16.xpose.msra.mxu0 %v1000
        %1010 = vmatmul.bf16.gmra.mxu0 %v997
        %v1011 = vpop.f32.mrf.mxu0
        %v1012 = vadd.f32 0.0, %v1011
        %v1013 = vpop.f32.mrf.mxu0
        %v1014 = vadd.f32 0.0, %v1013
        %1015 = vdwg.mxu0
        %v1016 = vsel %vm659, %v1012, -inf
        %1017 = vmax.xlane.f32.xlu0 %v1016
        %v1018 = vpop.xlane.xlu0 %1017
        %v1019 = vsel %vm659, %v1014, -inf
        %1020 = vmax.xlane.f32.xlu0 %v1019
        %v1021 = vpop.xlane.xlu0 %1020
        %v1022 = vsub.f32 %v1012, %v1018
        %v1023 = vsub.f32 %v1014, %v1021
        %v1024 = vmul.f32 %v1022, 1.442695
        %v1025 = vpow.pop %v1024
        %v1026 = vmul.f32 %v1023, 1.442695
        %v1027 = vpow.pop %v1026
        %v1028 = vsel %vm659, %v1025, 0.0
        %1029 = vadd.xlane.f32.xlu0 %v1028
        %v1030 = vpop.xlane.xlu0 %1029
        %v1031 = vsel %vm659, %v1027, 0.0
        %1032 = vadd.xlane.f32.xlu0 %v1031
        %v1033 = vpop.xlane.xlu0 %1032
        %v1034 = vrcp.pop %v1030
        %v1035 = vmul.f32 %v1030, %v1034
        %v1036 = vsub.f32 1.0, %v1035
        %v1037 = vmul.f32 %v1034, %v1036
        %v1038 = vadd.f32 %v1034, %v1037
        %vm1039 = vweird.f32 %v1030
        %vm1040 = vweird.f32 %v1034
        %vm1041 = vmor %vm1039, %vm1040
        %v1042 = vsel %vm1041, %v1034, %v1038
        %v1043 = vand.u32 2147483647, %v1030
        %vm1044 = vcmp.eq.f32.partialorder %v1043, 8.507059e+37
        %v1045 = vand.u32 %v1030, 2147483648
        %v1046 = vor.u32 1.1754944e-38, %v1045
        %v1047 = vsel %vm1044, %v1046, %v1042
        %v1048 = vrcp.pop %v1033
        %v1049 = vmul.f32 %v1033, %v1048
        %v1050 = vsub.f32 1.0, %v1049
        %v1051 = vmul.f32 %v1048, %v1050
        %v1052 = vadd.f32 %v1048, %v1051
        %vm1053 = vweird.f32 %v1033
        %vm1054 = vweird.f32 %v1048
        %vm1055 = vmor %vm1053, %vm1054
        %v1056 = vsel %vm1055, %v1048, %v1052
        %v1057 = vand.u32 2147483647, %v1033
        %vm1058 = vcmp.eq.f32.partialorder %v1057, 8.507059e+37
        %v1059 = vand.u32 %v1033, 2147483648
        %v1060 = vor.u32 1.1754944e-38, %v1059
        %v1061 = vsel %vm1058, %v1060, %v1056
        %v1062 = vmul.f32 %v1025, %v1047
        %v1063 = vmul.f32 %v1027, %v1061
        %v1064 = vadd.f32 %v942, %v1062
        %v1065 = vadd.f32 %v943, %v1063
        %v1066 = vpack.c.bf16 %v1063, %v1062
        %v1069 = vunpack.c.l.b16 %v985
        %v1070 = vunpack.c.l.b16 %v986
        %v1071 = vpack.c.b16 %v1070, %v1069
        %1072 = vrot.lane.b32.xlu0 %v1071, 32
        %v1073 = vpop.permute.xlu0 %1072
        %v1076 = vsel %vm659, %v1066, 0
        %1078 = vmatpush.bf16.msra.mxu0 0
        %1079 = vmatpush.bf16.msra.mxu0 0
        %1080 = vmatpush.bf16.msra.mxu0 0
        %1081 = vmatpush.bf16.msra.mxu0 0
        %1082 = vmatpush.bf16.msra.mxu0 0
        %1083 = vmatpush.bf16.msra.mxu0 0
        %1084 = vmatpush.bf16.msra.mxu0 0
        %1085 = vmatpush.bf16.msra.mxu0 %v1073
        %1086 = vmatmul.bf16.gmra.mxu0 %v1076
        %v1087 = vpop.f32.mrf.mxu0
        %v1088 = vadd.f32 0.0, %v1087
        %v1089 = vpop.f32.mrf.mxu0
        %v1090 = vadd.f32 0.0, %v1089
        %1091 = vdwg.mxu0
        %v1092 = vpack.c.bf16 %v1088, %v1088
        %v1093 = vpack.c.bf16 %v1090, %v1090
        %1096 = vrot.lane.b32.xlu0 %v1092, 96
        %v1097 = vpop.permute.xlu0 %1096
        %1098 = vrot.lane.b32.xlu0 %v1093, 96
        %v1099 = vpop.permute.xlu0 %1098
        %vm1102 = vcmask 1044224
        %1103 = vst.msk [vmem:[#allocation2] sm:$0xf] %vm1102, %v1097
        %1104 = vst.msk [vmem:[#allocation2 + $0x4] sm:$0xf] %vm1102, %v1099
        %v1105 = vmul.f32 %v1064, 0.25
        %v1106 = vmul.f32 %v1065, 0.25
        %1107 = vst.msk [vmem:[%s592] sm:$0xff] %vm659, %v1105
        %1108 = vst.msk [vmem:[%s592 + $0x8] sm:$0xff] %vm659, %v1106
        %v1109 = vld [vmem:[#allocation2] sm:$0xf]
        %v1110 = vld [vmem:[#allocation2 + $0x4] sm:$0xf]
        %v1111 = vld [vmem:[#allocation6] sm:$0xf]
        %v1112 = vld [vmem:[#allocation6 + $0x4] sm:$0xf]
        %v1113 = vld [vmem:[#allocation6 + $0x8] sm:$0xf]
        %v1114 = vld [vmem:[#allocation6 + $0xc] sm:$0xf]
        %v1115 = vld [vmem:[#allocation6 + $0x10] sm:$0xf]
        %v1116 = vld [vmem:[#allocation6 + $0x14] sm:$0xf]
        %v1117 = vld [vmem:[#allocation6 + $0x18] sm:$0xf]
        %v1118 = vld [vmem:[#allocation6 + $0x1c] sm:$0xf]
        %v1119 = vld [vmem:[#allocation6 + $0x20] sm:$0xf]
        %v1120 = vld [vmem:[#allocation6 + $0x24] sm:$0xf]
        %v1121 = vld [vmem:[#allocation6 + $0x28] sm:$0xf]
        %v1122 = vld [vmem:[#allocation6 + $0x2c] sm:$0xf]
        %v1123 = vld [vmem:[#allocation6 + $0x30] sm:$0xf]
        %v1124 = vld [vmem:[#allocation6 + $0x34] sm:$0xf]
        %v1125 = vld [vmem:[#allocation6 + $0x38] sm:$0xf]
        %v1126 = vld [vmem:[#allocation6 + $0x3c] sm:$0xf]
        %v1127 = vld [vmem:[%s4] sm:$0x1]
        %v1129 = vperm.slane %v1127, 0
        %v1133 = vunpack.c.l.b16 %v1109
        %v1134 = vunpack.c.l.b16 %v1110
        %v1135 = vpack.c.b16 %v1134, %v1133
        %v1153 = vunpack.c.l.b16 %v1111
        %v1154 = vunpack.c.l.b16 %v1112
        %v1155 = vunpack.c.l.b16 %v1113
        %v1156 = vunpack.c.l.b16 %v1114
        %v1157 = vunpack.c.l.b16 %v1115
        %v1158 = vunpack.c.l.b16 %v1116
        %v1159 = vunpack.c.l.b16 %v1117
        %v1160 = vunpack.c.l.b16 %v1118
        %v1161 = vunpack.c.l.b16 %v1119
        %v1162 = vunpack.c.l.b16 %v1120
        %v1163 = vunpack.c.l.b16 %v1121
        %v1164 = vunpack.c.l.b16 %v1122
        %v1165 = vunpack.c.l.b16 %v1123
        %v1166 = vunpack.c.l.b16 %v1124
        %v1167 = vunpack.c.l.b16 %v1125
        %v1168 = vunpack.c.l.b16 %v1126
        %v1169 = vpack.c.b16 %v1154, %v1153
        %v1170 = vpack.c.b16 %v1156, %v1155
        %v1171 = vpack.c.b16 %v1158, %v1157
        %v1172 = vpack.c.b16 %v1160, %v1159
        %v1173 = vpack.c.b16 %v1162, %v1161
        %v1174 = vpack.c.b16 %v1164, %v1163
        %v1175 = vpack.c.b16 %v1166, %v1165
        %v1176 = vpack.c.b16 %v1168, %v1167
        %1185 = vmatpush.bf16.msra.mxu0 %v1176
        %1186 = vmatpush.bf16.msra.mxu0 %v1175
        %1187 = vmatpush.bf16.msra.mxu0 %v1174
        %1188 = vmatpush.bf16.msra.mxu0 %v1173
        %1189 = vmatpush.bf16.msra.mxu0 %v1172
        %1190 = vmatpush.bf16.msra.mxu0 %v1171
        %1191 = vmatpush.bf16.msra.mxu0 %v1170
        %1192 = vmatpush.bf16.msra.mxu0 %v1169
        %1193 = vmatmul.bf16.gmra.mxu0 %v1135
        %v1194 = vpop.f32.mrf.mxu0
        %v1195 = vadd.f32 %v1129, %v1194
        %v1196 = vpop.f32.mrf.mxu0
        %v1197 = vadd.f32 %v1129, %v1196
        %1198 = vdwg.mxu0
        %v1199 = vld [vmem:[%s602] sm:$0xf]
        %v1200 = vld [vmem:[%s602 + $0x4] sm:$0xf]
        %v1201 = vunpack.c.l.bf16 %v1199
        %v1202 = vunpack.c.l.bf16 %v1200
        %v1203 = vadd.f32 %v1195, %v1201
        %v1204 = vadd.f32 %v1197, %v1202
        %1205 = vadd.xlane.f32.xlu0 %v1203
        %v1206 = vpop.xlane.xlu0 %1205
        %1207 = vadd.xlane.f32.xlu0 %v1204
        %v1208 = vpop.xlane.xlu0 %1207
        %v1209 = vrcp.pop 128.0
        %v1210 = vmul.f32 128.0, %v1209
        %v1211 = vsub.f32 1.0, %v1210
        %v1212 = vmul.f32 %v1209, %v1211
        %v1213 = vadd.f32 %v1209, %v1212
        %vm1214 = vweird.f32 %v1209
        %v1215 = vsel %vm1214, %v1209, %v1213
        %v1216 = vmul.f32 %v1206, %v1215
        %v1217 = vmul.f32 %v1208, %v1215
        %v1218 = vsub.f32 %v1203, %v1216
        %v1219 = vsub.f32 %v1204, %v1217
        %v1220 = vmul.f32 %v1218, %v1218
        %v1221 = vmul.f32 %v1219, %v1219
        %1222 = vadd.xlane.f32.xlu0 %v1220
        %v1223 = vpop.xlane.xlu0 %1222
        %1224 = vadd.xlane.f32.xlu0 %v1221
        %v1225 = vpop.xlane.xlu0 %1224
        %v1226 = vmul.f32 %v1223, %v1215
        %v1227 = vmul.f32 %v1225, %v1215
        %v1228 = vadd.f32 %v1226, 1e-05
        %v1229 = vadd.f32 %v1227, 1e-05
        %v1230 = vrsqrt.pop %v1228
        %v1231 = vmul.f32 %v1230, %v1228
        %v1232 = vmul.f32 %v1231, %v1230
        %v1233 = vmul.f32 0.5, %v1232
        %v1234 = vsub.f32 1.5, %v1233
        %v1235 = vmul.f32 %v1230, %v1234
        %vm1236 = vweird.f32 %v1228
        %vm1237 = vweird.f32 %v1230
        %vm1238 = vmor %vm1236, %vm1237
        %v1239 = vsel %vm1238, %v1230, %v1235
        %v1240 = vrsqrt.pop %v1229
        %v1241 = vmul.f32 %v1240, %v1229
        %v1242 = vmul.f32 %v1241, %v1240
        %v1243 = vmul.f32 0.5, %v1242
        %v1244 = vsub.f32 1.5, %v1243
        %v1245 = vmul.f32 %v1240, %v1244
        %vm1246 = vweird.f32 %v1229
        %vm1247 = vweird.f32 %v1240
        %vm1248 = vmor %vm1246, %vm1247
        %v1249 = vsel %vm1248, %v1240, %v1245
        %v1250 = vmul.f32 %v1218, %v1239
        %v1251 = vmul.f32 %v1219, %v1249
        %v1252 = vld [vmem:[%s6] sm:$0x1]
        %v1254 = vperm.slane %v1252, 0
        %v1256 = vmul.f32 %v1250, %v1254
        %v1257 = vmul.f32 %v1251, %v1254
        %v1258 = vld [vmem:[%s7] sm:$0x1]
        %v1260 = vperm.slane %v1258, 0
        %v1262 = vadd.f32 %v1256, %v1260
        %v1263 = vadd.f32 %v1257, %v1260
        %v1264 = vpack.c.bf16 %v1262, %v1262
        %v1265 = vpack.c.bf16 %v1263, %v1263
        %1266 = vst [vmem:[%s612] sm:$0xf] %v1264
        %1267 = vst [vmem:[%s612 + $0x4] sm:$0xf] %v1265
        %s1268 = smul.u32 2, %s30
        %p1269 = scmp.lt.s32.totalorder %s29, 1
        %s1270 = scalar_select %p1269, %s29, 1
        %p1271 = scmp.lt.s32.totalorder %s1268, 1
        %s1272 = scalar_select %p1271, %s1268, 1
        %s1273 = smul.addr %s1270, 2
        %s1274 = sadd.s32 %s1272, %s1273
        %s1275 = smul.addr %s1274, 4
        %s1276 = scalar_lea.vmem %s8, %s1275
        %s1277 = sand.u32 %s267, 1
        %s1278 = scalar_lea.sflag [#allocation8], %s1277
        %s1279 = sand.u32 %s267, 1
        %s1280 = smul.addr %s1279, 16
        %s1281 = scalar_lea.vmem [#allocation9], %s1280
        // Predicated region
        $region180: #{transformer_model.20} parent=162 // pred_check
          %p1282 = pneg %p249
        $region181: #{transformer_model.20} parent=162 // pred_check_branch
          %1284 = sbr.rel (%p1282) target = $region183
        $region182: #{transformer_model.20} parent=162 // pred_region
          %s1285 = smul.u32 2, %s30
        $region183: #{transformer_model.20} parent=162 // pred_fallthru
          _
        // Predicated region
        $region184: #{transformer_model.20} parent=162 // pred_check
          %p1286 = pneg %p277
        $region185: #{transformer_model.20} parent=162 // pred_check_branch
          %1288 = sbr.rel (%p1286) target = $region187
        $region186: #{transformer_model.20} parent=162 // pred_region
          %s1289 = smul.u32 2, %s30
          %1291 = vsyncadd %s1278, 0
          %s1292 = smul.addr %s29, 2
          %s1293 = sadd.s32 %s1289, %s1292
          %s1294 = smul.addr %s1293, 8
          %s1295 = scalar_lea.hbm %s9, %s1294
          %s1296 = sshll.u32 %s1281, 4
          %s1297 = int_to_ptr.vmem [resolvable:$true] %s1296
          %s1298 = sshll.u32 %s1295, 4
          %s1299 = int_to_ptr.hbm [resolvable:$true] %s1298
          %1304 = dma.vmem_to_hbm [thread:$0]  %s1297, 256, %s1299, %s1278, 128, 128, 8
        $region187: #{transformer_model.20} parent=162 // pred_fallthru
          _
      $region163: #{transformer_model.20} parent=5 // pred_fallthru
        _
      %p1305 = scmp.le.s32.totalorder 2, %s20
      // Predicated region
      $region188: #{transformer_model.20} parent=5 // pred_check
        %p1306 = pneg %p1305
      $region189: #{transformer_model.20} parent=5 // pred_check_branch
        %1308 = sbr.rel (%p1306) target = $region191
      $region190: #{transformer_model.20} parent=5 // pred_region
        %s1309 = ssub.s32 %s20, 2
        // Predicated region
        $region192: #{transformer_model.20} parent=190 // pred_check
          %p1310 = pneg %p255
        $region193: #{transformer_model.20} parent=190 // pred_check_branch
          %1312 = sbr.rel (%p1310) target = $region195
        $region194: #{transformer_model.20} parent=190 // pred_region
          %s1313 = smul.u32 2, %s32
          %p1314 = scmp.lt.s32.totalorder %s31, 1
          %s1315 = scalar_select %p1314, %s31, 1
          %p1316 = scmp.lt.s32.totalorder %s1313, 1
          %s1317 = scalar_select %p1316, %s1313, 1
          %s1318 = smul.addr %s1315, 2
          %s1319 = sadd.s32 %s1317, %s1318
          %s1320 = smul.addr %s1319, 4
          %s1321 = scalar_lea.vmem %s8, %s1320
        $region195: #{transformer_model.20} parent=190 // pred_fallthru
          _
        // Predicated region
        $region196: #{transformer_model.20} parent=190 // pred_check
          %p1322 = pneg %p283
        $region197: #{transformer_model.20} parent=190 // pred_check_branch
          %1324 = sbr.rel (%p1322) target = $region199
        $region198: #{transformer_model.20} parent=190 // pred_region
          %s1325 = sand.u32 %s268, 1
          %s1326 = scalar_lea.sflag [#allocation8], %s1325
          %s1327 = sand.u32 %s268, 1
          %s1328 = smul.addr %s1327, 16
          %s1329 = scalar_lea.vmem [#allocation9], %s1328
          %1331 = dma.done %s1326, 256
        $region199: #{transformer_model.20} parent=190 // pred_fallthru
          _
      $region191: #{transformer_model.20} parent=5 // pred_fallthru
        _
    $region6: #{transformer_model.20} parent=1 // loop_footer
      %s24 = sadd.s32 1, %s20
    $region7: #{transformer_model.20} parent=1 // loop_footer_branch
      %19 = sbr.rel target = $region3
    $region8: #{transformer_model.20} parent=1 // loop_exit
      _
    %1332 = vsyncpa [#allocation7], 1
    %s1333 = scalar_lea.sflag [#allocation7], 1
    %1334 = vsyncpa %s1333, 1
    %1335 = vsyncpa [#allocation8], 1
    %s1336 = scalar_lea.sflag [#allocation8], 1
    %1337 = vsyncpa %s1336, 1

// kernel: transformer_model.25
$region0: #{transformer_model.25}
  #allocation0 [shape = 'u32[]', space=smem, size = 0x4, offset = 0x4, fixed_abs, tag = 'smem constant byte address 0x4 - core index']
  #allocation1 [shape = 'u32[72,128]{1,0:T(1,128)}', space=vmem, size = 0x9000, scoped, tag = 'internal scratch']
  %s0 = inlined_call_operand.vmem [shape: bf16[32,128], index: 0, kind: input, shape index: {}]
  %s1 = inlined_call_operand.vmem [shape: f32[1,128], index: 1, kind: input, shape index: {}]
  %s2 = inlined_call_operand.vmem [shape: f32[1,128], index: 2, kind: input, shape index: {}]
  %s3 = inlined_call_operand.hbm [shape: f32[32,128], index: 3, kind: output, shape index: {}]
  %s4 = sld [smem:[#allocation0]]
  $region22: #{transformer_model.25} parent=0
    _
  %s6 = ssub.s32 1, %s4
  %s7 = scalar_select 0, %s6, %s4
  $region1: #{transformer_model.25} parent=0
    #allocation2 [shape = 'u8[16384]{0}', space=vmem, size = 0x4000, scoped, tag = 'output window, operand 0, single buffered']
    #allocation3 [shape = 's32[1]{0}', space=sflag, size = 0x4, scoped, tag = 'scoped memory for transformer_model.25']
    %8 = vsyncpa [#allocation3], 0
    // Predicated region
    $region2: #{transformer_model.25} parent=1 // pred_check
      _
    $region3: #{transformer_model.25} parent=1 // pred_check_branch
      %10 = sbr.rel (0) target = $region5
    $region4: #{transformer_model.25} parent=1 // pred_region
      _
    $region5: #{transformer_model.25} parent=1 // pred_fallthru
      _
    // Predicated region
    $region6: #{transformer_model.25} parent=1 // pred_check
      _
    $region7: #{transformer_model.25} parent=1 // pred_check_branch
      %12 = sbr.rel (0) target = $region9
    $region8: #{transformer_model.25} parent=1 // pred_region
      _
    $region9: #{transformer_model.25} parent=1 // pred_fallthru
      _
    // Predicated region
    $region10: #{transformer_model.25} parent=1 // pred_check
      _
    $region11: #{transformer_model.25} parent=1 // pred_check_branch
      %14 = sbr.rel (0) target = $region13
    $region12: #{transformer_model.25} parent=1 // pred_region
      _
    $region13: #{transformer_model.25} parent=1 // pred_fallthru
      _
    %v15 = vld [vmem:[%s0] sm:$0xf]
    %v16 = vld [vmem:[%s0 + $0x4] sm:$0xf]
    %v17 = vld [vmem:[%s0 + $0x8] sm:$0xf]
    %v18 = vld [vmem:[%s0 + $0xc] sm:$0xf]
    %v19 = vunpack.c.l.bf16 %v15
    %v20 = vunpack.c.l.bf16 %v16
    %v21 = vunpack.c.l.bf16 %v17
    %v22 = vunpack.c.l.bf16 %v18
    %23 = vadd.xlane.f32.xlu0 %v19
    %v24 = vpop.xlane.xlu0 %23
    %25 = vadd.xlane.f32.xlu0 %v20
    %v26 = vpop.xlane.xlu0 %25
    %27 = vadd.xlane.f32.xlu0 %v21
    %v28 = vpop.xlane.xlu0 %27
    %29 = vadd.xlane.f32.xlu0 %v22
    %v30 = vpop.xlane.xlu0 %29
    %v31 = vrcp.pop 128.0
    %v32 = vmul.f32 128.0, %v31
    %v33 = vsub.f32 1.0, %v32
    %v34 = vmul.f32 %v31, %v33
    %v35 = vadd.f32 %v31, %v34
    %vm36 = vweird.f32 %v31
    %v37 = vsel %vm36, %v31, %v35
    %v38 = vmul.f32 %v24, %v37
    %v39 = vmul.f32 %v26, %v37
    %v40 = vmul.f32 %v28, %v37
    %v41 = vmul.f32 %v30, %v37
    %v42 = vsub.f32 %v19, %v38
    %v43 = vsub.f32 %v20, %v39
    %v44 = vsub.f32 %v21, %v40
    %v45 = vsub.f32 %v22, %v41
    %v46 = vmul.f32 %v42, %v42
    %v47 = vmul.f32 %v43, %v43
    %v48 = vmul.f32 %v44, %v44
    %v49 = vmul.f32 %v45, %v45
    %50 = vadd.xlane.f32.xlu0 %v46
    %v51 = vpop.xlane.xlu0 %50
    %52 = vadd.xlane.f32.xlu0 %v47
    %v53 = vpop.xlane.xlu0 %52
    %54 = vadd.xlane.f32.xlu0 %v48
    %v55 = vpop.xlane.xlu0 %54
    %56 = vadd.xlane.f32.xlu0 %v49
    %v57 = vpop.xlane.xlu0 %56
    %v58 = vmul.f32 %v51, %v37
    %v59 = vmul.f32 %v53, %v37
    %v60 = vmul.f32 %v55, %v37
    %v61 = vmul.f32 %v57, %v37
    %v62 = vadd.f32 %v58, 1e-05
    %v63 = vadd.f32 %v59, 1e-05
    %v64 = vadd.f32 %v60, 1e-05
    %v65 = vadd.f32 %v61, 1e-05
    %v66 = vrsqrt.pop %v62
    %v67 = vmul.f32 %v66, %v62
    %v68 = vmul.f32 %v67, %v66
    %v69 = vmul.f32 0.5, %v68
    %v70 = vsub.f32 1.5, %v69
    %v71 = vmul.f32 %v66, %v70
    %vm72 = vweird.f32 %v62
    %vm73 = vweird.f32 %v66
    %vm74 = vmor %vm72, %vm73
    %v75 = vsel %vm74, %v66, %v71
    %v76 = vrsqrt.pop %v63
    %v77 = vmul.f32 %v76, %v63
    %v78 = vmul.f32 %v77, %v76
    %v79 = vmul.f32 0.5, %v78
    %v80 = vsub.f32 1.5, %v79
    %v81 = vmul.f32 %v76, %v80
    %vm82 = vweird.f32 %v63
    %vm83 = vweird.f32 %v76
    %vm84 = vmor %vm82, %vm83
    %v85 = vsel %vm84, %v76, %v81
    %v86 = vrsqrt.pop %v64
    %v87 = vmul.f32 %v86, %v64
    %v88 = vmul.f32 %v87, %v86
    %v89 = vmul.f32 0.5, %v88
    %v90 = vsub.f32 1.5, %v89
    %v91 = vmul.f32 %v86, %v90
    %vm92 = vweird.f32 %v64
    %vm93 = vweird.f32 %v86
    %vm94 = vmor %vm92, %vm93
    %v95 = vsel %vm94, %v86, %v91
    %v96 = vrsqrt.pop %v65
    %v97 = vmul.f32 %v96, %v65
    %v98 = vmul.f32 %v97, %v96
    %v99 = vmul.f32 0.5, %v98
    %v100 = vsub.f32 1.5, %v99
    %v101 = vmul.f32 %v96, %v100
    %vm102 = vweird.f32 %v65
    %vm103 = vweird.f32 %v96
    %vm104 = vmor %vm102, %vm103
    %v105 = vsel %vm104, %v96, %v101
    %v106 = vmul.f32 %v42, %v75
    %v107 = vmul.f32 %v43, %v85
    %v108 = vmul.f32 %v44, %v95
    %v109 = vmul.f32 %v45, %v105
    %v110 = vld [vmem:[%s1] sm:$0x1]
    %v112 = vperm.slane %v110, 0
    %v114 = vmul.f32 %v106, %v112
    %v115 = vmul.f32 %v107, %v112
    %v116 = vmul.f32 %v108, %v112
    %v117 = vmul.f32 %v109, %v112
    %v118 = vld [vmem:[%s2] sm:$0x1]
    %v120 = vperm.slane %v118, 0
    %v122 = vadd.f32 %v114, %v120
    %v123 = vadd.f32 %v115, %v120
    %v124 = vadd.f32 %v116, %v120
    %v125 = vadd.f32 %v117, %v120
    %126 = vst [vmem:[#allocation2] sm:$0xff] %v122
    %127 = vst [vmem:[#allocation2 + $0x8] sm:$0xff] %v123
    %128 = vst [vmem:[#allocation2 + $0x10] sm:$0xff] %v124
    %129 = vst [vmem:[#allocation2 + $0x18] sm:$0xff] %v125
    // Predicated region
    $region14: #{transformer_model.25} parent=1 // pred_check
      _
    $region15: #{transformer_model.25} parent=1 // pred_check_branch
      %131 = sbr.rel (0) target = $region17
    $region16: #{transformer_model.25} parent=1 // pred_region
      %133 = vsyncadd [#allocation3], 0
      %s134 = sshll.u32 [#allocation2], 4
      %s135 = int_to_ptr.vmem [resolvable:$true] %s134
      %s136 = sshll.u32 %s3, 4
      %s137 = int_to_ptr.hbm [resolvable:$true] %s136
      %142 = dma.vmem_to_hbm [thread:$0]  %s135, 512, %s137, [#allocation3], 128, 128, 8
    $region17: #{transformer_model.25} parent=1 // pred_fallthru
      _
    // Predicated region
    $region18: #{transformer_model.25} parent=1 // pred_check
      _
    $region19: #{transformer_model.25} parent=1 // pred_check_branch
      %144 = sbr.rel (0) target = $region21
    $region20: #{transformer_model.25} parent=1 // pred_region
      %146 = dma.done [#allocation3], 512
    $region21: #{transformer_model.25} parent=1 // pred_fallthru
      _
    %147 = vsyncpa [#allocation3], 1

// kernel: transformer_model.24
$region0: #{transformer_model.24}
  #allocation0 [shape = 'u32[]', space=smem, size = 0x4, offset = 0x4, fixed_abs, tag = 'smem constant byte address 0x4 - core index']
  #allocation1 [shape = 'u32[72,128]{1,0:T(1,128)}', space=vmem, size = 0x9000, scoped, tag = 'internal scratch']
  #allocation2 [shape = 'f32[32,128]{1,0:T(8,128)}', space=vmem, size = 0x4000, scoped, tag = 'scratch operand']
  %s0 = inlined_call_operand.vmem [shape: bf16[32,128], index: 0, kind: input, shape index: {}]
  %s1 = inlined_call_operand.hbm [shape: bf16[128,256], index: 1, kind: input, shape index: {}]
  %s2 = inlined_call_operand.vmem [shape: f32[1,256], index: 2, kind: input, shape index: {}]
  %s3 = inlined_call_operand.hbm [shape: bf16[256,128], index: 3, kind: input, shape index: {}]
  %s4 = inlined_call_operand.vmem [shape: f32[1,128], index: 4, kind: input, shape index: {}]
  %s5 = inlined_call_operand.vmem [shape: f32[1,128], index: 5, kind: input, shape index: {}]
  %s6 = inlined_call_operand.vmem [shape: f32[1,128], index: 6, kind: input, shape index: {}]
  %s7 = inlined_call_operand.vmem [shape: bf16[32,128], index: 7, kind: output, shape index: {}]
  %s8 = sld [smem:[#allocation0]]
  $region54: #{transformer_model.24} parent=0
    _
  %s10 = ssub.s32 1, %s8
  %s11 = scalar_select 0, %s10, %s8
  $region1: #{transformer_model.24} parent=0
    #allocation3 [shape = 'u8[65536]{0}', space=vmem, size = 0x10000, scoped, tag = 'input window, operand 1, single buffered']
    #allocation4 [shape = 's32[1]{0}', space=sflag, size = 0x4, scoped, tag = 'scoped memory for transformer_model.24']
    #allocation5 [shape = 'u8[65536]{0}', space=vmem, size = 0x10000, scoped, tag = 'input window, operand 3, single buffered']
    #allocation6 [shape = 's32[1]{0}', space=sflag, size = 0x4, scoped, tag = 'scoped memory for transformer_model.24']
    %12 = vsyncpa [#allocation4], 0
    %13 = vsyncpa [#allocation6], 0
    // Predicated region
    $region2: #{transformer_model.24} parent=1 // pred_check
      _
    $region3: #{transformer_model.24} parent=1 // pred_check_branch
      %15 = sbr.rel (0) target = $region5
    $region4: #{transformer_model.24} parent=1 // pred_region
      _
    $region5: #{transformer_model.24} parent=1 // pred_fallthru
      _
    // Predicated region
    $region6: #{transformer_model.24} parent=1 // pred_check
      _
    $region7: #{transformer_model.24} parent=1 // pred_check_branch
      %17 = sbr.rel (0) target = $region9
    $region8: #{transformer_model.24} parent=1 // pred_region
      %19 = vsyncadd [#allocation4], 0
      %s20 = sshll.u32 %s1, 4
      %s21 = int_to_ptr.hbm [resolvable:$true] %s20
      %s22 = sshll.u32 [#allocation3], 4
      %s23 = int_to_ptr.vmem [resolvable:$true] %s22
      %28 = dma.hbm_to_vmem [thread:$0]  %s21, 2048, %s23, [#allocation4], 128, 128, 8
    $region9: #{transformer_model.24} parent=1 // pred_fallthru
      _
    // Predicated region
    $region10: #{transformer_model.24} parent=1 // pred_check
      _
    $region11: #{transformer_model.24} parent=1 // pred_check_branch
      %30 = sbr.rel (0) target = $region13
    $region12: #{transformer_model.24} parent=1 // pred_region
      _
    $region13: #{transformer_model.24} parent=1 // pred_fallthru
      _
    // Predicated region
    $region14: #{transformer_model.24} parent=1 // pred_check
      _
    $region15: #{transformer_model.24} parent=1 // pred_check_branch
      %32 = sbr.rel (0) target = $region17
    $region16: #{transformer_model.24} parent=1 // pred_region
      %34 = vsyncadd [#allocation6], 0
      %s35 = sshll.u32 %s3, 4
      %s36 = int_to_ptr.hbm [resolvable:$true] %s35
      %s37 = sshll.u32 [#allocation5], 4
      %s38 = int_to_ptr.vmem [resolvable:$true] %s37
      %43 = dma.hbm_to_vmem [thread:$0]  %s36, 2048, %s38, [#allocation6], 64, 64, 4
    $region17: #{transformer_model.24} parent=1 // pred_fallthru
      _
    // Predicated region
    $region18: #{transformer_model.24} parent=1 // pred_check
      _
    $region19: #{transformer_model.24} parent=1 // pred_check_branch
      %45 = sbr.rel (0) target = $region21
    $region20: #{transformer_model.24} parent=1 // pred_region
      _
    $region21: #{transformer_model.24} parent=1 // pred_fallthru
      _
    // Predicated region
    $region22: #{transformer_model.24} parent=1 // pred_check
      _
    $region23: #{transformer_model.24} parent=1 // pred_check_branch
      %47 = sbr.rel (0) target = $region25
    $region24: #{transformer_model.24} parent=1 // pred_region
      _
    $region25: #{transformer_model.24} parent=1 // pred_fallthru
      _
    // Predicated region
    $region26: #{transformer_model.24} parent=1 // pred_check
      _
    $region27: #{transformer_model.24} parent=1 // pred_check_branch
      %49 = sbr.rel (0) target = $region29
    $region28: #{transformer_model.24} parent=1 // pred_region
      _
    $region29: #{transformer_model.24} parent=1 // pred_fallthru
      _
    // Predicated region
    $region30: #{transformer_model.24} parent=1 // pred_check
      _
    $region31: #{transformer_model.24} parent=1 // pred_check_branch
      %51 = sbr.rel (0) target = $region33
    $region32: #{transformer_model.24} parent=1 // pred_region
      %53 = dma.done [#allocation4], 2048
    $region33: #{transformer_model.24} parent=1 // pred_fallthru
      _
    // Predicated region
    $region34: #{transformer_model.24} parent=1 // pred_check
      _
    $region35: #{transformer_model.24} parent=1 // pred_check_branch
      %55 = sbr.rel (0) target = $region37
    $region36: #{transformer_model.24} parent=1 // pred_region
      %57 = dma.done [#allocation6], 2048
    $region37: #{transformer_model.24} parent=1 // pred_fallthru
      _
    %p58 = scmp.eq.s32.totalorder 0, 0
    // Predicated region
    $region38: #{transformer_model.24} parent=1 // pred_check
      %p59 = pneg %p58
    $region39: #{transformer_model.24} parent=1 // pred_check_branch
      %61 = sbr.rel (%p59) target = $region41
    $region40: #{transformer_model.24} parent=1 // pred_region
      %62 = vst [vmem:[#allocation2] sm:$0xff] 0.0
      %63 = vst [vmem:[#allocation2 + $0x8] sm:$0xff] 0.0
      %64 = vst [vmem:[#allocation2 + $0x10] sm:$0xff] 0.0
      %65 = vst [vmem:[#allocation2 + $0x18] sm:$0xff] 0.0
    $region41: #{transformer_model.24} parent=1 // pred_fallthru
      _
    %v66 = vld [vmem:[%s0] sm:$0xf]
    %v67 = vld [vmem:[%s0 + $0x4] sm:$0xf]
    %v68 = vld [vmem:[%s0 + $0x8] sm:$0xf]
    %v69 = vld [vmem:[%s0 + $0xc] sm:$0xf]
    %v70 = vld [vmem:[#allocation3] sm:$0xff]
    %v71 = vld [vmem:[#allocation3 + $0x8] sm:$0xff]
    %v72 = vld [vmem:[#allocation3 + $0x10] sm:$0xff]
    %v73 = vld [vmem:[#allocation3 + $0x18] sm:$0xff]
    %v74 = vld [vmem:[#allocation3 + $0x20] sm:$0xff]
    %v75 = vld [vmem:[#allocation3 + $0x28] sm:$0xff]
    %v76 = vld [vmem:[#allocation3 + $0x30] sm:$0xff]
    %v77 = vld [vmem:[#allocation3 + $0x38] sm:$0xff]
    %v78 = vld [vmem:[#allocation3 + $0x40] sm:$0xff]
    %v79 = vld [vmem:[#allocation3 + $0x48] sm:$0xff]
    %v80 = vld [vmem:[#allocation3 + $0x50] sm:$0xff]
    %v81 = vld [vmem:[#allocation3 + $0x58] sm:$0xff]
    %v82 = vld [vmem:[#allocation3 + $0x60] sm:$0xff]
    %v83 = vld [vmem:[#allocation3 + $0x68] sm:$0xff]
    %v84 = vld [vmem:[#allocation3 + $0x70] sm:$0xff]
    %v85 = vld [vmem:[#allocation3 + $0x78] sm:$0xff]
    %v86 = vld [vmem:[%s2] sm:$0x3]
    %v88 = vperm.slane %v86, 0
    %v89 = vperm.slane %v86, 1
    %v96 = vunpack.c.l.b16 %v66
    %v97 = vunpack.c.l.b16 %v67
    %v98 = vunpack.c.l.b16 %v68
    %v99 = vunpack.c.l.b16 %v69
    %v100 = vpack.c.b16 %v97, %v96
    %v101 = vpack.c.b16 %v99, %v98
    %v120 = vunpack.c.l.b16 %v70
    %v121 = vunpack.c.h.b16 %v70
    %v122 = vunpack.c.l.b16 %v71
    %v123 = vunpack.c.h.b16 %v71
    %v124 = vunpack.c.l.b16 %v72
    %v125 = vunpack.c.h.b16 %v72
    %v126 = vunpack.c.l.b16 %v73
    %v127 = vunpack.c.h.b16 %v73
    %v128 = vunpack.c.l.b16 %v74
    %v129 = vunpack.c.h.b16 %v74
    %v130 = vunpack.c.l.b16 %v75
    %v131 = vunpack.c.h.b16 %v75
    %v132 = vunpack.c.l.b16 %v76
    %v133 = vunpack.c.h.b16 %v76
    %v134 = vunpack.c.l.b16 %v77
    %v135 = vunpack.c.h.b16 %v77
    %v136 = vunpack.c.l.b16 %v78
    %v137 = vunpack.c.h.b16 %v78
    %v138 = vunpack.c.l.b16 %v79
    %v139 = vunpack.c.h.b16 %v79
    %v140 = vunpack.c.l.b16 %v80
    %v141 = vunpack.c.h.b16 %v80
    %v142 = vunpack.c.l.b16 %v81
    %v143 = vunpack.c.h.b16 %v81
    %v144 = vunpack.c.l.b16 %v82
    %v145 = vunpack.c.h.b16 %v82
    %v146 = vunpack.c.l.b16 %v83
    %v147 = vunpack.c.h.b16 %v83
    %v148 = vunpack.c.l.b16 %v84
    %v149 = vunpack.c.h.b16 %v84
    %v150 = vunpack.c.l.b16 %v85
    %v151 = vunpack.c.h.b16 %v85
    %v152 = vpack.c.b16 %v122, %v120
    %v153 = vpack.c.b16 %v123, %v121
    %v154 = vpack.c.b16 %v126, %v124
    %v155 = vpack.c.b16 %v127, %v125
    %v156 = vpack.c.b16 %v130, %v128
    %v157 = vpack.c.b16 %v131, %v129
    %v158 = vpack.c.b16 %v134, %v132
    %v159 = vpack.c.b16 %v135, %v133
    %v160 = vpack.c.b16 %v138, %v136
    %v161 = vpack.c.b16 %v139, %v137
    %v162 = vpack.c.b16 %v142, %v140
    %v163 = vpack.c.b16 %v143, %v141
    %v164 = vpack.c.b16 %v146, %v144
    %v165 = vpack.c.b16 %v147, %v145
    %v166 = vpack.c.b16 %v150, %v148
    %v167 = vpack.c.b16 %v151, %v149
    %184 = vmatpush.bf16.msra.mxu0 %v166
    %185 = vmatpush.bf16.msra.mxu0 %v164
    %186 = vmatpush.bf16.msra.mxu0 %v162
    %187 = vmatpush.bf16.msra.mxu0 %v160
    %188 = vmatpush.bf16.msra.mxu0 %v158
    %189 = vmatpush.bf16.msra.mxu0 %v156
    %190 = vmatpush.bf16.msra.mxu0 %v154
    %191 = vmatpush.bf16.msra.mxu0 %v152
    %192 = vmatmul.bf16.gmra.mxu0 %v100
    %v193 = vpop.f32.mrf.mxu0
    %v194 = vadd.f32 %v88, %v193
    %v195 = vpop.f32.mrf.mxu0
    %v196 = vadd.f32 %v88, %v195
    %197 = vmatmul.bf16.gmra.mxu0 %v101
    %v198 = vpop.f32.mrf.mxu0
    %v199 = vadd.f32 %v88, %v198
    %v200 = vpop.f32.mrf.mxu0
    %v201 = vadd.f32 %v88, %v200
    %202 = vdwg.mxu0
    %203 = vmatpush.bf16.msra.mxu0 %v167
    %204 = vmatpush.bf16.msra.mxu0 %v165
    %205 = vmatpush.bf16.msra.mxu0 %v163
    %206 = vmatpush.bf16.msra.mxu0 %v161
    %207 = vmatpush.bf16.msra.mxu0 %v159
    %208 = vmatpush.bf16.msra.mxu0 %v157
    %209 = vmatpush.bf16.msra.mxu0 %v155
    %210 = vmatpush.bf16.msra.mxu0 %v153
    %211 = vmatmul.bf16.gmra.mxu0 %v100
    %v212 = vpop.f32.mrf.mxu0
    %v213 = vadd.f32 %v89, %v212
    %v214 = vpop.f32.mrf.mxu0
    %v215 = vadd.f32 %v89, %v214
    %216 = vmatmul.bf16.gmra.mxu0 %v101
    %v217 = vpop.f32.mrf.mxu0
    %v218 = vadd.f32 %v89, %v217
    %v219 = vpop.f32.mrf.mxu0
    %v220 = vadd.f32 %v89, %v219
    %221 = vdwg.mxu0
    %v222 = vmax.f32 %v194, 0.0
    %v223 = vmax.f32 %v213, 0.0
    %v224 = vmax.f32 %v196, 0.0
    %v225 = vmax.f32 %v215, 0.0
    %v226 = vmax.f32 %v199, 0.0
    %v227 = vmax.f32 %v218, 0.0
    %v228 = vmax.f32 %v201, 0.0
    %v229 = vmax.f32 %v220, 0.0
    %v230 = vld [vmem:[#allocation2] sm:$0xff]
    %v231 = vld [vmem:[#allocation2 + $0x8] sm:$0xff]
    %v232 = vld [vmem:[#allocation2 + $0x10] sm:$0xff]
    %v233 = vld [vmem:[#allocation2 + $0x18] sm:$0xff]
    %v234 = vpack.c.bf16 %v224, %v222
    %v235 = vpack.c.bf16 %v225, %v223
    %v236 = vpack.c.bf16 %v228, %v226
    %v237 = vpack.c.bf16 %v229, %v227
    %v238 = vld [vmem:[#allocation5] sm:$0xf]
    %v239 = vld [vmem:[#allocation5 + $0x4] sm:$0xf]
    %v240 = vld [vmem:[#allocation5 + $0x8] sm:$0xf]
    %v241 = vld [vmem:[#allocation5 + $0xc] sm:$0xf]
    %v242 = vld [vmem:[#allocation5 + $0x10] sm:$0xf]
    %v243 = vld [vmem:[#allocation5 + $0x14] sm:$0xf]
    %v244 = vld [vmem:[#allocation5 + $0x18] sm:$0xf]
    %v245 = vld [vmem:[#allocation5 + $0x1c] sm:$0xf]
    %v246 = vld [vmem:[#allocation5 + $0x20] sm:$0xf]
    %v247 = vld [vmem:[#allocation5 + $0x24] sm:$0xf]
    %v248 = vld [vmem:[#allocation5 + $0x28] sm:$0xf]
    %v249 = vld [vmem:[#allocation5 + $0x2c] sm:$0xf]
    %v250 = vld [vmem:[#allocation5 + $0x30] sm:$0xf]
    %v251 = vld [vmem:[#allocation5 + $0x34] sm:$0xf]
    %v252 = vld [vmem:[#allocation5 + $0x38] sm:$0xf]
    %v253 = vld [vmem:[#allocation5 + $0x3c] sm:$0xf]
    %v254 = vld [vmem:[#allocation5 + $0x40] sm:$0xf]
    %v255 = vld [vmem:[#allocation5 + $0x44] sm:$0xf]
    %v256 = vld [vmem:[#allocation5 + $0x48] sm:$0xf]
    %v257 = vld [vmem:[#allocation5 + $0x4c] sm:$0xf]
    %v258 = vld [vmem:[#allocation5 + $0x50] sm:$0xf]
    %v259 = vld [vmem:[#allocation5 + $0x54] sm:$0xf]
    %v260 = vld [vmem:[#allocation5 + $0x58] sm:$0xf]
    %v261 = vld [vmem:[#allocation5 + $0x5c] sm:$0xf]
    %v262 = vld [vmem:[#allocation5 + $0x60] sm:$0xf]
    %v263 = vld [vmem:[#allocation5 + $0x64] sm:$0xf]
    %v264 = vld [vmem:[#allocation5 + $0x68] sm:$0xf]
    %v265 = vld [vmem:[#allocation5 + $0x6c] sm:$0xf]
    %v266 = vld [vmem:[#allocation5 + $0x70] sm:$0xf]
    %v267 = vld [vmem:[#allocation5 + $0x74] sm:$0xf]
    %v268 = vld [vmem:[#allocation5 + $0x78] sm:$0xf]
    %v269 = vld [vmem:[#allocation5 + $0x7c] sm:$0xf]
    %v302 = vunpack.c.l.b16 %v238
    %v303 = vunpack.c.l.b16 %v239
    %v304 = vunpack.c.l.b16 %v240
    %v305 = vunpack.c.l.b16 %v241
    %v306 = vunpack.c.l.b16 %v242
    %v307 = vunpack.c.l.b16 %v243
    %v308 = vunpack.c.l.b16 %v244
    %v309 = vunpack.c.l.b16 %v245
    %v310 = vunpack.c.l.b16 %v246
    %v311 = vunpack.c.l.b16 %v247
    %v312 = vunpack.c.l.b16 %v248
    %v313 = vunpack.c.l.b16 %v249
    %v314 = vunpack.c.l.b16 %v250
    %v315 = vunpack.c.l.b16 %v251
    %v316 = vunpack.c.l.b16 %v252
    %v317 = vunpack.c.l.b16 %v253
    %v318 = vunpack.c.l.b16 %v254
    %v319 = vunpack.c.l.b16 %v255
    %v320 = vunpack.c.l.b16 %v256
    %v321 = vunpack.c.l.b16 %v257
    %v322 = vunpack.c.l.b16 %v258
    %v323 = vunpack.c.l.b16 %v259
    %v324 = vunpack.c.l.b16 %v260
    %v325 = vunpack.c.l.b16 %v261
    %v326 = vunpack.c.l.b16 %v262
    %v327 = vunpack.c.l.b16 %v263
    %v328 = vunpack.c.l.b16 %v264
    %v329 = vunpack.c.l.b16 %v265
    %v330 = vunpack.c.l.b16 %v266
    %v331 = vunpack.c.l.b16 %v267
    %v332 = vunpack.c.l.b16 %v268
    %v333 = vunpack.c.l.b16 %v269
    %v334 = vpack.c.b16 %v303, %v302
    %v335 = vpack.c.b16 %v305, %v304
    %v336 = vpack.c.b16 %v307, %v306
    %v337 = vpack.c.b16 %v309, %v308
    %v338 = vpack.c.b16 %v311, %v310
    %v339 = vpack.c.b16 %v313, %v312
    %v340 = vpack.c.b16 %v315, %v314
    %v341 = vpack.c.b16 %v317, %v316
    %v342 = vpack.c.b16 %v319, %v318
    %v343 = vpack.c.b16 %v321, %v320
    %v344 = vpack.c.b16 %v323, %v322
    %v345 = vpack.c.b16 %v325, %v324
    %v346 = vpack.c.b16 %v327, %v326
    %v347 = vpack.c.b16 %v329, %v328
    %v348 = vpack.c.b16 %v331, %v330
    %v349 = vpack.c.b16 %v333, %v332
    %366 = vmatpush.bf16.msra.mxu0 %v341
    %367 = vmatpush.bf16.msra.mxu0 %v340
    %368 = vmatpush.bf16.msra.mxu0 %v339
    %369 = vmatpush.bf16.msra.mxu0 %v338
    %370 = vmatpush.bf16.msra.mxu0 %v337
    %371 = vmatpush.bf16.msra.mxu0 %v336
    %372 = vmatpush.bf16.msra.mxu0 %v335
    %373 = vmatpush.bf16.msra.mxu0 %v334
    %374 = vmatmul.bf16.gmra.mxu0 %v234
    %v375 = vpop.f32.mrf.mxu0
    %v376 = vadd.f32 0.0, %v375
    %v377 = vpop.f32.mrf.mxu0
    %v378 = vadd.f32 0.0, %v377
    %379 = vmatmul.bf16.gmra.mxu0 %v236
    %v380 = vpop.f32.mrf.mxu0
    %v381 = vadd.f32 0.0, %v380
    %v382 = vpop.f32.mrf.mxu0
    %v383 = vadd.f32 0.0, %v382
    %384 = vdwg.mxu0
    %385 = vmatpush.bf16.msra.mxu0 %v349
    %386 = vmatpush.bf16.msra.mxu0 %v348
    %387 = vmatpush.bf16.msra.mxu0 %v347
    %388 = vmatpush.bf16.msra.mxu0 %v346
    %389 = vmatpush.bf16.msra.mxu0 %v345
    %390 = vmatpush.bf16.msra.mxu0 %v344
    %391 = vmatpush.bf16.msra.mxu0 %v343
    %392 = vmatpush.bf16.msra.mxu0 %v342
    %393 = vmatmul.bf16.gmra.mxu0 %v235
    %v394 = vpop.f32.mrf.mxu0
    %v395 = vadd.f32 %v376, %v394
    %v396 = vpop.f32.mrf.mxu0
    %v397 = vadd.f32 %v378, %v396
    %398 = vmatmul.bf16.gmra.mxu0 %v237
    %v399 = vpop.f32.mrf.mxu0
    %v400 = vadd.f32 %v381, %v399
    %v401 = vpop.f32.mrf.mxu0
    %v402 = vadd.f32 %v383, %v401
    %403 = vdwg.mxu0
    %v404 = vadd.f32 %v230, %v395
    %v405 = vadd.f32 %v231, %v397
    %v406 = vadd.f32 %v232, %v400
    %v407 = vadd.f32 %v233, %v402
    %408 = vst [vmem:[#allocation2] sm:$0xff] %v404
    %409 = vst [vmem:[#allocation2 + $0x8] sm:$0xff] %v405
    %410 = vst [vmem:[#allocation2 + $0x10] sm:$0xff] %v406
    %411 = vst [vmem:[#allocation2 + $0x18] sm:$0xff] %v407
    // Predicated region
    $region42: #{transformer_model.24} parent=1 // pred_check
      %p412 = pneg %p58
    $region43: #{transformer_model.24} parent=1 // pred_check_branch
      %414 = sbr.rel (%p412) target = $region45
    $region44: #{transformer_model.24} parent=1 // pred_region
      %v415 = vld [vmem:[#allocation2] sm:$0xff]
      %v416 = vld [vmem:[#allocation2 + $0x8] sm:$0xff]
      %v417 = vld [vmem:[#allocation2 + $0x10] sm:$0xff]
      %v418 = vld [vmem:[#allocation2 + $0x18] sm:$0xff]
      %v419 = vld [vmem:[%s4] sm:$0x1]
      %v421 = vperm.slane %v419, 0
      %v423 = vadd.f32 %v415, %v421
      %v424 = vadd.f32 %v416, %v421
      %v425 = vadd.f32 %v417, %v421
      %v426 = vadd.f32 %v418, %v421
      %v427 = vld [vmem:[%s0] sm:$0xf]
      %v428 = vld [vmem:[%s0 + $0x4] sm:$0xf]
      %v429 = vld [vmem:[%s0 + $0x8] sm:$0xf]
      %v430 = vld [vmem:[%s0 + $0xc] sm:$0xf]
      %v431 = vunpack.c.l.bf16 %v427
      %v432 = vunpack.c.l.bf16 %v428
      %v433 = vunpack.c.l.bf16 %v429
      %v434 = vunpack.c.l.bf16 %v430
      %v435 = vadd.f32 %v423, %v431
      %v436 = vadd.f32 %v424, %v432
      %v437 = vadd.f32 %v425, %v433
      %v438 = vadd.f32 %v426, %v434
      %439 = vadd.xlane.f32.xlu0 %v435
      %v440 = vpop.xlane.xlu0 %439
      %441 = vadd.xlane.f32.xlu0 %v436
      %v442 = vpop.xlane.xlu0 %441
      %443 = vadd.xlane.f32.xlu0 %v437
      %v444 = vpop.xlane.xlu0 %443
      %445 = vadd.xlane.f32.xlu0 %v438
      %v446 = vpop.xlane.xlu0 %445
      %v447 = vrcp.pop 128.0
      %v448 = vmul.f32 128.0, %v447
      %v449 = vsub.f32 1.0, %v448
      %v450 = vmul.f32 %v447, %v449
      %v451 = vadd.f32 %v447, %v450
      %vm452 = vweird.f32 %v447
      %v453 = vsel %vm452, %v447, %v451
      %v454 = vmul.f32 %v440, %v453
      %v455 = vmul.f32 %v442, %v453
      %v456 = vmul.f32 %v444, %v453
      %v457 = vmul.f32 %v446, %v453
      %v458 = vsub.f32 %v435, %v454
      %v459 = vsub.f32 %v436, %v455
      %v460 = vsub.f32 %v437, %v456
      %v461 = vsub.f32 %v438, %v457
      %v462 = vmul.f32 %v458, %v458
      %v463 = vmul.f32 %v459, %v459
      %v464 = vmul.f32 %v460, %v460
      %v465 = vmul.f32 %v461, %v461
      %466 = vadd.xlane.f32.xlu0 %v462
      %v467 = vpop.xlane.xlu0 %466
      %468 = vadd.xlane.f32.xlu0 %v463
      %v469 = vpop.xlane.xlu0 %468
      %470 = vadd.xlane.f32.xlu0 %v464
      %v471 = vpop.xlane.xlu0 %470
      %472 = vadd.xlane.f32.xlu0 %v465
      %v473 = vpop.xlane.xlu0 %472
      %v474 = vmul.f32 %v467, %v453
      %v475 = vmul.f32 %v469, %v453
      %v476 = vmul.f32 %v471, %v453
      %v477 = vmul.f32 %v473, %v453
      %v478 = vadd.f32 %v474, 1e-05
      %v479 = vadd.f32 %v475, 1e-05
      %v480 = vadd.f32 %v476, 1e-05
      %v481 = vadd.f32 %v477, 1e-05
      %v482 = vrsqrt.pop %v478
      %v483 = vmul.f32 %v482, %v478
      %v484 = vmul.f32 %v483, %v482
      %v485 = vmul.f32 0.5, %v484
      %v486 = vsub.f32 1.5, %v485
      %v487 = vmul.f32 %v482, %v486
      %vm488 = vweird.f32 %v478
      %vm489 = vweird.f32 %v482
      %vm490 = vmor %vm488, %vm489
      %v491 = vsel %vm490, %v482, %v487
      %v492 = vrsqrt.pop %v479
      %v493 = vmul.f32 %v492, %v479
      %v494 = vmul.f32 %v493, %v492
      %v495 = vmul.f32 0.5, %v494
      %v496 = vsub.f32 1.5, %v495
      %v497 = vmul.f32 %v492, %v496
      %vm498 = vweird.f32 %v479
      %vm499 = vweird.f32 %v492
      %vm500 = vmor %vm498, %vm499
      %v501 = vsel %vm500, %v492, %v497
      %v502 = vrsqrt.pop %v480
      %v503 = vmul.f32 %v502, %v480
      %v504 = vmul.f32 %v503, %v502
      %v505 = vmul.f32 0.5, %v504
      %v506 = vsub.f32 1.5, %v505
      %v507 = vmul.f32 %v502, %v506
      %vm508 = vweird.f32 %v480
      %vm509 = vweird.f32 %v502
      %vm510 = vmor %vm508, %vm509
      %v511 = vsel %vm510, %v502, %v507
      %v512 = vrsqrt.pop %v481
      %v513 = vmul.f32 %v512, %v481
      %v514 = vmul.f32 %v513, %v512
      %v515 = vmul.f32 0.5, %v514
      %v516 = vsub.f32 1.5, %v515
      %v517 = vmul.f32 %v512, %v516
      %vm518 = vweird.f32 %v481
      %vm519 = vweird.f32 %v512
      %vm520 = vmor %vm518, %vm519
      %v521 = vsel %vm520, %v512, %v517
      %v522 = vmul.f32 %v458, %v491
      %v523 = vmul.f32 %v459, %v501
      %v524 = vmul.f32 %v460, %v511
      %v525 = vmul.f32 %v461, %v521
      %v526 = vld [vmem:[%s5] sm:$0x1]
      %v528 = vperm.slane %v526, 0
      %v530 = vmul.f32 %v522, %v528
      %v531 = vmul.f32 %v523, %v528
      %v532 = vmul.f32 %v524, %v528
      %v533 = vmul.f32 %v525, %v528
      %v534 = vld [vmem:[%s6] sm:$0x1]
      %v536 = vperm.slane %v534, 0
      %v538 = vadd.f32 %v530, %v536
      %v539 = vadd.f32 %v531, %v536
      %v540 = vadd.f32 %v532, %v536
      %v541 = vadd.f32 %v533, %v536
      %v542 = vpack.c.bf16 %v538, %v538
      %v543 = vpack.c.bf16 %v539, %v539
      %v544 = vpack.c.bf16 %v540, %v540
      %v545 = vpack.c.bf16 %v541, %v541
      %546 = vst [vmem:[%s7] sm:$0xf] %v542
      %547 = vst [vmem:[%s7 + $0x4] sm:$0xf] %v543
      %548 = vst [vmem:[%s7 + $0x8] sm:$0xf] %v544
      %549 = vst [vmem:[%s7 + $0xc] sm:$0xf] %v545
    $region45: #{transformer_model.24} parent=1 // pred_fallthru
      _
    // Predicated region
    $region46: #{transformer_model.24} parent=1 // pred_check
      _
    $region47: #{transformer_model.24} parent=1 // pred_check_branch
      %551 = sbr.rel (0) target = $region49
    $region48: #{transformer_model.24} parent=1 // pred_region
      _
    $region49: #{transformer_model.24} parent=1 // pred_fallthru
      _
    // Predicated region
    $region50: #{transformer_model.24} parent=1 // pred_check
      _
    $region51: #{transformer_model.24} parent=1 // pred_check_branch
      %553 = sbr.rel (0) target = $region53
    $region52: #{transformer_model.24} parent=1 // pred_region
      _
    $region53: #{transformer_model.24} parent=1 // pred_fallthru
      _
    %554 = vsyncpa [#allocation4], 1
    %555 = vsyncpa [#allocation6], 1

</llo_original>
